<compile_context>
chip_gen: v5e
topology: v5e:2x2
jax: 0.10.0
libtpu: 0.0.40
codegen_flags: <defaults>
</compile_context>

<pallas_src>
import math
from functools import partial

import jax
import jax.numpy as jnp
from jax.experimental import pallas as pl
from jax.experimental.pallas import tpu as pltpu

# ----------------------------- config (small) --------------------------------
IN_C = 3
OUT_C = 3
N_FEAT = 8
DEGRADE_NUM = 2          # number of heads (Head modules / DALayer heads)
SCALE_UNET = 4
SCALE_ORS = 4
NUM_CAB = 2
KSIZE = 3
REDUCTION = 4
PRELU_ALPHA = 0.25       # nn.PReLU() default init, shared instance

_TILE_M = 2048           # rows per program when tiling very large images

# ----------------------------- layout helpers ---------------------------------
def _flatT(x):
    """(B,H,W,C) NHWC -> (C, M) with M = B*H*W on the lane axis."""
    B, H, W, C = x.shape
    return x.reshape(B * H * W, C).T


def _unflatT(y, B, H, W):
    """(C, M) -> (B,H,W,C)."""
    C = y.shape[0]
    return y.T.reshape(B, H, W, C)


def _im2col_T(x, kh, kw):
    """(B,H,W,C) -> (kh*kw*C, B*H*W), 'same' zero padding, shift-major rows."""
    B, H, W, C = x.shape
    if kh == 1 and kw == 1:
        return x.reshape(B * H * W, C).T
    ph, pw = kh // 2, kw // 2
    xp = jnp.pad(x, ((0, 0), (ph, ph), (pw, pw), (0, 0)))
    cols = [xp[:, dy:dy + H, dx:dx + W, :] for dy in range(kh) for dx in range(kw)]
    return jnp.concatenate(cols, axis=-1).reshape(B * H * W, kh * kw * C).T


# ----------------------------- Pallas kernels ---------------------------------
_CONV_KERNELS = {}


def _get_conv_kernel(has_bias, activation, has_res):
    """Fused matmul kernel: out = act(W @ Xcol + bias) + residual."""
    key = (has_bias, activation, has_res)
    if key in _CONV_KERNELS:
        return _CONV_KERNELS[key]

    def kernel(*refs):
        i = 0
        x_ref = refs[i]; i += 1          # (K, tile_m)
        w_ref = refs[i]; i += 1          # (Cout, K)
        b_ref = None
        r_ref = None
        if has_bias:
            b_ref = refs[i]; i += 1      # (Cout, 1)
        if has_res:
            r_ref = refs[i]; i += 1      # (Cout, tile_m)
        o_ref = refs[i]                   # (Cout, tile_m)

        acc = jnp.dot(w_ref[...], x_ref[...], preferred_element_type=jnp.float32)
        if has_bias:
            acc = acc + b_ref[...]
        if activation == "prelu":
            acc = jnp.where(acc >= 0.0, acc, PRELU_ALPHA * acc)
        elif activation == "relu":
            acc = jnp.maximum(acc, 0.0)
        elif activation == "sigmoid":
            acc = jax.nn.sigmoid(acc)
        if has_res:
            acc = acc + r_ref[...]
        o_ref[...] = acc.astype(o_ref.dtype)

    _CONV_KERNELS[key] = kernel
    return kernel


def conv2d(x, w, b=None, activation=None, residual=None):
    """Conv2d (stride 1, padding=k//2) as a single lane-dense Pallas matmul.

    x: (B,H,W,Cin) f32, w: (kh,kw,Cin,Cout), b: (Cout,) or None,
    residual: optional NHWC tensor with Cout channels added after activation.
    """
    B, H, W, Cin = x.shape
    kh, kw, _, Cout = w.shape
    M = B * H * W
    K = kh * kw * Cin

    xcolT = _im2col_T(x, kh, kw)                 # (K, M)
    wT = w.reshape(K, Cout).T                     # (Cout, K)

    tile_m = _TILE_M if (M > _TILE_M and M % _TILE_M == 0) else M
    grid = (M // tile_m,)

    in_specs = [pl.BlockSpec((K, tile_m), lambda i: (0, i)),
                pl.BlockSpec((Cout, K), lambda i: (0, 0))]
    args = [xcolT, wT]
    if b is not None:
        in_specs.append(pl.BlockSpec((Cout, 1), lambda i: (0, 0)))
        args.append(b.reshape(Cout, 1))
    if residual is not None:
        in_specs.append(pl.BlockSpec((Cout, tile_m), lambda i: (0, i)))
        args.append(_flatT(residual))

    kernel = _get_conv_kernel(b is not None, activation, residual is not None)
    outT = pl.pallas_call(
        kernel,
        grid=grid,
        in_specs=in_specs,
        out_specs=pl.BlockSpec((Cout, tile_m), lambda i: (0, i)),
        out_shape=jax.ShapeDtypeStruct((Cout, M), jnp.float32),
        compiler_params=pltpu.CompilerParams(dimension_semantics=("parallel",)),
        cost_estimate=pl.CostEstimate(
            flops=2 * M * K * Cout, transcendentals=0,
            bytes_accessed=4 * (K * M + Cout * K + Cout * M)),
    )(*args)
    return _unflatT(outT, B, H, W)


def _cab_tail_kernel(rescol_ref, wmh_ref, gate_ref, hsum_ref, wca1_ref, wca2_ref,
                     pool_ref, bcast_ref, xin_ref, o_ref):
    """Fused DALayer (multi-head conv + attention sum) + CALayer + residual."""
    # multi-head 3x3 conv, all heads in a single MXU matmul: (C*nh, M)
    y = jnp.dot(wmh_ref[...], rescol_ref[...], preferred_element_type=jnp.float32)
    # per-head attention weighting + sum over heads as one matmul: (C, M)
    da = jnp.dot(hsum_ref[...], y * gate_ref[...], preferred_element_type=jnp.float32)
    # CALayer: per-image global average pool via pooling matrix, squeeze/excite
    s = jnp.dot(da, pool_ref[...], preferred_element_type=jnp.float32)            # (C, B)
    s = jnp.maximum(jnp.dot(wca1_ref[...], s, preferred_element_type=jnp.float32), 0.0)
    s = jax.nn.sigmoid(jnp.dot(wca2_ref[...], s, preferred_element_type=jnp.float32))
    scale = jnp.dot(s, bcast_ref[...], preferred_element_type=jnp.float32)         # (C, M)
    o_ref[...] = (da * scale + xin_ref[...]).astype(o_ref.dtype)


def _sam_kernel(x_ref, ximg_ref, w1_ref, w2_ref, w3_ref, o1_ref, img_ref):
    """Fused SAM (kernel_size=1): 3 matmuls + sigmoid gate + residuals."""
    x = x_ref[...]
    x1 = jnp.dot(w1_ref[...], x, preferred_element_type=jnp.float32)               # (C, M)
    img = jnp.dot(w2_ref[...], x, preferred_element_type=jnp.float32) + ximg_ref[...]  # (3, M)
    x2 = jax.nn.sigmoid(jnp.dot(w3_ref[...], img, preferred_element_type=jnp.float32))
    o1_ref[...] = (x1 * x2 + x).astype(o1_ref.dtype)
    img_ref[...] = img.astype(img_ref.dtype)


def _dual_add_kernel(base_ref, a_ref, wa_ref, b_ref, wb_ref, o_ref):
    """out = base + conv1x1(a) + conv1x1(b), fused."""
    acc = base_ref[...]
    acc = acc + jnp.dot(wa_ref[...], a_ref[...], preferred_element_type=jnp.float32)
    acc = acc + jnp.dot(wb_ref[...], b_ref[...], preferred_element_type=jnp.float32)
    o_ref[...] = acc.astype(o_ref.dtype)


def dual_conv1x1_add(base, a, wa, b, wb):
    B, H, W, Cout = base.shape
    M = B * H * W
    waT = wa.reshape(wa.shape[2], Cout).T
    wbT = wb.reshape(wb.shape[2], Cout).T
    outT = pl.pallas_call(
        _dual_add_kernel,
        out_shape=jax.ShapeDtypeStruct((Cout, M), jnp.float32),
    )(_flatT(base), _flatT(a), waT, _flatT(b), wbT)
    return _unflatT(outT, B, H, W)


# ----------------------------- glue ops ---------------------------------------
def _resize_axis(out_size, in_size):
    # PyTorch bilinear, align_corners=False (half-pixel centers), no antialias.
    i = jnp.arange(out_size, dtype=jnp.float32)
    src = (i + 0.5) * (in_size / out_size) - 0.5
    src = jnp.clip(src, 0.0, in_size - 1.0)
    i0 = jnp.floor(src).astype(jnp.int32)
    i1 = jnp.minimum(i0 + 1, in_size - 1)
    w1 = src - i0.astype(jnp.float32)
    return i0, i1, 1.0 - w1, w1


def resize_bilinear(x, out_h, out_w):
    B, H, W, C = x.shape
    r0, r1, rw0, rw1 = _resize_axis(out_h, H)
    c0, c1, cw0, cw1 = _resize_axis(out_w, W)
    x = (jnp.take(x, r0, axis=1) * rw0[None, :, None, None]
         + jnp.take(x, r1, axis=1) * rw1[None, :, None, None])
    x = (jnp.take(x, c0, axis=2) * cw0[None, None, :, None]
         + jnp.take(x, c1, axis=2) * cw1[None, None, :, None])
    return x


def positional_encoding(idx, dim):
    count = dim // 2
    step = jnp.arange(count, dtype=jnp.float32) / count
    enc = idx[:, None] * jnp.exp(-math.log(10000.0) * step[None, :])
    return jnp.concatenate([jnp.sin(enc), jnp.cos(enc)], axis=-1)


# ----------------------------- parameter init ---------------------------------
class PG:
    def __init__(self, seed):
        self.key = jax.random.PRNGKey(seed)
        self.count = 0

    def _take(self):
        k = jax.random.fold_in(self.key, self.count)
        self.count += 1
        return k

    def conv(self, cin, cout, k, bias=False):
        fan_in = cin * k * k
        w = jax.random.normal(self._take(), (k, k, cin, cout), jnp.float32) / math.sqrt(fan_in)
        p = {"w": w}
        if bias:
            p["b"] = 0.01 * jax.random.normal(self._take(), (cout,), jnp.float32)
        return p


def init_cab(pg, ch, type_dim, nh):
    return {
        "conv1": pg.conv(ch, ch, KSIZE),
        "da_mh": pg.conv(ch, ch * nh, 3),
        "da_sig1": pg.conv(type_dim, type_dim // 4, 1),
        "da_sig2": pg.conv(type_dim // 4, nh, 1),
        "ca1": pg.conv(ch, ch // REDUCTION, 1),
        "ca2": pg.conv(ch // REDUCTION, ch, 1),
    }


def init_resblock(pg, ch):
    return {"c1": pg.conv(ch, ch, KSIZE), "c2": pg.conv(ch, ch, KSIZE)}


def init_head(pg, in_c, out_c, nh):
    return [{"conv0": pg.conv(in_c, out_c, KSIZE, bias=True),
             "rb1": init_resblock(pg, out_c),
             "rb2": init_resblock(pg, out_c)} for _ in range(nh)]


def init_encoder(pg, nf, su, csff, type_dim, nh):
    p = {
        "l1": [init_cab(pg, nf, type_dim, nh) for _ in range(2)],
        "l2": [init_cab(pg, nf + su, type_dim, nh) for _ in range(2)],
        "l3": [init_cab(pg, nf + 2 * su, type_dim, nh) for _ in range(2)],
        "down12": pg.conv(nf, nf + su, 1),
        "down23": pg.conv(nf + su, nf + 2 * su, 1),
    }
    if csff:
        p["csff_enc1"] = pg.conv(nf, nf, 1)
        p["csff_enc2"] = pg.conv(nf + su, nf + su, 1)
        p["csff_enc3"] = pg.conv(nf + 2 * su, nf + 2 * su, 1)
        p["csff_dec1"] = pg.conv(nf, nf, 1)
        p["csff_dec2"] = pg.conv(nf + su, nf + su, 1)
        p["csff_dec3"] = pg.conv(nf + 2 * su, nf + 2 * su, 1)
    return p


def init_decoder(pg, nf, su, type_dim, nh):
    return {
        "l1": [init_cab(pg, nf, type_dim, nh) for _ in range(2)],
        "l2": [init_cab(pg, nf + su, type_dim, nh) for _ in range(2)],
        "l3": [init_cab(pg, nf + 2 * su, type_dim, nh) for _ in range(2)],
        "skip1": init_cab(pg, nf, type_dim, nh),
        "skip2": init_cab(pg, nf + su, type_dim, nh),
        "up21": pg.conv(nf + su, nf, 1),
        "up32": pg.conv(nf + 2 * su, nf + su, 1),
    }


def init_orb(pg, ch, num_cab, type_dim, nh):
    return {"cabs": [init_cab(pg, ch, type_dim, nh) for _ in range(num_cab)],
            "conv1": pg.conv(ch, ch, KSIZE)}


def init_orsnet(pg, nf, so, su, num_cab, type_dim, nh):
    ch = nf + so
    return {
        "orb1": init_orb(pg, ch, num_cab, type_dim, nh),
        "orb2": init_orb(pg, ch, num_cab, type_dim, nh),
        "orb3": init_orb(pg, ch, num_cab, type_dim, nh),
        "up_enc1": pg.conv(nf + su, nf, 1),
        "up_dec1": pg.conv(nf + su, nf, 1),
        "up_enc2_a": pg.conv(nf + 2 * su, nf + su, 1),
        "up_enc2_b": pg.conv(nf + su, nf, 1),
        "up_dec2_a": pg.conv(nf + 2 * su, nf + su, 1),
        "up_dec2_b": pg.conv(nf + su, nf, 1),
        "conv_enc1": pg.conv(nf, ch, 1), "conv_enc2": pg.conv(nf, ch, 1),
        "conv_enc3": pg.conv(nf, ch, 1), "conv_dec1": pg.conv(nf, ch, 1),
        "conv_dec2": pg.conv(nf, ch, 1), "conv_dec3": pg.conv(nf, ch, 1),
    }


def init_sam(pg, nf):
    return {"c1": pg.conv(nf, nf, 1), "c2": pg.conv(nf, 3, 1), "c3": pg.conv(3, nf, 1)}


def init_model(seed=42):
    pg = PG(seed)
    nf, su, so = N_FEAT, SCALE_UNET, SCALE_ORS
    nh = DEGRADE_NUM
    return {
        "mlp1": pg.conv(nf, nf * 4, 1, bias=True),
        "mlp2": pg.conv(nf * 4, nf, 1, bias=True),
        "head1": init_head(pg, IN_C, nf, nh),
        "head2": init_head(pg, IN_C, nf, nh),
        "head3": init_head(pg, IN_C, nf, nh),
        "shallow1": init_cab(pg, nf, nf, nh),
        "shallow2": init_cab(pg, nf, nf, nh),
        "shallow3": init_cab(pg, nf, nf, nh),
        "enc1": init_encoder(pg, nf, su, False, nf, nh),
        "dec1": init_decoder(pg, nf, su, nf, nh),
        "enc2": init_encoder(pg, nf, su, True, nf, nh),
        "dec2": init_decoder(pg, nf, su, nf, nh),
        "ors": init_orsnet(pg, nf, so, su, NUM_CAB, nf, nh),
        "sam12": init_sam(pg, nf),
        "sam23": init_sam(pg, nf),
        "concat12": pg.conv(nf * 2, nf, KSIZE),
        "concat23": pg.conv(nf * 2, nf + so, KSIZE),
        "tail": pg.conv(nf + so, OUT_C, KSIZE),
    }


# ----------------------------- module forwards --------------------------------
def apply_cab(p, x, emb):
    """CAB: res = PReLU(conv1(x)); res = DALayer(res, emb); res = CALayer(res); res + x.

    2 pallas_calls: conv1+PReLU, then a fully fused DA+CA+residual tail.
    """
    B, H, W, C = x.shape
    HW = H * W
    M = B * HW
    nh = DEGRADE_NUM

    res = conv2d(x, p["conv1"]["w"], activation="prelu")

    # DA attention from the type embedding: M=1 matmuls stay in plain JAX.
    a = jnp.maximum(emb @ p["da_sig1"]["w"].reshape(emb.shape[-1], -1), 0.0)
    a = a @ p["da_sig2"]["w"].reshape(a.shape[-1], nh)
    a = jax.nn.softmax(a, axis=-1)                                       # (B, nh)

    # Tiny constant matrices so the tail kernel is pure matmul/elementwise:
    gate = jnp.repeat(jnp.repeat(a.T, C, axis=0), HW, axis=1)            # (C*nh, M)
    hsum = jnp.tile(jnp.eye(C, dtype=jnp.float32), (1, nh))              # (C, C*nh)
    pool = jnp.kron(jnp.eye(B, dtype=jnp.float32),
                    jnp.ones((HW, 1), jnp.float32)) / float(HW)          # (M, B)
    bcast = jnp.kron(jnp.eye(B, dtype=jnp.float32),
                     jnp.ones((1, HW), jnp.float32))                     # (B, M)

    rescolT = _im2col_T(res, 3, 3)                                        # (9C, M)
    wmhT = p["da_mh"]["w"].reshape(9 * C, C * nh).T                       # (C*nh, 9C)
    wca1T = p["ca1"]["w"].reshape(C, C // REDUCTION).T                    # (C/4, C)
    wca2T = p["ca2"]["w"].reshape(C // REDUCTION, C).T                    # (C, C/4)

    flops = 2 * M * 9 * C * C * nh + 2 * M * C * nh * C
    outT = pl.pallas_call(
        _cab_tail_kernel,
        out_shape=jax.ShapeDtypeStruct((C, M), jnp.float32),
        cost_estimate=pl.CostEstimate(
            flops=flops, transcendentals=C * B,
            bytes_accessed=4 * (9 * C + 2 * C * nh + 3 * C) * M),
    )(rescolT, wmhT, gate, hsum, wca1T, wca2T, pool, bcast, _flatT(x))
    return _unflatT(outT, B, H, W)


def apply_resblock(p, x):
    r = conv2d(x, p["c1"]["w"], activation="prelu")
    return conv2d(r, p["c2"]["w"], residual=x)


def apply_head(heads, x, idx):
    p = heads[idx]
    h = conv2d(x, p["conv0"]["w"], b=p["conv0"]["b"])
    h = apply_resblock(p["rb1"], h)
    h = apply_resblock(p["rb2"], h)
    return h


def downsample(pw, x):
    B, H, W, C = x.shape
    return conv2d(resize_bilinear(x, H // 2, W // 2), pw["w"])


def upsample(pw, x, skip=None):
    B, H, W, C = x.shape
    return conv2d(resize_bilinear(x, H * 2, W * 2), pw["w"], residual=skip)


def apply_sam(p, x, x_img):
    B, H, W, C = x.shape
    M = B * H * W
    w1T = p["c1"]["w"].reshape(C, C).T
    w2T = p["c2"]["w"].reshape(C, 3).T
    w3T = p["c3"]["w"].reshape(3, C).T
    outT, imgT = pl.pallas_call(
        _sam_kernel,
        out_shape=(jax.ShapeDtypeStruct((C, M), jnp.float32),
                   jax.ShapeDtypeStruct((3, M), jnp.float32)),
    )(_flatT(x), _flatT(x_img), w1T, w2T, w3T)
    return _unflatT(outT, B, H, W), _unflatT(imgT, B, H, W)


def apply_encoder(p, x, emb, enc_outs=None, dec_outs=None):
    enc1 = x
    for c in p["l1"]:
        enc1 = apply_cab(c, enc1, emb)
    if enc_outs is not None:
        enc1 = dual_conv1x1_add(enc1, enc_outs[0], p["csff_enc1"]["w"],
                                dec_outs[0], p["csff_dec1"]["w"])
    enc2 = downsample(p["down12"], enc1)
    for c in p["l2"]:
        enc2 = apply_cab(c, enc2, emb)
    if enc_outs is not None:
        enc2 = dual_conv1x1_add(enc2, enc_outs[1], p["csff_enc2"]["w"],
                                dec_outs[1], p["csff_dec2"]["w"])
    enc3 = downsample(p["down23"], enc2)
    for c in p["l3"]:
        enc3 = apply_cab(c, enc3, emb)
    if enc_outs is not None:
        enc3 = dual_conv1x1_add(enc3, enc_outs[2], p["csff_enc3"]["w"],
                                dec_outs[2], p["csff_dec3"]["w"])
    return [enc1, enc2, enc3]


def apply_decoder(p, outs, emb):
    enc1, enc2, enc3 = outs
    dec3 = enc3
    for c in p["l3"]:
        dec3 = apply_cab(c, dec3, emb)
    x = upsample(p["up32"], dec3, skip=apply_cab(p["skip2"], enc2, emb))
    dec2 = x
    for c in p["l2"]:
        dec2 = apply_cab(c, dec2, emb)
    x = upsample(p["up21"], dec2, skip=apply_cab(p["skip1"], enc1, emb))
    dec1 = x
    for c in p["l1"]:
        dec1 = apply_cab(c, dec1, emb)
    return [dec1, dec2, dec3]


def apply_orb(p, x, emb):
    res = x
    for c in p["cabs"]:
        res = apply_cab(c, res, emb)
    return conv2d(res, p["conv1"]["w"], residual=x)


def apply_orsnet(p, x, enc_outs, dec_outs, emb):
    x = apply_orb(p["orb1"], x, emb)
    x = dual_conv1x1_add(x, enc_outs[0], p["conv_enc1"]["w"],
                         dec_outs[0], p["conv_dec1"]["w"])
    x = apply_orb(p["orb2"], x, emb)
    x = dual_conv1x1_add(x, upsample(p["up_enc1"], enc_outs[1]), p["conv_enc2"]["w"],
                         upsample(p["up_dec1"], dec_outs[1]), p["conv_dec2"]["w"])
    x = apply_orb(p["orb3"], x, emb)
    ue = upsample(p["up_enc2_b"], upsample(p["up_enc2_a"], enc_outs[2]))
    ud = upsample(p["up_dec2_b"], upsample(p["up_dec2_a"], dec_outs[2]))
    x = dual_conv1x1_add(x, ue, p["conv_enc3"]["w"], ud, p["conv_dec3"]["w"])
    return x


# ----------------------------- full model forward -----------------------------
def forward(params, x3_nchw, index, head_idx):
    nf = N_FEAT
    x = jnp.transpose(x3_nchw, (0, 2, 3, 1)).astype(jnp.float32)   # NCHW -> NHWC
    B, H, W, _ = x.shape

    # type embedding MLP (PositionalEncoding -> Linear -> Swish -> Linear), plain jnp
    pe = positional_encoding(index.astype(jnp.float32), nf)          # (B, nf)
    h = pe @ params["mlp1"]["w"].reshape(nf, nf * 4) + params["mlp1"]["b"]
    h = h * jax.nn.sigmoid(h)
    index_emb = h @ params["mlp2"]["w"].reshape(nf * 4, nf) + params["mlp2"]["b"]

    x2top = x[:, :H // 2]
    x2bot = x[:, H // 2:]
    x1ltop, x1rtop = x2top[:, :, :W // 2], x2top[:, :, W // 2:]
    x1lbot, x1rbot = x2bot[:, :, :W // 2], x2bot[:, :, W // 2:]

    # ---- Stage 1: the 4 quarter patches share weights -> stack along batch ----
    x1 = jnp.concatenate([x1ltop, x1rtop, x1lbot, x1rbot], axis=0)
    emb4 = jnp.concatenate([index_emb] * 4, axis=0)
    f = apply_head(params["head1"], x1, head_idx)
    f = apply_cab(params["shallow1"], f, emb4)
    feat1 = apply_encoder(params["enc1"], f, emb4)

    feat1_top, feat1_bot = [], []
    for lv in feat1:
        lt, rt, lb, rb = lv[0:B], lv[B:2 * B], lv[2 * B:3 * B], lv[3 * B:4 * B]
        feat1_top.append(jnp.concatenate([lt, rt], axis=2))   # cat along W
        feat1_bot.append(jnp.concatenate([lb, rb], axis=2))

    emb2 = jnp.concatenate([index_emb] * 2, axis=0)
    feat1_tb = [jnp.concatenate([t, b], axis=0) for t, b in zip(feat1_top, feat1_bot)]
    res1_tb = apply_decoder(params["dec1"], feat1_tb, emb2)

    x2_img_tb = jnp.concatenate([x2top, x2bot], axis=0)
    x2_samfeats_tb, stage1_img_tb = apply_sam(params["sam12"], res1_tb[0], x2_img_tb)
    stage1_img = jnp.concatenate([stage1_img_tb[:B], stage1_img_tb[B:]], axis=1)

    # ---- Stage 2 (top & bottom halves batched) ----
    f2 = apply_head(params["head2"], x2_img_tb, head_idx)
    f2 = apply_cab(params["shallow2"], f2, emb2)
    x2_cat = conv2d(jnp.concatenate([f2, x2_samfeats_tb], axis=3), params["concat12"]["w"])
    feat2_tb = apply_encoder(params["enc2"], x2_cat, emb2, feat1_tb, res1_tb)
    feat2 = [jnp.concatenate([lv[:B], lv[B:]], axis=1) for lv in feat2_tb]    # cat along H
    res2 = apply_decoder(params["dec2"], feat2, index_emb)

    x3_samfeats, stage2_img = apply_sam(params["sam23"], res2[0], x)

    # ---- Stage 3 ----
    f3 = apply_head(params["head3"], x, head_idx)
    f3 = apply_cab(params["shallow3"], f3, index_emb)
    x3_cat = conv2d(jnp.concatenate([f3, x3_samfeats], axis=3), params["concat23"]["w"])
    x3_cat = apply_orsnet(params["ors"], x3_cat, feat2, res2, index_emb)
    stage3_img = conv2d(x3_cat, params["tail"]["w"], residual=x)

    to_nchw = lambda t: jnp.transpose(t, (0, 3, 1, 2))
    return [to_nchw(stage3_img), to_nchw(stage2_img), to_nchw(stage1_img)]


# ----------------------------- main -------------------------------------------
if __name__ == "__main__":
    key = jax.random.PRNGKey(0)
    B, H, W = 1, 16, 16
    x3_img = jax.random.normal(key, (B, IN_C, H, W), jnp.float32)
    index = jnp.array([1], dtype=jnp.int32)    # degradation-type index
    head_idx = 1                               # static int (== index[0] in PyTorch)

    params = init_model(seed=42)
    fwd = jax.jit(partial(forward, head_idx=head_idx))
    outs = fwd(params, x3_img, index)
    outs = jax.block_until_ready(outs)

    assert outs[0].shape == (B, OUT_C, H, W)
    assert outs[1].shape == (B, OUT_C, H, W)
    assert outs[2].shape == (B, OUT_C, H, W)
    print("KERNEL_OK")
</pallas_src>

<mosaic_0001>
module attributes {stable_mosaic.version = 11 : i64} {
  func.func @kernel(%arg0: i32, %arg1: memref<27x256xf32, #tpu.memory_space<vmem>>, %arg2: memref<8x27xf32, #tpu.memory_space<vmem>>, %arg3: memref<8x1xf32, #tpu.memory_space<vmem>>, %arg4: memref<8x256xf32, #tpu.memory_space<vmem>>) attributes {dimension_semantics = [#tpu.dimension_semantics<parallel>], iteration_bounds = array<i64: 1>, scalar_prefetch = 0 : i64, scratch_operands = 0 : i64, tpu.core_type = #tpu.core_type<tc>, window_params = [{transform_indices = @transform_0, window_bounds = array<i64: 27, 256>}, {pipeline_mode = #tpu.pipeline_mode<synchronous>, transform_indices = @transform_1, window_bounds = array<i64: 8, 27>}, {pipeline_mode = #tpu.pipeline_mode<synchronous>, transform_indices = @transform_2, window_bounds = array<i64: 8, 1>}, {transform_indices = @transform_3, window_bounds = array<i64: 8, 256>}]} {
    %c0 = arith.constant 0 : index
    %c0_0 = arith.constant 0 : index
    %0 = vector.load %arg2[%c0, %c0_0] : memref<8x27xf32, #tpu.memory_space<vmem>>, vector<8x27xf32>
    %c0_1 = arith.constant 0 : index
    %c0_2 = arith.constant 0 : index
    %1 = vector.load %arg1[%c0_1, %c0_2] : memref<27x256xf32, #tpu.memory_space<vmem>>, vector<27x256xf32>
    %cst = arith.constant dense<0.000000e+00> : vector<8x256xf32>
    %2 = tpu.matmul %0, %1, %cst {dimension_numbers = #tpu.dot_dimension_numbers<[1], [0], [0], [1], [0, 0, 1, 1], [], []>} : vector<8x27xf32>, vector<27x256xf32>, vector<8x256xf32> -> vector<8x256xf32>
    %c0_3 = arith.constant 0 : index
    %c0_4 = arith.constant 0 : index
    %3 = vector.load %arg3[%c0_3, %c0_4] : memref<8x1xf32, #tpu.memory_space<vmem>>, vector<8x1xf32>
    %4 = vector.broadcast %3 : vector<8x1xf32> to vector<8x256xf32>
    %5 = arith.addf %2, %4 : vector<8x256xf32>
    %c0_5 = arith.constant 0 : index
    %c0_6 = arith.constant 0 : index
    %6 = vector.load %arg4[%c0_5, %c0_6] : memref<8x256xf32, #tpu.memory_space<vmem>>, vector<8x256xf32>
    tpu.vector_store %arg4[%c0_5, %c0_6], %5 {strides = array<i32>} : memref<8x256xf32, #tpu.memory_space<vmem>>, vector<8x256xf32>,
    return
  }
  func.func @transform_0(%arg0: i32) -> (i32, i32) {
    %c0_i32 = arith.constant 0 : i32
    %c0_i32_0 = arith.constant 0 : i32
    return %c0_i32, %arg0 : i32, i32
  }
  func.func @transform_1(%arg0: i32) -> (i32, i32) {
    %c0_i32 = arith.constant 0 : i32
    %c0_i32_0 = arith.constant 0 : i32
    %c0_i32_1 = arith.constant 0 : i32
    return %c0_i32, %c0_i32_0 : i32, i32
  }
  func.func @transform_2(%arg0: i32) -> (i32, i32) {
    %c0_i32 = arith.constant 0 : i32
    %c0_i32_0 = arith.constant 0 : i32
    %c0_i32_1 = arith.constant 0 : i32
    return %c0_i32, %c0_i32_0 : i32, i32
  }
  func.func @transform_3(%arg0: i32) -> (i32, i32) {
    %c0_i32 = arith.constant 0 : i32
    %c0_i32_0 = arith.constant 0 : i32
    return %c0_i32, %arg0 : i32, i32
  }
}

module attributes {stable_mosaic.version = 11 : i64} {
  func.func @kernel(%arg0: i32, %arg1: memref<72x256xf32, #tpu.memory_space<vmem>>, %arg2: memref<8x72xf32, #tpu.memory_space<vmem>>, %arg3: memref<8x256xf32, #tpu.memory_space<vmem>>, %arg4: memref<8x256xf32, #tpu.memory_space<vmem>>) attributes {dimension_semantics = [#tpu.dimension_semantics<parallel>], iteration_bounds = array<i64: 1>, scalar_prefetch = 0 : i64, scratch_operands = 0 : i64, tpu.core_type = #tpu.core_type<tc>, window_params = [{transform_indices = @transform_0, window_bounds = array<i64: 72, 256>}, {pipeline_mode = #tpu.pipeline_mode<synchronous>, transform_indices = @transform_1, window_bounds = array<i64: 8, 72>}, {transform_indices = @transform_2, window_bounds = array<i64: 8, 256>}, {transform_indices = @transform_3, window_bounds = array<i64: 8, 256>}]} {
    %c0 = arith.constant 0 : index
    %c0_0 = arith.constant 0 : index
    %0 = vector.load %arg2[%c0, %c0_0] : memref<8x72xf32, #tpu.memory_space<vmem>>, vector<8x72xf32>
    %c0_1 = arith.constant 0 : index
    %c0_2 = arith.constant 0 : index
    %1 = vector.load %arg1[%c0_1, %c0_2] : memref<72x256xf32, #tpu.memory_space<vmem>>, vector<72x256xf32>
    %cst = arith.constant dense<0.000000e+00> : vector<8x256xf32>
    %2 = tpu.matmul %0, %1, %cst {dimension_numbers = #tpu.dot_dimension_numbers<[1], [0], [0], [1], [0, 0, 1, 1], [], []>} : vector<8x72xf32>, vector<72x256xf32>, vector<8x256xf32> -> vector<8x256xf32>
    %c0_3 = arith.constant 0 : index
    %c0_4 = arith.constant 0 : index
    %3 = vector.load %arg3[%c0_3, %c0_4] : memref<8x256xf32, #tpu.memory_space<vmem>>, vector<8x256xf32>
    %4 = arith.addf %2, %3 : vector<8x256xf32>
    %c0_5 = arith.constant 0 : index
    %c0_6 = arith.constant 0 : index
    %5 = vector.load %arg4[%c0_5, %c0_6] : memref<8x256xf32, #tpu.memory_space<vmem>>, vector<8x256xf32>
    tpu.vector_store %arg4[%c0_5, %c0_6], %4 {strides = array<i32>} : memref<8x256xf32, #tpu.memory_space<vmem>>, vector<8x256xf32>,
    return
  }
  func.func @transform_0(%arg0: i32) -> (i32, i32) {
    %c0_i32 = arith.constant 0 : i32
    %c0_i32_0 = arith.constant 0 : i32
    return %c0_i32, %arg0 : i32, i32
  }
  func.func @transform_1(%arg0: i32) -> (i32, i32) {
    %c0_i32 = arith.constant 0 : i32
    %c0_i32_0 = arith.constant 0 : i32
    %c0_i32_1 = arith.constant 0 : i32
    return %c0_i32, %c0_i32_0 : i32, i32
  }
  func.func @transform_2(%arg0: i32) -> (i32, i32) {
    %c0_i32 = arith.constant 0 : i32
    %c0_i32_0 = arith.constant 0 : i32
    return %c0_i32, %arg0 : i32, i32
  }
  func.func @transform_3(%arg0: i32) -> (i32, i32) {
    %c0_i32 = arith.constant 0 : i32
    %c0_i32_0 = arith.constant 0 : i32
    return %c0_i32, %arg0 : i32, i32
  }
}

module attributes {stable_mosaic.version = 11 : i64} {
  func.func @kernel(%arg0: i32, %arg1: memref<72x256xf32, #tpu.memory_space<vmem>>, %arg2: memref<8x72xf32, #tpu.memory_space<vmem>>, %arg3: memref<8x256xf32, #tpu.memory_space<vmem>>) attributes {dimension_semantics = [#tpu.dimension_semantics<parallel>], iteration_bounds = array<i64: 1>, scalar_prefetch = 0 : i64, scratch_operands = 0 : i64, tpu.core_type = #tpu.core_type<tc>, window_params = [{transform_indices = @transform_0, window_bounds = array<i64: 72, 256>}, {pipeline_mode = #tpu.pipeline_mode<synchronous>, transform_indices = @transform_1, window_bounds = array<i64: 8, 72>}, {transform_indices = @transform_2, window_bounds = array<i64: 8, 256>}]} {
    %c0 = arith.constant 0 : index
    %c0_0 = arith.constant 0 : index
    %0 = vector.load %arg2[%c0, %c0_0] : memref<8x72xf32, #tpu.memory_space<vmem>>, vector<8x72xf32>
    %c0_1 = arith.constant 0 : index
    %c0_2 = arith.constant 0 : index
    %1 = vector.load %arg1[%c0_1, %c0_2] : memref<72x256xf32, #tpu.memory_space<vmem>>, vector<72x256xf32>
    %cst = arith.constant dense<0.000000e+00> : vector<8x256xf32>
    %2 = tpu.matmul %0, %1, %cst {dimension_numbers = #tpu.dot_dimension_numbers<[1], [0], [0], [1], [0, 0, 1, 1], [], []>} : vector<8x72xf32>, vector<72x256xf32>, vector<8x256xf32> -> vector<8x256xf32>
    %cst_3 = arith.constant 0.000000e+00 : f32
    %3 = vector.broadcast %cst_3 : f32 to vector<8x256xf32>
    %4 = arith.cmpf oge, %2, %3 : vector<8x256xf32>
    %cst_4 = arith.constant 2.500000e-01 : f32
    %5 = vector.broadcast %cst_4 : f32 to vector<8x256xf32>
    %6 = arith.mulf %5, %2 : vector<8x256xf32>
    %7 = arith.select %4, %2, %6 : vector<8x256xi1>, vector<8x256xf32>
    %c0_5 = arith.constant 0 : index
    %c0_6 = arith.constant 0 : index
    %8 = vector.load %arg3[%c0_5, %c0_6] : memref<8x256xf32, #tpu.memory_space<vmem>>, vector<8x256xf32>
    tpu.vector_store %arg3[%c0_5, %c0_6], %7 {strides = array<i32>} : memref<8x256xf32, #tpu.memory_space<vmem>>, vector<8x256xf32>,
    return
  }
  func.func @transform_0(%arg0: i32) -> (i32, i32) {
    %c0_i32 = arith.constant 0 : i32
    %c0_i32_0 = arith.constant 0 : i32
    return %c0_i32, %arg0 : i32, i32
  }
  func.func @transform_1(%arg0: i32) -> (i32, i32) {
    %c0_i32 = arith.constant 0 : i32
    %c0_i32_0 = arith.constant 0 : i32
    %c0_i32_1 = arith.constant 0 : i32
    return %c0_i32, %c0_i32_0 : i32, i32
  }
  func.func @transform_2(%arg0: i32) -> (i32, i32) {
    %c0_i32 = arith.constant 0 : i32
    %c0_i32_0 = arith.constant 0 : i32
    return %c0_i32, %arg0 : i32, i32
  }
}

module attributes {stable_mosaic.version = 11 : i64} {
  func.func @_cab_tail_kernel(%arg0: memref<72x256xf32, #tpu.memory_space<vmem>>, %arg1: memref<16x72xf32, #tpu.memory_space<vmem>>, %arg2: memref<16x256xf32, #tpu.memory_space<vmem>>, %arg3: memref<8x16xf32, #tpu.memory_space<vmem>>, %arg4: memref<2x8xf32, #tpu.memory_space<vmem>>, %arg5: memref<8x2xf32, #tpu.memory_space<vmem>>, %arg6: memref<256x4xf32, #tpu.memory_space<vmem>>, %arg7: memref<4x256xf32, #tpu.memory_space<vmem>>, %arg8: memref<8x256xf32, #tpu.memory_space<vmem>>, %arg9: memref<8x256xf32, #tpu.memory_space<vmem>>) attributes {dimension_semantics = [], scalar_prefetch = 0 : i64, scratch_operands = 0 : i64, tpu.core_type = #tpu.core_type<tc>} {
    %c0 = arith.constant 0 : index
    %c0_0 = arith.constant 0 : index
    %0 = vector.load %arg1[%c0, %c0_0] : memref<16x72xf32, #tpu.memory_space<vmem>>, vector<16x72xf32>
    %c0_1 = arith.constant 0 : index
    %c0_2 = arith.constant 0 : index
    %1 = vector.load %arg0[%c0_1, %c0_2] : memref<72x256xf32, #tpu.memory_space<vmem>>, vector<72x256xf32>
    %cst = arith.constant dense<0.000000e+00> : vector<16x256xf32>
    %2 = tpu.matmul %0, %1, %cst {dimension_numbers = #tpu.dot_dimension_numbers<[1], [0], [0], [1], [0, 0, 1, 1], [], []>} : vector<16x72xf32>, vector<72x256xf32>, vector<16x256xf32> -> vector<16x256xf32>
    %c0_3 = arith.constant 0 : index
    %c0_4 = arith.constant 0 : index
    %3 = vector.load %arg3[%c0_3, %c0_4] : memref<8x16xf32, #tpu.memory_space<vmem>>, vector<8x16xf32>
    %c0_5 = arith.constant 0 : index
    %c0_6 = arith.constant 0 : index
    %4 = vector.load %arg2[%c0_5, %c0_6] : memref<16x256xf32, #tpu.memory_space<vmem>>, vector<16x256xf32>
    %5 = arith.mulf %2, %4 : vector<16x256xf32>
    %cst_7 = arith.constant dense<0.000000e+00> : vector<8x256xf32>
    %6 = tpu.matmul %3, %5, %cst_7 {dimension_numbers = #tpu.dot_dimension_numbers<[1], [0], [0], [1], [0, 0, 1, 1], [], []>} : vector<8x16xf32>, vector<16x256xf32>, vector<8x256xf32> -> vector<8x256xf32>
    %c0_8 = arith.constant 0 : index
    %c0_9 = arith.constant 0 : index
    %7 = vector.load %arg6[%c0_8, %c0_9] : memref<256x4xf32, #tpu.memory_space<vmem>>, vector<256x4xf32>
    %cst_10 = arith.constant dense<0.000000e+00> : vector<8x4xf32>
    %8 = tpu.matmul %6, %7, %cst_10 {dimension_numbers = #tpu.dot_dimension_numbers<[1], [0], [0], [1], [0, 0, 1, 1], [], []>} : vector<8x256xf32>, vector<256x4xf32>, vector<8x4xf32> -> vector<8x4xf32>
    %c0_11 = arith.constant 0 : index
    %c0_12 = arith.constant 0 : index
    %9 = vector.load %arg4[%c0_11, %c0_12] : memref<2x8xf32, #tpu.memory_space<vmem>>, vector<2x8xf32>
    %cst_13 = arith.constant dense<0.000000e+00> : vector<2x4xf32>
    %10 = tpu.matmul %9, %8, %cst_13 {dimension_numbers = #tpu.dot_dimension_numbers<[1], [0], [0], [1], [0, 0, 1, 1], [], []>} : vector<2x8xf32>, vector<8x4xf32>, vector<2x4xf32> -> vector<2x4xf32>
    %cst_14 = arith.constant 0.000000e+00 : f32
    %11 = vector.broadcast %cst_14 : f32 to vector<2x4xf32>
    %12 = arith.maximumf %10, %11 : vector<2x4xf32>
    %c0_15 = arith.constant 0 : index
    %c0_16 = arith.constant 0 : index
    %13 = vector.load %arg5[%c0_15, %c0_16] : memref<8x2xf32, #tpu.memory_space<vmem>>, vector<8x2xf32>
    %cst_17 = arith.constant dense<0.000000e+00> : vector<8x4xf32>
    %14 = tpu.matmul %13, %12, %cst_17 {dimension_numbers = #tpu.dot_dimension_numbers<[1], [0], [0], [1], [0, 0, 1, 1], [], []>} : vector<8x2xf32>, vector<2x4xf32>, vector<8x4xf32> -> vector<8x4xf32>
    %15 = arith.negf %14 : vector<8x4xf32>
    %16 = math.exp %15 : vector<8x4xf32>
    %cst_18 = arith.constant 1.000000e+00 : f32
    %17 = vector.broadcast %cst_18 : f32 to vector<8x4xf32>
    %18 = arith.addf %17, %16 : vector<8x4xf32>
    %19 = arith.divf %17, %18 : vector<8x4xf32>
    %c0_19 = arith.constant 0 : index
    %c0_20 = arith.constant 0 : index
    %20 = vector.load %arg7[%c0_19, %c0_20] : memref<4x256xf32, #tpu.memory_space<vmem>>, vector<4x256xf32>
    %cst_21 = arith.constant dense<0.000000e+00> : vector<8x256xf32>
    %21 = tpu.matmul %19, %20, %cst_21 {dimension_numbers = #tpu.dot_dimension_numbers<[1], [0], [0], [1], [0, 0, 1, 1], [], []>} : vector<8x4xf32>, vector<4x256xf32>, vector<8x256xf32> -> vector<8x256xf32>
    %22 = arith.mulf %6, %21 : vector<8x256xf32>
    %c0_22 = arith.constant 0 : index
    %c0_23 = arith.constant 0 : index
    %23 = vector.load %arg8[%c0_22, %c0_23] : memref<8x256xf32, #tpu.memory_space<vmem>>, vector<8x256xf32>
    %24 = arith.addf %22, %23 : vector<8x256xf32>
    %c0_24 = arith.constant 0 : index
    %c0_25 = arith.constant 0 : index
    %25 = vector.load %arg9[%c0_24, %c0_25] : memref<8x256xf32, #tpu.memory_space<vmem>>, vector<8x256xf32>
    tpu.vector_store %arg9[%c0_24, %c0_25], %24 {strides = array<i32>} : memref<8x256xf32, #tpu.memory_space<vmem>>, vector<8x256xf32>,
    return
  }
}

module attributes {stable_mosaic.version = 11 : i64} {
  func.func @kernel(%arg0: i32, %arg1: memref<8x64xf32, #tpu.memory_space<vmem>>, %arg2: memref<12x8xf32, #tpu.memory_space<vmem>>, %arg3: memref<12x64xf32, #tpu.memory_space<vmem>>) attributes {dimension_semantics = [#tpu.dimension_semantics<parallel>], iteration_bounds = array<i64: 1>, scalar_prefetch = 0 : i64, scratch_operands = 0 : i64, tpu.core_type = #tpu.core_type<tc>, window_params = [{transform_indices = @transform_0, window_bounds = array<i64: 8, 64>}, {pipeline_mode = #tpu.pipeline_mode<synchronous>, transform_indices = @transform_1, window_bounds = array<i64: 12, 8>}, {transform_indices = @transform_2, window_bounds = array<i64: 12, 64>}]} {
    %c0 = arith.constant 0 : index
    %c0_0 = arith.constant 0 : index
    %0 = vector.load %arg2[%c0, %c0_0] : memref<12x8xf32, #tpu.memory_space<vmem>>, vector<12x8xf32>
    %c0_1 = arith.constant 0 : index
    %c0_2 = arith.constant 0 : index
    %1 = vector.load %arg1[%c0_1, %c0_2] : memref<8x64xf32, #tpu.memory_space<vmem>>, vector<8x64xf32>
    %cst = arith.constant dense<0.000000e+00> : vector<12x64xf32>
    %2 = tpu.matmul %0, %1, %cst {dimension_numbers = #tpu.dot_dimension_numbers<[1], [0], [0], [1], [0, 0, 1, 1], [], []>} : vector<12x8xf32>, vector<8x64xf32>, vector<12x64xf32> -> vector<12x64xf32>
    %c0_3 = arith.constant 0 : index
    %c0_4 = arith.constant 0 : index
    %3 = vector.load %arg3[%c0_3, %c0_4] : memref<12x64xf32, #tpu.memory_space<vmem>>, vector<12x64xf32>
    tpu.vector_store %arg3[%c0_3, %c0_4], %2 {strides = array<i32>} : memref<12x64xf32, #tpu.memory_space<vmem>>, vector<12x64xf32>,
    return
  }
  func.func @transform_0(%arg0: i32) -> (i32, i32) {
    %c0_i32 = arith.constant 0 : i32
    %c0_i32_0 = arith.constant 0 : i32
    return %c0_i32, %arg0 : i32, i32
  }
  func.func @transform_1(%arg0: i32) -> (i32, i32) {
    %c0_i32 = arith.constant 0 : i32
    %c0_i32_0 = arith.constant 0 : i32
    %c0_i32_1 = arith.constant 0 : i32
    return %c0_i32, %c0_i32_0 : i32, i32
  }
  func.func @transform_2(%arg0: i32) -> (i32, i32) {
    %c0_i32 = arith.constant 0 : i32
    %c0_i32_0 = arith.constant 0 : i32
    return %c0_i32, %arg0 : i32, i32
  }
}

module attributes {stable_mosaic.version = 11 : i64} {
  func.func @kernel(%arg0: i32, %arg1: memref<108x64xf32, #tpu.memory_space<vmem>>, %arg2: memref<12x108xf32, #tpu.memory_space<vmem>>, %arg3: memref<12x64xf32, #tpu.memory_space<vmem>>) attributes {dimension_semantics = [#tpu.dimension_semantics<parallel>], iteration_bounds = array<i64: 1>, scalar_prefetch = 0 : i64, scratch_operands = 0 : i64, tpu.core_type = #tpu.core_type<tc>, window_params = [{transform_indices = @transform_0, window_bounds = array<i64: 108, 64>}, {pipeline_mode = #tpu.pipeline_mode<synchronous>, transform_indices = @transform_1, window_bounds = array<i64: 12, 108>}, {transform_indices = @transform_2, window_bounds = array<i64: 12, 64>}]} {
    %c0 = arith.constant 0 : index
    %c0_0 = arith.constant 0 : index
    %0 = vector.load %arg2[%c0, %c0_0] : memref<12x108xf32, #tpu.memory_space<vmem>>, vector<12x108xf32>
    %c0_1 = arith.constant 0 : index
    %c0_2 = arith.constant 0 : index
    %1 = vector.load %arg1[%c0_1, %c0_2] : memref<108x64xf32, #tpu.memory_space<vmem>>, vector<108x64xf32>
    %cst = arith.constant dense<0.000000e+00> : vector<12x64xf32>
    %2 = tpu.matmul %0, %1, %cst {dimension_numbers = #tpu.dot_dimension_numbers<[1], [0], [0], [1], [0, 0, 1, 1], [], []>} : vector<12x108xf32>, vector<108x64xf32>, vector<12x64xf32> -> vector<12x64xf32>
    %cst_3 = arith.constant 0.000000e+00 : f32
    %3 = vector.broadcast %cst_3 : f32 to vector<12x64xf32>
    %4 = arith.cmpf oge, %2, %3 : vector<12x64xf32>
    %cst_4 = arith.constant 2.500000e-01 : f32
    %5 = vector.broadcast %cst_4 : f32 to vector<12x64xf32>
    %6 = arith.mulf %5, %2 : vector<12x64xf32>
    %7 = arith.select %4, %2, %6 : vector<12x64xi1>, vector<12x64xf32>
    %c0_5 = arith.constant 0 : index
    %c0_6 = arith.constant 0 : index
    %8 = vector.load %arg3[%c0_5, %c0_6] : memref<12x64xf32, #tpu.memory_space<vmem>>, vector<12x64xf32>
    tpu.vector_store %arg3[%c0_5, %c0_6], %7 {strides = array<i32>} : memref<12x64xf32, #tpu.memory_space<vmem>>, vector<12x64xf32>,
    return
  }
  func.func @transform_0(%arg0: i32) -> (i32, i32) {
    %c0_i32 = arith.constant 0 : i32
    %c0_i32_0 = arith.constant 0 : i32
    return %c0_i32, %arg0 : i32, i32
  }
  func.func @transform_1(%arg0: i32) -> (i32, i32) {
    %c0_i32 = arith.constant 0 : i32
    %c0_i32_0 = arith.constant 0 : i32
    %c0_i32_1 = arith.constant 0 : i32
    return %c0_i32, %c0_i32_0 : i32, i32
  }
  func.func @transform_2(%arg0: i32) -> (i32, i32) {
    %c0_i32 = arith.constant 0 : i32
    %c0_i32_0 = arith.constant 0 : i32
    return %c0_i32, %arg0 : i32, i32
  }
}

module attributes {stable_mosaic.version = 11 : i64} {
  func.func @_cab_tail_kernel(%arg0: memref<108x64xf32, #tpu.memory_space<vmem>>, %arg1: memref<24x108xf32, #tpu.memory_space<vmem>>, %arg2: memref<24x64xf32, #tpu.memory_space<vmem>>, %arg3: memref<12x24xf32, #tpu.memory_space<vmem>>, %arg4: memref<3x12xf32, #tpu.memory_space<vmem>>, %arg5: memref<12x3xf32, #tpu.memory_space<vmem>>, %arg6: memref<64x4xf32, #tpu.memory_space<vmem>>, %arg7: memref<4x64xf32, #tpu.memory_space<vmem>>, %arg8: memref<12x64xf32, #tpu.memory_space<vmem>>, %arg9: memref<12x64xf32, #tpu.memory_space<vmem>>) attributes {dimension_semantics = [], scalar_prefetch = 0 : i64, scratch_operands = 0 : i64, tpu.core_type = #tpu.core_type<tc>} {
    %c0 = arith.constant 0 : index
    %c0_0 = arith.constant 0 : index
    %0 = vector.load %arg1[%c0, %c0_0] : memref<24x108xf32, #tpu.memory_space<vmem>>, vector<24x108xf32>
    %c0_1 = arith.constant 0 : index
    %c0_2 = arith.constant 0 : index
    %1 = vector.load %arg0[%c0_1, %c0_2] : memref<108x64xf32, #tpu.memory_space<vmem>>, vector<108x64xf32>
    %cst = arith.constant dense<0.000000e+00> : vector<24x64xf32>
    %2 = tpu.matmul %0, %1, %cst {dimension_numbers = #tpu.dot_dimension_numbers<[1], [0], [0], [1], [0, 0, 1, 1], [], []>} : vector<24x108xf32>, vector<108x64xf32>, vector<24x64xf32> -> vector<24x64xf32>
    %c0_3 = arith.constant 0 : index
    %c0_4 = arith.constant 0 : index
    %3 = vector.load %arg3[%c0_3, %c0_4] : memref<12x24xf32, #tpu.memory_space<vmem>>, vector<12x24xf32>
    %c0_5 = arith.constant 0 : index
    %c0_6 = arith.constant 0 : index
    %4 = vector.load %arg2[%c0_5, %c0_6] : memref<24x64xf32, #tpu.memory_space<vmem>>, vector<24x64xf32>
    %5 = arith.mulf %2, %4 : vector<24x64xf32>
    %cst_7 = arith.constant dense<0.000000e+00> : vector<12x64xf32>
    %6 = tpu.matmul %3, %5, %cst_7 {dimension_numbers = #tpu.dot_dimension_numbers<[1], [0], [0], [1], [0, 0, 1, 1], [], []>} : vector<12x24xf32>, vector<24x64xf32>, vector<12x64xf32> -> vector<12x64xf32>
    %c0_8 = arith.constant 0 : index
    %c0_9 = arith.constant 0 : index
    %7 = vector.load %arg6[%c0_8, %c0_9] : memref<64x4xf32, #tpu.memory_space<vmem>>, vector<64x4xf32>
    %cst_10 = arith.constant dense<0.000000e+00> : vector<12x4xf32>
    %8 = tpu.matmul %6, %7, %cst_10 {dimension_numbers = #tpu.dot_dimension_numbers<[1], [0], [0], [1], [0, 0, 1, 1], [], []>} : vector<12x64xf32>, vector<64x4xf32>, vector<12x4xf32> -> vector<12x4xf32>
    %c0_11 = arith.constant 0 : index
    %c0_12 = arith.constant 0 : index
    %9 = vector.load %arg4[%c0_11, %c0_12] : memref<3x12xf32, #tpu.memory_space<vmem>>, vector<3x12xf32>
    %cst_13 = arith.constant dense<0.000000e+00> : vector<3x4xf32>
    %10 = tpu.matmul %9, %8, %cst_13 {dimension_numbers = #tpu.dot_dimension_numbers<[1], [0], [0], [1], [0, 0, 1, 1], [], []>} : vector<3x12xf32>, vector<12x4xf32>, vector<3x4xf32> -> vector<3x4xf32>
    %cst_14 = arith.constant 0.000000e+00 : f32
    %11 = vector.broadcast %cst_14 : f32 to vector<3x4xf32>
    %12 = arith.maximumf %10, %11 : vector<3x4xf32>
    %c0_15 = arith.constant 0 : index
    %c0_16 = arith.constant 0 : index
    %13 = vector.load %arg5[%c0_15, %c0_16] : memref<12x3xf32, #tpu.memory_space<vmem>>, vector<12x3xf32>
    %cst_17 = arith.constant dense<0.000000e+00> : vector<12x4xf32>
    %14 = tpu.matmul %13, %12, %cst_17 {dimension_numbers = #tpu.dot_dimension_numbers<[1], [0], [0], [1], [0, 0, 1, 1], [], []>} : vector<12x3xf32>, vector<3x4xf32>, vector<12x4xf32> -> vector<12x4xf32>
    %15 = arith.negf %14 : vector<12x4xf32>
    %16 = math.exp %15 : vector<12x4xf32>
    %cst_18 = arith.constant 1.000000e+00 : f32
    %17 = vector.broadcast %cst_18 : f32 to vector<12x4xf32>
    %18 = arith.addf %17, %16 : vector<12x4xf32>
    %19 = arith.divf %17, %18 : vector<12x4xf32>
    %c0_19 = arith.constant 0 : index
    %c0_20 = arith.constant 0 : index
    %20 = vector.load %arg7[%c0_19, %c0_20] : memref<4x64xf32, #tpu.memory_space<vmem>>, vector<4x64xf32>
    %cst_21 = arith.constant dense<0.000000e+00> : vector<12x64xf32>
    %21 = tpu.matmul %19, %20, %cst_21 {dimension_numbers = #tpu.dot_dimension_numbers<[1], [0], [0], [1], [0, 0, 1, 1], [], []>} : vector<12x4xf32>, vector<4x64xf32>, vector<12x64xf32> -> vector<12x64xf32>
    %22 = arith.mulf %6, %21 : vector<12x64xf32>
    %c0_22 = arith.constant 0 : index
    %c0_23 = arith.constant 0 : index
    %23 = vector.load %arg8[%c0_22, %c0_23] : memref<12x64xf32, #tpu.memory_space<vmem>>, vector<12x64xf32>
    %24 = arith.addf %22, %23 : vector<12x64xf32>
    %c0_24 = arith.constant 0 : index
    %c0_25 = arith.constant 0 : index
    %25 = vector.load %arg9[%c0_24, %c0_25] : memref<12x64xf32, #tpu.memory_space<vmem>>, vector<12x64xf32>
    tpu.vector_store %arg9[%c0_24, %c0_25], %24 {strides = array<i32>} : memref<12x64xf32, #tpu.memory_space<vmem>>, vector<12x64xf32>,
    return
  }
}

module attributes {stable_mosaic.version = 11 : i64} {
  func.func @kernel(%arg0: i32, %arg1: memref<12x16xf32, #tpu.memory_space<vmem>>, %arg2: memref<16x12xf32, #tpu.memory_space<vmem>>, %arg3: memref<16x16xf32, #tpu.memory_space<vmem>>) attributes {dimension_semantics = [#tpu.dimension_semantics<parallel>], iteration_bounds = array<i64: 1>, scalar_prefetch = 0 : i64, scratch_operands = 0 : i64, tpu.core_type = #tpu.core_type<tc>, window_params = [{transform_indices = @transform_0, window_bounds = array<i64: 12, 16>}, {pipeline_mode = #tpu.pipeline_mode<synchronous>, transform_indices = @transform_1, window_bounds = array<i64: 16, 12>}, {transform_indices = @transform_2, window_bounds = array<i64: 16, 16>}]} {
    %c0 = arith.constant 0 : index
    %c0_0 = arith.constant 0 : index
    %0 = vector.load %arg2[%c0, %c0_0] : memref<16x12xf32, #tpu.memory_space<vmem>>, vector<16x12xf32>
    %c0_1 = arith.constant 0 : index
    %c0_2 = arith.constant 0 : index
    %1 = vector.load %arg1[%c0_1, %c0_2] : memref<12x16xf32, #tpu.memory_space<vmem>>, vector<12x16xf32>
    %cst = arith.constant dense<0.000000e+00> : vector<16x16xf32>
    %2 = tpu.matmul %0, %1, %cst {dimension_numbers = #tpu.dot_dimension_numbers<[1], [0], [0], [1], [0, 0, 1, 1], [], []>} : vector<16x12xf32>, vector<12x16xf32>, vector<16x16xf32> -> vector<16x16xf32>
    %c0_3 = arith.constant 0 : index
    %c0_4 = arith.constant 0 : index
    %3 = vector.load %arg3[%c0_3, %c0_4] : memref<16x16xf32, #tpu.memory_space<vmem>>, vector<16x16xf32>
    tpu.vector_store %arg3[%c0_3, %c0_4], %2 {strides = array<i32>} : memref<16x16xf32, #tpu.memory_space<vmem>>, vector<16x16xf32>,
    return
  }
  func.func @transform_0(%arg0: i32) -> (i32, i32) {
    %c0_i32 = arith.constant 0 : i32
    %c0_i32_0 = arith.constant 0 : i32
    return %c0_i32, %arg0 : i32, i32
  }
  func.func @transform_1(%arg0: i32) -> (i32, i32) {
    %c0_i32 = arith.constant 0 : i32
    %c0_i32_0 = arith.constant 0 : i32
    %c0_i32_1 = arith.constant 0 : i32
    return %c0_i32, %c0_i32_0 : i32, i32
  }
  func.func @transform_2(%arg0: i32) -> (i32, i32) {
    %c0_i32 = arith.constant 0 : i32
    %c0_i32_0 = arith.constant 0 : i32
    return %c0_i32, %arg0 : i32, i32
  }
}

module attributes {stable_mosaic.version = 11 : i64} {
  func.func @kernel(%arg0: i32, %arg1: memref<144x16xf32, #tpu.memory_space<vmem>>, %arg2: memref<16x144xf32, #tpu.memory_space<vmem>>, %arg3: memref<16x16xf32, #tpu.memory_space<vmem>>) attributes {dimension_semantics = [#tpu.dimension_semantics<parallel>], iteration_bounds = array<i64: 1>, scalar_prefetch = 0 : i64, scratch_operands = 0 : i64, tpu.core_type = #tpu.core_type<tc>, window_params = [{transform_indices = @transform_0, window_bounds = array<i64: 144, 16>}, {pipeline_mode = #tpu.pipeline_mode<synchronous>, transform_indices = @transform_1, window_bounds = array<i64: 16, 144>}, {transform_indices = @transform_2, window_bounds = array<i64: 16, 16>}]} {
    %c0 = arith.constant 0 : index
    %c0_0 = arith.constant 0 : index
    %0 = vector.load %arg2[%c0, %c0_0] : memref<16x144xf32, #tpu.memory_space<vmem>>, vector<16x144xf32>
    %c0_1 = arith.constant 0 : index
    %c0_2 = arith.constant 0 : index
    %1 = vector.load %arg1[%c0_1, %c0_2] : memref<144x16xf32, #tpu.memory_space<vmem>>, vector<144x16xf32>
    %cst = arith.constant dense<0.000000e+00> : vector<16x16xf32>
    %2 = tpu.matmul %0, %1, %cst {dimension_numbers = #tpu.dot_dimension_numbers<[1], [0], [0], [1], [0, 0, 1, 1], [], []>} : vector<16x144xf32>, vector<144x16xf32>, vector<16x16xf32> -> vector<16x16xf32>
    %cst_3 = arith.constant 0.000000e+00 : f32
    %3 = vector.broadcast %cst_3 : f32 to vector<16x16xf32>
    %4 = arith.cmpf oge, %2, %3 : vector<16x16xf32>
    %cst_4 = arith.constant 2.500000e-01 : f32
    %5 = vector.broadcast %cst_4 : f32 to vector<16x16xf32>
    %6 = arith.mulf %5, %2 : vector<16x16xf32>
    %7 = arith.select %4, %2, %6 : vector<16x16xi1>, vector<16x16xf32>
    %c0_5 = arith.constant 0 : index
    %c0_6 = arith.constant 0 : index
    %8 = vector.load %arg3[%c0_5, %c0_6] : memref<16x16xf32, #tpu.memory_space<vmem>>, vector<16x16xf32>
    tpu.vector_store %arg3[%c0_5, %c0_6], %7 {strides = array<i32>} : memref<16x16xf32, #tpu.memory_space<vmem>>, vector<16x16xf32>,
    return
  }
  func.func @transform_0(%arg0: i32) -> (i32, i32) {
    %c0_i32 = arith.constant 0 : i32
    %c0_i32_0 = arith.constant 0 : i32
    return %c0_i32, %arg0 : i32, i32
  }
  func.func @transform_1(%arg0: i32) -> (i32, i32) {
    %c0_i32 = arith.constant 0 : i32
    %c0_i32_0 = arith.constant 0 : i32
    %c0_i32_1 = arith.constant 0 : i32
    return %c0_i32, %c0_i32_0 : i32, i32
  }
  func.func @transform_2(%arg0: i32) -> (i32, i32) {
    %c0_i32 = arith.constant 0 : i32
    %c0_i32_0 = arith.constant 0 : i32
    return %c0_i32, %arg0 : i32, i32
  }
}

module attributes {stable_mosaic.version = 11 : i64} {
  func.func @_cab_tail_kernel(%arg0: memref<144x16xf32, #tpu.memory_space<vmem>>, %arg1: memref<32x144xf32, #tpu.memory_space<vmem>>, %arg2: memref<32x16xf32, #tpu.memory_space<vmem>>, %arg3: memref<16x32xf32, #tpu.memory_space<vmem>>, %arg4: memref<4x16xf32, #tpu.memory_space<vmem>>, %arg5: memref<16x4xf32, #tpu.memory_space<vmem>>, %arg6: memref<16x4xf32, #tpu.memory_space<vmem>>, %arg7: memref<4x16xf32, #tpu.memory_space<vmem>>, %arg8: memref<16x16xf32, #tpu.memory_space<vmem>>, %arg9: memref<16x16xf32, #tpu.memory_space<vmem>>) attributes {dimension_semantics = [], scalar_prefetch = 0 : i64, scratch_operands = 0 : i64, tpu.core_type = #tpu.core_type<tc>} {
    %c0 = arith.constant 0 : index
    %c0_0 = arith.constant 0 : index
    %0 = vector.load %arg1[%c0, %c0_0] : memref<32x144xf32, #tpu.memory_space<vmem>>, vector<32x144xf32>
    %c0_1 = arith.constant 0 : index
    %c0_2 = arith.constant 0 : index
    %1 = vector.load %arg0[%c0_1, %c0_2] : memref<144x16xf32, #tpu.memory_space<vmem>>, vector<144x16xf32>
    %cst = arith.constant dense<0.000000e+00> : vector<32x16xf32>
    %2 = tpu.matmul %0, %1, %cst {dimension_numbers = #tpu.dot_dimension_numbers<[1], [0], [0], [1], [0, 0, 1, 1], [], []>} : vector<32x144xf32>, vector<144x16xf32>, vector<32x16xf32> -> vector<32x16xf32>
    %c0_3 = arith.constant 0 : index
    %c0_4 = arith.constant 0 : index
    %3 = vector.load %arg3[%c0_3, %c0_4] : memref<16x32xf32, #tpu.memory_space<vmem>>, vector<16x32xf32>
    %c0_5 = arith.constant 0 : index
    %c0_6 = arith.constant 0 : index
    %4 = vector.load %arg2[%c0_5, %c0_6] : memref<32x16xf32, #tpu.memory_space<vmem>>, vector<32x16xf32>
    %5 = arith.mulf %2, %4 : vector<32x16xf32>
    %cst_7 = arith.constant dense<0.000000e+00> : vector<16x16xf32>
    %6 = tpu.matmul %3, %5, %cst_7 {dimension_numbers = #tpu.dot_dimension_numbers<[1], [0], [0], [1], [0, 0, 1, 1], [], []>} : vector<16x32xf32>, vector<32x16xf32>, vector<16x16xf32> -> vector<16x16xf32>
    %c0_8 = arith.constant 0 : index
    %c0_9 = arith.constant 0 : index
    %7 = vector.load %arg6[%c0_8, %c0_9] : memref<16x4xf32, #tpu.memory_space<vmem>>, vector<16x4xf32>
    %cst_10 = arith.constant dense<0.000000e+00> : vector<16x4xf32>
    %8 = tpu.matmul %6, %7, %cst_10 {dimension_numbers = #tpu.dot_dimension_numbers<[1], [0], [0], [1], [0, 0, 1, 1], [], []>} : vector<16x16xf32>, vector<16x4xf32>, vector<16x4xf32> -> vector<16x4xf32>
    %c0_11 = arith.constant 0 : index
    %c0_12 = arith.constant 0 : index
    %9 = vector.load %arg4[%c0_11, %c0_12] : memref<4x16xf32, #tpu.memory_space<vmem>>, vector<4x16xf32>
    %cst_13 = arith.constant dense<0.000000e+00> : vector<4x4xf32>
    %10 = tpu.matmul %9, %8, %cst_13 {dimension_numbers = #tpu.dot_dimension_numbers<[1], [0], [0], [1], [0, 0, 1, 1], [], []>} : vector<4x16xf32>, vector<16x4xf32>, vector<4x4xf32> -> vector<4x4xf32>
    %cst_14 = arith.constant 0.000000e+00 : f32
    %11 = vector.broadcast %cst_14 : f32 to vector<4x4xf32>
    %12 = arith.maximumf %10, %11 : vector<4x4xf32>
    %c0_15 = arith.constant 0 : index
    %c0_16 = arith.constant 0 : index
    %13 = vector.load %arg5[%c0_15, %c0_16] : memref<16x4xf32, #tpu.memory_space<vmem>>, vector<16x4xf32>
    %cst_17 = arith.constant dense<0.000000e+00> : vector<16x4xf32>
    %14 = tpu.matmul %13, %12, %cst_17 {dimension_numbers = #tpu.dot_dimension_numbers<[1], [0], [0], [1], [0, 0, 1, 1], [], []>} : vector<16x4xf32>, vector<4x4xf32>, vector<16x4xf32> -> vector<16x4xf32>
    %15 = arith.negf %14 : vector<16x4xf32>
    %16 = math.exp %15 : vector<16x4xf32>
    %cst_18 = arith.constant 1.000000e+00 : f32
    %17 = vector.broadcast %cst_18 : f32 to vector<16x4xf32>
    %18 = arith.addf %17, %16 : vector<16x4xf32>
    %19 = arith.divf %17, %18 : vector<16x4xf32>
    %c0_19 = arith.constant 0 : index
    %c0_20 = arith.constant 0 : index
    %20 = vector.load %arg7[%c0_19, %c0_20] : memref<4x16xf32, #tpu.memory_space<vmem>>, vector<4x16xf32>
    %cst_21 = arith.constant dense<0.000000e+00> : vector<16x16xf32>
    %21 = tpu.matmul %19, %20, %cst_21 {dimension_numbers = #tpu.dot_dimension_numbers<[1], [0], [0], [1], [0, 0, 1, 1], [], []>} : vector<16x4xf32>, vector<4x16xf32>, vector<16x16xf32> -> vector<16x16xf32>
    %22 = arith.mulf %6, %21 : vector<16x16xf32>
    %c0_22 = arith.constant 0 : index
    %c0_23 = arith.constant 0 : index
    %23 = vector.load %arg8[%c0_22, %c0_23] : memref<16x16xf32, #tpu.memory_space<vmem>>, vector<16x16xf32>
    %24 = arith.addf %22, %23 : vector<16x16xf32>
    %c0_24 = arith.constant 0 : index
    %c0_25 = arith.constant 0 : index
    %25 = vector.load %arg9[%c0_24, %c0_25] : memref<16x16xf32, #tpu.memory_space<vmem>>, vector<16x16xf32>
    tpu.vector_store %arg9[%c0_24, %c0_25], %24 {strides = array<i32>} : memref<16x16xf32, #tpu.memory_space<vmem>>, vector<16x16xf32>,
    return
  }
}

module attributes {stable_mosaic.version = 11 : i64} {
  func.func @_cab_tail_kernel(%arg0: memref<144x16xf32, #tpu.memory_space<vmem>>, %arg1: memref<32x144xf32, #tpu.memory_space<vmem>>, %arg2: memref<32x16xf32, #tpu.memory_space<vmem>>, %arg3: memref<16x32xf32, #tpu.memory_space<vmem>>, %arg4: memref<4x16xf32, #tpu.memory_space<vmem>>, %arg5: memref<16x4xf32, #tpu.memory_space<vmem>>, %arg6: memref<16x2xf32, #tpu.memory_space<vmem>>, %arg7: memref<2x16xf32, #tpu.memory_space<vmem>>, %arg8: memref<16x16xf32, #tpu.memory_space<vmem>>, %arg9: memref<16x16xf32, #tpu.memory_space<vmem>>) attributes {dimension_semantics = [], scalar_prefetch = 0 : i64, scratch_operands = 0 : i64, tpu.core_type = #tpu.core_type<tc>} {
    %c0 = arith.constant 0 : index
    %c0_0 = arith.constant 0 : index
    %0 = vector.load %arg1[%c0, %c0_0] : memref<32x144xf32, #tpu.memory_space<vmem>>, vector<32x144xf32>
    %c0_1 = arith.constant 0 : index
    %c0_2 = arith.constant 0 : index
    %1 = vector.load %arg0[%c0_1, %c0_2] : memref<144x16xf32, #tpu.memory_space<vmem>>, vector<144x16xf32>
    %cst = arith.constant dense<0.000000e+00> : vector<32x16xf32>
    %2 = tpu.matmul %0, %1, %cst {dimension_numbers = #tpu.dot_dimension_numbers<[1], [0], [0], [1], [0, 0, 1, 1], [], []>} : vector<32x144xf32>, vector<144x16xf32>, vector<32x16xf32> -> vector<32x16xf32>
    %c0_3 = arith.constant 0 : index
    %c0_4 = arith.constant 0 : index
    %3 = vector.load %arg3[%c0_3, %c0_4] : memref<16x32xf32, #tpu.memory_space<vmem>>, vector<16x32xf32>
    %c0_5 = arith.constant 0 : index
    %c0_6 = arith.constant 0 : index
    %4 = vector.load %arg2[%c0_5, %c0_6] : memref<32x16xf32, #tpu.memory_space<vmem>>, vector<32x16xf32>
    %5 = arith.mulf %2, %4 : vector<32x16xf32>
    %cst_7 = arith.constant dense<0.000000e+00> : vector<16x16xf32>
    %6 = tpu.matmul %3, %5, %cst_7 {dimension_numbers = #tpu.dot_dimension_numbers<[1], [0], [0], [1], [0, 0, 1, 1], [], []>} : vector<16x32xf32>, vector<32x16xf32>, vector<16x16xf32> -> vector<16x16xf32>
    %c0_8 = arith.constant 0 : index
    %c0_9 = arith.constant 0 : index
    %7 = vector.load %arg6[%c0_8, %c0_9] : memref<16x2xf32, #tpu.memory_space<vmem>>, vector<16x2xf32>
    %cst_10 = arith.constant dense<0.000000e+00> : vector<16x2xf32>
    %8 = tpu.matmul %6, %7, %cst_10 {dimension_numbers = #tpu.dot_dimension_numbers<[1], [0], [0], [1], [0, 0, 1, 1], [], []>} : vector<16x16xf32>, vector<16x2xf32>, vector<16x2xf32> -> vector<16x2xf32>
    %c0_11 = arith.constant 0 : index
    %c0_12 = arith.constant 0 : index
    %9 = vector.load %arg4[%c0_11, %c0_12] : memref<4x16xf32, #tpu.memory_space<vmem>>, vector<4x16xf32>
    %cst_13 = arith.constant dense<0.000000e+00> : vector<4x2xf32>
    %10 = tpu.matmul %9, %8, %cst_13 {dimension_numbers = #tpu.dot_dimension_numbers<[1], [0], [0], [1], [0, 0, 1, 1], [], []>} : vector<4x16xf32>, vector<16x2xf32>, vector<4x2xf32> -> vector<4x2xf32>
    %cst_14 = arith.constant 0.000000e+00 : f32
    %11 = vector.broadcast %cst_14 : f32 to vector<4x2xf32>
    %12 = arith.maximumf %10, %11 : vector<4x2xf32>
    %c0_15 = arith.constant 0 : index
    %c0_16 = arith.constant 0 : index
    %13 = vector.load %arg5[%c0_15, %c0_16] : memref<16x4xf32, #tpu.memory_space<vmem>>, vector<16x4xf32>
    %cst_17 = arith.constant dense<0.000000e+00> : vector<16x2xf32>
    %14 = tpu.matmul %13, %12, %cst_17 {dimension_numbers = #tpu.dot_dimension_numbers<[1], [0], [0], [1], [0, 0, 1, 1], [], []>} : vector<16x4xf32>, vector<4x2xf32>, vector<16x2xf32> -> vector<16x2xf32>
    %15 = arith.negf %14 : vector<16x2xf32>
    %16 = math.exp %15 : vector<16x2xf32>
    %cst_18 = arith.constant 1.000000e+00 : f32
    %17 = vector.broadcast %cst_18 : f32 to vector<16x2xf32>
    %18 = arith.addf %17, %16 : vector<16x2xf32>
    %19 = arith.divf %17, %18 : vector<16x2xf32>
    %c0_19 = arith.constant 0 : index
    %c0_20 = arith.constant 0 : index
    %20 = vector.load %arg7[%c0_19, %c0_20] : memref<2x16xf32, #tpu.memory_space<vmem>>, vector<2x16xf32>
    %cst_21 = arith.constant dense<0.000000e+00> : vector<16x16xf32>
    %21 = tpu.matmul %19, %20, %cst_21 {dimension_numbers = #tpu.dot_dimension_numbers<[1], [0], [0], [1], [0, 0, 1, 1], [], []>} : vector<16x2xf32>, vector<2x16xf32>, vector<16x16xf32> -> vector<16x16xf32>
    %22 = arith.mulf %6, %21 : vector<16x16xf32>
    %c0_22 = arith.constant 0 : index
    %c0_23 = arith.constant 0 : index
    %23 = vector.load %arg8[%c0_22, %c0_23] : memref<16x16xf32, #tpu.memory_space<vmem>>, vector<16x16xf32>
    %24 = arith.addf %22, %23 : vector<16x16xf32>
    %c0_24 = arith.constant 0 : index
    %c0_25 = arith.constant 0 : index
    %25 = vector.load %arg9[%c0_24, %c0_25] : memref<16x16xf32, #tpu.memory_space<vmem>>, vector<16x16xf32>
    tpu.vector_store %arg9[%c0_24, %c0_25], %24 {strides = array<i32>} : memref<16x16xf32, #tpu.memory_space<vmem>>, vector<16x16xf32>,
    return
  }
}

module attributes {stable_mosaic.version = 11 : i64} {
  func.func @kernel(%arg0: i32, %arg1: memref<16x64xf32, #tpu.memory_space<vmem>>, %arg2: memref<12x16xf32, #tpu.memory_space<vmem>>, %arg3: memref<12x64xf32, #tpu.memory_space<vmem>>, %arg4: memref<12x64xf32, #tpu.memory_space<vmem>>) attributes {dimension_semantics = [#tpu.dimension_semantics<parallel>], iteration_bounds = array<i64: 1>, scalar_prefetch = 0 : i64, scratch_operands = 0 : i64, tpu.core_type = #tpu.core_type<tc>, window_params = [{transform_indices = @transform_0, window_bounds = array<i64: 16, 64>}, {pipeline_mode = #tpu.pipeline_mode<synchronous>, transform_indices = @transform_1, window_bounds = array<i64: 12, 16>}, {transform_indices = @transform_2, window_bounds = array<i64: 12, 64>}, {transform_indices = @transform_3, window_bounds = array<i64: 12, 64>}]} {
    %c0 = arith.constant 0 : index
    %c0_0 = arith.constant 0 : index
    %0 = vector.load %arg2[%c0, %c0_0] : memref<12x16xf32, #tpu.memory_space<vmem>>, vector<12x16xf32>
    %c0_1 = arith.constant 0 : index
    %c0_2 = arith.constant 0 : index
    %1 = vector.load %arg1[%c0_1, %c0_2] : memref<16x64xf32, #tpu.memory_space<vmem>>, vector<16x64xf32>
    %cst = arith.constant dense<0.000000e+00> : vector<12x64xf32>
    %2 = tpu.matmul %0, %1, %cst {dimension_numbers = #tpu.dot_dimension_numbers<[1], [0], [0], [1], [0, 0, 1, 1], [], []>} : vector<12x16xf32>, vector<16x64xf32>, vector<12x64xf32> -> vector<12x64xf32>
    %c0_3 = arith.constant 0 : index
    %c0_4 = arith.constant 0 : index
    %3 = vector.load %arg3[%c0_3, %c0_4] : memref<12x64xf32, #tpu.memory_space<vmem>>, vector<12x64xf32>
    %4 = arith.addf %2, %3 : vector<12x64xf32>
    %c0_5 = arith.constant 0 : index
    %c0_6 = arith.constant 0 : index
    %5 = vector.load %arg4[%c0_5, %c0_6] : memref<12x64xf32, #tpu.memory_space<vmem>>, vector<12x64xf32>
    tpu.vector_store %arg4[%c0_5, %c0_6], %4 {strides = array<i32>} : memref<12x64xf32, #tpu.memory_space<vmem>>, vector<12x64xf32>,
    return
  }
  func.func @transform_0(%arg0: i32) -> (i32, i32) {
    %c0_i32 = arith.constant 0 : i32
    %c0_i32_0 = arith.constant 0 : i32
    return %c0_i32, %arg0 : i32, i32
  }
  func.func @transform_1(%arg0: i32) -> (i32, i32) {
    %c0_i32 = arith.constant 0 : i32
    %c0_i32_0 = arith.constant 0 : i32
    %c0_i32_1 = arith.constant 0 : i32
    return %c0_i32, %c0_i32_0 : i32, i32
  }
  func.func @transform_2(%arg0: i32) -> (i32, i32) {
    %c0_i32 = arith.constant 0 : i32
    %c0_i32_0 = arith.constant 0 : i32
    return %c0_i32, %arg0 : i32, i32
  }
  func.func @transform_3(%arg0: i32) -> (i32, i32) {
    %c0_i32 = arith.constant 0 : i32
    %c0_i32_0 = arith.constant 0 : i32
    return %c0_i32, %arg0 : i32, i32
  }
}

module attributes {stable_mosaic.version = 11 : i64} {
  func.func @_cab_tail_kernel(%arg0: memref<108x64xf32, #tpu.memory_space<vmem>>, %arg1: memref<24x108xf32, #tpu.memory_space<vmem>>, %arg2: memref<24x64xf32, #tpu.memory_space<vmem>>, %arg3: memref<12x24xf32, #tpu.memory_space<vmem>>, %arg4: memref<3x12xf32, #tpu.memory_space<vmem>>, %arg5: memref<12x3xf32, #tpu.memory_space<vmem>>, %arg6: memref<64x2xf32, #tpu.memory_space<vmem>>, %arg7: memref<2x64xf32, #tpu.memory_space<vmem>>, %arg8: memref<12x64xf32, #tpu.memory_space<vmem>>, %arg9: memref<12x64xf32, #tpu.memory_space<vmem>>) attributes {dimension_semantics = [], scalar_prefetch = 0 : i64, scratch_operands = 0 : i64, tpu.core_type = #tpu.core_type<tc>} {
    %c0 = arith.constant 0 : index
    %c0_0 = arith.constant 0 : index
    %0 = vector.load %arg1[%c0, %c0_0] : memref<24x108xf32, #tpu.memory_space<vmem>>, vector<24x108xf32>
    %c0_1 = arith.constant 0 : index
    %c0_2 = arith.constant 0 : index
    %1 = vector.load %arg0[%c0_1, %c0_2] : memref<108x64xf32, #tpu.memory_space<vmem>>, vector<108x64xf32>
    %cst = arith.constant dense<0.000000e+00> : vector<24x64xf32>
    %2 = tpu.matmul %0, %1, %cst {dimension_numbers = #tpu.dot_dimension_numbers<[1], [0], [0], [1], [0, 0, 1, 1], [], []>} : vector<24x108xf32>, vector<108x64xf32>, vector<24x64xf32> -> vector<24x64xf32>
    %c0_3 = arith.constant 0 : index
    %c0_4 = arith.constant 0 : index
    %3 = vector.load %arg3[%c0_3, %c0_4] : memref<12x24xf32, #tpu.memory_space<vmem>>, vector<12x24xf32>
    %c0_5 = arith.constant 0 : index
    %c0_6 = arith.constant 0 : index
    %4 = vector.load %arg2[%c0_5, %c0_6] : memref<24x64xf32, #tpu.memory_space<vmem>>, vector<24x64xf32>
    %5 = arith.mulf %2, %4 : vector<24x64xf32>
    %cst_7 = arith.constant dense<0.000000e+00> : vector<12x64xf32>
    %6 = tpu.matmul %3, %5, %cst_7 {dimension_numbers = #tpu.dot_dimension_numbers<[1], [0], [0], [1], [0, 0, 1, 1], [], []>} : vector<12x24xf32>, vector<24x64xf32>, vector<12x64xf32> -> vector<12x64xf32>
    %c0_8 = arith.constant 0 : index
    %c0_9 = arith.constant 0 : index
    %7 = vector.load %arg6[%c0_8, %c0_9] : memref<64x2xf32, #tpu.memory_space<vmem>>, vector<64x2xf32>
    %cst_10 = arith.constant dense<0.000000e+00> : vector<12x2xf32>
    %8 = tpu.matmul %6, %7, %cst_10 {dimension_numbers = #tpu.dot_dimension_numbers<[1], [0], [0], [1], [0, 0, 1, 1], [], []>} : vector<12x64xf32>, vector<64x2xf32>, vector<12x2xf32> -> vector<12x2xf32>
    %c0_11 = arith.constant 0 : index
    %c0_12 = arith.constant 0 : index
    %9 = vector.load %arg4[%c0_11, %c0_12] : memref<3x12xf32, #tpu.memory_space<vmem>>, vector<3x12xf32>
    %cst_13 = arith.constant dense<0.000000e+00> : vector<3x2xf32>
    %10 = tpu.matmul %9, %8, %cst_13 {dimension_numbers = #tpu.dot_dimension_numbers<[1], [0], [0], [1], [0, 0, 1, 1], [], []>} : vector<3x12xf32>, vector<12x2xf32>, vector<3x2xf32> -> vector<3x2xf32>
    %cst_14 = arith.constant 0.000000e+00 : f32
    %11 = vector.broadcast %cst_14 : f32 to vector<3x2xf32>
    %12 = arith.maximumf %10, %11 : vector<3x2xf32>
    %c0_15 = arith.constant 0 : index
    %c0_16 = arith.constant 0 : index
    %13 = vector.load %arg5[%c0_15, %c0_16] : memref<12x3xf32, #tpu.memory_space<vmem>>, vector<12x3xf32>
    %cst_17 = arith.constant dense<0.000000e+00> : vector<12x2xf32>
    %14 = tpu.matmul %13, %12, %cst_17 {dimension_numbers = #tpu.dot_dimension_numbers<[1], [0], [0], [1], [0, 0, 1, 1], [], []>} : vector<12x3xf32>, vector<3x2xf32>, vector<12x2xf32> -> vector<12x2xf32>
    %15 = arith.negf %14 : vector<12x2xf32>
    %16 = math.exp %15 : vector<12x2xf32>
    %cst_18 = arith.constant 1.000000e+00 : f32
    %17 = vector.broadcast %cst_18 : f32 to vector<12x2xf32>
    %18 = arith.addf %17, %16 : vector<12x2xf32>
    %19 = arith.divf %17, %18 : vector<12x2xf32>
    %c0_19 = arith.constant 0 : index
    %c0_20 = arith.constant 0 : index
    %20 = vector.load %arg7[%c0_19, %c0_20] : memref<2x64xf32, #tpu.memory_space<vmem>>, vector<2x64xf32>
    %cst_21 = arith.constant dense<0.000000e+00> : vector<12x64xf32>
    %21 = tpu.matmul %19, %20, %cst_21 {dimension_numbers = #tpu.dot_dimension_numbers<[1], [0], [0], [1], [0, 0, 1, 1], [], []>} : vector<12x2xf32>, vector<2x64xf32>, vector<12x64xf32> -> vector<12x64xf32>
    %22 = arith.mulf %6, %21 : vector<12x64xf32>
    %c0_22 = arith.constant 0 : index
    %c0_23 = arith.constant 0 : index
    %23 = vector.load %arg8[%c0_22, %c0_23] : memref<12x64xf32, #tpu.memory_space<vmem>>, vector<12x64xf32>
    %24 = arith.addf %22, %23 : vector<12x64xf32>
    %c0_24 = arith.constant 0 : index
    %c0_25 = arith.constant 0 : index
    %25 = vector.load %arg9[%c0_24, %c0_25] : memref<12x64xf32, #tpu.memory_space<vmem>>, vector<12x64xf32>
    tpu.vector_store %arg9[%c0_24, %c0_25], %24 {strides = array<i32>} : memref<12x64xf32, #tpu.memory_space<vmem>>, vector<12x64xf32>,
    return
  }
}

module attributes {stable_mosaic.version = 11 : i64} {
  func.func @kernel(%arg0: i32, %arg1: memref<12x256xf32, #tpu.memory_space<vmem>>, %arg2: memref<8x12xf32, #tpu.memory_space<vmem>>, %arg3: memref<8x256xf32, #tpu.memory_space<vmem>>, %arg4: memref<8x256xf32, #tpu.memory_space<vmem>>) attributes {dimension_semantics = [#tpu.dimension_semantics<parallel>], iteration_bounds = array<i64: 1>, scalar_prefetch = 0 : i64, scratch_operands = 0 : i64, tpu.core_type = #tpu.core_type<tc>, window_params = [{transform_indices = @transform_0, window_bounds = array<i64: 12, 256>}, {pipeline_mode = #tpu.pipeline_mode<synchronous>, transform_indices = @transform_1, window_bounds = array<i64: 8, 12>}, {transform_indices = @transform_2, window_bounds = array<i64: 8, 256>}, {transform_indices = @transform_3, window_bounds = array<i64: 8, 256>}]} {
    %c0 = arith.constant 0 : index
    %c0_0 = arith.constant 0 : index
    %0 = vector.load %arg2[%c0, %c0_0] : memref<8x12xf32, #tpu.memory_space<vmem>>, vector<8x12xf32>
    %c0_1 = arith.constant 0 : index
    %c0_2 = arith.constant 0 : index
    %1 = vector.load %arg1[%c0_1, %c0_2] : memref<12x256xf32, #tpu.memory_space<vmem>>, vector<12x256xf32>
    %cst = arith.constant dense<0.000000e+00> : vector<8x256xf32>
    %2 = tpu.matmul %0, %1, %cst {dimension_numbers = #tpu.dot_dimension_numbers<[1], [0], [0], [1], [0, 0, 1, 1], [], []>} : vector<8x12xf32>, vector<12x256xf32>, vector<8x256xf32> -> vector<8x256xf32>
    %c0_3 = arith.constant 0 : index
    %c0_4 = arith.constant 0 : index
    %3 = vector.load %arg3[%c0_3, %c0_4] : memref<8x256xf32, #tpu.memory_space<vmem>>, vector<8x256xf32>
    %4 = arith.addf %2, %3 : vector<8x256xf32>
    %c0_5 = arith.constant 0 : index
    %c0_6 = arith.constant 0 : index
    %5 = vector.load %arg4[%c0_5, %c0_6] : memref<8x256xf32, #tpu.memory_space<vmem>>, vector<8x256xf32>
    tpu.vector_store %arg4[%c0_5, %c0_6], %4 {strides = array<i32>} : memref<8x256xf32, #tpu.memory_space<vmem>>, vector<8x256xf32>,
    return
  }
  func.func @transform_0(%arg0: i32) -> (i32, i32) {
    %c0_i32 = arith.constant 0 : i32
    %c0_i32_0 = arith.constant 0 : i32
    return %c0_i32, %arg0 : i32, i32
  }
  func.func @transform_1(%arg0: i32) -> (i32, i32) {
    %c0_i32 = arith.constant 0 : i32
    %c0_i32_0 = arith.constant 0 : i32
    %c0_i32_1 = arith.constant 0 : i32
    return %c0_i32, %c0_i32_0 : i32, i32
  }
  func.func @transform_2(%arg0: i32) -> (i32, i32) {
    %c0_i32 = arith.constant 0 : i32
    %c0_i32_0 = arith.constant 0 : i32
    return %c0_i32, %arg0 : i32, i32
  }
  func.func @transform_3(%arg0: i32) -> (i32, i32) {
    %c0_i32 = arith.constant 0 : i32
    %c0_i32_0 = arith.constant 0 : i32
    return %c0_i32, %arg0 : i32, i32
  }
}

module attributes {stable_mosaic.version = 11 : i64} {
  func.func @_cab_tail_kernel(%arg0: memref<72x256xf32, #tpu.memory_space<vmem>>, %arg1: memref<16x72xf32, #tpu.memory_space<vmem>>, %arg2: memref<16x256xf32, #tpu.memory_space<vmem>>, %arg3: memref<8x16xf32, #tpu.memory_space<vmem>>, %arg4: memref<2x8xf32, #tpu.memory_space<vmem>>, %arg5: memref<8x2xf32, #tpu.memory_space<vmem>>, %arg6: memref<256x2xf32, #tpu.memory_space<vmem>>, %arg7: memref<2x256xf32, #tpu.memory_space<vmem>>, %arg8: memref<8x256xf32, #tpu.memory_space<vmem>>, %arg9: memref<8x256xf32, #tpu.memory_space<vmem>>) attributes {dimension_semantics = [], scalar_prefetch = 0 : i64, scratch_operands = 0 : i64, tpu.core_type = #tpu.core_type<tc>} {
    %c0 = arith.constant 0 : index
    %c0_0 = arith.constant 0 : index
    %0 = vector.load %arg1[%c0, %c0_0] : memref<16x72xf32, #tpu.memory_space<vmem>>, vector<16x72xf32>
    %c0_1 = arith.constant 0 : index
    %c0_2 = arith.constant 0 : index
    %1 = vector.load %arg0[%c0_1, %c0_2] : memref<72x256xf32, #tpu.memory_space<vmem>>, vector<72x256xf32>
    %cst = arith.constant dense<0.000000e+00> : vector<16x256xf32>
    %2 = tpu.matmul %0, %1, %cst {dimension_numbers = #tpu.dot_dimension_numbers<[1], [0], [0], [1], [0, 0, 1, 1], [], []>} : vector<16x72xf32>, vector<72x256xf32>, vector<16x256xf32> -> vector<16x256xf32>
    %c0_3 = arith.constant 0 : index
    %c0_4 = arith.constant 0 : index
    %3 = vector.load %arg3[%c0_3, %c0_4] : memref<8x16xf32, #tpu.memory_space<vmem>>, vector<8x16xf32>
    %c0_5 = arith.constant 0 : index
    %c0_6 = arith.constant 0 : index
    %4 = vector.load %arg2[%c0_5, %c0_6] : memref<16x256xf32, #tpu.memory_space<vmem>>, vector<16x256xf32>
    %5 = arith.mulf %2, %4 : vector<16x256xf32>
    %cst_7 = arith.constant dense<0.000000e+00> : vector<8x256xf32>
    %6 = tpu.matmul %3, %5, %cst_7 {dimension_numbers = #tpu.dot_dimension_numbers<[1], [0], [0], [1], [0, 0, 1, 1], [], []>} : vector<8x16xf32>, vector<16x256xf32>, vector<8x256xf32> -> vector<8x256xf32>
    %c0_8 = arith.constant 0 : index
    %c0_9 = arith.constant 0 : index
    %7 = vector.load %arg6[%c0_8, %c0_9] : memref<256x2xf32, #tpu.memory_space<vmem>>, vector<256x2xf32>
    %cst_10 = arith.constant dense<0.000000e+00> : vector<8x2xf32>
    %8 = tpu.matmul %6, %7, %cst_10 {dimension_numbers = #tpu.dot_dimension_numbers<[1], [0], [0], [1], [0, 0, 1, 1], [], []>} : vector<8x256xf32>, vector<256x2xf32>, vector<8x2xf32> -> vector<8x2xf32>
    %c0_11 = arith.constant 0 : index
    %c0_12 = arith.constant 0 : index
    %9 = vector.load %arg4[%c0_11, %c0_12] : memref<2x8xf32, #tpu.memory_space<vmem>>, vector<2x8xf32>
    %cst_13 = arith.constant dense<0.000000e+00> : vector<2x2xf32>
    %10 = tpu.matmul %9, %8, %cst_13 {dimension_numbers = #tpu.dot_dimension_numbers<[1], [0], [0], [1], [0, 0, 1, 1], [], []>} : vector<2x8xf32>, vector<8x2xf32>, vector<2x2xf32> -> vector<2x2xf32>
    %cst_14 = arith.constant 0.000000e+00 : f32
    %11 = vector.broadcast %cst_14 : f32 to vector<2x2xf32>
    %12 = arith.maximumf %10, %11 : vector<2x2xf32>
    %c0_15 = arith.constant 0 : index
    %c0_16 = arith.constant 0 : index
    %13 = vector.load %arg5[%c0_15, %c0_16] : memref<8x2xf32, #tpu.memory_space<vmem>>, vector<8x2xf32>
    %cst_17 = arith.constant dense<0.000000e+00> : vector<8x2xf32>
    %14 = tpu.matmul %13, %12, %cst_17 {dimension_numbers = #tpu.dot_dimension_numbers<[1], [0], [0], [1], [0, 0, 1, 1], [], []>} : vector<8x2xf32>, vector<2x2xf32>, vector<8x2xf32> -> vector<8x2xf32>
    %15 = arith.negf %14 : vector<8x2xf32>
    %16 = math.exp %15 : vector<8x2xf32>
    %cst_18 = arith.constant 1.000000e+00 : f32
    %17 = vector.broadcast %cst_18 : f32 to vector<8x2xf32>
    %18 = arith.addf %17, %16 : vector<8x2xf32>
    %19 = arith.divf %17, %18 : vector<8x2xf32>
    %c0_19 = arith.constant 0 : index
    %c0_20 = arith.constant 0 : index
    %20 = vector.load %arg7[%c0_19, %c0_20] : memref<2x256xf32, #tpu.memory_space<vmem>>, vector<2x256xf32>
    %cst_21 = arith.constant dense<0.000000e+00> : vector<8x256xf32>
    %21 = tpu.matmul %19, %20, %cst_21 {dimension_numbers = #tpu.dot_dimension_numbers<[1], [0], [0], [1], [0, 0, 1, 1], [], []>} : vector<8x2xf32>, vector<2x256xf32>, vector<8x256xf32> -> vector<8x256xf32>
    %22 = arith.mulf %6, %21 : vector<8x256xf32>
    %c0_22 = arith.constant 0 : index
    %c0_23 = arith.constant 0 : index
    %23 = vector.load %arg8[%c0_22, %c0_23] : memref<8x256xf32, #tpu.memory_space<vmem>>, vector<8x256xf32>
    %24 = arith.addf %22, %23 : vector<8x256xf32>
    %c0_24 = arith.constant 0 : index
    %c0_25 = arith.constant 0 : index
    %25 = vector.load %arg9[%c0_24, %c0_25] : memref<8x256xf32, #tpu.memory_space<vmem>>, vector<8x256xf32>
    tpu.vector_store %arg9[%c0_24, %c0_25], %24 {strides = array<i32>} : memref<8x256xf32, #tpu.memory_space<vmem>>, vector<8x256xf32>,
    return
  }
}

module attributes {stable_mosaic.version = 11 : i64} {
  func.func @_sam_kernel(%arg0: memref<8x256xf32, #tpu.memory_space<vmem>>, %arg1: memref<3x256xf32, #tpu.memory_space<vmem>>, %arg2: memref<8x8xf32, #tpu.memory_space<vmem>>, %arg3: memref<3x8xf32, #tpu.memory_space<vmem>>, %arg4: memref<8x3xf32, #tpu.memory_space<vmem>>, %arg5: memref<8x256xf32, #tpu.memory_space<vmem>>, %arg6: memref<3x256xf32, #tpu.memory_space<vmem>>) attributes {dimension_semantics = [], scalar_prefetch = 0 : i64, scratch_operands = 0 : i64, tpu.core_type = #tpu.core_type<tc>} {
    %c0 = arith.constant 0 : index
    %c0_0 = arith.constant 0 : index
    %0 = vector.load %arg0[%c0, %c0_0] : memref<8x256xf32, #tpu.memory_space<vmem>>, vector<8x256xf32>
    %c0_1 = arith.constant 0 : index
    %c0_2 = arith.constant 0 : index
    %1 = vector.load %arg2[%c0_1, %c0_2] : memref<8x8xf32, #tpu.memory_space<vmem>>, vector<8x8xf32>
    %cst = arith.constant dense<0.000000e+00> : vector<8x256xf32>
    %2 = tpu.matmul %1, %0, %cst {dimension_numbers = #tpu.dot_dimension_numbers<[1], [0], [0], [1], [0, 0, 1, 1], [], []>} : vector<8x8xf32>, vector<8x256xf32>, vector<8x256xf32> -> vector<8x256xf32>
    %c0_3 = arith.constant 0 : index
    %c0_4 = arith.constant 0 : index
    %3 = vector.load %arg3[%c0_3, %c0_4] : memref<3x8xf32, #tpu.memory_space<vmem>>, vector<3x8xf32>
    %cst_5 = arith.constant dense<0.000000e+00> : vector<3x256xf32>
    %4 = tpu.matmul %3, %0, %cst_5 {dimension_numbers = #tpu.dot_dimension_numbers<[1], [0], [0], [1], [0, 0, 1, 1], [], []>} : vector<3x8xf32>, vector<8x256xf32>, vector<3x256xf32> -> vector<3x256xf32>
    %c0_6 = arith.constant 0 : index
    %c0_7 = arith.constant 0 : index
    %5 = vector.load %arg1[%c0_6, %c0_7] : memref<3x256xf32, #tpu.memory_space<vmem>>, vector<3x256xf32>
    %6 = arith.addf %4, %5 : vector<3x256xf32>
    %c0_8 = arith.constant 0 : index
    %c0_9 = arith.constant 0 : index
    %7 = vector.load %arg4[%c0_8, %c0_9] : memref<8x3xf32, #tpu.memory_space<vmem>>, vector<8x3xf32>
    %cst_10 = arith.constant dense<0.000000e+00> : vector<8x256xf32>
    %8 = tpu.matmul %7, %6, %cst_10 {dimension_numbers = #tpu.dot_dimension_numbers<[1], [0], [0], [1], [0, 0, 1, 1], [], []>} : vector<8x3xf32>, vector<3x256xf32>, vector<8x256xf32> -> vector<8x256xf32>
    %9 = arith.negf %8 : vector<8x256xf32>
    %10 = math.exp %9 : vector<8x256xf32>
    %cst_11 = arith.constant 1.000000e+00 : f32
    %11 = vector.broadcast %cst_11 : f32 to vector<8x256xf32>
    %12 = arith.addf %11, %10 : vector<8x256xf32>
    %13 = arith.divf %11, %12 : vector<8x256xf32>
    %14 = arith.mulf %2, %13 : vector<8x256xf32>
    %15 = arith.addf %14, %0 : vector<8x256xf32>
    %c0_12 = arith.constant 0 : index
    %c0_13 = arith.constant 0 : index
    %16 = vector.load %arg5[%c0_12, %c0_13] : memref<8x256xf32, #tpu.memory_space<vmem>>, vector<8x256xf32>
    tpu.vector_store %arg5[%c0_12, %c0_13], %15 {strides = array<i32>} : memref<8x256xf32, #tpu.memory_space<vmem>>, vector<8x256xf32>,
    %c0_14 = arith.constant 0 : index
    %c0_15 = arith.constant 0 : index
    %17 = vector.load %arg6[%c0_14, %c0_15] : memref<3x256xf32, #tpu.memory_space<vmem>>, vector<3x256xf32>
    tpu.vector_store %arg6[%c0_14, %c0_15], %6 {strides = array<i32>} : memref<3x256xf32, #tpu.memory_space<vmem>>, vector<3x256xf32>,
    return
  }
}

module attributes {stable_mosaic.version = 11 : i64} {
  func.func @_dual_add_kernel(%arg0: memref<8x256xf32, #tpu.memory_space<vmem>>, %arg1: memref<8x256xf32, #tpu.memory_space<vmem>>, %arg2: memref<8x8xf32, #tpu.memory_space<vmem>>, %arg3: memref<8x256xf32, #tpu.memory_space<vmem>>, %arg4: memref<8x8xf32, #tpu.memory_space<vmem>>, %arg5: memref<8x256xf32, #tpu.memory_space<vmem>>) attributes {dimension_semantics = [], scalar_prefetch = 0 : i64, scratch_operands = 0 : i64, tpu.core_type = #tpu.core_type<tc>} {
    %c0 = arith.constant 0 : index
    %c0_0 = arith.constant 0 : index
    %0 = vector.load %arg0[%c0, %c0_0] : memref<8x256xf32, #tpu.memory_space<vmem>>, vector<8x256xf32>
    %c0_1 = arith.constant 0 : index
    %c0_2 = arith.constant 0 : index
    %1 = vector.load %arg2[%c0_1, %c0_2] : memref<8x8xf32, #tpu.memory_space<vmem>>, vector<8x8xf32>
    %c0_3 = arith.constant 0 : index
    %c0_4 = arith.constant 0 : index
    %2 = vector.load %arg1[%c0_3, %c0_4] : memref<8x256xf32, #tpu.memory_space<vmem>>, vector<8x256xf32>
    %cst = arith.constant dense<0.000000e+00> : vector<8x256xf32>
    %3 = tpu.matmul %1, %2, %cst {dimension_numbers = #tpu.dot_dimension_numbers<[1], [0], [0], [1], [0, 0, 1, 1], [], []>} : vector<8x8xf32>, vector<8x256xf32>, vector<8x256xf32> -> vector<8x256xf32>
    %4 = arith.addf %0, %3 : vector<8x256xf32>
    %c0_5 = arith.constant 0 : index
    %c0_6 = arith.constant 0 : index
    %5 = vector.load %arg4[%c0_5, %c0_6] : memref<8x8xf32, #tpu.memory_space<vmem>>, vector<8x8xf32>
    %c0_7 = arith.constant 0 : index
    %c0_8 = arith.constant 0 : index
    %6 = vector.load %arg3[%c0_7, %c0_8] : memref<8x256xf32, #tpu.memory_space<vmem>>, vector<8x256xf32>
    %cst_9 = arith.constant dense<0.000000e+00> : vector<8x256xf32>
    %7 = tpu.matmul %5, %6, %cst_9 {dimension_numbers = #tpu.dot_dimension_numbers<[1], [0], [0], [1], [0, 0, 1, 1], [], []>} : vector<8x8xf32>, vector<8x256xf32>, vector<8x256xf32> -> vector<8x256xf32>
    %8 = arith.addf %4, %7 : vector<8x256xf32>
    %c0_10 = arith.constant 0 : index
    %c0_11 = arith.constant 0 : index
    %9 = vector.load %arg5[%c0_10, %c0_11] : memref<8x256xf32, #tpu.memory_space<vmem>>, vector<8x256xf32>
    tpu.vector_store %arg5[%c0_10, %c0_11], %8 {strides = array<i32>} : memref<8x256xf32, #tpu.memory_space<vmem>>, vector<8x256xf32>,
    return
  }
}

module attributes {stable_mosaic.version = 11 : i64} {
  func.func @kernel(%arg0: i32, %arg1: memref<144x256xf32, #tpu.memory_space<vmem>>, %arg2: memref<8x144xf32, #tpu.memory_space<vmem>>, %arg3: memref<8x256xf32, #tpu.memory_space<vmem>>) attributes {dimension_semantics = [#tpu.dimension_semantics<parallel>], iteration_bounds = array<i64: 1>, scalar_prefetch = 0 : i64, scratch_operands = 0 : i64, tpu.core_type = #tpu.core_type<tc>, window_params = [{transform_indices = @transform_0, window_bounds = array<i64: 144, 256>}, {pipeline_mode = #tpu.pipeline_mode<synchronous>, transform_indices = @transform_1, window_bounds = array<i64: 8, 144>}, {transform_indices = @transform_2, window_bounds = array<i64: 8, 256>}]} {
    %c0 = arith.constant 0 : index
    %c0_0 = arith.constant 0 : index
    %0 = vector.load %arg2[%c0, %c0_0] : memref<8x144xf32, #tpu.memory_space<vmem>>, vector<8x144xf32>
    %c0_1 = arith.constant 0 : index
    %c0_2 = arith.constant 0 : index
    %1 = vector.load %arg1[%c0_1, %c0_2] : memref<144x256xf32, #tpu.memory_space<vmem>>, vector<144x256xf32>
    %cst = arith.constant dense<0.000000e+00> : vector<8x256xf32>
    %2 = tpu.matmul %0, %1, %cst {dimension_numbers = #tpu.dot_dimension_numbers<[1], [0], [0], [1], [0, 0, 1, 1], [], []>} : vector<8x144xf32>, vector<144x256xf32>, vector<8x256xf32> -> vector<8x256xf32>
    %c0_3 = arith.constant 0 : index
    %c0_4 = arith.constant 0 : index
    %3 = vector.load %arg3[%c0_3, %c0_4] : memref<8x256xf32, #tpu.memory_space<vmem>>, vector<8x256xf32>
    tpu.vector_store %arg3[%c0_3, %c0_4], %2 {strides = array<i32>} : memref<8x256xf32, #tpu.memory_space<vmem>>, vector<8x256xf32>,
    return
  }
  func.func @transform_0(%arg0: i32) -> (i32, i32) {
    %c0_i32 = arith.constant 0 : i32
    %c0_i32_0 = arith.constant 0 : i32
    return %c0_i32, %arg0 : i32, i32
  }
  func.func @transform_1(%arg0: i32) -> (i32, i32) {
    %c0_i32 = arith.constant 0 : i32
    %c0_i32_0 = arith.constant 0 : i32
    %c0_i32_1 = arith.constant 0 : i32
    return %c0_i32, %c0_i32_0 : i32, i32
  }
  func.func @transform_2(%arg0: i32) -> (i32, i32) {
    %c0_i32 = arith.constant 0 : i32
    %c0_i32_0 = arith.constant 0 : i32
    return %c0_i32, %arg0 : i32, i32
  }
}

module attributes {stable_mosaic.version = 11 : i64} {
  func.func @_dual_add_kernel(%arg0: memref<12x64xf32, #tpu.memory_space<vmem>>, %arg1: memref<12x64xf32, #tpu.memory_space<vmem>>, %arg2: memref<12x12xf32, #tpu.memory_space<vmem>>, %arg3: memref<12x64xf32, #tpu.memory_space<vmem>>, %arg4: memref<12x12xf32, #tpu.memory_space<vmem>>, %arg5: memref<12x64xf32, #tpu.memory_space<vmem>>) attributes {dimension_semantics = [], scalar_prefetch = 0 : i64, scratch_operands = 0 : i64, tpu.core_type = #tpu.core_type<tc>} {
    %c0 = arith.constant 0 : index
    %c0_0 = arith.constant 0 : index
    %0 = vector.load %arg0[%c0, %c0_0] : memref<12x64xf32, #tpu.memory_space<vmem>>, vector<12x64xf32>
    %c0_1 = arith.constant 0 : index
    %c0_2 = arith.constant 0 : index
    %1 = vector.load %arg2[%c0_1, %c0_2] : memref<12x12xf32, #tpu.memory_space<vmem>>, vector<12x12xf32>
    %c0_3 = arith.constant 0 : index
    %c0_4 = arith.constant 0 : index
    %2 = vector.load %arg1[%c0_3, %c0_4] : memref<12x64xf32, #tpu.memory_space<vmem>>, vector<12x64xf32>
    %cst = arith.constant dense<0.000000e+00> : vector<12x64xf32>
    %3 = tpu.matmul %1, %2, %cst {dimension_numbers = #tpu.dot_dimension_numbers<[1], [0], [0], [1], [0, 0, 1, 1], [], []>} : vector<12x12xf32>, vector<12x64xf32>, vector<12x64xf32> -> vector<12x64xf32>
    %4 = arith.addf %0, %3 : vector<12x64xf32>
    %c0_5 = arith.constant 0 : index
    %c0_6 = arith.constant 0 : index
    %5 = vector.load %arg4[%c0_5, %c0_6] : memref<12x12xf32, #tpu.memory_space<vmem>>, vector<12x12xf32>
    %c0_7 = arith.constant 0 : index
    %c0_8 = arith.constant 0 : index
    %6 = vector.load %arg3[%c0_7, %c0_8] : memref<12x64xf32, #tpu.memory_space<vmem>>, vector<12x64xf32>
    %cst_9 = arith.constant dense<0.000000e+00> : vector<12x64xf32>
    %7 = tpu.matmul %5, %6, %cst_9 {dimension_numbers = #tpu.dot_dimension_numbers<[1], [0], [0], [1], [0, 0, 1, 1], [], []>} : vector<12x12xf32>, vector<12x64xf32>, vector<12x64xf32> -> vector<12x64xf32>
    %8 = arith.addf %4, %7 : vector<12x64xf32>
    %c0_10 = arith.constant 0 : index
    %c0_11 = arith.constant 0 : index
    %9 = vector.load %arg5[%c0_10, %c0_11] : memref<12x64xf32, #tpu.memory_space<vmem>>, vector<12x64xf32>
    tpu.vector_store %arg5[%c0_10, %c0_11], %8 {strides = array<i32>} : memref<12x64xf32, #tpu.memory_space<vmem>>, vector<12x64xf32>,
    return
  }
}

module attributes {stable_mosaic.version = 11 : i64} {
  func.func @_dual_add_kernel(%arg0: memref<16x16xf32, #tpu.memory_space<vmem>>, %arg1: memref<16x16xf32, #tpu.memory_space<vmem>>, %arg2: memref<16x16xf32, #tpu.memory_space<vmem>>, %arg3: memref<16x16xf32, #tpu.memory_space<vmem>>, %arg4: memref<16x16xf32, #tpu.memory_space<vmem>>, %arg5: memref<16x16xf32, #tpu.memory_space<vmem>>) attributes {dimension_semantics = [], scalar_prefetch = 0 : i64, scratch_operands = 0 : i64, tpu.core_type = #tpu.core_type<tc>} {
    %c0 = arith.constant 0 : index
    %c0_0 = arith.constant 0 : index
    %0 = vector.load %arg0[%c0, %c0_0] : memref<16x16xf32, #tpu.memory_space<vmem>>, vector<16x16xf32>
    %c0_1 = arith.constant 0 : index
    %c0_2 = arith.constant 0 : index
    %1 = vector.load %arg2[%c0_1, %c0_2] : memref<16x16xf32, #tpu.memory_space<vmem>>, vector<16x16xf32>
    %c0_3 = arith.constant 0 : index
    %c0_4 = arith.constant 0 : index
    %2 = vector.load %arg1[%c0_3, %c0_4] : memref<16x16xf32, #tpu.memory_space<vmem>>, vector<16x16xf32>
    %cst = arith.constant dense<0.000000e+00> : vector<16x16xf32>
    %3 = tpu.matmul %1, %2, %cst {dimension_numbers = #tpu.dot_dimension_numbers<[1], [0], [0], [1], [0, 0, 1, 1], [], []>} : vector<16x16xf32>, vector<16x16xf32>, vector<16x16xf32> -> vector<16x16xf32>
    %4 = arith.addf %0, %3 : vector<16x16xf32>
    %c0_5 = arith.constant 0 : index
    %c0_6 = arith.constant 0 : index
    %5 = vector.load %arg4[%c0_5, %c0_6] : memref<16x16xf32, #tpu.memory_space<vmem>>, vector<16x16xf32>
    %c0_7 = arith.constant 0 : index
    %c0_8 = arith.constant 0 : index
    %6 = vector.load %arg3[%c0_7, %c0_8] : memref<16x16xf32, #tpu.memory_space<vmem>>, vector<16x16xf32>
    %cst_9 = arith.constant dense<0.000000e+00> : vector<16x16xf32>
    %7 = tpu.matmul %5, %6, %cst_9 {dimension_numbers = #tpu.dot_dimension_numbers<[1], [0], [0], [1], [0, 0, 1, 1], [], []>} : vector<16x16xf32>, vector<16x16xf32>, vector<16x16xf32> -> vector<16x16xf32>
    %8 = arith.addf %4, %7 : vector<16x16xf32>
    %c0_10 = arith.constant 0 : index
    %c0_11 = arith.constant 0 : index
    %9 = vector.load %arg5[%c0_10, %c0_11] : memref<16x16xf32, #tpu.memory_space<vmem>>, vector<16x16xf32>
    tpu.vector_store %arg5[%c0_10, %c0_11], %8 {strides = array<i32>} : memref<16x16xf32, #tpu.memory_space<vmem>>, vector<16x16xf32>,
    return
  }
}

module attributes {stable_mosaic.version = 11 : i64} {
  func.func @_cab_tail_kernel(%arg0: memref<144x16xf32, #tpu.memory_space<vmem>>, %arg1: memref<32x144xf32, #tpu.memory_space<vmem>>, %arg2: memref<32x16xf32, #tpu.memory_space<vmem>>, %arg3: memref<16x32xf32, #tpu.memory_space<vmem>>, %arg4: memref<4x16xf32, #tpu.memory_space<vmem>>, %arg5: memref<16x4xf32, #tpu.memory_space<vmem>>, %arg6: memref<16x1xf32, #tpu.memory_space<vmem>>, %arg7: memref<1x16xf32, #tpu.memory_space<vmem>>, %arg8: memref<16x16xf32, #tpu.memory_space<vmem>>, %arg9: memref<16x16xf32, #tpu.memory_space<vmem>>) attributes {dimension_semantics = [], scalar_prefetch = 0 : i64, scratch_operands = 0 : i64, tpu.core_type = #tpu.core_type<tc>} {
    %c0 = arith.constant 0 : index
    %c0_0 = arith.constant 0 : index
    %0 = vector.load %arg1[%c0, %c0_0] : memref<32x144xf32, #tpu.memory_space<vmem>>, vector<32x144xf32>
    %c0_1 = arith.constant 0 : index
    %c0_2 = arith.constant 0 : index
    %1 = vector.load %arg0[%c0_1, %c0_2] : memref<144x16xf32, #tpu.memory_space<vmem>>, vector<144x16xf32>
    %cst = arith.constant dense<0.000000e+00> : vector<32x16xf32>
    %2 = tpu.matmul %0, %1, %cst {dimension_numbers = #tpu.dot_dimension_numbers<[1], [0], [0], [1], [0, 0, 1, 1], [], []>} : vector<32x144xf32>, vector<144x16xf32>, vector<32x16xf32> -> vector<32x16xf32>
    %c0_3 = arith.constant 0 : index
    %c0_4 = arith.constant 0 : index
    %3 = vector.load %arg3[%c0_3, %c0_4] : memref<16x32xf32, #tpu.memory_space<vmem>>, vector<16x32xf32>
    %c0_5 = arith.constant 0 : index
    %c0_6 = arith.constant 0 : index
    %4 = vector.load %arg2[%c0_5, %c0_6] : memref<32x16xf32, #tpu.memory_space<vmem>>, vector<32x16xf32>
    %5 = arith.mulf %2, %4 : vector<32x16xf32>
    %cst_7 = arith.constant dense<0.000000e+00> : vector<16x16xf32>
    %6 = tpu.matmul %3, %5, %cst_7 {dimension_numbers = #tpu.dot_dimension_numbers<[1], [0], [0], [1], [0, 0, 1, 1], [], []>} : vector<16x32xf32>, vector<32x16xf32>, vector<16x16xf32> -> vector<16x16xf32>
    %c0_8 = arith.constant 0 : index
    %c0_9 = arith.constant 0 : index
    %7 = vector.load %arg6[%c0_8, %c0_9] : memref<16x1xf32, #tpu.memory_space<vmem>>, vector<16x1xf32>
    %cst_10 = arith.constant dense<0.000000e+00> : vector<16x1xf32>
    %8 = tpu.matmul %6, %7, %cst_10 {dimension_numbers = #tpu.dot_dimension_numbers<[1], [0], [0], [1], [0, 0, 1, 1], [], []>} : vector<16x16xf32>, vector<16x1xf32>, vector<16x1xf32> -> vector<16x1xf32>
    %c0_11 = arith.constant 0 : index
    %c0_12 = arith.constant 0 : index
    %9 = vector.load %arg4[%c0_11, %c0_12] : memref<4x16xf32, #tpu.memory_space<vmem>>, vector<4x16xf32>
    %cst_13 = arith.constant dense<0.000000e+00> : vector<4x1xf32>
    %10 = tpu.matmul %9, %8, %cst_13 {dimension_numbers = #tpu.dot_dimension_numbers<[1], [0], [0], [1], [0, 0, 1, 1], [], []>} : vector<4x16xf32>, vector<16x1xf32>, vector<4x1xf32> -> vector<4x1xf32>
    %cst_14 = arith.constant 0.000000e+00 : f32
    %11 = vector.broadcast %cst_14 : f32 to vector<4x1xf32>
    %12 = arith.maximumf %10, %11 : vector<4x1xf32>
    %c0_15 = arith.constant 0 : index
    %c0_16 = arith.constant 0 : index
    %13 = vector.load %arg5[%c0_15, %c0_16] : memref<16x4xf32, #tpu.memory_space<vmem>>, vector<16x4xf32>
    %cst_17 = arith.constant dense<0.000000e+00> : vector<16x1xf32>
    %14 = tpu.matmul %13, %12, %cst_17 {dimension_numbers = #tpu.dot_dimension_numbers<[1], [0], [0], [1], [0, 0, 1, 1], [], []>} : vector<16x4xf32>, vector<4x1xf32>, vector<16x1xf32> -> vector<16x1xf32>
    %15 = arith.negf %14 : vector<16x1xf32>
    %16 = math.exp %15 : vector<16x1xf32>
    %cst_18 = arith.constant 1.000000e+00 : f32
    %17 = vector.broadcast %cst_18 : f32 to vector<16x1xf32>
    %18 = arith.addf %17, %16 : vector<16x1xf32>
    %19 = arith.divf %17, %18 : vector<16x1xf32>
    %c0_19 = arith.constant 0 : index
    %c0_20 = arith.constant 0 : index
    %20 = vector.load %arg7[%c0_19, %c0_20] : memref<1x16xf32, #tpu.memory_space<vmem>>, vector<1x16xf32>
    %cst_21 = arith.constant dense<0.000000e+00> : vector<16x16xf32>
    %21 = tpu.matmul %19, %20, %cst_21 {dimension_numbers = #tpu.dot_dimension_numbers<[1], [0], [0], [1], [0, 0, 1, 1], [], []>} : vector<16x1xf32>, vector<1x16xf32>, vector<16x16xf32> -> vector<16x16xf32>
    %22 = arith.mulf %6, %21 : vector<16x16xf32>
    %c0_22 = arith.constant 0 : index
    %c0_23 = arith.constant 0 : index
    %23 = vector.load %arg8[%c0_22, %c0_23] : memref<16x16xf32, #tpu.memory_space<vmem>>, vector<16x16xf32>
    %24 = arith.addf %22, %23 : vector<16x16xf32>
    %c0_24 = arith.constant 0 : index
    %c0_25 = arith.constant 0 : index
    %25 = vector.load %arg9[%c0_24, %c0_25] : memref<16x16xf32, #tpu.memory_space<vmem>>, vector<16x16xf32>
    tpu.vector_store %arg9[%c0_24, %c0_25], %24 {strides = array<i32>} : memref<16x16xf32, #tpu.memory_space<vmem>>, vector<16x16xf32>,
    return
  }
}

module attributes {stable_mosaic.version = 11 : i64} {
  func.func @kernel(%arg0: i32, %arg1: memref<16x64xf32, #tpu.memory_space<vmem>>, %arg2: memref<12x16xf32, #tpu.memory_space<vmem>>, %arg3: memref<12x64xf32, #tpu.memory_space<vmem>>) attributes {dimension_semantics = [#tpu.dimension_semantics<parallel>], iteration_bounds = array<i64: 1>, scalar_prefetch = 0 : i64, scratch_operands = 0 : i64, tpu.core_type = #tpu.core_type<tc>, window_params = [{transform_indices = @transform_0, window_bounds = array<i64: 16, 64>}, {pipeline_mode = #tpu.pipeline_mode<synchronous>, transform_indices = @transform_1, window_bounds = array<i64: 12, 16>}, {transform_indices = @transform_2, window_bounds = array<i64: 12, 64>}]} {
    %c0 = arith.constant 0 : index
    %c0_0 = arith.constant 0 : index
    %0 = vector.load %arg2[%c0, %c0_0] : memref<12x16xf32, #tpu.memory_space<vmem>>, vector<12x16xf32>
    %c0_1 = arith.constant 0 : index
    %c0_2 = arith.constant 0 : index
    %1 = vector.load %arg1[%c0_1, %c0_2] : memref<16x64xf32, #tpu.memory_space<vmem>>, vector<16x64xf32>
    %cst = arith.constant dense<0.000000e+00> : vector<12x64xf32>
    %2 = tpu.matmul %0, %1, %cst {dimension_numbers = #tpu.dot_dimension_numbers<[1], [0], [0], [1], [0, 0, 1, 1], [], []>} : vector<12x16xf32>, vector<16x64xf32>, vector<12x64xf32> -> vector<12x64xf32>
    %c0_3 = arith.constant 0 : index
    %c0_4 = arith.constant 0 : index
    %3 = vector.load %arg3[%c0_3, %c0_4] : memref<12x64xf32, #tpu.memory_space<vmem>>, vector<12x64xf32>
    tpu.vector_store %arg3[%c0_3, %c0_4], %2 {strides = array<i32>} : memref<12x64xf32, #tpu.memory_space<vmem>>, vector<12x64xf32>,
    return
  }
  func.func @transform_0(%arg0: i32) -> (i32, i32) {
    %c0_i32 = arith.constant 0 : i32
    %c0_i32_0 = arith.constant 0 : i32
    return %c0_i32, %arg0 : i32, i32
  }
  func.func @transform_1(%arg0: i32) -> (i32, i32) {
    %c0_i32 = arith.constant 0 : i32
    %c0_i32_0 = arith.constant 0 : i32
    %c0_i32_1 = arith.constant 0 : i32
    return %c0_i32, %c0_i32_0 : i32, i32
  }
  func.func @transform_2(%arg0: i32) -> (i32, i32) {
    %c0_i32 = arith.constant 0 : i32
    %c0_i32_0 = arith.constant 0 : i32
    return %c0_i32, %arg0 : i32, i32
  }
}

module attributes {stable_mosaic.version = 11 : i64} {
  func.func @_cab_tail_kernel(%arg0: memref<108x64xf32, #tpu.memory_space<vmem>>, %arg1: memref<24x108xf32, #tpu.memory_space<vmem>>, %arg2: memref<24x64xf32, #tpu.memory_space<vmem>>, %arg3: memref<12x24xf32, #tpu.memory_space<vmem>>, %arg4: memref<3x12xf32, #tpu.memory_space<vmem>>, %arg5: memref<12x3xf32, #tpu.memory_space<vmem>>, %arg6: memref<64x1xf32, #tpu.memory_space<vmem>>, %arg7: memref<1x64xf32, #tpu.memory_space<vmem>>, %arg8: memref<12x64xf32, #tpu.memory_space<vmem>>, %arg9: memref<12x64xf32, #tpu.memory_space<vmem>>) attributes {dimension_semantics = [], scalar_prefetch = 0 : i64, scratch_operands = 0 : i64, tpu.core_type = #tpu.core_type<tc>} {
    %c0 = arith.constant 0 : index
    %c0_0 = arith.constant 0 : index
    %0 = vector.load %arg1[%c0, %c0_0] : memref<24x108xf32, #tpu.memory_space<vmem>>, vector<24x108xf32>
    %c0_1 = arith.constant 0 : index
    %c0_2 = arith.constant 0 : index
    %1 = vector.load %arg0[%c0_1, %c0_2] : memref<108x64xf32, #tpu.memory_space<vmem>>, vector<108x64xf32>
    %cst = arith.constant dense<0.000000e+00> : vector<24x64xf32>
    %2 = tpu.matmul %0, %1, %cst {dimension_numbers = #tpu.dot_dimension_numbers<[1], [0], [0], [1], [0, 0, 1, 1], [], []>} : vector<24x108xf32>, vector<108x64xf32>, vector<24x64xf32> -> vector<24x64xf32>
    %c0_3 = arith.constant 0 : index
    %c0_4 = arith.constant 0 : index
    %3 = vector.load %arg3[%c0_3, %c0_4] : memref<12x24xf32, #tpu.memory_space<vmem>>, vector<12x24xf32>
    %c0_5 = arith.constant 0 : index
    %c0_6 = arith.constant 0 : index
    %4 = vector.load %arg2[%c0_5, %c0_6] : memref<24x64xf32, #tpu.memory_space<vmem>>, vector<24x64xf32>
    %5 = arith.mulf %2, %4 : vector<24x64xf32>
    %cst_7 = arith.constant dense<0.000000e+00> : vector<12x64xf32>
    %6 = tpu.matmul %3, %5, %cst_7 {dimension_numbers = #tpu.dot_dimension_numbers<[1], [0], [0], [1], [0, 0, 1, 1], [], []>} : vector<12x24xf32>, vector<24x64xf32>, vector<12x64xf32> -> vector<12x64xf32>
    %c0_8 = arith.constant 0 : index
    %c0_9 = arith.constant 0 : index
    %7 = vector.load %arg6[%c0_8, %c0_9] : memref<64x1xf32, #tpu.memory_space<vmem>>, vector<64x1xf32>
    %cst_10 = arith.constant dense<0.000000e+00> : vector<12x1xf32>
    %8 = tpu.matmul %6, %7, %cst_10 {dimension_numbers = #tpu.dot_dimension_numbers<[1], [0], [0], [1], [0, 0, 1, 1], [], []>} : vector<12x64xf32>, vector<64x1xf32>, vector<12x1xf32> -> vector<12x1xf32>
    %c0_11 = arith.constant 0 : index
    %c0_12 = arith.constant 0 : index
    %9 = vector.load %arg4[%c0_11, %c0_12] : memref<3x12xf32, #tpu.memory_space<vmem>>, vector<3x12xf32>
    %cst_13 = arith.constant dense<0.000000e+00> : vector<3x1xf32>
    %10 = tpu.matmul %9, %8, %cst_13 {dimension_numbers = #tpu.dot_dimension_numbers<[1], [0], [0], [1], [0, 0, 1, 1], [], []>} : vector<3x12xf32>, vector<12x1xf32>, vector<3x1xf32> -> vector<3x1xf32>
    %cst_14 = arith.constant 0.000000e+00 : f32
    %11 = vector.broadcast %cst_14 : f32 to vector<3x1xf32>
    %12 = arith.maximumf %10, %11 : vector<3x1xf32>
    %c0_15 = arith.constant 0 : index
    %c0_16 = arith.constant 0 : index
    %13 = vector.load %arg5[%c0_15, %c0_16] : memref<12x3xf32, #tpu.memory_space<vmem>>, vector<12x3xf32>
    %cst_17 = arith.constant dense<0.000000e+00> : vector<12x1xf32>
    %14 = tpu.matmul %13, %12, %cst_17 {dimension_numbers = #tpu.dot_dimension_numbers<[1], [0], [0], [1], [0, 0, 1, 1], [], []>} : vector<12x3xf32>, vector<3x1xf32>, vector<12x1xf32> -> vector<12x1xf32>
    %15 = arith.negf %14 : vector<12x1xf32>
    %16 = math.exp %15 : vector<12x1xf32>
    %cst_18 = arith.constant 1.000000e+00 : f32
    %17 = vector.broadcast %cst_18 : f32 to vector<12x1xf32>
    %18 = arith.addf %17, %16 : vector<12x1xf32>
    %19 = arith.divf %17, %18 : vector<12x1xf32>
    %c0_19 = arith.constant 0 : index
    %c0_20 = arith.constant 0 : index
    %20 = vector.load %arg7[%c0_19, %c0_20] : memref<1x64xf32, #tpu.memory_space<vmem>>, vector<1x64xf32>
    %cst_21 = arith.constant dense<0.000000e+00> : vector<12x64xf32>
    %21 = tpu.matmul %19, %20, %cst_21 {dimension_numbers = #tpu.dot_dimension_numbers<[1], [0], [0], [1], [0, 0, 1, 1], [], []>} : vector<12x1xf32>, vector<1x64xf32>, vector<12x64xf32> -> vector<12x64xf32>
    %22 = arith.mulf %6, %21 : vector<12x64xf32>
    %c0_22 = arith.constant 0 : index
    %c0_23 = arith.constant 0 : index
    %23 = vector.load %arg8[%c0_22, %c0_23] : memref<12x64xf32, #tpu.memory_space<vmem>>, vector<12x64xf32>
    %24 = arith.addf %22, %23 : vector<12x64xf32>
    %c0_24 = arith.constant 0 : index
    %c0_25 = arith.constant 0 : index
    %25 = vector.load %arg9[%c0_24, %c0_25] : memref<12x64xf32, #tpu.memory_space<vmem>>, vector<12x64xf32>
    tpu.vector_store %arg9[%c0_24, %c0_25], %24 {strides = array<i32>} : memref<12x64xf32, #tpu.memory_space<vmem>>, vector<12x64xf32>,
    return
  }
}

module attributes {stable_mosaic.version = 11 : i64} {
  func.func @_cab_tail_kernel(%arg0: memref<72x256xf32, #tpu.memory_space<vmem>>, %arg1: memref<16x72xf32, #tpu.memory_space<vmem>>, %arg2: memref<16x256xf32, #tpu.memory_space<vmem>>, %arg3: memref<8x16xf32, #tpu.memory_space<vmem>>, %arg4: memref<2x8xf32, #tpu.memory_space<vmem>>, %arg5: memref<8x2xf32, #tpu.memory_space<vmem>>, %arg6: memref<256x1xf32, #tpu.memory_space<vmem>>, %arg7: memref<1x256xf32, #tpu.memory_space<vmem>>, %arg8: memref<8x256xf32, #tpu.memory_space<vmem>>, %arg9: memref<8x256xf32, #tpu.memory_space<vmem>>) attributes {dimension_semantics = [], scalar_prefetch = 0 : i64, scratch_operands = 0 : i64, tpu.core_type = #tpu.core_type<tc>} {
    %c0 = arith.constant 0 : index
    %c0_0 = arith.constant 0 : index
    %0 = vector.load %arg1[%c0, %c0_0] : memref<16x72xf32, #tpu.memory_space<vmem>>, vector<16x72xf32>
    %c0_1 = arith.constant 0 : index
    %c0_2 = arith.constant 0 : index
    %1 = vector.load %arg0[%c0_1, %c0_2] : memref<72x256xf32, #tpu.memory_space<vmem>>, vector<72x256xf32>
    %cst = arith.constant dense<0.000000e+00> : vector<16x256xf32>
    %2 = tpu.matmul %0, %1, %cst {dimension_numbers = #tpu.dot_dimension_numbers<[1], [0], [0], [1], [0, 0, 1, 1], [], []>} : vector<16x72xf32>, vector<72x256xf32>, vector<16x256xf32> -> vector<16x256xf32>
    %c0_3 = arith.constant 0 : index
    %c0_4 = arith.constant 0 : index
    %3 = vector.load %arg3[%c0_3, %c0_4] : memref<8x16xf32, #tpu.memory_space<vmem>>, vector<8x16xf32>
    %c0_5 = arith.constant 0 : index
    %c0_6 = arith.constant 0 : index
    %4 = vector.load %arg2[%c0_5, %c0_6] : memref<16x256xf32, #tpu.memory_space<vmem>>, vector<16x256xf32>
    %5 = arith.mulf %2, %4 : vector<16x256xf32>
    %cst_7 = arith.constant dense<0.000000e+00> : vector<8x256xf32>
    %6 = tpu.matmul %3, %5, %cst_7 {dimension_numbers = #tpu.dot_dimension_numbers<[1], [0], [0], [1], [0, 0, 1, 1], [], []>} : vector<8x16xf32>, vector<16x256xf32>, vector<8x256xf32> -> vector<8x256xf32>
    %c0_8 = arith.constant 0 : index
    %c0_9 = arith.constant 0 : index
    %7 = vector.load %arg6[%c0_8, %c0_9] : memref<256x1xf32, #tpu.memory_space<vmem>>, vector<256x1xf32>
    %cst_10 = arith.constant dense<0.000000e+00> : vector<8x1xf32>
    %8 = tpu.matmul %6, %7, %cst_10 {dimension_numbers = #tpu.dot_dimension_numbers<[1], [0], [0], [1], [0, 0, 1, 1], [], []>} : vector<8x256xf32>, vector<256x1xf32>, vector<8x1xf32> -> vector<8x1xf32>
    %c0_11 = arith.constant 0 : index
    %c0_12 = arith.constant 0 : index
    %9 = vector.load %arg4[%c0_11, %c0_12] : memref<2x8xf32, #tpu.memory_space<vmem>>, vector<2x8xf32>
    %cst_13 = arith.constant dense<0.000000e+00> : vector<2x1xf32>
    %10 = tpu.matmul %9, %8, %cst_13 {dimension_numbers = #tpu.dot_dimension_numbers<[1], [0], [0], [1], [0, 0, 1, 1], [], []>} : vector<2x8xf32>, vector<8x1xf32>, vector<2x1xf32> -> vector<2x1xf32>
    %cst_14 = arith.constant 0.000000e+00 : f32
    %11 = vector.broadcast %cst_14 : f32 to vector<2x1xf32>
    %12 = arith.maximumf %10, %11 : vector<2x1xf32>
    %c0_15 = arith.constant 0 : index
    %c0_16 = arith.constant 0 : index
    %13 = vector.load %arg5[%c0_15, %c0_16] : memref<8x2xf32, #tpu.memory_space<vmem>>, vector<8x2xf32>
    %cst_17 = arith.constant dense<0.000000e+00> : vector<8x1xf32>
    %14 = tpu.matmul %13, %12, %cst_17 {dimension_numbers = #tpu.dot_dimension_numbers<[1], [0], [0], [1], [0, 0, 1, 1], [], []>} : vector<8x2xf32>, vector<2x1xf32>, vector<8x1xf32> -> vector<8x1xf32>
    %15 = arith.negf %14 : vector<8x1xf32>
    %16 = math.exp %15 : vector<8x1xf32>
    %cst_18 = arith.constant 1.000000e+00 : f32
    %17 = vector.broadcast %cst_18 : f32 to vector<8x1xf32>
    %18 = arith.addf %17, %16 : vector<8x1xf32>
    %19 = arith.divf %17, %18 : vector<8x1xf32>
    %c0_19 = arith.constant 0 : index
    %c0_20 = arith.constant 0 : index
    %20 = vector.load %arg7[%c0_19, %c0_20] : memref<1x256xf32, #tpu.memory_space<vmem>>, vector<1x256xf32>
    %cst_21 = arith.constant dense<0.000000e+00> : vector<8x256xf32>
    %21 = tpu.matmul %19, %20, %cst_21 {dimension_numbers = #tpu.dot_dimension_numbers<[1], [0], [0], [1], [0, 0, 1, 1], [], []>} : vector<8x1xf32>, vector<1x256xf32>, vector<8x256xf32> -> vector<8x256xf32>
    %22 = arith.mulf %6, %21 : vector<8x256xf32>
    %c0_22 = arith.constant 0 : index
    %c0_23 = arith.constant 0 : index
    %23 = vector.load %arg8[%c0_22, %c0_23] : memref<8x256xf32, #tpu.memory_space<vmem>>, vector<8x256xf32>
    %24 = arith.addf %22, %23 : vector<8x256xf32>
    %c0_24 = arith.constant 0 : index
    %c0_25 = arith.constant 0 : index
    %25 = vector.load %arg9[%c0_24, %c0_25] : memref<8x256xf32, #tpu.memory_space<vmem>>, vector<8x256xf32>
    tpu.vector_store %arg9[%c0_24, %c0_25], %24 {strides = array<i32>} : memref<8x256xf32, #tpu.memory_space<vmem>>, vector<8x256xf32>,
    return
  }
}

module attributes {stable_mosaic.version = 11 : i64} {
  func.func @kernel(%arg0: i32, %arg1: memref<144x256xf32, #tpu.memory_space<vmem>>, %arg2: memref<12x144xf32, #tpu.memory_space<vmem>>, %arg3: memref<12x256xf32, #tpu.memory_space<vmem>>) attributes {dimension_semantics = [#tpu.dimension_semantics<parallel>], iteration_bounds = array<i64: 1>, scalar_prefetch = 0 : i64, scratch_operands = 0 : i64, tpu.core_type = #tpu.core_type<tc>, window_params = [{transform_indices = @transform_0, window_bounds = array<i64: 144, 256>}, {pipeline_mode = #tpu.pipeline_mode<synchronous>, transform_indices = @transform_1, window_bounds = array<i64: 12, 144>}, {transform_indices = @transform_2, window_bounds = array<i64: 12, 256>}]} {
    %c0 = arith.constant 0 : index
    %c0_0 = arith.constant 0 : index
    %0 = vector.load %arg2[%c0, %c0_0] : memref<12x144xf32, #tpu.memory_space<vmem>>, vector<12x144xf32>
    %c0_1 = arith.constant 0 : index
    %c0_2 = arith.constant 0 : index
    %1 = vector.load %arg1[%c0_1, %c0_2] : memref<144x256xf32, #tpu.memory_space<vmem>>, vector<144x256xf32>
    %cst = arith.constant dense<0.000000e+00> : vector<12x256xf32>
    %2 = tpu.matmul %0, %1, %cst {dimension_numbers = #tpu.dot_dimension_numbers<[1], [0], [0], [1], [0, 0, 1, 1], [], []>} : vector<12x144xf32>, vector<144x256xf32>, vector<12x256xf32> -> vector<12x256xf32>
    %c0_3 = arith.constant 0 : index
    %c0_4 = arith.constant 0 : index
    %3 = vector.load %arg3[%c0_3, %c0_4] : memref<12x256xf32, #tpu.memory_space<vmem>>, vector<12x256xf32>
    tpu.vector_store %arg3[%c0_3, %c0_4], %2 {strides = array<i32>} : memref<12x256xf32, #tpu.memory_space<vmem>>, vector<12x256xf32>,
    return
  }
  func.func @transform_0(%arg0: i32) -> (i32, i32) {
    %c0_i32 = arith.constant 0 : i32
    %c0_i32_0 = arith.constant 0 : i32
    return %c0_i32, %arg0 : i32, i32
  }
  func.func @transform_1(%arg0: i32) -> (i32, i32) {
    %c0_i32 = arith.constant 0 : i32
    %c0_i32_0 = arith.constant 0 : i32
    %c0_i32_1 = arith.constant 0 : i32
    return %c0_i32, %c0_i32_0 : i32, i32
  }
  func.func @transform_2(%arg0: i32) -> (i32, i32) {
    %c0_i32 = arith.constant 0 : i32
    %c0_i32_0 = arith.constant 0 : i32
    return %c0_i32, %arg0 : i32, i32
  }
}

module attributes {stable_mosaic.version = 11 : i64} {
  func.func @kernel(%arg0: i32, %arg1: memref<108x256xf32, #tpu.memory_space<vmem>>, %arg2: memref<12x108xf32, #tpu.memory_space<vmem>>, %arg3: memref<12x256xf32, #tpu.memory_space<vmem>>) attributes {dimension_semantics = [#tpu.dimension_semantics<parallel>], iteration_bounds = array<i64: 1>, scalar_prefetch = 0 : i64, scratch_operands = 0 : i64, tpu.core_type = #tpu.core_type<tc>, window_params = [{transform_indices = @transform_0, window_bounds = array<i64: 108, 256>}, {pipeline_mode = #tpu.pipeline_mode<synchronous>, transform_indices = @transform_1, window_bounds = array<i64: 12, 108>}, {transform_indices = @transform_2, window_bounds = array<i64: 12, 256>}]} {
    %c0 = arith.constant 0 : index
    %c0_0 = arith.constant 0 : index
    %0 = vector.load %arg2[%c0, %c0_0] : memref<12x108xf32, #tpu.memory_space<vmem>>, vector<12x108xf32>
    %c0_1 = arith.constant 0 : index
    %c0_2 = arith.constant 0 : index
    %1 = vector.load %arg1[%c0_1, %c0_2] : memref<108x256xf32, #tpu.memory_space<vmem>>, vector<108x256xf32>
    %cst = arith.constant dense<0.000000e+00> : vector<12x256xf32>
    %2 = tpu.matmul %0, %1, %cst {dimension_numbers = #tpu.dot_dimension_numbers<[1], [0], [0], [1], [0, 0, 1, 1], [], []>} : vector<12x108xf32>, vector<108x256xf32>, vector<12x256xf32> -> vector<12x256xf32>
    %cst_3 = arith.constant 0.000000e+00 : f32
    %3 = vector.broadcast %cst_3 : f32 to vector<12x256xf32>
    %4 = arith.cmpf oge, %2, %3 : vector<12x256xf32>
    %cst_4 = arith.constant 2.500000e-01 : f32
    %5 = vector.broadcast %cst_4 : f32 to vector<12x256xf32>
    %6 = arith.mulf %5, %2 : vector<12x256xf32>
    %7 = arith.select %4, %2, %6 : vector<12x256xi1>, vector<12x256xf32>
    %c0_5 = arith.constant 0 : index
    %c0_6 = arith.constant 0 : index
    %8 = vector.load %arg3[%c0_5, %c0_6] : memref<12x256xf32, #tpu.memory_space<vmem>>, vector<12x256xf32>
    tpu.vector_store %arg3[%c0_5, %c0_6], %7 {strides = array<i32>} : memref<12x256xf32, #tpu.memory_space<vmem>>, vector<12x256xf32>,
    return
  }
  func.func @transform_0(%arg0: i32) -> (i32, i32) {
    %c0_i32 = arith.constant 0 : i32
    %c0_i32_0 = arith.constant 0 : i32
    return %c0_i32, %arg0 : i32, i32
  }
  func.func @transform_1(%arg0: i32) -> (i32, i32) {
    %c0_i32 = arith.constant 0 : i32
    %c0_i32_0 = arith.constant 0 : i32
    %c0_i32_1 = arith.constant 0 : i32
    return %c0_i32, %c0_i32_0 : i32, i32
  }
  func.func @transform_2(%arg0: i32) -> (i32, i32) {
    %c0_i32 = arith.constant 0 : i32
    %c0_i32_0 = arith.constant 0 : i32
    return %c0_i32, %arg0 : i32, i32
  }
}

module attributes {stable_mosaic.version = 11 : i64} {
  func.func @_dual_add_kernel(%arg0: memref<12x256xf32, #tpu.memory_space<vmem>>, %arg1: memref<8x256xf32, #tpu.memory_space<vmem>>, %arg2: memref<12x8xf32, #tpu.memory_space<vmem>>, %arg3: memref<8x256xf32, #tpu.memory_space<vmem>>, %arg4: memref<12x8xf32, #tpu.memory_space<vmem>>, %arg5: memref<12x256xf32, #tpu.memory_space<vmem>>) attributes {dimension_semantics = [], scalar_prefetch = 0 : i64, scratch_operands = 0 : i64, tpu.core_type = #tpu.core_type<tc>} {
    %c0 = arith.constant 0 : index
    %c0_0 = arith.constant 0 : index
    %0 = vector.load %arg0[%c0, %c0_0] : memref<12x256xf32, #tpu.memory_space<vmem>>, vector<12x256xf32>
    %c0_1 = arith.constant 0 : index
    %c0_2 = arith.constant 0 : index
    %1 = vector.load %arg2[%c0_1, %c0_2] : memref<12x8xf32, #tpu.memory_space<vmem>>, vector<12x8xf32>
    %c0_3 = arith.constant 0 : index
    %c0_4 = arith.constant 0 : index
    %2 = vector.load %arg1[%c0_3, %c0_4] : memref<8x256xf32, #tpu.memory_space<vmem>>, vector<8x256xf32>
    %cst = arith.constant dense<0.000000e+00> : vector<12x256xf32>
    %3 = tpu.matmul %1, %2, %cst {dimension_numbers = #tpu.dot_dimension_numbers<[1], [0], [0], [1], [0, 0, 1, 1], [], []>} : vector<12x8xf32>, vector<8x256xf32>, vector<12x256xf32> -> vector<12x256xf32>
    %4 = arith.addf %0, %3 : vector<12x256xf32>
    %c0_5 = arith.constant 0 : index
    %c0_6 = arith.constant 0 : index
    %5 = vector.load %arg4[%c0_5, %c0_6] : memref<12x8xf32, #tpu.memory_space<vmem>>, vector<12x8xf32>
    %c0_7 = arith.constant 0 : index
    %c0_8 = arith.constant 0 : index
    %6 = vector.load %arg3[%c0_7, %c0_8] : memref<8x256xf32, #tpu.memory_space<vmem>>, vector<8x256xf32>
    %cst_9 = arith.constant dense<0.000000e+00> : vector<12x256xf32>
    %7 = tpu.matmul %5, %6, %cst_9 {dimension_numbers = #tpu.dot_dimension_numbers<[1], [0], [0], [1], [0, 0, 1, 1], [], []>} : vector<12x8xf32>, vector<8x256xf32>, vector<12x256xf32> -> vector<12x256xf32>
    %8 = arith.addf %4, %7 : vector<12x256xf32>
    %c0_10 = arith.constant 0 : index
    %c0_11 = arith.constant 0 : index
    %9 = vector.load %arg5[%c0_10, %c0_11] : memref<12x256xf32, #tpu.memory_space<vmem>>, vector<12x256xf32>
    tpu.vector_store %arg5[%c0_10, %c0_11], %8 {strides = array<i32>} : memref<12x256xf32, #tpu.memory_space<vmem>>, vector<12x256xf32>,
    return
  }
}

module attributes {stable_mosaic.version = 11 : i64} {
  func.func @kernel(%arg0: i32, %arg1: memref<108x256xf32, #tpu.memory_space<vmem>>, %arg2: memref<12x108xf32, #tpu.memory_space<vmem>>, %arg3: memref<12x256xf32, #tpu.memory_space<vmem>>, %arg4: memref<12x256xf32, #tpu.memory_space<vmem>>) attributes {dimension_semantics = [#tpu.dimension_semantics<parallel>], iteration_bounds = array<i64: 1>, scalar_prefetch = 0 : i64, scratch_operands = 0 : i64, tpu.core_type = #tpu.core_type<tc>, window_params = [{transform_indices = @transform_0, window_bounds = array<i64: 108, 256>}, {pipeline_mode = #tpu.pipeline_mode<synchronous>, transform_indices = @transform_1, window_bounds = array<i64: 12, 108>}, {transform_indices = @transform_2, window_bounds = array<i64: 12, 256>}, {transform_indices = @transform_3, window_bounds = array<i64: 12, 256>}]} {
    %c0 = arith.constant 0 : index
    %c0_0 = arith.constant 0 : index
    %0 = vector.load %arg2[%c0, %c0_0] : memref<12x108xf32, #tpu.memory_space<vmem>>, vector<12x108xf32>
    %c0_1 = arith.constant 0 : index
    %c0_2 = arith.constant 0 : index
    %1 = vector.load %arg1[%c0_1, %c0_2] : memref<108x256xf32, #tpu.memory_space<vmem>>, vector<108x256xf32>
    %cst = arith.constant dense<0.000000e+00> : vector<12x256xf32>
    %2 = tpu.matmul %0, %1, %cst {dimension_numbers = #tpu.dot_dimension_numbers<[1], [0], [0], [1], [0, 0, 1, 1], [], []>} : vector<12x108xf32>, vector<108x256xf32>, vector<12x256xf32> -> vector<12x256xf32>
    %c0_3 = arith.constant 0 : index
    %c0_4 = arith.constant 0 : index
    %3 = vector.load %arg3[%c0_3, %c0_4] : memref<12x256xf32, #tpu.memory_space<vmem>>, vector<12x256xf32>
    %4 = arith.addf %2, %3 : vector<12x256xf32>
    %c0_5 = arith.constant 0 : index
    %c0_6 = arith.constant 0 : index
    %5 = vector.load %arg4[%c0_5, %c0_6] : memref<12x256xf32, #tpu.memory_space<vmem>>, vector<12x256xf32>
    tpu.vector_store %arg4[%c0_5, %c0_6], %4 {strides = array<i32>} : memref<12x256xf32, #tpu.memory_space<vmem>>, vector<12x256xf32>,
    return
  }
  func.func @transform_0(%arg0: i32) -> (i32, i32) {
    %c0_i32 = arith.constant 0 : i32
    %c0_i32_0 = arith.constant 0 : i32
    return %c0_i32, %arg0 : i32, i32
  }
  func.func @transform_1(%arg0: i32) -> (i32, i32) {
    %c0_i32 = arith.constant 0 : i32
    %c0_i32_0 = arith.constant 0 : i32
    %c0_i32_1 = arith.constant 0 : i32
    return %c0_i32, %c0_i32_0 : i32, i32
  }
  func.func @transform_2(%arg0: i32) -> (i32, i32) {
    %c0_i32 = arith.constant 0 : i32
    %c0_i32_0 = arith.constant 0 : i32
    return %c0_i32, %arg0 : i32, i32
  }
  func.func @transform_3(%arg0: i32) -> (i32, i32) {
    %c0_i32 = arith.constant 0 : i32
    %c0_i32_0 = arith.constant 0 : i32
    return %c0_i32, %arg0 : i32, i32
  }
}

module attributes {stable_mosaic.version = 11 : i64} {
  func.func @_cab_tail_kernel(%arg0: memref<108x256xf32, #tpu.memory_space<vmem>>, %arg1: memref<24x108xf32, #tpu.memory_space<vmem>>, %arg2: memref<24x256xf32, #tpu.memory_space<vmem>>, %arg3: memref<12x24xf32, #tpu.memory_space<vmem>>, %arg4: memref<3x12xf32, #tpu.memory_space<vmem>>, %arg5: memref<12x3xf32, #tpu.memory_space<vmem>>, %arg6: memref<256x1xf32, #tpu.memory_space<vmem>>, %arg7: memref<1x256xf32, #tpu.memory_space<vmem>>, %arg8: memref<12x256xf32, #tpu.memory_space<vmem>>, %arg9: memref<12x256xf32, #tpu.memory_space<vmem>>) attributes {dimension_semantics = [], scalar_prefetch = 0 : i64, scratch_operands = 0 : i64, tpu.core_type = #tpu.core_type<tc>} {
    %c0 = arith.constant 0 : index
    %c0_0 = arith.constant 0 : index
    %0 = vector.load %arg1[%c0, %c0_0] : memref<24x108xf32, #tpu.memory_space<vmem>>, vector<24x108xf32>
    %c0_1 = arith.constant 0 : index
    %c0_2 = arith.constant 0 : index
    %1 = vector.load %arg0[%c0_1, %c0_2] : memref<108x256xf32, #tpu.memory_space<vmem>>, vector<108x256xf32>
    %cst = arith.constant dense<0.000000e+00> : vector<24x256xf32>
    %2 = tpu.matmul %0, %1, %cst {dimension_numbers = #tpu.dot_dimension_numbers<[1], [0], [0], [1], [0, 0, 1, 1], [], []>} : vector<24x108xf32>, vector<108x256xf32>, vector<24x256xf32> -> vector<24x256xf32>
    %c0_3 = arith.constant 0 : index
    %c0_4 = arith.constant 0 : index
    %3 = vector.load %arg3[%c0_3, %c0_4] : memref<12x24xf32, #tpu.memory_space<vmem>>, vector<12x24xf32>
    %c0_5 = arith.constant 0 : index
    %c0_6 = arith.constant 0 : index
    %4 = vector.load %arg2[%c0_5, %c0_6] : memref<24x256xf32, #tpu.memory_space<vmem>>, vector<24x256xf32>
    %5 = arith.mulf %2, %4 : vector<24x256xf32>
    %cst_7 = arith.constant dense<0.000000e+00> : vector<12x256xf32>
    %6 = tpu.matmul %3, %5, %cst_7 {dimension_numbers = #tpu.dot_dimension_numbers<[1], [0], [0], [1], [0, 0, 1, 1], [], []>} : vector<12x24xf32>, vector<24x256xf32>, vector<12x256xf32> -> vector<12x256xf32>
    %c0_8 = arith.constant 0 : index
    %c0_9 = arith.constant 0 : index
    %7 = vector.load %arg6[%c0_8, %c0_9] : memref<256x1xf32, #tpu.memory_space<vmem>>, vector<256x1xf32>
    %cst_10 = arith.constant dense<0.000000e+00> : vector<12x1xf32>
    %8 = tpu.matmul %6, %7, %cst_10 {dimension_numbers = #tpu.dot_dimension_numbers<[1], [0], [0], [1], [0, 0, 1, 1], [], []>} : vector<12x256xf32>, vector<256x1xf32>, vector<12x1xf32> -> vector<12x1xf32>
    %c0_11 = arith.constant 0 : index
    %c0_12 = arith.constant 0 : index
    %9 = vector.load %arg4[%c0_11, %c0_12] : memref<3x12xf32, #tpu.memory_space<vmem>>, vector<3x12xf32>
    %cst_13 = arith.constant dense<0.000000e+00> : vector<3x1xf32>
    %10 = tpu.matmul %9, %8, %cst_13 {dimension_numbers = #tpu.dot_dimension_numbers<[1], [0], [0], [1], [0, 0, 1, 1], [], []>} : vector<3x12xf32>, vector<12x1xf32>, vector<3x1xf32> -> vector<3x1xf32>
    %cst_14 = arith.constant 0.000000e+00 : f32
    %11 = vector.broadcast %cst_14 : f32 to vector<3x1xf32>
    %12 = arith.maximumf %10, %11 : vector<3x1xf32>
    %c0_15 = arith.constant 0 : index
    %c0_16 = arith.constant 0 : index
    %13 = vector.load %arg5[%c0_15, %c0_16] : memref<12x3xf32, #tpu.memory_space<vmem>>, vector<12x3xf32>
    %cst_17 = arith.constant dense<0.000000e+00> : vector<12x1xf32>
    %14 = tpu.matmul %13, %12, %cst_17 {dimension_numbers = #tpu.dot_dimension_numbers<[1], [0], [0], [1], [0, 0, 1, 1], [], []>} : vector<12x3xf32>, vector<3x1xf32>, vector<12x1xf32> -> vector<12x1xf32>
    %15 = arith.negf %14 : vector<12x1xf32>
    %16 = math.exp %15 : vector<12x1xf32>
    %cst_18 = arith.constant 1.000000e+00 : f32
    %17 = vector.broadcast %cst_18 : f32 to vector<12x1xf32>
    %18 = arith.addf %17, %16 : vector<12x1xf32>
    %19 = arith.divf %17, %18 : vector<12x1xf32>
    %c0_19 = arith.constant 0 : index
    %c0_20 = arith.constant 0 : index
    %20 = vector.load %arg7[%c0_19, %c0_20] : memref<1x256xf32, #tpu.memory_space<vmem>>, vector<1x256xf32>
    %cst_21 = arith.constant dense<0.000000e+00> : vector<12x256xf32>
    %21 = tpu.matmul %19, %20, %cst_21 {dimension_numbers = #tpu.dot_dimension_numbers<[1], [0], [0], [1], [0, 0, 1, 1], [], []>} : vector<12x1xf32>, vector<1x256xf32>, vector<12x256xf32> -> vector<12x256xf32>
    %22 = arith.mulf %6, %21 : vector<12x256xf32>
    %c0_22 = arith.constant 0 : index
    %c0_23 = arith.constant 0 : index
    %23 = vector.load %arg8[%c0_22, %c0_23] : memref<12x256xf32, #tpu.memory_space<vmem>>, vector<12x256xf32>
    %24 = arith.addf %22, %23 : vector<12x256xf32>
    %c0_24 = arith.constant 0 : index
    %c0_25 = arith.constant 0 : index
    %25 = vector.load %arg9[%c0_24, %c0_25] : memref<12x256xf32, #tpu.memory_space<vmem>>, vector<12x256xf32>
    tpu.vector_store %arg9[%c0_24, %c0_25], %24 {strides = array<i32>} : memref<12x256xf32, #tpu.memory_space<vmem>>, vector<12x256xf32>,
    return
  }
}

module attributes {stable_mosaic.version = 11 : i64} {
  func.func @kernel(%arg0: i32, %arg1: memref<12x256xf32, #tpu.memory_space<vmem>>, %arg2: memref<8x12xf32, #tpu.memory_space<vmem>>, %arg3: memref<8x256xf32, #tpu.memory_space<vmem>>) attributes {dimension_semantics = [#tpu.dimension_semantics<parallel>], iteration_bounds = array<i64: 1>, scalar_prefetch = 0 : i64, scratch_operands = 0 : i64, tpu.core_type = #tpu.core_type<tc>, window_params = [{transform_indices = @transform_0, window_bounds = array<i64: 12, 256>}, {pipeline_mode = #tpu.pipeline_mode<synchronous>, transform_indices = @transform_1, window_bounds = array<i64: 8, 12>}, {transform_indices = @transform_2, window_bounds = array<i64: 8, 256>}]} {
    %c0 = arith.constant 0 : index
    %c0_0 = arith.constant 0 : index
    %0 = vector.load %arg2[%c0, %c0_0] : memref<8x12xf32, #tpu.memory_space<vmem>>, vector<8x12xf32>
    %c0_1 = arith.constant 0 : index
    %c0_2 = arith.constant 0 : index
    %1 = vector.load %arg1[%c0_1, %c0_2] : memref<12x256xf32, #tpu.memory_space<vmem>>, vector<12x256xf32>
    %cst = arith.constant dense<0.000000e+00> : vector<8x256xf32>
    %2 = tpu.matmul %0, %1, %cst {dimension_numbers = #tpu.dot_dimension_numbers<[1], [0], [0], [1], [0, 0, 1, 1], [], []>} : vector<8x12xf32>, vector<12x256xf32>, vector<8x256xf32> -> vector<8x256xf32>
    %c0_3 = arith.constant 0 : index
    %c0_4 = arith.constant 0 : index
    %3 = vector.load %arg3[%c0_3, %c0_4] : memref<8x256xf32, #tpu.memory_space<vmem>>, vector<8x256xf32>
    tpu.vector_store %arg3[%c0_3, %c0_4], %2 {strides = array<i32>} : memref<8x256xf32, #tpu.memory_space<vmem>>, vector<8x256xf32>,
    return
  }
  func.func @transform_0(%arg0: i32) -> (i32, i32) {
    %c0_i32 = arith.constant 0 : i32
    %c0_i32_0 = arith.constant 0 : i32
    return %c0_i32, %arg0 : i32, i32
  }
  func.func @transform_1(%arg0: i32) -> (i32, i32) {
    %c0_i32 = arith.constant 0 : i32
    %c0_i32_0 = arith.constant 0 : i32
    %c0_i32_1 = arith.constant 0 : i32
    return %c0_i32, %c0_i32_0 : i32, i32
  }
  func.func @transform_2(%arg0: i32) -> (i32, i32) {
    %c0_i32 = arith.constant 0 : i32
    %c0_i32_0 = arith.constant 0 : i32
    return %c0_i32, %arg0 : i32, i32
  }
}

module attributes {stable_mosaic.version = 11 : i64} {
  func.func @kernel(%arg0: i32, %arg1: memref<108x256xf32, #tpu.memory_space<vmem>>, %arg2: memref<3x108xf32, #tpu.memory_space<vmem>>, %arg3: memref<3x256xf32, #tpu.memory_space<vmem>>, %arg4: memref<3x256xf32, #tpu.memory_space<vmem>>) attributes {dimension_semantics = [#tpu.dimension_semantics<parallel>], iteration_bounds = array<i64: 1>, scalar_prefetch = 0 : i64, scratch_operands = 0 : i64, tpu.core_type = #tpu.core_type<tc>, window_params = [{transform_indices = @transform_0, window_bounds = array<i64: 108, 256>}, {pipeline_mode = #tpu.pipeline_mode<synchronous>, transform_indices = @transform_1, window_bounds = array<i64: 3, 108>}, {transform_indices = @transform_2, window_bounds = array<i64: 3, 256>}, {transform_indices = @transform_3, window_bounds = array<i64: 3, 256>}]} {
    %c0 = arith.constant 0 : index
    %c0_0 = arith.constant 0 : index
    %0 = vector.load %arg2[%c0, %c0_0] : memref<3x108xf32, #tpu.memory_space<vmem>>, vector<3x108xf32>
    %c0_1 = arith.constant 0 : index
    %c0_2 = arith.constant 0 : index
    %1 = vector.load %arg1[%c0_1, %c0_2] : memref<108x256xf32, #tpu.memory_space<vmem>>, vector<108x256xf32>
    %cst = arith.constant dense<0.000000e+00> : vector<3x256xf32>
    %2 = tpu.matmul %0, %1, %cst {dimension_numbers = #tpu.dot_dimension_numbers<[1], [0], [0], [1], [0, 0, 1, 1], [], []>} : vector<3x108xf32>, vector<108x256xf32>, vector<3x256xf32> -> vector<3x256xf32>
    %c0_3 = arith.constant 0 : index
    %c0_4 = arith.constant 0 : index
    %3 = vector.load %arg3[%c0_3, %c0_4] : memref<3x256xf32, #tpu.memory_space<vmem>>, vector<3x256xf32>
    %4 = arith.addf %2, %3 : vector<3x256xf32>
    %c0_5 = arith.constant 0 : index
    %c0_6 = arith.constant 0 : index
    %5 = vector.load %arg4[%c0_5, %c0_6] : memref<3x256xf32, #tpu.memory_space<vmem>>, vector<3x256xf32>
    tpu.vector_store %arg4[%c0_5, %c0_6], %4 {strides = array<i32>} : memref<3x256xf32, #tpu.memory_space<vmem>>, vector<3x256xf32>,
    return
  }
  func.func @transform_0(%arg0: i32) -> (i32, i32) {
    %c0_i32 = arith.constant 0 : i32
    %c0_i32_0 = arith.constant 0 : i32
    return %c0_i32, %arg0 : i32, i32
  }
  func.func @transform_1(%arg0: i32) -> (i32, i32) {
    %c0_i32 = arith.constant 0 : i32
    %c0_i32_0 = arith.constant 0 : i32
    %c0_i32_1 = arith.constant 0 : i32
    return %c0_i32, %c0_i32_0 : i32, i32
  }
  func.func @transform_2(%arg0: i32) -> (i32, i32) {
    %c0_i32 = arith.constant 0 : i32
    %c0_i32_0 = arith.constant 0 : i32
    return %c0_i32, %arg0 : i32, i32
  }
  func.func @transform_3(%arg0: i32) -> (i32, i32) {
    %c0_i32 = arith.constant 0 : i32
    %c0_i32_0 = arith.constant 0 : i32
    return %c0_i32, %arg0 : i32, i32
  }
}

</mosaic_0001>

<llo_original>
// kernel: forward.117
$region0: #{forward.117}
  #allocation0 [shape = 'u32[]', space=smem, size = 0x4, offset = 0x4, fixed_abs, tag = 'smem constant byte address 0x4 - core index']
  #allocation1 [shape = 'u32[72,128]{1,0:T(1,128)}', space=vmem, size = 0x9000, scoped, tag = 'internal scratch']
  %s0 = inlined_call_operand.vmem [shape: f32[27,256], index: 0, kind: input, shape index: {}]
  %s1 = inlined_call_operand.vmem [shape: f32[8,27], index: 1, kind: input, shape index: {}]
  %s2 = inlined_call_operand.vmem [shape: f32[8,1], index: 2, kind: input, shape index: {}]
  %s3 = inlined_call_operand.vmem [shape: f32[8,256], index: 3, kind: output, shape index: {}]
  %s4 = sld [smem:[#allocation0]]
  $region22: #{forward.117} parent=0
    _
  %s6 = ssub.s32 1, %s4
  %s7 = scalar_select 0, %s6, %s4
  // Predicated region
  $region2: #{forward.117} parent=0 // pred_check
    _
  $region3: #{forward.117} parent=0 // pred_check_branch
    %9 = sbr.rel (0) target = $region5
  $region4: #{forward.117} parent=0 // pred_region
    _
  $region5: #{forward.117} parent=0 // pred_fallthru
    _
  // Predicated region
  $region6: #{forward.117} parent=0 // pred_check
    _
  $region7: #{forward.117} parent=0 // pred_check_branch
    %11 = sbr.rel (0) target = $region9
  $region8: #{forward.117} parent=0 // pred_region
    _
  $region9: #{forward.117} parent=0 // pred_fallthru
    _
  // Predicated region
  $region10: #{forward.117} parent=0 // pred_check
    _
  $region11: #{forward.117} parent=0 // pred_check_branch
    %13 = sbr.rel (0) target = $region13
  $region12: #{forward.117} parent=0 // pred_region
    _
  $region13: #{forward.117} parent=0 // pred_fallthru
    _
  %v14 = vld [vmem:[%s1] sm:$0xff]
  %v15 = vld [vmem:[%s0] sm:$0xff]
  %v16 = vld [vmem:[%s0 + $0x8] sm:$0xff]
  %v17 = vld [vmem:[%s0 + $0x10] sm:$0xff]
  %v18 = vld [vmem:[%s0 + $0x18] sm:$0xff]
  %v19 = vld [vmem:[%s0 + $0x20] sm:$0xff]
  %v20 = vld [vmem:[%s0 + $0x28] sm:$0xff]
  %v21 = vld [vmem:[%s0 + $0x30] sm:$0x7]
  %v22 = vld [vmem:[%s0 + $0x38] sm:$0x7]
  %v23 = vld [vmem:[%s2] sm:$0xff]
  %25 = vset.pattern.permute.xlu0 0
  %26 = vperm.xlu0 %25, %v23
  %v27 = vpop.permute.xlu0 %26
  %vm29 = vcmask 220160
  %v31 = vsel %vm29, %v14, 0
  %vm33 = vcmask 1042432
  %v35 = vsel %vm33, %v21, 0
  %v38 = vsel %vm33, %v22, 0
  %40 = vmatpush.msra.mxu0 0.0
  %41 = vmatpush.msra.mxu0 0.0
  %42 = vmatpush.msra.mxu0 0.0
  %43 = vmatpush.msra.mxu0 0.0
  %44 = vmatpush.msra.mxu0 0.0
  %45 = vmatpush.msra.mxu0 0.0
  %46 = vmatpush.msra.mxu0 0.0
  %47 = vmatpush.msra.mxu0 0.0
  %48 = vmatpush.msra.mxu0 0.0
  %49 = vmatpush.msra.mxu0 0.0
  %50 = vmatpush.msra.mxu0 0.0
  %51 = vmatpush.msra.mxu0 0.0
  %52 = vmatpush.msra.mxu0 %v35
  %53 = vmatpush.msra.mxu0 %v19
  %54 = vmatpush.msra.mxu0 %v17
  %55 = vmatpush.msra.mxu0 %v15
  %56 = vmatmul.f32.gmra.mxu0 %v31
  %v57 = vpop.f32.mrf.mxu0
  %v58 = vadd.f32 %v27, %v57
  %59 = vdwg.mxu0
  %60 = vmatpush.msra.mxu0 0.0
  %61 = vmatpush.msra.mxu0 0.0
  %62 = vmatpush.msra.mxu0 0.0
  %63 = vmatpush.msra.mxu0 0.0
  %64 = vmatpush.msra.mxu0 0.0
  %65 = vmatpush.msra.mxu0 0.0
  %66 = vmatpush.msra.mxu0 0.0
  %67 = vmatpush.msra.mxu0 0.0
  %68 = vmatpush.msra.mxu0 0.0
  %69 = vmatpush.msra.mxu0 0.0
  %70 = vmatpush.msra.mxu0 0.0
  %71 = vmatpush.msra.mxu0 0.0
  %72 = vmatpush.msra.mxu0 %v38
  %73 = vmatpush.msra.mxu0 %v20
  %74 = vmatpush.msra.mxu0 %v18
  %75 = vmatpush.msra.mxu0 %v16
  %76 = vmatmul.f32.gmra.mxu0 %v31
  %v77 = vpop.f32.mrf.mxu0
  %v78 = vadd.f32 %v27, %v77
  %79 = vdwg.mxu0
  %80 = vst [vmem:[%s3] sm:$0xff] %v58
  %81 = vst [vmem:[%s3 + $0x8] sm:$0xff] %v78
  // Predicated region
  $region14: #{forward.117} parent=0 // pred_check
    _
  $region15: #{forward.117} parent=0 // pred_check_branch
    %83 = sbr.rel (0) target = $region17
  $region16: #{forward.117} parent=0 // pred_region
    _
  $region17: #{forward.117} parent=0 // pred_fallthru
    _
  // Predicated region
  $region18: #{forward.117} parent=0 // pred_check
    _
  $region19: #{forward.117} parent=0 // pred_check_branch
    %85 = sbr.rel (0) target = $region21
  $region20: #{forward.117} parent=0 // pred_region
    _
  $region21: #{forward.117} parent=0 // pred_fallthru
    _

// kernel: forward.119
$region0: #{forward.119}
  #allocation0 [shape = 'u32[]', space=smem, size = 0x4, offset = 0x4, fixed_abs, tag = 'smem constant byte address 0x4 - core index']
  #allocation1 [shape = 'u32[72,128]{1,0:T(1,128)}', space=vmem, size = 0x9000, scoped, tag = 'internal scratch']
  %s0 = inlined_call_operand.vmem [shape: f32[72,256], index: 0, kind: input, shape index: {}]
  %s1 = inlined_call_operand.vmem [shape: f32[8,72], index: 1, kind: input, shape index: {}]
  %s2 = inlined_call_operand.vmem [shape: f32[8,256], index: 2, kind: input, shape index: {}]
  %s3 = inlined_call_operand.vmem [shape: f32[8,256], index: 3, kind: output, shape index: {}]
  %s4 = sld [smem:[#allocation0]]
  $region22: #{forward.119} parent=0
    _
  %s6 = ssub.s32 1, %s4
  %s7 = scalar_select 0, %s6, %s4
  // Predicated region
  $region2: #{forward.119} parent=0 // pred_check
    _
  $region3: #{forward.119} parent=0 // pred_check_branch
    %9 = sbr.rel (0) target = $region5
  $region4: #{forward.119} parent=0 // pred_region
    _
  $region5: #{forward.119} parent=0 // pred_fallthru
    _
  // Predicated region
  $region6: #{forward.119} parent=0 // pred_check
    _
  $region7: #{forward.119} parent=0 // pred_check_branch
    %11 = sbr.rel (0) target = $region9
  $region8: #{forward.119} parent=0 // pred_region
    _
  $region9: #{forward.119} parent=0 // pred_fallthru
    _
  // Predicated region
  $region10: #{forward.119} parent=0 // pred_check
    _
  $region11: #{forward.119} parent=0 // pred_check_branch
    %13 = sbr.rel (0) target = $region13
  $region12: #{forward.119} parent=0 // pred_region
    _
  $region13: #{forward.119} parent=0 // pred_fallthru
    _
  %v14 = vld [vmem:[%s1] sm:$0xff]
  %v15 = vld [vmem:[%s0] sm:$0xff]
  %v16 = vld [vmem:[%s0 + $0x8] sm:$0xff]
  %v17 = vld [vmem:[%s0 + $0x10] sm:$0xff]
  %v18 = vld [vmem:[%s0 + $0x18] sm:$0xff]
  %v19 = vld [vmem:[%s0 + $0x20] sm:$0xff]
  %v20 = vld [vmem:[%s0 + $0x28] sm:$0xff]
  %v21 = vld [vmem:[%s0 + $0x30] sm:$0xff]
  %v22 = vld [vmem:[%s0 + $0x38] sm:$0xff]
  %v23 = vld [vmem:[%s0 + $0x40] sm:$0xff]
  %v24 = vld [vmem:[%s0 + $0x48] sm:$0xff]
  %v25 = vld [vmem:[%s0 + $0x50] sm:$0xff]
  %v26 = vld [vmem:[%s0 + $0x58] sm:$0xff]
  %v27 = vld [vmem:[%s0 + $0x60] sm:$0xff]
  %v28 = vld [vmem:[%s0 + $0x68] sm:$0xff]
  %v29 = vld [vmem:[%s0 + $0x70] sm:$0xff]
  %v30 = vld [vmem:[%s0 + $0x78] sm:$0xff]
  %v31 = vld [vmem:[%s0 + $0x80] sm:$0xff]
  %v32 = vld [vmem:[%s0 + $0x88] sm:$0xff]
  %v33 = vld [vmem:[%s2] sm:$0xff]
  %v34 = vld [vmem:[%s2 + $0x8] sm:$0xff]
  %vm35 = vcmask 588800
  %v37 = vsel %vm35, %v14, 0
  %39 = vmatpush.msra.mxu0 0.0
  %40 = vmatpush.msra.mxu0 0.0
  %41 = vmatpush.msra.mxu0 0.0
  %42 = vmatpush.msra.mxu0 0.0
  %43 = vmatpush.msra.mxu0 0.0
  %44 = vmatpush.msra.mxu0 0.0
  %45 = vmatpush.msra.mxu0 0.0
  %46 = vmatpush.msra.mxu0 %v31
  %47 = vmatpush.msra.mxu0 %v29
  %48 = vmatpush.msra.mxu0 %v27
  %49 = vmatpush.msra.mxu0 %v25
  %50 = vmatpush.msra.mxu0 %v23
  %51 = vmatpush.msra.mxu0 %v21
  %52 = vmatpush.msra.mxu0 %v19
  %53 = vmatpush.msra.mxu0 %v17
  %54 = vmatpush.msra.mxu0 %v15
  %55 = vmatmul.f32.gmra.mxu0 %v37
  %v56 = vpop.f32.mrf.mxu0
  %v57 = vadd.f32 %v33, %v56
  %58 = vdwg.mxu0
  %59 = vmatpush.msra.mxu0 0.0
  %60 = vmatpush.msra.mxu0 0.0
  %61 = vmatpush.msra.mxu0 0.0
  %62 = vmatpush.msra.mxu0 0.0
  %63 = vmatpush.msra.mxu0 0.0
  %64 = vmatpush.msra.mxu0 0.0
  %65 = vmatpush.msra.mxu0 0.0
  %66 = vmatpush.msra.mxu0 %v32
  %67 = vmatpush.msra.mxu0 %v30
  %68 = vmatpush.msra.mxu0 %v28
  %69 = vmatpush.msra.mxu0 %v26
  %70 = vmatpush.msra.mxu0 %v24
  %71 = vmatpush.msra.mxu0 %v22
  %72 = vmatpush.msra.mxu0 %v20
  %73 = vmatpush.msra.mxu0 %v18
  %74 = vmatpush.msra.mxu0 %v16
  %75 = vmatmul.f32.gmra.mxu0 %v37
  %v76 = vpop.f32.mrf.mxu0
  %v77 = vadd.f32 %v34, %v76
  %78 = vdwg.mxu0
  %79 = vst [vmem:[%s3] sm:$0xff] %v57
  %80 = vst [vmem:[%s3 + $0x8] sm:$0xff] %v77
  // Predicated region
  $region14: #{forward.119} parent=0 // pred_check
    _
  $region15: #{forward.119} parent=0 // pred_check_branch
    %82 = sbr.rel (0) target = $region17
  $region16: #{forward.119} parent=0 // pred_region
    _
  $region17: #{forward.119} parent=0 // pred_fallthru
    _
  // Predicated region
  $region18: #{forward.119} parent=0 // pred_check
    _
  $region19: #{forward.119} parent=0 // pred_check_branch
    %84 = sbr.rel (0) target = $region21
  $region20: #{forward.119} parent=0 // pred_region
    _
  $region21: #{forward.119} parent=0 // pred_fallthru
    _

// kernel: forward.118
$region0: #{forward.118}
  #allocation0 [shape = 'u32[]', space=smem, size = 0x4, offset = 0x4, fixed_abs, tag = 'smem constant byte address 0x4 - core index']
  #allocation1 [shape = 'u32[72,128]{1,0:T(1,128)}', space=vmem, size = 0x9000, scoped, tag = 'internal scratch']
  %s0 = inlined_call_operand.vmem [shape: f32[72,256], index: 0, kind: input, shape index: {}]
  %s1 = inlined_call_operand.vmem [shape: f32[8,72], index: 1, kind: input, shape index: {}]
  %s2 = inlined_call_operand.vmem [shape: f32[8,256], index: 2, kind: output, shape index: {}]
  %s3 = sld [smem:[#allocation0]]
  $region18: #{forward.118} parent=0
    _
  %s5 = ssub.s32 1, %s3
  %s6 = scalar_select 0, %s5, %s3
  // Predicated region
  $region2: #{forward.118} parent=0 // pred_check
    _
  $region3: #{forward.118} parent=0 // pred_check_branch
    %8 = sbr.rel (0) target = $region5
  $region4: #{forward.118} parent=0 // pred_region
    _
  $region5: #{forward.118} parent=0 // pred_fallthru
    _
  // Predicated region
  $region6: #{forward.118} parent=0 // pred_check
    _
  $region7: #{forward.118} parent=0 // pred_check_branch
    %10 = sbr.rel (0) target = $region9
  $region8: #{forward.118} parent=0 // pred_region
    _
  $region9: #{forward.118} parent=0 // pred_fallthru
    _
  %v11 = vld [vmem:[%s1] sm:$0xff]
  %v12 = vld [vmem:[%s0] sm:$0xff]
  %v13 = vld [vmem:[%s0 + $0x8] sm:$0xff]
  %v14 = vld [vmem:[%s0 + $0x10] sm:$0xff]
  %v15 = vld [vmem:[%s0 + $0x18] sm:$0xff]
  %v16 = vld [vmem:[%s0 + $0x20] sm:$0xff]
  %v17 = vld [vmem:[%s0 + $0x28] sm:$0xff]
  %v18 = vld [vmem:[%s0 + $0x30] sm:$0xff]
  %v19 = vld [vmem:[%s0 + $0x38] sm:$0xff]
  %v20 = vld [vmem:[%s0 + $0x40] sm:$0xff]
  %v21 = vld [vmem:[%s0 + $0x48] sm:$0xff]
  %v22 = vld [vmem:[%s0 + $0x50] sm:$0xff]
  %v23 = vld [vmem:[%s0 + $0x58] sm:$0xff]
  %v24 = vld [vmem:[%s0 + $0x60] sm:$0xff]
  %v25 = vld [vmem:[%s0 + $0x68] sm:$0xff]
  %v26 = vld [vmem:[%s0 + $0x70] sm:$0xff]
  %v27 = vld [vmem:[%s0 + $0x78] sm:$0xff]
  %v28 = vld [vmem:[%s0 + $0x80] sm:$0xff]
  %v29 = vld [vmem:[%s0 + $0x88] sm:$0xff]
  %vm30 = vcmask 588800
  %v32 = vsel %vm30, %v11, 0
  %34 = vmatpush.msra.mxu0 0.0
  %35 = vmatpush.msra.mxu0 0.0
  %36 = vmatpush.msra.mxu0 0.0
  %37 = vmatpush.msra.mxu0 0.0
  %38 = vmatpush.msra.mxu0 0.0
  %39 = vmatpush.msra.mxu0 0.0
  %40 = vmatpush.msra.mxu0 0.0
  %41 = vmatpush.msra.mxu0 %v28
  %42 = vmatpush.msra.mxu0 %v26
  %43 = vmatpush.msra.mxu0 %v24
  %44 = vmatpush.msra.mxu0 %v22
  %45 = vmatpush.msra.mxu0 %v20
  %46 = vmatpush.msra.mxu0 %v18
  %47 = vmatpush.msra.mxu0 %v16
  %48 = vmatpush.msra.mxu0 %v14
  %49 = vmatpush.msra.mxu0 %v12
  %50 = vmatmul.f32.gmra.mxu0 %v32
  %v51 = vpop.f32.mrf.mxu0
  %v52 = vadd.f32 0.0, %v51
  %53 = vdwg.mxu0
  %54 = vmatpush.msra.mxu0 0.0
  %55 = vmatpush.msra.mxu0 0.0
  %56 = vmatpush.msra.mxu0 0.0
  %57 = vmatpush.msra.mxu0 0.0
  %58 = vmatpush.msra.mxu0 0.0
  %59 = vmatpush.msra.mxu0 0.0
  %60 = vmatpush.msra.mxu0 0.0
  %61 = vmatpush.msra.mxu0 %v29
  %62 = vmatpush.msra.mxu0 %v27
  %63 = vmatpush.msra.mxu0 %v25
  %64 = vmatpush.msra.mxu0 %v23
  %65 = vmatpush.msra.mxu0 %v21
  %66 = vmatpush.msra.mxu0 %v19
  %67 = vmatpush.msra.mxu0 %v17
  %68 = vmatpush.msra.mxu0 %v15
  %69 = vmatpush.msra.mxu0 %v13
  %70 = vmatmul.f32.gmra.mxu0 %v32
  %v71 = vpop.f32.mrf.mxu0
  %v72 = vadd.f32 0.0, %v71
  %73 = vdwg.mxu0
  %vm74 = vcmp.ge.f32.partialorder %v52, 0.0
  %vm75 = vcmp.ge.f32.partialorder %v72, 0.0
  %v76 = vmul.f32 %v52, 0.25
  %v77 = vmul.f32 %v72, 0.25
  %v78 = vsel %vm74, %v52, %v76
  %v79 = vsel %vm75, %v72, %v77
  %80 = vst [vmem:[%s2] sm:$0xff] %v78
  %81 = vst [vmem:[%s2 + $0x8] sm:$0xff] %v79
  // Predicated region
  $region10: #{forward.118} parent=0 // pred_check
    _
  $region11: #{forward.118} parent=0 // pred_check_branch
    %83 = sbr.rel (0) target = $region13
  $region12: #{forward.118} parent=0 // pred_region
    _
  $region13: #{forward.118} parent=0 // pred_fallthru
    _
  // Predicated region
  $region14: #{forward.118} parent=0 // pred_check
    _
  $region15: #{forward.118} parent=0 // pred_check_branch
    %85 = sbr.rel (0) target = $region17
  $region16: #{forward.118} parent=0 // pred_region
    _
  $region17: #{forward.118} parent=0 // pred_fallthru
    _

// kernel: tile.339
$region0: #{tile.339}
  %s0 = inlined_call_operand.vmem [shape: f32[8,2,8], index: 0, kind: input, shape index: {}]
  %s1 = inlined_call_operand.vmem [shape: f32[8,16], index: 1, kind: output, shape index: {}]
  $region1: #{tile.339} parent=0
    #allocation0 [shape = 'u8[32768]{0}', space=vmem, size = 0x8000, scoped, tag = 'scoped mem for input reshape']
    %s3 = ssub.s32 4, 1
    %s4 = scalar_lea.vmem %s0, 14
    %v5 = vld [vmem:[%s4] sm:%s3]
    %s6 = scalar_lea.vmem [#allocation0], 56
    %7 = vst [vmem:[%s6] sm:%s3] %v5
    %s8 = scalar_lea.vmem %s0, 12
    %v9 = vld [vmem:[%s8] sm:%s3]
    %s10 = scalar_lea.vmem [#allocation0], 48
    %11 = vst [vmem:[%s10] sm:%s3] %v9
    %s12 = scalar_lea.vmem %s0, 10
    %v13 = vld [vmem:[%s12] sm:%s3]
    %s14 = scalar_lea.vmem [#allocation0], 40
    %15 = vst [vmem:[%s14] sm:%s3] %v13
    %s16 = scalar_lea.vmem %s0, 8
    %v17 = vld [vmem:[%s16] sm:%s3]
    %s18 = scalar_lea.vmem [#allocation0], 32
    %19 = vst [vmem:[%s18] sm:%s3] %v17
    %s20 = scalar_lea.vmem %s0, 6
    %v21 = vld [vmem:[%s20] sm:%s3]
    %s22 = scalar_lea.vmem [#allocation0], 24
    %23 = vst [vmem:[%s22] sm:%s3] %v21
    %s24 = scalar_lea.vmem %s0, 4
    %v25 = vld [vmem:[%s24] sm:%s3]
    %s26 = scalar_lea.vmem [#allocation0], 16
    %27 = vst [vmem:[%s26] sm:%s3] %v25
    %s28 = scalar_lea.vmem %s0, 2
    %v29 = vld [vmem:[%s28] sm:%s3]
    %s30 = scalar_lea.vmem [#allocation0], 8
    %31 = vst [vmem:[%s30] sm:%s3] %v29
    %v32 = vld [vmem:[%s0] sm:%s3]
    %33 = vst [vmem:[#allocation0] sm:%s3] %v32
    %v34 = vld [vmem:[#allocation0] ss:$8 sm:$0xf]
    %v35 = vld [vmem:[#allocation0] ss:$8 sm:$0xf0]
    %vm36 = vcmask 1047556
    %v37 = vsel %vm36, %v35, %v34
    %vm38 = vcmask 64512
    %39 = vst.msk [vmem:[%s1] sm:$0xff] %vm38, %v37
    %s40 = scalar_lea.vmem [#allocation0], 1
    %v41 = vld [vmem:[%s40] ss:$8 sm:$0xf]
    %s42 = scalar_lea.vmem [#allocation0], 1
    %v43 = vld [vmem:[%s42] ss:$8 sm:$0xf0]
    %vm44 = vcmask 1047556
    %v45 = vsel %vm44, %v43, %v41
    %46 = vrot.lane.b32.xlu0 %v45, 8
    %v47 = vpop.permute.xlu0 %46
    %vm48 = vcmask 130112
    %49 = vst.msk [vmem:[%s1] sm:$0xff] %vm48, %v47

// kernel: forward.123
$region0: #{forward.123}
  #allocation0 [shape = 'u32[]', space=smem, size = 0x4, offset = 0x4, fixed_abs, tag = 'smem constant byte address 0x4 - core index']
  #allocation1 [shape = 'u32[72,128]{1,0:T(1,128)}', space=vmem, size = 0x9000, scoped, tag = 'internal scratch']
  %s0 = inlined_call_operand.vmem [shape: f32[72,256], index: 0, kind: input, shape index: {}]
  %s1 = inlined_call_operand.vmem [shape: f32[16,72], index: 1, kind: input, shape index: {}]
  %s2 = inlined_call_operand.vmem [shape: f32[16,256], index: 2, kind: input, shape index: {}]
  %s3 = inlined_call_operand.vmem [shape: f32[8,16], index: 3, kind: input, shape index: {}]
  %s4 = inlined_call_operand.vmem [shape: f32[2,8], index: 4, kind: input, shape index: {}]
  %s5 = inlined_call_operand.vmem [shape: f32[8,2], index: 5, kind: input, shape index: {}]
  %s6 = inlined_call_operand.vmem [shape: f32[256,4], index: 6, kind: input, shape index: {}]
  %s7 = inlined_call_operand.vmem [shape: f32[4,256], index: 7, kind: input, shape index: {}]
  %s8 = inlined_call_operand.vmem [shape: f32[8,256], index: 8, kind: input, shape index: {}]
  %s9 = inlined_call_operand.vmem [shape: f32[8,256], index: 9, kind: output, shape index: {}]
  %s10 = sld [smem:[#allocation0]]
  $region46: #{forward.123} parent=0
    _
  %s12 = ssub.s32 1, %s10
  %s13 = scalar_select 0, %s12, %s10
  // Predicated region
  $region2: #{forward.123} parent=0 // pred_check
    _
  $region3: #{forward.123} parent=0 // pred_check_branch
    %15 = sbr.rel (0) target = $region5
  $region4: #{forward.123} parent=0 // pred_region
    _
  $region5: #{forward.123} parent=0 // pred_fallthru
    _
  // Predicated region
  $region6: #{forward.123} parent=0 // pred_check
    _
  $region7: #{forward.123} parent=0 // pred_check_branch
    %17 = sbr.rel (0) target = $region9
  $region8: #{forward.123} parent=0 // pred_region
    _
  $region9: #{forward.123} parent=0 // pred_fallthru
    _
  // Predicated region
  $region10: #{forward.123} parent=0 // pred_check
    _
  $region11: #{forward.123} parent=0 // pred_check_branch
    %19 = sbr.rel (0) target = $region13
  $region12: #{forward.123} parent=0 // pred_region
    _
  $region13: #{forward.123} parent=0 // pred_fallthru
    _
  // Predicated region
  $region14: #{forward.123} parent=0 // pred_check
    _
  $region15: #{forward.123} parent=0 // pred_check_branch
    %21 = sbr.rel (0) target = $region17
  $region16: #{forward.123} parent=0 // pred_region
    _
  $region17: #{forward.123} parent=0 // pred_fallthru
    _
  // Predicated region
  $region18: #{forward.123} parent=0 // pred_check
    _
  $region19: #{forward.123} parent=0 // pred_check_branch
    %23 = sbr.rel (0) target = $region21
  $region20: #{forward.123} parent=0 // pred_region
    _
  $region21: #{forward.123} parent=0 // pred_fallthru
    _
  // Predicated region
  $region22: #{forward.123} parent=0 // pred_check
    _
  $region23: #{forward.123} parent=0 // pred_check_branch
    %25 = sbr.rel (0) target = $region25
  $region24: #{forward.123} parent=0 // pred_region
    _
  $region25: #{forward.123} parent=0 // pred_fallthru
    _
  // Predicated region
  $region26: #{forward.123} parent=0 // pred_check
    _
  $region27: #{forward.123} parent=0 // pred_check_branch
    %27 = sbr.rel (0) target = $region29
  $region28: #{forward.123} parent=0 // pred_region
    _
  $region29: #{forward.123} parent=0 // pred_fallthru
    _
  // Predicated region
  $region30: #{forward.123} parent=0 // pred_check
    _
  $region31: #{forward.123} parent=0 // pred_check_branch
    %29 = sbr.rel (0) target = $region33
  $region32: #{forward.123} parent=0 // pred_region
    _
  $region33: #{forward.123} parent=0 // pred_fallthru
    _
  // Predicated region
  $region34: #{forward.123} parent=0 // pred_check
    _
  $region35: #{forward.123} parent=0 // pred_check_branch
    %31 = sbr.rel (0) target = $region37
  $region36: #{forward.123} parent=0 // pred_region
    _
  $region37: #{forward.123} parent=0 // pred_fallthru
    _
  %v32 = vld [vmem:[%s1] sm:$0xff]
  %v33 = vld [vmem:[%s1 + $0x8] sm:$0xff]
  %v34 = vld [vmem:[%s0] sm:$0xff]
  %v35 = vld [vmem:[%s0 + $0x8] sm:$0xff]
  %v36 = vld [vmem:[%s0 + $0x10] sm:$0xff]
  %v37 = vld [vmem:[%s0 + $0x18] sm:$0xff]
  %v38 = vld [vmem:[%s0 + $0x20] sm:$0xff]
  %v39 = vld [vmem:[%s0 + $0x28] sm:$0xff]
  %v40 = vld [vmem:[%s0 + $0x30] sm:$0xff]
  %v41 = vld [vmem:[%s0 + $0x38] sm:$0xff]
  %v42 = vld [vmem:[%s0 + $0x40] sm:$0xff]
  %v43 = vld [vmem:[%s0 + $0x48] sm:$0xff]
  %v44 = vld [vmem:[%s0 + $0x50] sm:$0xff]
  %v45 = vld [vmem:[%s0 + $0x58] sm:$0xff]
  %v46 = vld [vmem:[%s0 + $0x60] sm:$0xff]
  %v47 = vld [vmem:[%s0 + $0x68] sm:$0xff]
  %v48 = vld [vmem:[%s0 + $0x70] sm:$0xff]
  %v49 = vld [vmem:[%s0 + $0x78] sm:$0xff]
  %v50 = vld [vmem:[%s0 + $0x80] sm:$0xff]
  %v51 = vld [vmem:[%s0 + $0x88] sm:$0xff]
  %vm52 = vcmask 588800
  %v54 = vsel %vm52, %v32, 0
  %v57 = vsel %vm52, %v33, 0
  %59 = vmatpush.msra.mxu0 0.0
  %60 = vmatpush.msra.mxu0 0.0
  %61 = vmatpush.msra.mxu0 0.0
  %62 = vmatpush.msra.mxu0 0.0
  %63 = vmatpush.msra.mxu0 0.0
  %64 = vmatpush.msra.mxu0 0.0
  %65 = vmatpush.msra.mxu0 0.0
  %66 = vmatpush.msra.mxu0 %v50
  %67 = vmatpush.msra.mxu0 %v48
  %68 = vmatpush.msra.mxu0 %v46
  %69 = vmatpush.msra.mxu0 %v44
  %70 = vmatpush.msra.mxu0 %v42
  %71 = vmatpush.msra.mxu0 %v40
  %72 = vmatpush.msra.mxu0 %v38
  %73 = vmatpush.msra.mxu0 %v36
  %74 = vmatpush.msra.mxu0 %v34
  %75 = vmatmul.f32.gmra.mxu0 %v54
  %v76 = vpop.f32.mrf.mxu0
  %v77 = vadd.f32 0.0, %v76
  %78 = vmatmul.f32.gmra.mxu0 %v57
  %v79 = vpop.f32.mrf.mxu0
  %v80 = vadd.f32 0.0, %v79
  %81 = vdwg.mxu0
  %82 = vmatpush.msra.mxu0 0.0
  %83 = vmatpush.msra.mxu0 0.0
  %84 = vmatpush.msra.mxu0 0.0
  %85 = vmatpush.msra.mxu0 0.0
  %86 = vmatpush.msra.mxu0 0.0
  %87 = vmatpush.msra.mxu0 0.0
  %88 = vmatpush.msra.mxu0 0.0
  %89 = vmatpush.msra.mxu0 %v51
  %90 = vmatpush.msra.mxu0 %v49
  %91 = vmatpush.msra.mxu0 %v47
  %92 = vmatpush.msra.mxu0 %v45
  %93 = vmatpush.msra.mxu0 %v43
  %94 = vmatpush.msra.mxu0 %v41
  %95 = vmatpush.msra.mxu0 %v39
  %96 = vmatpush.msra.mxu0 %v37
  %97 = vmatpush.msra.mxu0 %v35
  %98 = vmatmul.f32.gmra.mxu0 %v54
  %v99 = vpop.f32.mrf.mxu0
  %v100 = vadd.f32 0.0, %v99
  %101 = vmatmul.f32.gmra.mxu0 %v57
  %v102 = vpop.f32.mrf.mxu0
  %v103 = vadd.f32 0.0, %v102
  %104 = vdwg.mxu0
  %v105 = vld [vmem:[%s3] sm:$0xff]
  %v106 = vld [vmem:[%s2] sm:$0xff]
  %v107 = vld [vmem:[%s2 + $0x8] sm:$0xff]
  %v108 = vld [vmem:[%s2 + $0x10] sm:$0xff]
  %v109 = vld [vmem:[%s2 + $0x18] sm:$0xff]
  %v110 = vmul.f32 %v77, %v106
  %v111 = vmul.f32 %v100, %v107
  %v112 = vmul.f32 %v80, %v108
  %v113 = vmul.f32 %v103, %v109
  %vm114 = vcmask 130048
  %v116 = vsel %vm114, %v105, 0
  %118 = vmatpush.msra.mxu0 0.0
  %119 = vmatpush.msra.mxu0 0.0
  %120 = vmatpush.msra.mxu0 0.0
  %121 = vmatpush.msra.mxu0 0.0
  %122 = vmatpush.msra.mxu0 0.0
  %123 = vmatpush.msra.mxu0 0.0
  %124 = vmatpush.msra.mxu0 0.0
  %125 = vmatpush.msra.mxu0 0.0
  %126 = vmatpush.msra.mxu0 0.0
  %127 = vmatpush.msra.mxu0 0.0
  %128 = vmatpush.msra.mxu0 0.0
  %129 = vmatpush.msra.mxu0 0.0
  %130 = vmatpush.msra.mxu0 0.0
  %131 = vmatpush.msra.mxu0 0.0
  %132 = vmatpush.msra.mxu0 %v112
  %133 = vmatpush.msra.mxu0 %v110
  %134 = vmatmul.f32.gmra.mxu0 %v116
  %v135 = vpop.f32.mrf.mxu0
  %v136 = vadd.f32 0.0, %v135
  %137 = vdwg.mxu0
  %138 = vmatpush.msra.mxu0 0.0
  %139 = vmatpush.msra.mxu0 0.0
  %140 = vmatpush.msra.mxu0 0.0
  %141 = vmatpush.msra.mxu0 0.0
  %142 = vmatpush.msra.mxu0 0.0
  %143 = vmatpush.msra.mxu0 0.0
  %144 = vmatpush.msra.mxu0 0.0
  %145 = vmatpush.msra.mxu0 0.0
  %146 = vmatpush.msra.mxu0 0.0
  %147 = vmatpush.msra.mxu0 0.0
  %148 = vmatpush.msra.mxu0 0.0
  %149 = vmatpush.msra.mxu0 0.0
  %150 = vmatpush.msra.mxu0 0.0
  %151 = vmatpush.msra.mxu0 0.0
  %152 = vmatpush.msra.mxu0 %v113
  %153 = vmatpush.msra.mxu0 %v111
  %154 = vmatmul.f32.gmra.mxu0 %v116
  %v155 = vpop.f32.mrf.mxu0
  %v156 = vadd.f32 0.0, %v155
  %157 = vdwg.mxu0
  %v158 = vld [vmem:[%s6] sm:$0xff]
  %v159 = vld [vmem:[%s6 + $0x8] sm:$0xff]
  %v160 = vld [vmem:[%s6 + $0x10] sm:$0xff]
  %v161 = vld [vmem:[%s6 + $0x18] sm:$0xff]
  %v162 = vld [vmem:[%s6 + $0x20] sm:$0xff]
  %v163 = vld [vmem:[%s6 + $0x28] sm:$0xff]
  %v164 = vld [vmem:[%s6 + $0x30] sm:$0xff]
  %v165 = vld [vmem:[%s6 + $0x38] sm:$0xff]
  %v166 = vld [vmem:[%s6 + $0x40] sm:$0xff]
  %v167 = vld [vmem:[%s6 + $0x48] sm:$0xff]
  %v168 = vld [vmem:[%s6 + $0x50] sm:$0xff]
  %v169 = vld [vmem:[%s6 + $0x58] sm:$0xff]
  %v170 = vld [vmem:[%s6 + $0x60] sm:$0xff]
  %v171 = vld [vmem:[%s6 + $0x68] sm:$0xff]
  %v172 = vld [vmem:[%s6 + $0x70] sm:$0xff]
  %v173 = vld [vmem:[%s6 + $0x78] sm:$0xff]
  %v174 = vld [vmem:[%s6 + $0x80] sm:$0xff]
  %v175 = vld [vmem:[%s6 + $0x88] sm:$0xff]
  %v176 = vld [vmem:[%s6 + $0x90] sm:$0xff]
  %v177 = vld [vmem:[%s6 + $0x98] sm:$0xff]
  %v178 = vld [vmem:[%s6 + $0xa0] sm:$0xff]
  %v179 = vld [vmem:[%s6 + $0xa8] sm:$0xff]
  %v180 = vld [vmem:[%s6 + $0xb0] sm:$0xff]
  %v181 = vld [vmem:[%s6 + $0xb8] sm:$0xff]
  %v182 = vld [vmem:[%s6 + $0xc0] sm:$0xff]
  %v183 = vld [vmem:[%s6 + $0xc8] sm:$0xff]
  %v184 = vld [vmem:[%s6 + $0xd0] sm:$0xff]
  %v185 = vld [vmem:[%s6 + $0xd8] sm:$0xff]
  %v186 = vld [vmem:[%s6 + $0xe0] sm:$0xff]
  %v187 = vld [vmem:[%s6 + $0xe8] sm:$0xff]
  %v188 = vld [vmem:[%s6 + $0xf0] sm:$0xff]
  %v189 = vld [vmem:[%s6 + $0xf8] sm:$0xff]
  %190 = vmatpush.msra.mxu0 %v173
  %191 = vmatpush.msra.mxu0 %v172
  %192 = vmatpush.msra.mxu0 %v171
  %193 = vmatpush.msra.mxu0 %v170
  %194 = vmatpush.msra.mxu0 %v169
  %195 = vmatpush.msra.mxu0 %v168
  %196 = vmatpush.msra.mxu0 %v167
  %197 = vmatpush.msra.mxu0 %v166
  %198 = vmatpush.msra.mxu0 %v165
  %199 = vmatpush.msra.mxu0 %v164
  %200 = vmatpush.msra.mxu0 %v163
  %201 = vmatpush.msra.mxu0 %v162
  %202 = vmatpush.msra.mxu0 %v161
  %203 = vmatpush.msra.mxu0 %v160
  %204 = vmatpush.msra.mxu0 %v159
  %205 = vmatpush.msra.mxu0 %v158
  %206 = vmatmul.f32.gmra.mxu0 %v136
  %v207 = vpop.f32.mrf.mxu0
  %v208 = vadd.f32 0.0, %v207
  %209 = vdwg.mxu0
  %210 = vmatpush.msra.mxu0 %v189
  %211 = vmatpush.msra.mxu0 %v188
  %212 = vmatpush.msra.mxu0 %v187
  %213 = vmatpush.msra.mxu0 %v186
  %214 = vmatpush.msra.mxu0 %v185
  %215 = vmatpush.msra.mxu0 %v184
  %216 = vmatpush.msra.mxu0 %v183
  %217 = vmatpush.msra.mxu0 %v182
  %218 = vmatpush.msra.mxu0 %v181
  %219 = vmatpush.msra.mxu0 %v180
  %220 = vmatpush.msra.mxu0 %v179
  %221 = vmatpush.msra.mxu0 %v178
  %222 = vmatpush.msra.mxu0 %v177
  %223 = vmatpush.msra.mxu0 %v176
  %224 = vmatpush.msra.mxu0 %v175
  %225 = vmatpush.msra.mxu0 %v174
  %226 = vmatmul.f32.gmra.mxu0 %v156
  %v227 = vpop.f32.mrf.mxu0
  %v228 = vadd.f32 %v208, %v227
  %229 = vdwg.mxu0
  %v230 = vld [vmem:[%s4] sm:$0x3]
  %vm231 = vcmask 64512
  %v233 = vsel %vm231, %v230, 0
  %235 = vmatpush.msra.mxu0 0.0
  %236 = vmatpush.msra.mxu0 0.0
  %237 = vmatpush.msra.mxu0 0.0
  %238 = vmatpush.msra.mxu0 0.0
  %239 = vmatpush.msra.mxu0 0.0
  %240 = vmatpush.msra.mxu0 0.0
  %241 = vmatpush.msra.mxu0 0.0
  %242 = vmatpush.msra.mxu0 0.0
  %243 = vmatpush.msra.mxu0 0.0
  %244 = vmatpush.msra.mxu0 0.0
  %245 = vmatpush.msra.mxu0 0.0
  %246 = vmatpush.msra.mxu0 0.0
  %247 = vmatpush.msra.mxu0 0.0
  %248 = vmatpush.msra.mxu0 0.0
  %249 = vmatpush.msra.mxu0 0.0
  %250 = vmatpush.msra.mxu0 %v228
  %251 = vmatmul.f32.gmra.mxu0 %v233
  %v252 = vpop.f32.mrf.mxu0
  %v253 = vadd.f32 0.0, %v252
  %254 = vdwg.mxu0
  %v255 = vmax.f32 %v253, 0.0
  %v256 = vld [vmem:[%s5] sm:$0xff]
  %vm257 = vcmask 15360
  %v259 = vsel %vm257, %v256, 0
  %vm261 = vcmask 1041408
  %v263 = vsel %vm261, %v255, 0
  %265 = vmatpush.msra.mxu0 0.0
  %266 = vmatpush.msra.mxu0 0.0
  %267 = vmatpush.msra.mxu0 0.0
  %268 = vmatpush.msra.mxu0 0.0
  %269 = vmatpush.msra.mxu0 0.0
  %270 = vmatpush.msra.mxu0 0.0
  %271 = vmatpush.msra.mxu0 0.0
  %272 = vmatpush.msra.mxu0 0.0
  %273 = vmatpush.msra.mxu0 0.0
  %274 = vmatpush.msra.mxu0 0.0
  %275 = vmatpush.msra.mxu0 0.0
  %276 = vmatpush.msra.mxu0 0.0
  %277 = vmatpush.msra.mxu0 0.0
  %278 = vmatpush.msra.mxu0 0.0
  %279 = vmatpush.msra.mxu0 0.0
  %280 = vmatpush.msra.mxu0 %v263
  %281 = vmatmul.f32.gmra.mxu0 %v259
  %v282 = vpop.f32.mrf.mxu0
  %v283 = vadd.f32 0.0, %v282
  %284 = vdwg.mxu0
  %v285 = vxor.u32 %v283, 2147483648
  %v286 = vmul.f32 %v285, 1.442695
  %v287 = vpow.pop %v286
  %v288 = vadd.f32 %v287, 1.0
  %v289 = vrcp.pop %v288
  %v290 = vmul.f32 %v288, %v289
  %v291 = vsub.f32 1.0, %v290
  %v292 = vmul.f32 %v289, %v291
  %v293 = vadd.f32 %v289, %v292
  %vm294 = vweird.f32 %v288
  %vm295 = vweird.f32 %v289
  %vm296 = vmor %vm294, %vm295
  %v297 = vsel %vm296, %v289, %v293
  %v298 = vand.u32 2147483647, %v288
  %vm299 = vcmp.eq.f32.partialorder %v298, 8.507059e+37
  %v300 = vand.u32 %v288, 2147483648
  %v301 = vor.u32 1.1754944e-38, %v300
  %v302 = vsel %vm299, %v301, %v297
  %v303 = vmul.f32 1.0, %v302
  %v304 = vld [vmem:[%s7] sm:$0xff]
  %306 = vst [vmem:[#allocation1] ss:$2 sm:$0xff] %v304
  %v307 = vld.sshfl [vmem:[#allocation1] sm:$0xff pattern:$0x75316420]
  %v308 = vld.sshfl [vmem:[#allocation1 + $0x8] sm:$0xff pattern:$0x75316420]
  %vm309 = vcmask 31744
  %v311 = vsel %vm309, %v303, 0
  %vm313 = vcmask 1043456
  %v314 = vsel %vm313, %v307, 0
  %v316 = vsel %vm313, %v308, 0
  %318 = vmatpush.msra.mxu0 0.0
  %319 = vmatpush.msra.mxu0 0.0
  %320 = vmatpush.msra.mxu0 0.0
  %321 = vmatpush.msra.mxu0 0.0
  %322 = vmatpush.msra.mxu0 0.0
  %323 = vmatpush.msra.mxu0 0.0
  %324 = vmatpush.msra.mxu0 0.0
  %325 = vmatpush.msra.mxu0 0.0
  %326 = vmatpush.msra.mxu0 0.0
  %327 = vmatpush.msra.mxu0 0.0
  %328 = vmatpush.msra.mxu0 0.0
  %329 = vmatpush.msra.mxu0 0.0
  %330 = vmatpush.msra.mxu0 0.0
  %331 = vmatpush.msra.mxu0 0.0
  %332 = vmatpush.msra.mxu0 0.0
  %333 = vmatpush.msra.mxu0 %v314
  %334 = vmatmul.f32.gmra.mxu0 %v311
  %v335 = vpop.f32.mrf.mxu0
  %v336 = vadd.f32 0.0, %v335
  %337 = vdwg.mxu0
  %338 = vmatpush.msra.mxu0 0.0
  %339 = vmatpush.msra.mxu0 0.0
  %340 = vmatpush.msra.mxu0 0.0
  %341 = vmatpush.msra.mxu0 0.0
  %342 = vmatpush.msra.mxu0 0.0
  %343 = vmatpush.msra.mxu0 0.0
  %344 = vmatpush.msra.mxu0 0.0
  %345 = vmatpush.msra.mxu0 0.0
  %346 = vmatpush.msra.mxu0 0.0
  %347 = vmatpush.msra.mxu0 0.0
  %348 = vmatpush.msra.mxu0 0.0
  %349 = vmatpush.msra.mxu0 0.0
  %350 = vmatpush.msra.mxu0 0.0
  %351 = vmatpush.msra.mxu0 0.0
  %352 = vmatpush.msra.mxu0 0.0
  %353 = vmatpush.msra.mxu0 %v316
  %354 = vmatmul.f32.gmra.mxu0 %v311
  %v355 = vpop.f32.mrf.mxu0
  %v356 = vadd.f32 0.0, %v355
  %357 = vdwg.mxu0
  %v358 = vmul.f32 %v136, %v336
  %v359 = vmul.f32 %v156, %v356
  %v360 = vld [vmem:[%s8] sm:$0xff]
  %v361 = vld [vmem:[%s8 + $0x8] sm:$0xff]
  %v362 = vadd.f32 %v358, %v360
  %v363 = vadd.f32 %v359, %v361
  %364 = vst [vmem:[%s9] sm:$0xff] %v362
  %365 = vst [vmem:[%s9 + $0x8] sm:$0xff] %v363
  // Predicated region
  $region38: #{forward.123} parent=0 // pred_check
    _
  $region39: #{forward.123} parent=0 // pred_check_branch
    %367 = sbr.rel (0) target = $region41
  $region40: #{forward.123} parent=0 // pred_region
    _
  $region41: #{forward.123} parent=0 // pred_fallthru
    _
  // Predicated region
  $region42: #{forward.123} parent=0 // pred_check
    _
  $region43: #{forward.123} parent=0 // pred_check_branch
    %369 = sbr.rel (0) target = $region45
  $region44: #{forward.123} parent=0 // pred_region
    _
  $region45: #{forward.123} parent=0 // pred_fallthru
    _

// kernel: forward.128
$region0: #{forward.128}
  #allocation0 [shape = 'u32[]', space=smem, size = 0x4, offset = 0x4, fixed_abs, tag = 'smem constant byte address 0x4 - core index']
  #allocation1 [shape = 'u32[72,128]{1,0:T(1,128)}', space=vmem, size = 0x9000, scoped, tag = 'internal scratch']
  %s0 = inlined_call_operand.vmem [shape: f32[8,64], index: 0, kind: input, shape index: {}]
  %s1 = inlined_call_operand.vmem [shape: f32[12,8], index: 1, kind: input, shape index: {}]
  %s2 = inlined_call_operand.vmem [shape: f32[12,64], index: 2, kind: output, shape index: {}]
  %s3 = sld [smem:[#allocation0]]
  $region18: #{forward.128} parent=0
    _
  %s5 = ssub.s32 1, %s3
  %s6 = scalar_select 0, %s5, %s3
  // Predicated region
  $region2: #{forward.128} parent=0 // pred_check
    _
  $region3: #{forward.128} parent=0 // pred_check_branch
    %8 = sbr.rel (0) target = $region5
  $region4: #{forward.128} parent=0 // pred_region
    _
  $region5: #{forward.128} parent=0 // pred_fallthru
    _
  // Predicated region
  $region6: #{forward.128} parent=0 // pred_check
    _
  $region7: #{forward.128} parent=0 // pred_check_branch
    %10 = sbr.rel (0) target = $region9
  $region8: #{forward.128} parent=0 // pred_region
    _
  $region9: #{forward.128} parent=0 // pred_fallthru
    _
  %v11 = vld [vmem:[%s1] sm:$0xff]
  %v12 = vld [vmem:[%s1 + $0x8] sm:$0xf]
  %v13 = vld [vmem:[%s0] sm:$0xff]
  %vm14 = vcmask 64512
  %v16 = vsel %vm14, %v11, 0
  %v19 = vsel %vm14, %v12, 0
  %21 = vmatpush.msra.mxu0 0.0
  %22 = vmatpush.msra.mxu0 0.0
  %23 = vmatpush.msra.mxu0 0.0
  %24 = vmatpush.msra.mxu0 0.0
  %25 = vmatpush.msra.mxu0 0.0
  %26 = vmatpush.msra.mxu0 0.0
  %27 = vmatpush.msra.mxu0 0.0
  %28 = vmatpush.msra.mxu0 0.0
  %29 = vmatpush.msra.mxu0 0.0
  %30 = vmatpush.msra.mxu0 0.0
  %31 = vmatpush.msra.mxu0 0.0
  %32 = vmatpush.msra.mxu0 0.0
  %33 = vmatpush.msra.mxu0 0.0
  %34 = vmatpush.msra.mxu0 0.0
  %35 = vmatpush.msra.mxu0 0.0
  %36 = vmatpush.msra.mxu0 %v13
  %37 = vmatmul.f32.gmra.mxu0 %v16
  %v38 = vpop.f32.mrf.mxu0
  %v39 = vadd.f32 0.0, %v38
  %40 = vmatmul.f32.gmra.mxu0 %v19
  %v41 = vpop.f32.mrf.mxu0
  %v42 = vadd.f32 0.0, %v41
  %43 = vdwg.mxu0
  %vm44 = vcmask 523264
  %45 = vst.msk [vmem:[%s2] sm:$0xff] %vm44, %v39
  %vm46 = vcmask 519168
  %47 = vst.msk [vmem:[%s2 + $0x8] sm:$0xf] %vm46, %v42
  // Predicated region
  $region10: #{forward.128} parent=0 // pred_check
    _
  $region11: #{forward.128} parent=0 // pred_check_branch
    %49 = sbr.rel (0) target = $region13
  $region12: #{forward.128} parent=0 // pred_region
    _
  $region13: #{forward.128} parent=0 // pred_fallthru
    _
  // Predicated region
  $region14: #{forward.128} parent=0 // pred_check
    _
  $region15: #{forward.128} parent=0 // pred_check_branch
    %51 = sbr.rel (0) target = $region17
  $region16: #{forward.128} parent=0 // pred_region
    _
  $region17: #{forward.128} parent=0 // pred_fallthru
    _

// kernel: tile.204
$region0: #{tile.204}
  %s0 = inlined_call_operand.vmem [shape: f32[12,2,12], index: 0, kind: input, shape index: {}]
  %s1 = inlined_call_operand.vmem [shape: f32[12,24], index: 1, kind: output, shape index: {}]
  $region1: #{tile.204} parent=0
    #allocation0 [shape = 'u8[49152]{0}', space=vmem, size = 0xc000, scoped, tag = 'scoped mem for input reshape']
    %s3 = ssub.s32 4, 1
    %s4 = scalar_lea.vmem %s0, 22
    %v5 = vld [vmem:[%s4] sm:%s3]
    %s6 = scalar_lea.vmem [#allocation0], 88
    %7 = vst [vmem:[%s6] sm:%s3] %v5
    %s8 = scalar_lea.vmem %s0, 20
    %v9 = vld [vmem:[%s8] sm:%s3]
    %s10 = scalar_lea.vmem [#allocation0], 80
    %11 = vst [vmem:[%s10] sm:%s3] %v9
    %s12 = scalar_lea.vmem %s0, 18
    %v13 = vld [vmem:[%s12] sm:%s3]
    %s14 = scalar_lea.vmem [#allocation0], 72
    %15 = vst [vmem:[%s14] sm:%s3] %v13
    %s16 = scalar_lea.vmem %s0, 16
    %v17 = vld [vmem:[%s16] sm:%s3]
    %s18 = scalar_lea.vmem [#allocation0], 64
    %19 = vst [vmem:[%s18] sm:%s3] %v17
    %s20 = scalar_lea.vmem %s0, 14
    %v21 = vld [vmem:[%s20] sm:%s3]
    %s22 = scalar_lea.vmem [#allocation0], 56
    %23 = vst [vmem:[%s22] sm:%s3] %v21
    %s24 = scalar_lea.vmem %s0, 12
    %v25 = vld [vmem:[%s24] sm:%s3]
    %s26 = scalar_lea.vmem [#allocation0], 48
    %27 = vst [vmem:[%s26] sm:%s3] %v25
    %s28 = scalar_lea.vmem %s0, 10
    %v29 = vld [vmem:[%s28] sm:%s3]
    %s30 = scalar_lea.vmem [#allocation0], 40
    %31 = vst [vmem:[%s30] sm:%s3] %v29
    %s32 = scalar_lea.vmem %s0, 8
    %v33 = vld [vmem:[%s32] sm:%s3]
    %s34 = scalar_lea.vmem [#allocation0], 32
    %35 = vst [vmem:[%s34] sm:%s3] %v33
    %s36 = scalar_lea.vmem %s0, 6
    %v37 = vld [vmem:[%s36] sm:%s3]
    %s38 = scalar_lea.vmem [#allocation0], 24
    %39 = vst [vmem:[%s38] sm:%s3] %v37
    %s40 = scalar_lea.vmem %s0, 4
    %v41 = vld [vmem:[%s40] sm:%s3]
    %s42 = scalar_lea.vmem [#allocation0], 16
    %43 = vst [vmem:[%s42] sm:%s3] %v41
    %s44 = scalar_lea.vmem %s0, 2
    %v45 = vld [vmem:[%s44] sm:%s3]
    %s46 = scalar_lea.vmem [#allocation0], 8
    %47 = vst [vmem:[%s46] sm:%s3] %v45
    %v48 = vld [vmem:[%s0] sm:%s3]
    %49 = vst [vmem:[#allocation0] sm:%s3] %v48
    %v50 = vld [vmem:[#allocation0] ss:$8 sm:$0xf]
    %v51 = vld [vmem:[#allocation0] ss:$8 sm:$0xf0]
    %vm52 = vcmask 1047556
    %v53 = vsel %vm52, %v51, %v50
    %vm54 = vcmask 97280
    %55 = vst.msk [vmem:[%s1] sm:$0xff] %vm54, %v53
    %s56 = scalar_lea.vmem [#allocation0], 64
    %v57 = vld [vmem:[%s56] ss:$8 sm:$0xf]
    %vm58 = vcmask 97280
    %s59 = scalar_lea.vmem %s1, 8
    %60 = vst.msk [vmem:[%s59] sm:$0xf] %vm58, %v57
    %s61 = scalar_lea.vmem [#allocation0], 1
    %v62 = vld [vmem:[%s61] ss:$8 sm:$0xf]
    %s63 = scalar_lea.vmem [#allocation0], 1
    %v64 = vld [vmem:[%s63] ss:$8 sm:$0xf0]
    %vm65 = vcmask 1047556
    %v66 = vsel %vm65, %v64, %v62
    %67 = vrot.lane.b32.xlu0 %v66, 12
    %v68 = vpop.permute.xlu0 %67
    %vm69 = vcmask 195680
    %70 = vst.msk [vmem:[%s1] sm:$0xff] %vm69, %v68
    %s71 = scalar_lea.vmem [#allocation0], 65
    %v72 = vld [vmem:[%s71] ss:$8 sm:$0xf]
    %73 = vrot.lane.b32.xlu0 %v72, 12
    %v74 = vpop.permute.xlu0 %73
    %vm75 = vcmask 195680
    %s76 = scalar_lea.vmem %s1, 8
    %77 = vst.msk [vmem:[%s76] sm:$0xf] %vm75, %v74

// kernel: forward.129
$region0: #{forward.129}
  #allocation0 [shape = 'u32[]', space=smem, size = 0x4, offset = 0x4, fixed_abs, tag = 'smem constant byte address 0x4 - core index']
  #allocation1 [shape = 'u32[72,128]{1,0:T(1,128)}', space=vmem, size = 0x9000, scoped, tag = 'internal scratch']
  %s0 = inlined_call_operand.vmem [shape: f32[108,64], index: 0, kind: input, shape index: {}]
  %s1 = inlined_call_operand.vmem [shape: f32[12,108], index: 1, kind: input, shape index: {}]
  %s2 = inlined_call_operand.vmem [shape: f32[12,64], index: 2, kind: output, shape index: {}]
  %s3 = sld [smem:[#allocation0]]
  $region18: #{forward.129} parent=0
    _
  %s5 = ssub.s32 1, %s3
  %s6 = scalar_select 0, %s5, %s3
  // Predicated region
  $region2: #{forward.129} parent=0 // pred_check
    _
  $region3: #{forward.129} parent=0 // pred_check_branch
    %8 = sbr.rel (0) target = $region5
  $region4: #{forward.129} parent=0 // pred_region
    _
  $region5: #{forward.129} parent=0 // pred_fallthru
    _
  // Predicated region
  $region6: #{forward.129} parent=0 // pred_check
    _
  $region7: #{forward.129} parent=0 // pred_check_branch
    %10 = sbr.rel (0) target = $region9
  $region8: #{forward.129} parent=0 // pred_region
    _
  $region9: #{forward.129} parent=0 // pred_fallthru
    _
  %v11 = vld [vmem:[%s1] sm:$0xff]
  %v12 = vld [vmem:[%s1 + $0x8] sm:$0xf]
  %v13 = vld [vmem:[%s0] sm:$0xff]
  %v14 = vld [vmem:[%s0 + $0x8] sm:$0xff]
  %v15 = vld [vmem:[%s0 + $0x10] sm:$0xff]
  %v16 = vld [vmem:[%s0 + $0x18] sm:$0xff]
  %v17 = vld [vmem:[%s0 + $0x20] sm:$0xff]
  %v18 = vld [vmem:[%s0 + $0x28] sm:$0xff]
  %v19 = vld [vmem:[%s0 + $0x30] sm:$0xff]
  %v20 = vld [vmem:[%s0 + $0x38] sm:$0xff]
  %v21 = vld [vmem:[%s0 + $0x40] sm:$0xff]
  %v22 = vld [vmem:[%s0 + $0x48] sm:$0xff]
  %v23 = vld [vmem:[%s0 + $0x50] sm:$0xff]
  %v24 = vld [vmem:[%s0 + $0x58] sm:$0xff]
  %v25 = vld [vmem:[%s0 + $0x60] sm:$0xff]
  %v26 = vld [vmem:[%s0 + $0x68] sm:$0xf]
  %vm27 = vcmask 883712
  %v29 = vsel %vm27, %v11, 0
  %v32 = vsel %vm27, %v12, 0
  %vm34 = vcmask 1043456
  %v36 = vsel %vm34, %v26, 0
  %38 = vmatpush.msra.mxu0 0.0
  %39 = vmatpush.msra.mxu0 0.0
  %40 = vmatpush.msra.mxu0 %v36
  %41 = vmatpush.msra.mxu0 %v25
  %42 = vmatpush.msra.mxu0 %v24
  %43 = vmatpush.msra.mxu0 %v23
  %44 = vmatpush.msra.mxu0 %v22
  %45 = vmatpush.msra.mxu0 %v21
  %46 = vmatpush.msra.mxu0 %v20
  %47 = vmatpush.msra.mxu0 %v19
  %48 = vmatpush.msra.mxu0 %v18
  %49 = vmatpush.msra.mxu0 %v17
  %50 = vmatpush.msra.mxu0 %v16
  %51 = vmatpush.msra.mxu0 %v15
  %52 = vmatpush.msra.mxu0 %v14
  %53 = vmatpush.msra.mxu0 %v13
  %54 = vmatmul.f32.gmra.mxu0 %v29
  %v55 = vpop.f32.mrf.mxu0
  %v56 = vadd.f32 0.0, %v55
  %57 = vmatmul.f32.gmra.mxu0 %v32
  %v58 = vpop.f32.mrf.mxu0
  %v59 = vadd.f32 0.0, %v58
  %60 = vdwg.mxu0
  %vm61 = vcmp.ge.f32.partialorder %v56, 0.0
  %vm62 = vcmp.ge.f32.partialorder %v59, 0.0
  %v63 = vmul.f32 %v56, 0.25
  %v64 = vmul.f32 %v59, 0.25
  %v65 = vsel %vm61, %v56, %v63
  %v66 = vsel %vm62, %v59, %v64
  %vm67 = vcmask 523264
  %68 = vst.msk [vmem:[%s2] sm:$0xff] %vm67, %v65
  %vm69 = vcmask 519168
  %70 = vst.msk [vmem:[%s2 + $0x8] sm:$0xf] %vm69, %v66
  // Predicated region
  $region10: #{forward.129} parent=0 // pred_check
    _
  $region11: #{forward.129} parent=0 // pred_check_branch
    %72 = sbr.rel (0) target = $region13
  $region12: #{forward.129} parent=0 // pred_region
    _
  $region13: #{forward.129} parent=0 // pred_fallthru
    _
  // Predicated region
  $region14: #{forward.129} parent=0 // pred_check
    _
  $region15: #{forward.129} parent=0 // pred_check_branch
    %74 = sbr.rel (0) target = $region17
  $region16: #{forward.129} parent=0 // pred_region
    _
  $region17: #{forward.129} parent=0 // pred_fallthru
    _

// kernel: forward.130
$region0: #{forward.130}
  #allocation0 [shape = 'u32[]', space=smem, size = 0x4, offset = 0x4, fixed_abs, tag = 'smem constant byte address 0x4 - core index']
  #allocation1 [shape = 'u32[72,128]{1,0:T(1,128)}', space=vmem, size = 0x9000, scoped, tag = 'internal scratch']
  %s0 = inlined_call_operand.vmem [shape: f32[108,64], index: 0, kind: input, shape index: {}]
  %s1 = inlined_call_operand.vmem [shape: f32[24,108], index: 1, kind: input, shape index: {}]
  %s2 = inlined_call_operand.vmem [shape: f32[24,64], index: 2, kind: input, shape index: {}]
  %s3 = inlined_call_operand.vmem [shape: f32[12,24], index: 3, kind: input, shape index: {}]
  %s4 = inlined_call_operand.vmem [shape: f32[3,12], index: 4, kind: input, shape index: {}]
  %s5 = inlined_call_operand.vmem [shape: f32[12,3], index: 5, kind: input, shape index: {}]
  %s6 = inlined_call_operand.vmem [shape: f32[64,4], index: 6, kind: input, shape index: {}]
  %s7 = inlined_call_operand.vmem [shape: f32[4,64], index: 7, kind: input, shape index: {}]
  %s8 = inlined_call_operand.vmem [shape: f32[12,64], index: 8, kind: input, shape index: {}]
  %s9 = inlined_call_operand.vmem [shape: f32[12,64], index: 9, kind: output, shape index: {}]
  %s10 = sld [smem:[#allocation0]]
  $region46: #{forward.130} parent=0
    _
  %s12 = ssub.s32 1, %s10
  %s13 = scalar_select 0, %s12, %s10
  // Predicated region
  $region2: #{forward.130} parent=0 // pred_check
    _
  $region3: #{forward.130} parent=0 // pred_check_branch
    %15 = sbr.rel (0) target = $region5
  $region4: #{forward.130} parent=0 // pred_region
    _
  $region5: #{forward.130} parent=0 // pred_fallthru
    _
  // Predicated region
  $region6: #{forward.130} parent=0 // pred_check
    _
  $region7: #{forward.130} parent=0 // pred_check_branch
    %17 = sbr.rel (0) target = $region9
  $region8: #{forward.130} parent=0 // pred_region
    _
  $region9: #{forward.130} parent=0 // pred_fallthru
    _
  // Predicated region
  $region10: #{forward.130} parent=0 // pred_check
    _
  $region11: #{forward.130} parent=0 // pred_check_branch
    %19 = sbr.rel (0) target = $region13
  $region12: #{forward.130} parent=0 // pred_region
    _
  $region13: #{forward.130} parent=0 // pred_fallthru
    _
  // Predicated region
  $region14: #{forward.130} parent=0 // pred_check
    _
  $region15: #{forward.130} parent=0 // pred_check_branch
    %21 = sbr.rel (0) target = $region17
  $region16: #{forward.130} parent=0 // pred_region
    _
  $region17: #{forward.130} parent=0 // pred_fallthru
    _
  // Predicated region
  $region18: #{forward.130} parent=0 // pred_check
    _
  $region19: #{forward.130} parent=0 // pred_check_branch
    %23 = sbr.rel (0) target = $region21
  $region20: #{forward.130} parent=0 // pred_region
    _
  $region21: #{forward.130} parent=0 // pred_fallthru
    _
  // Predicated region
  $region22: #{forward.130} parent=0 // pred_check
    _
  $region23: #{forward.130} parent=0 // pred_check_branch
    %25 = sbr.rel (0) target = $region25
  $region24: #{forward.130} parent=0 // pred_region
    _
  $region25: #{forward.130} parent=0 // pred_fallthru
    _
  // Predicated region
  $region26: #{forward.130} parent=0 // pred_check
    _
  $region27: #{forward.130} parent=0 // pred_check_branch
    %27 = sbr.rel (0) target = $region29
  $region28: #{forward.130} parent=0 // pred_region
    _
  $region29: #{forward.130} parent=0 // pred_fallthru
    _
  // Predicated region
  $region30: #{forward.130} parent=0 // pred_check
    _
  $region31: #{forward.130} parent=0 // pred_check_branch
    %29 = sbr.rel (0) target = $region33
  $region32: #{forward.130} parent=0 // pred_region
    _
  $region33: #{forward.130} parent=0 // pred_fallthru
    _
  // Predicated region
  $region34: #{forward.130} parent=0 // pred_check
    _
  $region35: #{forward.130} parent=0 // pred_check_branch
    %31 = sbr.rel (0) target = $region37
  $region36: #{forward.130} parent=0 // pred_region
    _
  $region37: #{forward.130} parent=0 // pred_fallthru
    _
  %v32 = vld [vmem:[%s1] sm:$0xff]
  %v33 = vld [vmem:[%s1 + $0x8] sm:$0xff]
  %v34 = vld [vmem:[%s1 + $0x10] sm:$0xff]
  %v35 = vld [vmem:[%s0] sm:$0xff]
  %v36 = vld [vmem:[%s0 + $0x8] sm:$0xff]
  %v37 = vld [vmem:[%s0 + $0x10] sm:$0xff]
  %v38 = vld [vmem:[%s0 + $0x18] sm:$0xff]
  %v39 = vld [vmem:[%s0 + $0x20] sm:$0xff]
  %v40 = vld [vmem:[%s0 + $0x28] sm:$0xff]
  %v41 = vld [vmem:[%s0 + $0x30] sm:$0xff]
  %v42 = vld [vmem:[%s0 + $0x38] sm:$0xff]
  %v43 = vld [vmem:[%s0 + $0x40] sm:$0xff]
  %v44 = vld [vmem:[%s0 + $0x48] sm:$0xff]
  %v45 = vld [vmem:[%s0 + $0x50] sm:$0xff]
  %v46 = vld [vmem:[%s0 + $0x58] sm:$0xff]
  %v47 = vld [vmem:[%s0 + $0x60] sm:$0xff]
  %v48 = vld [vmem:[%s0 + $0x68] sm:$0xf]
  %vm49 = vcmask 883712
  %v51 = vsel %vm49, %v32, 0
  %v54 = vsel %vm49, %v33, 0
  %v57 = vsel %vm49, %v34, 0
  %vm59 = vcmask 1043456
  %v61 = vsel %vm59, %v48, 0
  %63 = vmatpush.msra.mxu0 0.0
  %64 = vmatpush.msra.mxu0 0.0
  %65 = vmatpush.msra.mxu0 %v61
  %66 = vmatpush.msra.mxu0 %v47
  %67 = vmatpush.msra.mxu0 %v46
  %68 = vmatpush.msra.mxu0 %v45
  %69 = vmatpush.msra.mxu0 %v44
  %70 = vmatpush.msra.mxu0 %v43
  %71 = vmatpush.msra.mxu0 %v42
  %72 = vmatpush.msra.mxu0 %v41
  %73 = vmatpush.msra.mxu0 %v40
  %74 = vmatpush.msra.mxu0 %v39
  %75 = vmatpush.msra.mxu0 %v38
  %76 = vmatpush.msra.mxu0 %v37
  %77 = vmatpush.msra.mxu0 %v36
  %78 = vmatpush.msra.mxu0 %v35
  %79 = vmatmul.f32.gmra.mxu0 %v51
  %v80 = vpop.f32.mrf.mxu0
  %v81 = vadd.f32 0.0, %v80
  %82 = vmatmul.f32.gmra.mxu0 %v54
  %v83 = vpop.f32.mrf.mxu0
  %v84 = vadd.f32 0.0, %v83
  %85 = vmatmul.f32.gmra.mxu0 %v57
  %v86 = vpop.f32.mrf.mxu0
  %v87 = vadd.f32 0.0, %v86
  %88 = vdwg.mxu0
  %v89 = vld [vmem:[%s3] sm:$0xff]
  %v90 = vld [vmem:[%s3 + $0x8] sm:$0xf]
  %v91 = vld [vmem:[%s2] sm:$0xff]
  %v92 = vld [vmem:[%s2 + $0x8] sm:$0xff]
  %v93 = vld [vmem:[%s2 + $0x10] sm:$0xff]
  %v94 = vmul.f32 %v81, %v91
  %v95 = vmul.f32 %v84, %v92
  %v96 = vmul.f32 %v87, %v93
  %vm97 = vcmask 195584
  %v99 = vsel %vm97, %v89, 0
  %v102 = vsel %vm97, %v90, 0
  %104 = vmatpush.msra.mxu0 0.0
  %105 = vmatpush.msra.mxu0 0.0
  %106 = vmatpush.msra.mxu0 0.0
  %107 = vmatpush.msra.mxu0 0.0
  %108 = vmatpush.msra.mxu0 0.0
  %109 = vmatpush.msra.mxu0 0.0
  %110 = vmatpush.msra.mxu0 0.0
  %111 = vmatpush.msra.mxu0 0.0
  %112 = vmatpush.msra.mxu0 0.0
  %113 = vmatpush.msra.mxu0 0.0
  %114 = vmatpush.msra.mxu0 0.0
  %115 = vmatpush.msra.mxu0 0.0
  %116 = vmatpush.msra.mxu0 0.0
  %117 = vmatpush.msra.mxu0 %v96
  %118 = vmatpush.msra.mxu0 %v95
  %119 = vmatpush.msra.mxu0 %v94
  %120 = vmatmul.f32.gmra.mxu0 %v99
  %v121 = vpop.f32.mrf.mxu0
  %v122 = vadd.f32 0.0, %v121
  %123 = vmatmul.f32.gmra.mxu0 %v102
  %v124 = vpop.f32.mrf.mxu0
  %v125 = vadd.f32 0.0, %v124
  %126 = vdwg.mxu0
  %v127 = vld [vmem:[%s6] sm:$0xff]
  %v128 = vld [vmem:[%s6 + $0x8] sm:$0xff]
  %v129 = vld [vmem:[%s6 + $0x10] sm:$0xff]
  %v130 = vld [vmem:[%s6 + $0x18] sm:$0xff]
  %v131 = vld [vmem:[%s6 + $0x20] sm:$0xff]
  %v132 = vld [vmem:[%s6 + $0x28] sm:$0xff]
  %v133 = vld [vmem:[%s6 + $0x30] sm:$0xff]
  %v134 = vld [vmem:[%s6 + $0x38] sm:$0xff]
  %vm135 = vcmask 523264
  %v137 = vsel %vm135, %v122, 0
  %v140 = vsel %vm135, %v125, 0
  %142 = vmatpush.msra.mxu0 0.0
  %143 = vmatpush.msra.mxu0 0.0
  %144 = vmatpush.msra.mxu0 0.0
  %145 = vmatpush.msra.mxu0 0.0
  %146 = vmatpush.msra.mxu0 0.0
  %147 = vmatpush.msra.mxu0 0.0
  %148 = vmatpush.msra.mxu0 0.0
  %149 = vmatpush.msra.mxu0 0.0
  %150 = vmatpush.msra.mxu0 %v134
  %151 = vmatpush.msra.mxu0 %v133
  %152 = vmatpush.msra.mxu0 %v132
  %153 = vmatpush.msra.mxu0 %v131
  %154 = vmatpush.msra.mxu0 %v130
  %155 = vmatpush.msra.mxu0 %v129
  %156 = vmatpush.msra.mxu0 %v128
  %157 = vmatpush.msra.mxu0 %v127
  %158 = vmatmul.f32.gmra.mxu0 %v137
  %v159 = vpop.f32.mrf.mxu0
  %v160 = vadd.f32 0.0, %v159
  %161 = vmatmul.f32.gmra.mxu0 %v140
  %v162 = vpop.f32.mrf.mxu0
  %v163 = vadd.f32 0.0, %v162
  %164 = vdwg.mxu0
  %v165 = vld [vmem:[%s4] sm:$0x7]
  %vm166 = vcmask 97280
  %v168 = vsel %vm166, %v165, 0
  %v171 = vsel %vm59, %v163, 0
  %173 = vmatpush.msra.mxu0 0.0
  %174 = vmatpush.msra.mxu0 0.0
  %175 = vmatpush.msra.mxu0 0.0
  %176 = vmatpush.msra.mxu0 0.0
  %177 = vmatpush.msra.mxu0 0.0
  %178 = vmatpush.msra.mxu0 0.0
  %179 = vmatpush.msra.mxu0 0.0
  %180 = vmatpush.msra.mxu0 0.0
  %181 = vmatpush.msra.mxu0 0.0
  %182 = vmatpush.msra.mxu0 0.0
  %183 = vmatpush.msra.mxu0 0.0
  %184 = vmatpush.msra.mxu0 0.0
  %185 = vmatpush.msra.mxu0 0.0
  %186 = vmatpush.msra.mxu0 0.0
  %187 = vmatpush.msra.mxu0 %v171
  %188 = vmatpush.msra.mxu0 %v160
  %189 = vmatmul.f32.gmra.mxu0 %v168
  %v190 = vpop.f32.mrf.mxu0
  %v191 = vadd.f32 0.0, %v190
  %192 = vdwg.mxu0
  %v193 = vmax.f32 %v191, 0.0
  %v194 = vld [vmem:[%s5] sm:$0xff]
  %v195 = vld [vmem:[%s5 + $0x8] sm:$0xf]
  %vm196 = vcmask 23552
  %v198 = vsel %vm196, %v194, 0
  %v201 = vsel %vm196, %v195, 0
  %vm203 = vcmask 1042432
  %v205 = vsel %vm203, %v193, 0
  %207 = vmatpush.msra.mxu0 0.0
  %208 = vmatpush.msra.mxu0 0.0
  %209 = vmatpush.msra.mxu0 0.0
  %210 = vmatpush.msra.mxu0 0.0
  %211 = vmatpush.msra.mxu0 0.0
  %212 = vmatpush.msra.mxu0 0.0
  %213 = vmatpush.msra.mxu0 0.0
  %214 = vmatpush.msra.mxu0 0.0
  %215 = vmatpush.msra.mxu0 0.0
  %216 = vmatpush.msra.mxu0 0.0
  %217 = vmatpush.msra.mxu0 0.0
  %218 = vmatpush.msra.mxu0 0.0
  %219 = vmatpush.msra.mxu0 0.0
  %220 = vmatpush.msra.mxu0 0.0
  %221 = vmatpush.msra.mxu0 0.0
  %222 = vmatpush.msra.mxu0 %v205
  %223 = vmatmul.f32.gmra.mxu0 %v198
  %v224 = vpop.f32.mrf.mxu0
  %v225 = vadd.f32 0.0, %v224
  %226 = vmatmul.f32.gmra.mxu0 %v201
  %v227 = vpop.f32.mrf.mxu0
  %v228 = vadd.f32 0.0, %v227
  %229 = vdwg.mxu0
  %v230 = vxor.u32 %v225, 2147483648
  %v231 = vxor.u32 %v228, 2147483648
  %v232 = vmul.f32 %v230, 1.442695
  %v233 = vpow.pop %v232
  %v234 = vmul.f32 %v231, 1.442695
  %v235 = vpow.pop %v234
  %v236 = vadd.f32 %v233, 1.0
  %v237 = vadd.f32 %v235, 1.0
  %v238 = vrcp.pop %v236
  %v239 = vmul.f32 %v236, %v238
  %v240 = vsub.f32 1.0, %v239
  %v241 = vmul.f32 %v238, %v240
  %v242 = vadd.f32 %v238, %v241
  %vm243 = vweird.f32 %v236
  %vm244 = vweird.f32 %v238
  %vm245 = vmor %vm243, %vm244
  %v246 = vsel %vm245, %v238, %v242
  %v247 = vand.u32 2147483647, %v236
  %vm248 = vcmp.eq.f32.partialorder %v247, 8.507059e+37
  %v249 = vand.u32 %v236, 2147483648
  %v250 = vor.u32 1.1754944e-38, %v249
  %v251 = vsel %vm248, %v250, %v246
  %v252 = vmul.f32 1.0, %v251
  %v253 = vrcp.pop %v237
  %v254 = vmul.f32 %v237, %v253
  %v255 = vsub.f32 1.0, %v254
  %v256 = vmul.f32 %v253, %v255
  %v257 = vadd.f32 %v253, %v256
  %vm258 = vweird.f32 %v237
  %vm259 = vweird.f32 %v253
  %vm260 = vmor %vm258, %vm259
  %v261 = vsel %vm260, %v253, %v257
  %v262 = vand.u32 2147483647, %v237
  %vm263 = vcmp.eq.f32.partialorder %v262, 8.507059e+37
  %v264 = vand.u32 %v237, 2147483648
  %v265 = vor.u32 1.1754944e-38, %v264
  %v266 = vsel %vm263, %v265, %v261
  %v267 = vmul.f32 1.0, %v266
  %v268 = vld [vmem:[%s7] sm:$0xf]
  %vm269 = vcmask 31744
  %v271 = vsel %vm269, %v252, 0
  %v274 = vsel %vm269, %v267, 0
  %v277 = vsel %vm59, %v268, 0
  %279 = vmatpush.msra.mxu0 0.0
  %280 = vmatpush.msra.mxu0 0.0
  %281 = vmatpush.msra.mxu0 0.0
  %282 = vmatpush.msra.mxu0 0.0
  %283 = vmatpush.msra.mxu0 0.0
  %284 = vmatpush.msra.mxu0 0.0
  %285 = vmatpush.msra.mxu0 0.0
  %286 = vmatpush.msra.mxu0 0.0
  %287 = vmatpush.msra.mxu0 0.0
  %288 = vmatpush.msra.mxu0 0.0
  %289 = vmatpush.msra.mxu0 0.0
  %290 = vmatpush.msra.mxu0 0.0
  %291 = vmatpush.msra.mxu0 0.0
  %292 = vmatpush.msra.mxu0 0.0
  %293 = vmatpush.msra.mxu0 0.0
  %294 = vmatpush.msra.mxu0 %v277
  %295 = vmatmul.f32.gmra.mxu0 %v271
  %v296 = vpop.f32.mrf.mxu0
  %v297 = vadd.f32 0.0, %v296
  %298 = vmatmul.f32.gmra.mxu0 %v274
  %v299 = vpop.f32.mrf.mxu0
  %v300 = vadd.f32 0.0, %v299
  %301 = vdwg.mxu0
  %v302 = vmul.f32 %v122, %v297
  %v303 = vmul.f32 %v125, %v300
  %v304 = vld [vmem:[%s8] sm:$0xff]
  %v305 = vld [vmem:[%s8 + $0x8] sm:$0xf]
  %v306 = vadd.f32 %v302, %v304
  %v307 = vadd.f32 %v303, %v305
  %308 = vst.msk [vmem:[%s9] sm:$0xff] %vm135, %v306
  %vm309 = vcmask 519168
  %310 = vst.msk [vmem:[%s9 + $0x8] sm:$0xf] %vm309, %v307
  // Predicated region
  $region38: #{forward.130} parent=0 // pred_check
    _
  $region39: #{forward.130} parent=0 // pred_check_branch
    %312 = sbr.rel (0) target = $region41
  $region40: #{forward.130} parent=0 // pred_region
    _
  $region41: #{forward.130} parent=0 // pred_fallthru
    _
  // Predicated region
  $region42: #{forward.130} parent=0 // pred_check
    _
  $region43: #{forward.130} parent=0 // pred_check_branch
    %314 = sbr.rel (0) target = $region45
  $region44: #{forward.130} parent=0 // pred_region
    _
  $region45: #{forward.130} parent=0 // pred_fallthru
    _

// kernel: forward.133
$region0: #{forward.133}
  #allocation0 [shape = 'u32[]', space=smem, size = 0x4, offset = 0x4, fixed_abs, tag = 'smem constant byte address 0x4 - core index']
  #allocation1 [shape = 'u32[72,128]{1,0:T(1,128)}', space=vmem, size = 0x9000, scoped, tag = 'internal scratch']
  %s0 = inlined_call_operand.vmem [shape: f32[12,16], index: 0, kind: input, shape index: {}]
  %s1 = inlined_call_operand.vmem [shape: f32[16,12], index: 1, kind: input, shape index: {}]
  %s2 = inlined_call_operand.vmem [shape: f32[16,16], index: 2, kind: output, shape index: {}]
  %s3 = sld [smem:[#allocation0]]
  $region18: #{forward.133} parent=0
    _
  %s5 = ssub.s32 1, %s3
  %s6 = scalar_select 0, %s5, %s3
  // Predicated region
  $region2: #{forward.133} parent=0 // pred_check
    _
  $region3: #{forward.133} parent=0 // pred_check_branch
    %8 = sbr.rel (0) target = $region5
  $region4: #{forward.133} parent=0 // pred_region
    _
  $region5: #{forward.133} parent=0 // pred_fallthru
    _
  // Predicated region
  $region6: #{forward.133} parent=0 // pred_check
    _
  $region7: #{forward.133} parent=0 // pred_check_branch
    %10 = sbr.rel (0) target = $region9
  $region8: #{forward.133} parent=0 // pred_region
    _
  $region9: #{forward.133} parent=0 // pred_fallthru
    _
  %v11 = vld [vmem:[%s1] sm:$0xff]
  %v12 = vld [vmem:[%s1 + $0x8] sm:$0xff]
  %v13 = vld [vmem:[%s0] sm:$0xff]
  %v14 = vld [vmem:[%s0 + $0x8] sm:$0xf]
  %vm15 = vcmask 97280
  %v17 = vsel %vm15, %v11, 0
  %v20 = vsel %vm15, %v12, 0
  %vm22 = vcmask 1043456
  %v24 = vsel %vm22, %v14, 0
  %26 = vmatpush.msra.mxu0 0.0
  %27 = vmatpush.msra.mxu0 0.0
  %28 = vmatpush.msra.mxu0 0.0
  %29 = vmatpush.msra.mxu0 0.0
  %30 = vmatpush.msra.mxu0 0.0
  %31 = vmatpush.msra.mxu0 0.0
  %32 = vmatpush.msra.mxu0 0.0
  %33 = vmatpush.msra.mxu0 0.0
  %34 = vmatpush.msra.mxu0 0.0
  %35 = vmatpush.msra.mxu0 0.0
  %36 = vmatpush.msra.mxu0 0.0
  %37 = vmatpush.msra.mxu0 0.0
  %38 = vmatpush.msra.mxu0 0.0
  %39 = vmatpush.msra.mxu0 0.0
  %40 = vmatpush.msra.mxu0 %v24
  %41 = vmatpush.msra.mxu0 %v13
  %42 = vmatmul.f32.gmra.mxu0 %v17
  %v43 = vpop.f32.mrf.mxu0
  %v44 = vadd.f32 0.0, %v43
  %45 = vmatmul.f32.gmra.mxu0 %v20
  %v46 = vpop.f32.mrf.mxu0
  %v47 = vadd.f32 0.0, %v46
  %48 = vdwg.mxu0
  %vm49 = vcmask 130048
  %50 = vst.msk [vmem:[%s2] sm:$0xff] %vm49, %v44
  %51 = vst.msk [vmem:[%s2 + $0x8] sm:$0xff] %vm49, %v47
  // Predicated region
  $region10: #{forward.133} parent=0 // pred_check
    _
  $region11: #{forward.133} parent=0 // pred_check_branch
    %53 = sbr.rel (0) target = $region13
  $region12: #{forward.133} parent=0 // pred_region
    _
  $region13: #{forward.133} parent=0 // pred_fallthru
    _
  // Predicated region
  $region14: #{forward.133} parent=0 // pred_check
    _
  $region15: #{forward.133} parent=0 // pred_check_branch
    %55 = sbr.rel (0) target = $region17
  $region16: #{forward.133} parent=0 // pred_region
    _
  $region17: #{forward.133} parent=0 // pred_fallthru
    _

// kernel: tile.214
$region0: #{tile.214}
  %s0 = inlined_call_operand.vmem [shape: f32[16,2,16], index: 0, kind: input, shape index: {}]
  %s1 = inlined_call_operand.vmem [shape: f32[16,32], index: 1, kind: output, shape index: {}]
  $region1: #{tile.214} parent=0
    #allocation0 [shape = 'u8[65536]{0}', space=vmem, size = 0x10000, scoped, tag = 'scoped mem for input reshape']
    %s3 = ssub.s32 4, 1
    %s4 = scalar_lea.vmem %s0, 30
    %v5 = vld [vmem:[%s4] sm:%s3]
    %s6 = scalar_lea.vmem [#allocation0], 120
    %7 = vst [vmem:[%s6] sm:%s3] %v5
    %s8 = scalar_lea.vmem %s0, 28
    %v9 = vld [vmem:[%s8] sm:%s3]
    %s10 = scalar_lea.vmem [#allocation0], 112
    %11 = vst [vmem:[%s10] sm:%s3] %v9
    %s12 = scalar_lea.vmem %s0, 26
    %v13 = vld [vmem:[%s12] sm:%s3]
    %s14 = scalar_lea.vmem [#allocation0], 104
    %15 = vst [vmem:[%s14] sm:%s3] %v13
    %s16 = scalar_lea.vmem %s0, 24
    %v17 = vld [vmem:[%s16] sm:%s3]
    %s18 = scalar_lea.vmem [#allocation0], 96
    %19 = vst [vmem:[%s18] sm:%s3] %v17
    %s20 = scalar_lea.vmem %s0, 22
    %v21 = vld [vmem:[%s20] sm:%s3]
    %s22 = scalar_lea.vmem [#allocation0], 88
    %23 = vst [vmem:[%s22] sm:%s3] %v21
    %s24 = scalar_lea.vmem %s0, 20
    %v25 = vld [vmem:[%s24] sm:%s3]
    %s26 = scalar_lea.vmem [#allocation0], 80
    %27 = vst [vmem:[%s26] sm:%s3] %v25
    %s28 = scalar_lea.vmem %s0, 18
    %v29 = vld [vmem:[%s28] sm:%s3]
    %s30 = scalar_lea.vmem [#allocation0], 72
    %31 = vst [vmem:[%s30] sm:%s3] %v29
    %s32 = scalar_lea.vmem %s0, 16
    %v33 = vld [vmem:[%s32] sm:%s3]
    %s34 = scalar_lea.vmem [#allocation0], 64
    %35 = vst [vmem:[%s34] sm:%s3] %v33
    %s36 = scalar_lea.vmem %s0, 14
    %v37 = vld [vmem:[%s36] sm:%s3]
    %s38 = scalar_lea.vmem [#allocation0], 56
    %39 = vst [vmem:[%s38] sm:%s3] %v37
    %s40 = scalar_lea.vmem %s0, 12
    %v41 = vld [vmem:[%s40] sm:%s3]
    %s42 = scalar_lea.vmem [#allocation0], 48
    %43 = vst [vmem:[%s42] sm:%s3] %v41
    %s44 = scalar_lea.vmem %s0, 10
    %v45 = vld [vmem:[%s44] sm:%s3]
    %s46 = scalar_lea.vmem [#allocation0], 40
    %47 = vst [vmem:[%s46] sm:%s3] %v45
    %s48 = scalar_lea.vmem %s0, 8
    %v49 = vld [vmem:[%s48] sm:%s3]
    %s50 = scalar_lea.vmem [#allocation0], 32
    %51 = vst [vmem:[%s50] sm:%s3] %v49
    %s52 = scalar_lea.vmem %s0, 6
    %v53 = vld [vmem:[%s52] sm:%s3]
    %s54 = scalar_lea.vmem [#allocation0], 24
    %55 = vst [vmem:[%s54] sm:%s3] %v53
    %s56 = scalar_lea.vmem %s0, 4
    %v57 = vld [vmem:[%s56] sm:%s3]
    %s58 = scalar_lea.vmem [#allocation0], 16
    %59 = vst [vmem:[%s58] sm:%s3] %v57
    %s60 = scalar_lea.vmem %s0, 2
    %v61 = vld [vmem:[%s60] sm:%s3]
    %s62 = scalar_lea.vmem [#allocation0], 8
    %63 = vst [vmem:[%s62] sm:%s3] %v61
    %v64 = vld [vmem:[%s0] sm:%s3]
    %65 = vst [vmem:[#allocation0] sm:%s3] %v64
    %v66 = vld [vmem:[#allocation0] ss:$8 sm:$0xf]
    %v67 = vld [vmem:[#allocation0] ss:$8 sm:$0xf0]
    %vm68 = vcmask 1047556
    %v69 = vsel %vm68, %v67, %v66
    %vm70 = vcmask 130048
    %71 = vst.msk [vmem:[%s1] sm:$0xff] %vm70, %v69
    %s72 = scalar_lea.vmem [#allocation0], 64
    %v73 = vld [vmem:[%s72] ss:$8 sm:$0xf]
    %s74 = scalar_lea.vmem [#allocation0], 64
    %v75 = vld [vmem:[%s74] ss:$8 sm:$0xf0]
    %vm76 = vcmask 1047556
    %v77 = vsel %vm76, %v75, %v73
    %vm78 = vcmask 130048
    %s79 = scalar_lea.vmem %s1, 8
    %80 = vst.msk [vmem:[%s79] sm:$0xff] %vm78, %v77
    %s81 = scalar_lea.vmem [#allocation0], 1
    %v82 = vld [vmem:[%s81] ss:$8 sm:$0xf]
    %s83 = scalar_lea.vmem [#allocation0], 1
    %v84 = vld [vmem:[%s83] ss:$8 sm:$0xf0]
    %vm85 = vcmask 1047556
    %v86 = vsel %vm85, %v84, %v82
    %87 = vrot.lane.b32.xlu0 %v86, 16
    %v88 = vpop.permute.xlu0 %87
    %vm89 = vcmask 261248
    %90 = vst.msk [vmem:[%s1] sm:$0xff] %vm89, %v88
    %s91 = scalar_lea.vmem [#allocation0], 65
    %v92 = vld [vmem:[%s91] ss:$8 sm:$0xf]
    %s93 = scalar_lea.vmem [#allocation0], 65
    %v94 = vld [vmem:[%s93] ss:$8 sm:$0xf0]
    %vm95 = vcmask 1047556
    %v96 = vsel %vm95, %v94, %v92
    %97 = vrot.lane.b32.xlu0 %v96, 16
    %v98 = vpop.permute.xlu0 %97
    %vm99 = vcmask 261248
    %s100 = scalar_lea.vmem %s1, 8
    %101 = vst.msk [vmem:[%s100] sm:$0xff] %vm99, %v98

// kernel: forward.134
$region0: #{forward.134}
  #allocation0 [shape = 'u32[]', space=smem, size = 0x4, offset = 0x4, fixed_abs, tag = 'smem constant byte address 0x4 - core index']
  #allocation1 [shape = 'u32[72,128]{1,0:T(1,128)}', space=vmem, size = 0x9000, scoped, tag = 'internal scratch']
  %s0 = inlined_call_operand.vmem [shape: f32[144,16], index: 0, kind: input, shape index: {}]
  %s1 = inlined_call_operand.vmem [shape: f32[16,144], index: 1, kind: input, shape index: {}]
  %s2 = inlined_call_operand.vmem [shape: f32[16,16], index: 2, kind: output, shape index: {}]
  %s3 = sld [smem:[#allocation0]]
  $region18: #{forward.134} parent=0
    _
  %s5 = ssub.s32 1, %s3
  %s6 = scalar_select 0, %s5, %s3
  // Predicated region
  $region2: #{forward.134} parent=0 // pred_check
    _
  $region3: #{forward.134} parent=0 // pred_check_branch
    %8 = sbr.rel (0) target = $region5
  $region4: #{forward.134} parent=0 // pred_region
    _
  $region5: #{forward.134} parent=0 // pred_fallthru
    _
  // Predicated region
  $region6: #{forward.134} parent=0 // pred_check
    _
  $region7: #{forward.134} parent=0 // pred_check_branch
    %10 = sbr.rel (0) target = $region9
  $region8: #{forward.134} parent=0 // pred_region
    _
  $region9: #{forward.134} parent=0 // pred_fallthru
    _
  %v11 = vld [vmem:[%s1] sm:$0xff]
  %v12 = vld [vmem:[%s1 + $0x8] sm:$0xff]
  %v13 = vld [vmem:[%s1 + $0x10] sm:$0xff]
  %v14 = vld [vmem:[%s1 + $0x18] sm:$0xff]
  %v15 = vld [vmem:[%s0] sm:$0xff]
  %v16 = vld [vmem:[%s0 + $0x8] sm:$0xff]
  %v17 = vld [vmem:[%s0 + $0x10] sm:$0xff]
  %v18 = vld [vmem:[%s0 + $0x18] sm:$0xff]
  %v19 = vld [vmem:[%s0 + $0x20] sm:$0xff]
  %v20 = vld [vmem:[%s0 + $0x28] sm:$0xff]
  %v21 = vld [vmem:[%s0 + $0x30] sm:$0xff]
  %v22 = vld [vmem:[%s0 + $0x38] sm:$0xff]
  %v23 = vld [vmem:[%s0 + $0x40] sm:$0xff]
  %v24 = vld [vmem:[%s0 + $0x48] sm:$0xff]
  %v25 = vld [vmem:[%s0 + $0x50] sm:$0xff]
  %v26 = vld [vmem:[%s0 + $0x58] sm:$0xff]
  %v27 = vld [vmem:[%s0 + $0x60] sm:$0xff]
  %v28 = vld [vmem:[%s0 + $0x68] sm:$0xff]
  %v29 = vld [vmem:[%s0 + $0x70] sm:$0xff]
  %v30 = vld [vmem:[%s0 + $0x78] sm:$0xff]
  %v31 = vld [vmem:[%s0 + $0x80] sm:$0xff]
  %v32 = vld [vmem:[%s0 + $0x88] sm:$0xff]
  %vm33 = vcmask 130048
  %v35 = vsel %vm33, %v12, 0
  %v38 = vsel %vm33, %v14, 0
  %40 = vmatpush.msra.mxu0 %v30
  %41 = vmatpush.msra.mxu0 %v29
  %42 = vmatpush.msra.mxu0 %v28
  %43 = vmatpush.msra.mxu0 %v27
  %44 = vmatpush.msra.mxu0 %v26
  %45 = vmatpush.msra.mxu0 %v25
  %46 = vmatpush.msra.mxu0 %v24
  %47 = vmatpush.msra.mxu0 %v23
  %48 = vmatpush.msra.mxu0 %v22
  %49 = vmatpush.msra.mxu0 %v21
  %50 = vmatpush.msra.mxu0 %v20
  %51 = vmatpush.msra.mxu0 %v19
  %52 = vmatpush.msra.mxu0 %v18
  %53 = vmatpush.msra.mxu0 %v17
  %54 = vmatpush.msra.mxu0 %v16
  %55 = vmatpush.msra.mxu0 %v15
  %56 = vmatmul.f32.gmra.mxu0 %v11
  %v57 = vpop.f32.mrf.mxu0
  %v58 = vadd.f32 0.0, %v57
  %59 = vmatmul.f32.gmra.mxu0 %v13
  %v60 = vpop.f32.mrf.mxu0
  %v61 = vadd.f32 0.0, %v60
  %62 = vdwg.mxu0
  %63 = vmatpush.msra.mxu0 0.0
  %64 = vmatpush.msra.mxu0 0.0
  %65 = vmatpush.msra.mxu0 0.0
  %66 = vmatpush.msra.mxu0 0.0
  %67 = vmatpush.msra.mxu0 0.0
  %68 = vmatpush.msra.mxu0 0.0
  %69 = vmatpush.msra.mxu0 0.0
  %70 = vmatpush.msra.mxu0 0.0
  %71 = vmatpush.msra.mxu0 0.0
  %72 = vmatpush.msra.mxu0 0.0
  %73 = vmatpush.msra.mxu0 0.0
  %74 = vmatpush.msra.mxu0 0.0
  %75 = vmatpush.msra.mxu0 0.0
  %76 = vmatpush.msra.mxu0 0.0
  %77 = vmatpush.msra.mxu0 %v32
  %78 = vmatpush.msra.mxu0 %v31
  %79 = vmatmul.f32.gmra.mxu0 %v35
  %v80 = vpop.f32.mrf.mxu0
  %v81 = vadd.f32 %v58, %v80
  %82 = vmatmul.f32.gmra.mxu0 %v38
  %v83 = vpop.f32.mrf.mxu0
  %v84 = vadd.f32 %v61, %v83
  %85 = vdwg.mxu0
  %vm86 = vcmp.ge.f32.partialorder %v81, 0.0
  %vm87 = vcmp.ge.f32.partialorder %v84, 0.0
  %v88 = vmul.f32 %v81, 0.25
  %v89 = vmul.f32 %v84, 0.25
  %v90 = vsel %vm86, %v81, %v88
  %v91 = vsel %vm87, %v84, %v89
  %92 = vst.msk [vmem:[%s2] sm:$0xff] %vm33, %v90
  %93 = vst.msk [vmem:[%s2 + $0x8] sm:$0xff] %vm33, %v91
  // Predicated region
  $region10: #{forward.134} parent=0 // pred_check
    _
  $region11: #{forward.134} parent=0 // pred_check_branch
    %95 = sbr.rel (0) target = $region13
  $region12: #{forward.134} parent=0 // pred_region
    _
  $region13: #{forward.134} parent=0 // pred_fallthru
    _
  // Predicated region
  $region14: #{forward.134} parent=0 // pred_check
    _
  $region15: #{forward.134} parent=0 // pred_check_branch
    %97 = sbr.rel (0) target = $region17
  $region16: #{forward.134} parent=0 // pred_region
    _
  $region17: #{forward.134} parent=0 // pred_fallthru
    _

// kernel: forward.135
$region0: #{forward.135}
  #allocation0 [shape = 'u32[]', space=smem, size = 0x4, offset = 0x4, fixed_abs, tag = 'smem constant byte address 0x4 - core index']
  #allocation1 [shape = 'u32[72,128]{1,0:T(1,128)}', space=vmem, size = 0x9000, scoped, tag = 'internal scratch']
  %s0 = inlined_call_operand.vmem [shape: f32[144,16], index: 0, kind: input, shape index: {}]
  %s1 = inlined_call_operand.vmem [shape: f32[32,144], index: 1, kind: input, shape index: {}]
  %s2 = inlined_call_operand.vmem [shape: f32[32,16], index: 2, kind: input, shape index: {}]
  %s3 = inlined_call_operand.vmem [shape: f32[16,32], index: 3, kind: input, shape index: {}]
  %s4 = inlined_call_operand.vmem [shape: f32[4,16], index: 4, kind: input, shape index: {}]
  %s5 = inlined_call_operand.vmem [shape: f32[16,4], index: 5, kind: input, shape index: {}]
  %s6 = inlined_call_operand.vmem [shape: f32[16,4], index: 6, kind: input, shape index: {}]
  %s7 = inlined_call_operand.vmem [shape: f32[4,16], index: 7, kind: input, shape index: {}]
  %s8 = inlined_call_operand.vmem [shape: f32[16,16], index: 8, kind: input, shape index: {}]
  %s9 = inlined_call_operand.vmem [shape: f32[16,16], index: 9, kind: output, shape index: {}]
  %s10 = sld [smem:[#allocation0]]
  $region46: #{forward.135} parent=0
    _
  %s12 = ssub.s32 1, %s10
  %s13 = scalar_select 0, %s12, %s10
  // Predicated region
  $region2: #{forward.135} parent=0 // pred_check
    _
  $region3: #{forward.135} parent=0 // pred_check_branch
    %15 = sbr.rel (0) target = $region5
  $region4: #{forward.135} parent=0 // pred_region
    _
  $region5: #{forward.135} parent=0 // pred_fallthru
    _
  // Predicated region
  $region6: #{forward.135} parent=0 // pred_check
    _
  $region7: #{forward.135} parent=0 // pred_check_branch
    %17 = sbr.rel (0) target = $region9
  $region8: #{forward.135} parent=0 // pred_region
    _
  $region9: #{forward.135} parent=0 // pred_fallthru
    _
  // Predicated region
  $region10: #{forward.135} parent=0 // pred_check
    _
  $region11: #{forward.135} parent=0 // pred_check_branch
    %19 = sbr.rel (0) target = $region13
  $region12: #{forward.135} parent=0 // pred_region
    _
  $region13: #{forward.135} parent=0 // pred_fallthru
    _
  // Predicated region
  $region14: #{forward.135} parent=0 // pred_check
    _
  $region15: #{forward.135} parent=0 // pred_check_branch
    %21 = sbr.rel (0) target = $region17
  $region16: #{forward.135} parent=0 // pred_region
    _
  $region17: #{forward.135} parent=0 // pred_fallthru
    _
  // Predicated region
  $region18: #{forward.135} parent=0 // pred_check
    _
  $region19: #{forward.135} parent=0 // pred_check_branch
    %23 = sbr.rel (0) target = $region21
  $region20: #{forward.135} parent=0 // pred_region
    _
  $region21: #{forward.135} parent=0 // pred_fallthru
    _
  // Predicated region
  $region22: #{forward.135} parent=0 // pred_check
    _
  $region23: #{forward.135} parent=0 // pred_check_branch
    %25 = sbr.rel (0) target = $region25
  $region24: #{forward.135} parent=0 // pred_region
    _
  $region25: #{forward.135} parent=0 // pred_fallthru
    _
  // Predicated region
  $region26: #{forward.135} parent=0 // pred_check
    _
  $region27: #{forward.135} parent=0 // pred_check_branch
    %27 = sbr.rel (0) target = $region29
  $region28: #{forward.135} parent=0 // pred_region
    _
  $region29: #{forward.135} parent=0 // pred_fallthru
    _
  // Predicated region
  $region30: #{forward.135} parent=0 // pred_check
    _
  $region31: #{forward.135} parent=0 // pred_check_branch
    %29 = sbr.rel (0) target = $region33
  $region32: #{forward.135} parent=0 // pred_region
    _
  $region33: #{forward.135} parent=0 // pred_fallthru
    _
  // Predicated region
  $region34: #{forward.135} parent=0 // pred_check
    _
  $region35: #{forward.135} parent=0 // pred_check_branch
    %31 = sbr.rel (0) target = $region37
  $region36: #{forward.135} parent=0 // pred_region
    _
  $region37: #{forward.135} parent=0 // pred_fallthru
    _
  %v32 = vld [vmem:[%s1] sm:$0xff]
  %v33 = vld [vmem:[%s1 + $0x8] sm:$0xff]
  %v34 = vld [vmem:[%s1 + $0x10] sm:$0xff]
  %v35 = vld [vmem:[%s1 + $0x18] sm:$0xff]
  %v36 = vld [vmem:[%s1 + $0x20] sm:$0xff]
  %v37 = vld [vmem:[%s1 + $0x28] sm:$0xff]
  %v38 = vld [vmem:[%s1 + $0x30] sm:$0xff]
  %v39 = vld [vmem:[%s1 + $0x38] sm:$0xff]
  %v40 = vld [vmem:[%s0] sm:$0xff]
  %v41 = vld [vmem:[%s0 + $0x8] sm:$0xff]
  %v42 = vld [vmem:[%s0 + $0x10] sm:$0xff]
  %v43 = vld [vmem:[%s0 + $0x18] sm:$0xff]
  %v44 = vld [vmem:[%s0 + $0x20] sm:$0xff]
  %v45 = vld [vmem:[%s0 + $0x28] sm:$0xff]
  %v46 = vld [vmem:[%s0 + $0x30] sm:$0xff]
  %v47 = vld [vmem:[%s0 + $0x38] sm:$0xff]
  %v48 = vld [vmem:[%s0 + $0x40] sm:$0xff]
  %v49 = vld [vmem:[%s0 + $0x48] sm:$0xff]
  %v50 = vld [vmem:[%s0 + $0x50] sm:$0xff]
  %v51 = vld [vmem:[%s0 + $0x58] sm:$0xff]
  %v52 = vld [vmem:[%s0 + $0x60] sm:$0xff]
  %v53 = vld [vmem:[%s0 + $0x68] sm:$0xff]
  %v54 = vld [vmem:[%s0 + $0x70] sm:$0xff]
  %v55 = vld [vmem:[%s0 + $0x78] sm:$0xff]
  %v56 = vld [vmem:[%s0 + $0x80] sm:$0xff]
  %v57 = vld [vmem:[%s0 + $0x88] sm:$0xff]
  %vm58 = vcmask 130048
  %v60 = vsel %vm58, %v33, 0
  %v63 = vsel %vm58, %v35, 0
  %v66 = vsel %vm58, %v37, 0
  %v69 = vsel %vm58, %v39, 0
  %71 = vmatpush.msra.mxu0 %v55
  %72 = vmatpush.msra.mxu0 %v54
  %73 = vmatpush.msra.mxu0 %v53
  %74 = vmatpush.msra.mxu0 %v52
  %75 = vmatpush.msra.mxu0 %v51
  %76 = vmatpush.msra.mxu0 %v50
  %77 = vmatpush.msra.mxu0 %v49
  %78 = vmatpush.msra.mxu0 %v48
  %79 = vmatpush.msra.mxu0 %v47
  %80 = vmatpush.msra.mxu0 %v46
  %81 = vmatpush.msra.mxu0 %v45
  %82 = vmatpush.msra.mxu0 %v44
  %83 = vmatpush.msra.mxu0 %v43
  %84 = vmatpush.msra.mxu0 %v42
  %85 = vmatpush.msra.mxu0 %v41
  %86 = vmatpush.msra.mxu0 %v40
  %87 = vmatmul.f32.gmra.mxu0 %v32
  %v88 = vpop.f32.mrf.mxu0
  %v89 = vadd.f32 0.0, %v88
  %90 = vmatmul.f32.gmra.mxu0 %v34
  %v91 = vpop.f32.mrf.mxu0
  %v92 = vadd.f32 0.0, %v91
  %93 = vmatmul.f32.gmra.mxu0 %v36
  %v94 = vpop.f32.mrf.mxu0
  %v95 = vadd.f32 0.0, %v94
  %96 = vmatmul.f32.gmra.mxu0 %v38
  %v97 = vpop.f32.mrf.mxu0
  %v98 = vadd.f32 0.0, %v97
  %99 = vdwg.mxu0
  %100 = vmatpush.msra.mxu0 0.0
  %101 = vmatpush.msra.mxu0 0.0
  %102 = vmatpush.msra.mxu0 0.0
  %103 = vmatpush.msra.mxu0 0.0
  %104 = vmatpush.msra.mxu0 0.0
  %105 = vmatpush.msra.mxu0 0.0
  %106 = vmatpush.msra.mxu0 0.0
  %107 = vmatpush.msra.mxu0 0.0
  %108 = vmatpush.msra.mxu0 0.0
  %109 = vmatpush.msra.mxu0 0.0
  %110 = vmatpush.msra.mxu0 0.0
  %111 = vmatpush.msra.mxu0 0.0
  %112 = vmatpush.msra.mxu0 0.0
  %113 = vmatpush.msra.mxu0 0.0
  %114 = vmatpush.msra.mxu0 %v57
  %115 = vmatpush.msra.mxu0 %v56
  %116 = vmatmul.f32.gmra.mxu0 %v60
  %v117 = vpop.f32.mrf.mxu0
  %v118 = vadd.f32 %v89, %v117
  %119 = vmatmul.f32.gmra.mxu0 %v63
  %v120 = vpop.f32.mrf.mxu0
  %v121 = vadd.f32 %v92, %v120
  %122 = vmatmul.f32.gmra.mxu0 %v66
  %v123 = vpop.f32.mrf.mxu0
  %v124 = vadd.f32 %v95, %v123
  %125 = vmatmul.f32.gmra.mxu0 %v69
  %v126 = vpop.f32.mrf.mxu0
  %v127 = vadd.f32 %v98, %v126
  %128 = vdwg.mxu0
  %v129 = vld [vmem:[%s3] sm:$0xff]
  %v130 = vld [vmem:[%s3 + $0x8] sm:$0xff]
  %v131 = vld [vmem:[%s2] sm:$0xff]
  %v132 = vld [vmem:[%s2 + $0x8] sm:$0xff]
  %v133 = vld [vmem:[%s2 + $0x10] sm:$0xff]
  %v134 = vld [vmem:[%s2 + $0x18] sm:$0xff]
  %v135 = vmul.f32 %v118, %v131
  %v136 = vmul.f32 %v121, %v132
  %v137 = vmul.f32 %v124, %v133
  %v138 = vmul.f32 %v127, %v134
  %vm139 = vcmask 261120
  %v141 = vsel %vm139, %v129, 0
  %v144 = vsel %vm139, %v130, 0
  %146 = vmatpush.msra.mxu0 0.0
  %147 = vmatpush.msra.mxu0 0.0
  %148 = vmatpush.msra.mxu0 0.0
  %149 = vmatpush.msra.mxu0 0.0
  %150 = vmatpush.msra.mxu0 0.0
  %151 = vmatpush.msra.mxu0 0.0
  %152 = vmatpush.msra.mxu0 0.0
  %153 = vmatpush.msra.mxu0 0.0
  %154 = vmatpush.msra.mxu0 0.0
  %155 = vmatpush.msra.mxu0 0.0
  %156 = vmatpush.msra.mxu0 0.0
  %157 = vmatpush.msra.mxu0 0.0
  %158 = vmatpush.msra.mxu0 %v138
  %159 = vmatpush.msra.mxu0 %v137
  %160 = vmatpush.msra.mxu0 %v136
  %161 = vmatpush.msra.mxu0 %v135
  %162 = vmatmul.f32.gmra.mxu0 %v141
  %v163 = vpop.f32.mrf.mxu0
  %v164 = vadd.f32 0.0, %v163
  %165 = vmatmul.f32.gmra.mxu0 %v144
  %v166 = vpop.f32.mrf.mxu0
  %v167 = vadd.f32 0.0, %v166
  %168 = vdwg.mxu0
  %v169 = vld [vmem:[%s6] sm:$0xff]
  %v170 = vld [vmem:[%s6 + $0x8] sm:$0xff]
  %v172 = vsel %vm58, %v164, 0
  %v175 = vsel %vm58, %v167, 0
  %177 = vmatpush.msra.mxu0 0.0
  %178 = vmatpush.msra.mxu0 0.0
  %179 = vmatpush.msra.mxu0 0.0
  %180 = vmatpush.msra.mxu0 0.0
  %181 = vmatpush.msra.mxu0 0.0
  %182 = vmatpush.msra.mxu0 0.0
  %183 = vmatpush.msra.mxu0 0.0
  %184 = vmatpush.msra.mxu0 0.0
  %185 = vmatpush.msra.mxu0 0.0
  %186 = vmatpush.msra.mxu0 0.0
  %187 = vmatpush.msra.mxu0 0.0
  %188 = vmatpush.msra.mxu0 0.0
  %189 = vmatpush.msra.mxu0 0.0
  %190 = vmatpush.msra.mxu0 0.0
  %191 = vmatpush.msra.mxu0 %v170
  %192 = vmatpush.msra.mxu0 %v169
  %193 = vmatmul.f32.gmra.mxu0 %v172
  %v194 = vpop.f32.mrf.mxu0
  %v195 = vadd.f32 0.0, %v194
  %196 = vmatmul.f32.gmra.mxu0 %v175
  %v197 = vpop.f32.mrf.mxu0
  %v198 = vadd.f32 0.0, %v197
  %199 = vdwg.mxu0
  %v200 = vld [vmem:[%s4] sm:$0xf]
  %v202 = vsel %vm58, %v200, 0
  %204 = vmatpush.msra.mxu0 0.0
  %205 = vmatpush.msra.mxu0 0.0
  %206 = vmatpush.msra.mxu0 0.0
  %207 = vmatpush.msra.mxu0 0.0
  %208 = vmatpush.msra.mxu0 0.0
  %209 = vmatpush.msra.mxu0 0.0
  %210 = vmatpush.msra.mxu0 0.0
  %211 = vmatpush.msra.mxu0 0.0
  %212 = vmatpush.msra.mxu0 0.0
  %213 = vmatpush.msra.mxu0 0.0
  %214 = vmatpush.msra.mxu0 0.0
  %215 = vmatpush.msra.mxu0 0.0
  %216 = vmatpush.msra.mxu0 0.0
  %217 = vmatpush.msra.mxu0 0.0
  %218 = vmatpush.msra.mxu0 %v198
  %219 = vmatpush.msra.mxu0 %v195
  %220 = vmatmul.f32.gmra.mxu0 %v202
  %v221 = vpop.f32.mrf.mxu0
  %v222 = vadd.f32 0.0, %v221
  %223 = vdwg.mxu0
  %v224 = vmax.f32 %v222, 0.0
  %v225 = vld [vmem:[%s5] sm:$0xff]
  %v226 = vld [vmem:[%s5 + $0x8] sm:$0xff]
  %vm227 = vcmask 31744
  %v229 = vsel %vm227, %v225, 0
  %v232 = vsel %vm227, %v226, 0
  %vm234 = vcmask 1043456
  %v236 = vsel %vm234, %v224, 0
  %238 = vmatpush.msra.mxu0 0.0
  %239 = vmatpush.msra.mxu0 0.0
  %240 = vmatpush.msra.mxu0 0.0
  %241 = vmatpush.msra.mxu0 0.0
  %242 = vmatpush.msra.mxu0 0.0
  %243 = vmatpush.msra.mxu0 0.0
  %244 = vmatpush.msra.mxu0 0.0
  %245 = vmatpush.msra.mxu0 0.0
  %246 = vmatpush.msra.mxu0 0.0
  %247 = vmatpush.msra.mxu0 0.0
  %248 = vmatpush.msra.mxu0 0.0
  %249 = vmatpush.msra.mxu0 0.0
  %250 = vmatpush.msra.mxu0 0.0
  %251 = vmatpush.msra.mxu0 0.0
  %252 = vmatpush.msra.mxu0 0.0
  %253 = vmatpush.msra.mxu0 %v236
  %254 = vmatmul.f32.gmra.mxu0 %v229
  %v255 = vpop.f32.mrf.mxu0
  %v256 = vadd.f32 0.0, %v255
  %257 = vmatmul.f32.gmra.mxu0 %v232
  %v258 = vpop.f32.mrf.mxu0
  %v259 = vadd.f32 0.0, %v258
  %260 = vdwg.mxu0
  %v261 = vxor.u32 %v256, 2147483648
  %v262 = vxor.u32 %v259, 2147483648
  %v263 = vmul.f32 %v261, 1.442695
  %v264 = vpow.pop %v263
  %v265 = vmul.f32 %v262, 1.442695
  %v266 = vpow.pop %v265
  %v267 = vadd.f32 %v264, 1.0
  %v268 = vadd.f32 %v266, 1.0
  %v269 = vrcp.pop %v267
  %v270 = vmul.f32 %v267, %v269
  %v271 = vsub.f32 1.0, %v270
  %v272 = vmul.f32 %v269, %v271
  %v273 = vadd.f32 %v269, %v272
  %vm274 = vweird.f32 %v267
  %vm275 = vweird.f32 %v269
  %vm276 = vmor %vm274, %vm275
  %v277 = vsel %vm276, %v269, %v273
  %v278 = vand.u32 2147483647, %v267
  %vm279 = vcmp.eq.f32.partialorder %v278, 8.507059e+37
  %v280 = vand.u32 %v267, 2147483648
  %v281 = vor.u32 1.1754944e-38, %v280
  %v282 = vsel %vm279, %v281, %v277
  %v283 = vmul.f32 1.0, %v282
  %v284 = vrcp.pop %v268
  %v285 = vmul.f32 %v268, %v284
  %v286 = vsub.f32 1.0, %v285
  %v287 = vmul.f32 %v284, %v286
  %v288 = vadd.f32 %v284, %v287
  %vm289 = vweird.f32 %v268
  %vm290 = vweird.f32 %v284
  %vm291 = vmor %vm289, %vm290
  %v292 = vsel %vm291, %v284, %v288
  %v293 = vand.u32 2147483647, %v268
  %vm294 = vcmp.eq.f32.partialorder %v293, 8.507059e+37
  %v295 = vand.u32 %v268, 2147483648
  %v296 = vor.u32 1.1754944e-38, %v295
  %v297 = vsel %vm294, %v296, %v292
  %v298 = vmul.f32 1.0, %v297
  %v299 = vld [vmem:[%s7] sm:$0xf]
  %v301 = vsel %vm227, %v283, 0
  %v304 = vsel %vm227, %v298, 0
  %v307 = vsel %vm234, %v299, 0
  %309 = vmatpush.msra.mxu0 0.0
  %310 = vmatpush.msra.mxu0 0.0
  %311 = vmatpush.msra.mxu0 0.0
  %312 = vmatpush.msra.mxu0 0.0
  %313 = vmatpush.msra.mxu0 0.0
  %314 = vmatpush.msra.mxu0 0.0
  %315 = vmatpush.msra.mxu0 0.0
  %316 = vmatpush.msra.mxu0 0.0
  %317 = vmatpush.msra.mxu0 0.0
  %318 = vmatpush.msra.mxu0 0.0
  %319 = vmatpush.msra.mxu0 0.0
  %320 = vmatpush.msra.mxu0 0.0
  %321 = vmatpush.msra.mxu0 0.0
  %322 = vmatpush.msra.mxu0 0.0
  %323 = vmatpush.msra.mxu0 0.0
  %324 = vmatpush.msra.mxu0 %v307
  %325 = vmatmul.f32.gmra.mxu0 %v301
  %v326 = vpop.f32.mrf.mxu0
  %v327 = vadd.f32 0.0, %v326
  %328 = vmatmul.f32.gmra.mxu0 %v304
  %v329 = vpop.f32.mrf.mxu0
  %v330 = vadd.f32 0.0, %v329
  %331 = vdwg.mxu0
  %v332 = vmul.f32 %v164, %v327
  %v333 = vmul.f32 %v167, %v330
  %v334 = vld [vmem:[%s8] sm:$0xff]
  %v335 = vld [vmem:[%s8 + $0x8] sm:$0xff]
  %v336 = vadd.f32 %v332, %v334
  %v337 = vadd.f32 %v333, %v335
  %338 = vst.msk [vmem:[%s9] sm:$0xff] %vm58, %v336
  %339 = vst.msk [vmem:[%s9 + $0x8] sm:$0xff] %vm58, %v337
  // Predicated region
  $region38: #{forward.135} parent=0 // pred_check
    _
  $region39: #{forward.135} parent=0 // pred_check_branch
    %341 = sbr.rel (0) target = $region41
  $region40: #{forward.135} parent=0 // pred_region
    _
  $region41: #{forward.135} parent=0 // pred_fallthru
    _
  // Predicated region
  $region42: #{forward.135} parent=0 // pred_check
    _
  $region43: #{forward.135} parent=0 // pred_check_branch
    %343 = sbr.rel (0) target = $region45
  $region44: #{forward.135} parent=0 // pred_region
    _
  $region45: #{forward.135} parent=0 // pred_fallthru
    _

// kernel: forward.139
$region0: #{forward.139}
  #allocation0 [shape = 'u32[]', space=smem, size = 0x4, offset = 0x4, fixed_abs, tag = 'smem constant byte address 0x4 - core index']
  #allocation1 [shape = 'u32[72,128]{1,0:T(1,128)}', space=vmem, size = 0x9000, scoped, tag = 'internal scratch']
  %s0 = inlined_call_operand.vmem [shape: f32[144,16], index: 0, kind: input, shape index: {}]
  %s1 = inlined_call_operand.vmem [shape: f32[32,144], index: 1, kind: input, shape index: {}]
  %s2 = inlined_call_operand.vmem [shape: f32[32,16], index: 2, kind: input, shape index: {}]
  %s3 = inlined_call_operand.vmem [shape: f32[16,32], index: 3, kind: input, shape index: {}]
  %s4 = inlined_call_operand.vmem [shape: f32[4,16], index: 4, kind: input, shape index: {}]
  %s5 = inlined_call_operand.vmem [shape: f32[16,4], index: 5, kind: input, shape index: {}]
  %s6 = inlined_call_operand.vmem [shape: f32[16,2], index: 6, kind: input, shape index: {}]
  %s7 = inlined_call_operand.vmem [shape: f32[2,16], index: 7, kind: input, shape index: {}]
  %s8 = inlined_call_operand.vmem [shape: f32[16,16], index: 8, kind: input, shape index: {}]
  %s9 = inlined_call_operand.vmem [shape: f32[16,16], index: 9, kind: output, shape index: {}]
  %s10 = sld [smem:[#allocation0]]
  $region46: #{forward.139} parent=0
    _
  %s12 = ssub.s32 1, %s10
  %s13 = scalar_select 0, %s12, %s10
  // Predicated region
  $region2: #{forward.139} parent=0 // pred_check
    _
  $region3: #{forward.139} parent=0 // pred_check_branch
    %15 = sbr.rel (0) target = $region5
  $region4: #{forward.139} parent=0 // pred_region
    _
  $region5: #{forward.139} parent=0 // pred_fallthru
    _
  // Predicated region
  $region6: #{forward.139} parent=0 // pred_check
    _
  $region7: #{forward.139} parent=0 // pred_check_branch
    %17 = sbr.rel (0) target = $region9
  $region8: #{forward.139} parent=0 // pred_region
    _
  $region9: #{forward.139} parent=0 // pred_fallthru
    _
  // Predicated region
  $region10: #{forward.139} parent=0 // pred_check
    _
  $region11: #{forward.139} parent=0 // pred_check_branch
    %19 = sbr.rel (0) target = $region13
  $region12: #{forward.139} parent=0 // pred_region
    _
  $region13: #{forward.139} parent=0 // pred_fallthru
    _
  // Predicated region
  $region14: #{forward.139} parent=0 // pred_check
    _
  $region15: #{forward.139} parent=0 // pred_check_branch
    %21 = sbr.rel (0) target = $region17
  $region16: #{forward.139} parent=0 // pred_region
    _
  $region17: #{forward.139} parent=0 // pred_fallthru
    _
  // Predicated region
  $region18: #{forward.139} parent=0 // pred_check
    _
  $region19: #{forward.139} parent=0 // pred_check_branch
    %23 = sbr.rel (0) target = $region21
  $region20: #{forward.139} parent=0 // pred_region
    _
  $region21: #{forward.139} parent=0 // pred_fallthru
    _
  // Predicated region
  $region22: #{forward.139} parent=0 // pred_check
    _
  $region23: #{forward.139} parent=0 // pred_check_branch
    %25 = sbr.rel (0) target = $region25
  $region24: #{forward.139} parent=0 // pred_region
    _
  $region25: #{forward.139} parent=0 // pred_fallthru
    _
  // Predicated region
  $region26: #{forward.139} parent=0 // pred_check
    _
  $region27: #{forward.139} parent=0 // pred_check_branch
    %27 = sbr.rel (0) target = $region29
  $region28: #{forward.139} parent=0 // pred_region
    _
  $region29: #{forward.139} parent=0 // pred_fallthru
    _
  // Predicated region
  $region30: #{forward.139} parent=0 // pred_check
    _
  $region31: #{forward.139} parent=0 // pred_check_branch
    %29 = sbr.rel (0) target = $region33
  $region32: #{forward.139} parent=0 // pred_region
    _
  $region33: #{forward.139} parent=0 // pred_fallthru
    _
  // Predicated region
  $region34: #{forward.139} parent=0 // pred_check
    _
  $region35: #{forward.139} parent=0 // pred_check_branch
    %31 = sbr.rel (0) target = $region37
  $region36: #{forward.139} parent=0 // pred_region
    _
  $region37: #{forward.139} parent=0 // pred_fallthru
    _
  %v32 = vld [vmem:[%s1] sm:$0xff]
  %v33 = vld [vmem:[%s1 + $0x8] sm:$0xff]
  %v34 = vld [vmem:[%s1 + $0x10] sm:$0xff]
  %v35 = vld [vmem:[%s1 + $0x18] sm:$0xff]
  %v36 = vld [vmem:[%s1 + $0x20] sm:$0xff]
  %v37 = vld [vmem:[%s1 + $0x28] sm:$0xff]
  %v38 = vld [vmem:[%s1 + $0x30] sm:$0xff]
  %v39 = vld [vmem:[%s1 + $0x38] sm:$0xff]
  %v40 = vld [vmem:[%s0] sm:$0xff]
  %v41 = vld [vmem:[%s0 + $0x8] sm:$0xff]
  %v42 = vld [vmem:[%s0 + $0x10] sm:$0xff]
  %v43 = vld [vmem:[%s0 + $0x18] sm:$0xff]
  %v44 = vld [vmem:[%s0 + $0x20] sm:$0xff]
  %v45 = vld [vmem:[%s0 + $0x28] sm:$0xff]
  %v46 = vld [vmem:[%s0 + $0x30] sm:$0xff]
  %v47 = vld [vmem:[%s0 + $0x38] sm:$0xff]
  %v48 = vld [vmem:[%s0 + $0x40] sm:$0xff]
  %v49 = vld [vmem:[%s0 + $0x48] sm:$0xff]
  %v50 = vld [vmem:[%s0 + $0x50] sm:$0xff]
  %v51 = vld [vmem:[%s0 + $0x58] sm:$0xff]
  %v52 = vld [vmem:[%s0 + $0x60] sm:$0xff]
  %v53 = vld [vmem:[%s0 + $0x68] sm:$0xff]
  %v54 = vld [vmem:[%s0 + $0x70] sm:$0xff]
  %v55 = vld [vmem:[%s0 + $0x78] sm:$0xff]
  %v56 = vld [vmem:[%s0 + $0x80] sm:$0xff]
  %v57 = vld [vmem:[%s0 + $0x88] sm:$0xff]
  %vm58 = vcmask 130048
  %v60 = vsel %vm58, %v33, 0
  %v63 = vsel %vm58, %v35, 0
  %v66 = vsel %vm58, %v37, 0
  %v69 = vsel %vm58, %v39, 0
  %71 = vmatpush.msra.mxu0 %v55
  %72 = vmatpush.msra.mxu0 %v54
  %73 = vmatpush.msra.mxu0 %v53
  %74 = vmatpush.msra.mxu0 %v52
  %75 = vmatpush.msra.mxu0 %v51
  %76 = vmatpush.msra.mxu0 %v50
  %77 = vmatpush.msra.mxu0 %v49
  %78 = vmatpush.msra.mxu0 %v48
  %79 = vmatpush.msra.mxu0 %v47
  %80 = vmatpush.msra.mxu0 %v46
  %81 = vmatpush.msra.mxu0 %v45
  %82 = vmatpush.msra.mxu0 %v44
  %83 = vmatpush.msra.mxu0 %v43
  %84 = vmatpush.msra.mxu0 %v42
  %85 = vmatpush.msra.mxu0 %v41
  %86 = vmatpush.msra.mxu0 %v40
  %87 = vmatmul.f32.gmra.mxu0 %v32
  %v88 = vpop.f32.mrf.mxu0
  %v89 = vadd.f32 0.0, %v88
  %90 = vmatmul.f32.gmra.mxu0 %v34
  %v91 = vpop.f32.mrf.mxu0
  %v92 = vadd.f32 0.0, %v91
  %93 = vmatmul.f32.gmra.mxu0 %v36
  %v94 = vpop.f32.mrf.mxu0
  %v95 = vadd.f32 0.0, %v94
  %96 = vmatmul.f32.gmra.mxu0 %v38
  %v97 = vpop.f32.mrf.mxu0
  %v98 = vadd.f32 0.0, %v97
  %99 = vdwg.mxu0
  %100 = vmatpush.msra.mxu0 0.0
  %101 = vmatpush.msra.mxu0 0.0
  %102 = vmatpush.msra.mxu0 0.0
  %103 = vmatpush.msra.mxu0 0.0
  %104 = vmatpush.msra.mxu0 0.0
  %105 = vmatpush.msra.mxu0 0.0
  %106 = vmatpush.msra.mxu0 0.0
  %107 = vmatpush.msra.mxu0 0.0
  %108 = vmatpush.msra.mxu0 0.0
  %109 = vmatpush.msra.mxu0 0.0
  %110 = vmatpush.msra.mxu0 0.0
  %111 = vmatpush.msra.mxu0 0.0
  %112 = vmatpush.msra.mxu0 0.0
  %113 = vmatpush.msra.mxu0 0.0
  %114 = vmatpush.msra.mxu0 %v57
  %115 = vmatpush.msra.mxu0 %v56
  %116 = vmatmul.f32.gmra.mxu0 %v60
  %v117 = vpop.f32.mrf.mxu0
  %v118 = vadd.f32 %v89, %v117
  %119 = vmatmul.f32.gmra.mxu0 %v63
  %v120 = vpop.f32.mrf.mxu0
  %v121 = vadd.f32 %v92, %v120
  %122 = vmatmul.f32.gmra.mxu0 %v66
  %v123 = vpop.f32.mrf.mxu0
  %v124 = vadd.f32 %v95, %v123
  %125 = vmatmul.f32.gmra.mxu0 %v69
  %v126 = vpop.f32.mrf.mxu0
  %v127 = vadd.f32 %v98, %v126
  %128 = vdwg.mxu0
  %v129 = vld [vmem:[%s3] sm:$0xff]
  %v130 = vld [vmem:[%s3 + $0x8] sm:$0xff]
  %v131 = vld [vmem:[%s2] sm:$0xff]
  %v132 = vld [vmem:[%s2 + $0x8] sm:$0xff]
  %v133 = vld [vmem:[%s2 + $0x10] sm:$0xff]
  %v134 = vld [vmem:[%s2 + $0x18] sm:$0xff]
  %v135 = vmul.f32 %v118, %v131
  %v136 = vmul.f32 %v121, %v132
  %v137 = vmul.f32 %v124, %v133
  %v138 = vmul.f32 %v127, %v134
  %vm139 = vcmask 261120
  %v141 = vsel %vm139, %v129, 0
  %v144 = vsel %vm139, %v130, 0
  %146 = vmatpush.msra.mxu0 0.0
  %147 = vmatpush.msra.mxu0 0.0
  %148 = vmatpush.msra.mxu0 0.0
  %149 = vmatpush.msra.mxu0 0.0
  %150 = vmatpush.msra.mxu0 0.0
  %151 = vmatpush.msra.mxu0 0.0
  %152 = vmatpush.msra.mxu0 0.0
  %153 = vmatpush.msra.mxu0 0.0
  %154 = vmatpush.msra.mxu0 0.0
  %155 = vmatpush.msra.mxu0 0.0
  %156 = vmatpush.msra.mxu0 0.0
  %157 = vmatpush.msra.mxu0 0.0
  %158 = vmatpush.msra.mxu0 %v138
  %159 = vmatpush.msra.mxu0 %v137
  %160 = vmatpush.msra.mxu0 %v136
  %161 = vmatpush.msra.mxu0 %v135
  %162 = vmatmul.f32.gmra.mxu0 %v141
  %v163 = vpop.f32.mrf.mxu0
  %v164 = vadd.f32 0.0, %v163
  %165 = vmatmul.f32.gmra.mxu0 %v144
  %v166 = vpop.f32.mrf.mxu0
  %v167 = vadd.f32 0.0, %v166
  %168 = vdwg.mxu0
  %v169 = vld [vmem:[%s6] sm:$0xff]
  %v170 = vld [vmem:[%s6 + $0x8] sm:$0xff]
  %v172 = vsel %vm58, %v164, 0
  %v175 = vsel %vm58, %v167, 0
  %177 = vmatpush.msra.mxu0 0.0
  %178 = vmatpush.msra.mxu0 0.0
  %179 = vmatpush.msra.mxu0 0.0
  %180 = vmatpush.msra.mxu0 0.0
  %181 = vmatpush.msra.mxu0 0.0
  %182 = vmatpush.msra.mxu0 0.0
  %183 = vmatpush.msra.mxu0 0.0
  %184 = vmatpush.msra.mxu0 0.0
  %185 = vmatpush.msra.mxu0 0.0
  %186 = vmatpush.msra.mxu0 0.0
  %187 = vmatpush.msra.mxu0 0.0
  %188 = vmatpush.msra.mxu0 0.0
  %189 = vmatpush.msra.mxu0 0.0
  %190 = vmatpush.msra.mxu0 0.0
  %191 = vmatpush.msra.mxu0 %v170
  %192 = vmatpush.msra.mxu0 %v169
  %193 = vmatmul.f32.gmra.mxu0 %v172
  %v194 = vpop.f32.mrf.mxu0
  %v195 = vadd.f32 0.0, %v194
  %196 = vmatmul.f32.gmra.mxu0 %v175
  %v197 = vpop.f32.mrf.mxu0
  %v198 = vadd.f32 0.0, %v197
  %199 = vdwg.mxu0
  %v200 = vld [vmem:[%s4] sm:$0xf]
  %v202 = vsel %vm58, %v200, 0
  %204 = vmatpush.msra.mxu0 0.0
  %205 = vmatpush.msra.mxu0 0.0
  %206 = vmatpush.msra.mxu0 0.0
  %207 = vmatpush.msra.mxu0 0.0
  %208 = vmatpush.msra.mxu0 0.0
  %209 = vmatpush.msra.mxu0 0.0
  %210 = vmatpush.msra.mxu0 0.0
  %211 = vmatpush.msra.mxu0 0.0
  %212 = vmatpush.msra.mxu0 0.0
  %213 = vmatpush.msra.mxu0 0.0
  %214 = vmatpush.msra.mxu0 0.0
  %215 = vmatpush.msra.mxu0 0.0
  %216 = vmatpush.msra.mxu0 0.0
  %217 = vmatpush.msra.mxu0 0.0
  %218 = vmatpush.msra.mxu0 %v198
  %219 = vmatpush.msra.mxu0 %v195
  %220 = vmatmul.f32.gmra.mxu0 %v202
  %v221 = vpop.f32.mrf.mxu0
  %v222 = vadd.f32 0.0, %v221
  %223 = vdwg.mxu0
  %v224 = vmax.f32 %v222, 0.0
  %v225 = vld [vmem:[%s5] sm:$0xff]
  %v226 = vld [vmem:[%s5 + $0x8] sm:$0xff]
  %vm227 = vcmask 31744
  %v229 = vsel %vm227, %v225, 0
  %v232 = vsel %vm227, %v226, 0
  %vm234 = vcmask 1043456
  %v236 = vsel %vm234, %v224, 0
  %238 = vmatpush.msra.mxu0 0.0
  %239 = vmatpush.msra.mxu0 0.0
  %240 = vmatpush.msra.mxu0 0.0
  %241 = vmatpush.msra.mxu0 0.0
  %242 = vmatpush.msra.mxu0 0.0
  %243 = vmatpush.msra.mxu0 0.0
  %244 = vmatpush.msra.mxu0 0.0
  %245 = vmatpush.msra.mxu0 0.0
  %246 = vmatpush.msra.mxu0 0.0
  %247 = vmatpush.msra.mxu0 0.0
  %248 = vmatpush.msra.mxu0 0.0
  %249 = vmatpush.msra.mxu0 0.0
  %250 = vmatpush.msra.mxu0 0.0
  %251 = vmatpush.msra.mxu0 0.0
  %252 = vmatpush.msra.mxu0 0.0
  %253 = vmatpush.msra.mxu0 %v236
  %254 = vmatmul.f32.gmra.mxu0 %v229
  %v255 = vpop.f32.mrf.mxu0
  %v256 = vadd.f32 0.0, %v255
  %257 = vmatmul.f32.gmra.mxu0 %v232
  %v258 = vpop.f32.mrf.mxu0
  %v259 = vadd.f32 0.0, %v258
  %260 = vdwg.mxu0
  %v261 = vxor.u32 %v256, 2147483648
  %v262 = vxor.u32 %v259, 2147483648
  %v263 = vmul.f32 %v261, 1.442695
  %v264 = vpow.pop %v263
  %v265 = vmul.f32 %v262, 1.442695
  %v266 = vpow.pop %v265
  %v267 = vadd.f32 %v264, 1.0
  %v268 = vadd.f32 %v266, 1.0
  %v269 = vrcp.pop %v267
  %v270 = vmul.f32 %v267, %v269
  %v271 = vsub.f32 1.0, %v270
  %v272 = vmul.f32 %v269, %v271
  %v273 = vadd.f32 %v269, %v272
  %vm274 = vweird.f32 %v267
  %vm275 = vweird.f32 %v269
  %vm276 = vmor %vm274, %vm275
  %v277 = vsel %vm276, %v269, %v273
  %v278 = vand.u32 2147483647, %v267
  %vm279 = vcmp.eq.f32.partialorder %v278, 8.507059e+37
  %v280 = vand.u32 %v267, 2147483648
  %v281 = vor.u32 1.1754944e-38, %v280
  %v282 = vsel %vm279, %v281, %v277
  %v283 = vmul.f32 1.0, %v282
  %v284 = vrcp.pop %v268
  %v285 = vmul.f32 %v268, %v284
  %v286 = vsub.f32 1.0, %v285
  %v287 = vmul.f32 %v284, %v286
  %v288 = vadd.f32 %v284, %v287
  %vm289 = vweird.f32 %v268
  %vm290 = vweird.f32 %v284
  %vm291 = vmor %vm289, %vm290
  %v292 = vsel %vm291, %v284, %v288
  %v293 = vand.u32 2147483647, %v268
  %vm294 = vcmp.eq.f32.partialorder %v293, 8.507059e+37
  %v295 = vand.u32 %v268, 2147483648
  %v296 = vor.u32 1.1754944e-38, %v295
  %v297 = vsel %vm294, %v296, %v292
  %v298 = vmul.f32 1.0, %v297
  %v299 = vld [vmem:[%s7] sm:$0x3]
  %vm300 = vcmask 15360
  %v302 = vsel %vm300, %v283, 0
  %v305 = vsel %vm300, %v298, 0
  %vm307 = vcmask 1041408
  %v309 = vsel %vm307, %v299, 0
  %311 = vmatpush.msra.mxu0 0.0
  %312 = vmatpush.msra.mxu0 0.0
  %313 = vmatpush.msra.mxu0 0.0
  %314 = vmatpush.msra.mxu0 0.0
  %315 = vmatpush.msra.mxu0 0.0
  %316 = vmatpush.msra.mxu0 0.0
  %317 = vmatpush.msra.mxu0 0.0
  %318 = vmatpush.msra.mxu0 0.0
  %319 = vmatpush.msra.mxu0 0.0
  %320 = vmatpush.msra.mxu0 0.0
  %321 = vmatpush.msra.mxu0 0.0
  %322 = vmatpush.msra.mxu0 0.0
  %323 = vmatpush.msra.mxu0 0.0
  %324 = vmatpush.msra.mxu0 0.0
  %325 = vmatpush.msra.mxu0 0.0
  %326 = vmatpush.msra.mxu0 %v309
  %327 = vmatmul.f32.gmra.mxu0 %v302
  %v328 = vpop.f32.mrf.mxu0
  %v329 = vadd.f32 0.0, %v328
  %330 = vmatmul.f32.gmra.mxu0 %v305
  %v331 = vpop.f32.mrf.mxu0
  %v332 = vadd.f32 0.0, %v331
  %333 = vdwg.mxu0
  %v334 = vmul.f32 %v164, %v329
  %v335 = vmul.f32 %v167, %v332
  %v336 = vld [vmem:[%s8] sm:$0xff]
  %v337 = vld [vmem:[%s8 + $0x8] sm:$0xff]
  %v338 = vadd.f32 %v334, %v336
  %v339 = vadd.f32 %v335, %v337
  %340 = vst.msk [vmem:[%s9] sm:$0xff] %vm58, %v338
  %341 = vst.msk [vmem:[%s9 + $0x8] sm:$0xff] %vm58, %v339
  // Predicated region
  $region38: #{forward.139} parent=0 // pred_check
    _
  $region39: #{forward.139} parent=0 // pred_check_branch
    %343 = sbr.rel (0) target = $region41
  $region40: #{forward.139} parent=0 // pred_region
    _
  $region41: #{forward.139} parent=0 // pred_fallthru
    _
  // Predicated region
  $region42: #{forward.139} parent=0 // pred_check
    _
  $region43: #{forward.139} parent=0 // pred_check_branch
    %345 = sbr.rel (0) target = $region45
  $region44: #{forward.139} parent=0 // pred_region
    _
  $region45: #{forward.139} parent=0 // pred_fallthru
    _

// kernel: forward.144
$region0: #{forward.144}
  #allocation0 [shape = 'u32[]', space=smem, size = 0x4, offset = 0x4, fixed_abs, tag = 'smem constant byte address 0x4 - core index']
  #allocation1 [shape = 'u32[72,128]{1,0:T(1,128)}', space=vmem, size = 0x9000, scoped, tag = 'internal scratch']
  %s0 = inlined_call_operand.vmem [shape: f32[16,64], index: 0, kind: input, shape index: {}]
  %s1 = inlined_call_operand.vmem [shape: f32[12,16], index: 1, kind: input, shape index: {}]
  %s2 = inlined_call_operand.vmem [shape: f32[12,64], index: 2, kind: input, shape index: {}]
  %s3 = inlined_call_operand.vmem [shape: f32[12,64], index: 3, kind: output, shape index: {}]
  %s4 = sld [smem:[#allocation0]]
  $region22: #{forward.144} parent=0
    _
  %s6 = ssub.s32 1, %s4
  %s7 = scalar_select 0, %s6, %s4
  // Predicated region
  $region2: #{forward.144} parent=0 // pred_check
    _
  $region3: #{forward.144} parent=0 // pred_check_branch
    %9 = sbr.rel (0) target = $region5
  $region4: #{forward.144} parent=0 // pred_region
    _
  $region5: #{forward.144} parent=0 // pred_fallthru
    _
  // Predicated region
  $region6: #{forward.144} parent=0 // pred_check
    _
  $region7: #{forward.144} parent=0 // pred_check_branch
    %11 = sbr.rel (0) target = $region9
  $region8: #{forward.144} parent=0 // pred_region
    _
  $region9: #{forward.144} parent=0 // pred_fallthru
    _
  // Predicated region
  $region10: #{forward.144} parent=0 // pred_check
    _
  $region11: #{forward.144} parent=0 // pred_check_branch
    %13 = sbr.rel (0) target = $region13
  $region12: #{forward.144} parent=0 // pred_region
    _
  $region13: #{forward.144} parent=0 // pred_fallthru
    _
  %v14 = vld [vmem:[%s1] sm:$0xff]
  %v15 = vld [vmem:[%s1 + $0x8] sm:$0xf]
  %v16 = vld [vmem:[%s0] sm:$0xff]
  %v17 = vld [vmem:[%s0 + $0x8] sm:$0xff]
  %v18 = vld [vmem:[%s2] sm:$0xff]
  %v19 = vld [vmem:[%s2 + $0x8] sm:$0xf]
  %vm20 = vcmask 130048
  %v22 = vsel %vm20, %v14, 0
  %v25 = vsel %vm20, %v15, 0
  %27 = vmatpush.msra.mxu0 0.0
  %28 = vmatpush.msra.mxu0 0.0
  %29 = vmatpush.msra.mxu0 0.0
  %30 = vmatpush.msra.mxu0 0.0
  %31 = vmatpush.msra.mxu0 0.0
  %32 = vmatpush.msra.mxu0 0.0
  %33 = vmatpush.msra.mxu0 0.0
  %34 = vmatpush.msra.mxu0 0.0
  %35 = vmatpush.msra.mxu0 0.0
  %36 = vmatpush.msra.mxu0 0.0
  %37 = vmatpush.msra.mxu0 0.0
  %38 = vmatpush.msra.mxu0 0.0
  %39 = vmatpush.msra.mxu0 0.0
  %40 = vmatpush.msra.mxu0 0.0
  %41 = vmatpush.msra.mxu0 %v17
  %42 = vmatpush.msra.mxu0 %v16
  %43 = vmatmul.f32.gmra.mxu0 %v22
  %v44 = vpop.f32.mrf.mxu0
  %v45 = vadd.f32 %v18, %v44
  %46 = vmatmul.f32.gmra.mxu0 %v25
  %v47 = vpop.f32.mrf.mxu0
  %v48 = vadd.f32 %v19, %v47
  %49 = vdwg.mxu0
  %vm50 = vcmask 523264
  %51 = vst.msk [vmem:[%s3] sm:$0xff] %vm50, %v45
  %vm52 = vcmask 519168
  %53 = vst.msk [vmem:[%s3 + $0x8] sm:$0xf] %vm52, %v48
  // Predicated region
  $region14: #{forward.144} parent=0 // pred_check
    _
  $region15: #{forward.144} parent=0 // pred_check_branch
    %55 = sbr.rel (0) target = $region17
  $region16: #{forward.144} parent=0 // pred_region
    _
  $region17: #{forward.144} parent=0 // pred_fallthru
    _
  // Predicated region
  $region18: #{forward.144} parent=0 // pred_check
    _
  $region19: #{forward.144} parent=0 // pred_check_branch
    %57 = sbr.rel (0) target = $region21
  $region20: #{forward.144} parent=0 // pred_region
    _
  $region21: #{forward.144} parent=0 // pred_fallthru
    _

// kernel: forward.143
$region0: #{forward.143}
  #allocation0 [shape = 'u32[]', space=smem, size = 0x4, offset = 0x4, fixed_abs, tag = 'smem constant byte address 0x4 - core index']
  #allocation1 [shape = 'u32[72,128]{1,0:T(1,128)}', space=vmem, size = 0x9000, scoped, tag = 'internal scratch']
  %s0 = inlined_call_operand.vmem [shape: f32[108,64], index: 0, kind: input, shape index: {}]
  %s1 = inlined_call_operand.vmem [shape: f32[24,108], index: 1, kind: input, shape index: {}]
  %s2 = inlined_call_operand.vmem [shape: f32[24,64], index: 2, kind: input, shape index: {}]
  %s3 = inlined_call_operand.vmem [shape: f32[12,24], index: 3, kind: input, shape index: {}]
  %s4 = inlined_call_operand.vmem [shape: f32[3,12], index: 4, kind: input, shape index: {}]
  %s5 = inlined_call_operand.vmem [shape: f32[12,3], index: 5, kind: input, shape index: {}]
  %s6 = inlined_call_operand.vmem [shape: f32[64,2], index: 6, kind: input, shape index: {}]
  %s7 = inlined_call_operand.vmem [shape: f32[2,64], index: 7, kind: input, shape index: {}]
  %s8 = inlined_call_operand.vmem [shape: f32[12,64], index: 8, kind: input, shape index: {}]
  %s9 = inlined_call_operand.vmem [shape: f32[12,64], index: 9, kind: output, shape index: {}]
  %s10 = sld [smem:[#allocation0]]
  $region46: #{forward.143} parent=0
    _
  %s12 = ssub.s32 1, %s10
  %s13 = scalar_select 0, %s12, %s10
  // Predicated region
  $region2: #{forward.143} parent=0 // pred_check
    _
  $region3: #{forward.143} parent=0 // pred_check_branch
    %15 = sbr.rel (0) target = $region5
  $region4: #{forward.143} parent=0 // pred_region
    _
  $region5: #{forward.143} parent=0 // pred_fallthru
    _
  // Predicated region
  $region6: #{forward.143} parent=0 // pred_check
    _
  $region7: #{forward.143} parent=0 // pred_check_branch
    %17 = sbr.rel (0) target = $region9
  $region8: #{forward.143} parent=0 // pred_region
    _
  $region9: #{forward.143} parent=0 // pred_fallthru
    _
  // Predicated region
  $region10: #{forward.143} parent=0 // pred_check
    _
  $region11: #{forward.143} parent=0 // pred_check_branch
    %19 = sbr.rel (0) target = $region13
  $region12: #{forward.143} parent=0 // pred_region
    _
  $region13: #{forward.143} parent=0 // pred_fallthru
    _
  // Predicated region
  $region14: #{forward.143} parent=0 // pred_check
    _
  $region15: #{forward.143} parent=0 // pred_check_branch
    %21 = sbr.rel (0) target = $region17
  $region16: #{forward.143} parent=0 // pred_region
    _
  $region17: #{forward.143} parent=0 // pred_fallthru
    _
  // Predicated region
  $region18: #{forward.143} parent=0 // pred_check
    _
  $region19: #{forward.143} parent=0 // pred_check_branch
    %23 = sbr.rel (0) target = $region21
  $region20: #{forward.143} parent=0 // pred_region
    _
  $region21: #{forward.143} parent=0 // pred_fallthru
    _
  // Predicated region
  $region22: #{forward.143} parent=0 // pred_check
    _
  $region23: #{forward.143} parent=0 // pred_check_branch
    %25 = sbr.rel (0) target = $region25
  $region24: #{forward.143} parent=0 // pred_region
    _
  $region25: #{forward.143} parent=0 // pred_fallthru
    _
  // Predicated region
  $region26: #{forward.143} parent=0 // pred_check
    _
  $region27: #{forward.143} parent=0 // pred_check_branch
    %27 = sbr.rel (0) target = $region29
  $region28: #{forward.143} parent=0 // pred_region
    _
  $region29: #{forward.143} parent=0 // pred_fallthru
    _
  // Predicated region
  $region30: #{forward.143} parent=0 // pred_check
    _
  $region31: #{forward.143} parent=0 // pred_check_branch
    %29 = sbr.rel (0) target = $region33
  $region32: #{forward.143} parent=0 // pred_region
    _
  $region33: #{forward.143} parent=0 // pred_fallthru
    _
  // Predicated region
  $region34: #{forward.143} parent=0 // pred_check
    _
  $region35: #{forward.143} parent=0 // pred_check_branch
    %31 = sbr.rel (0) target = $region37
  $region36: #{forward.143} parent=0 // pred_region
    _
  $region37: #{forward.143} parent=0 // pred_fallthru
    _
  %v32 = vld [vmem:[%s1] sm:$0xff]
  %v33 = vld [vmem:[%s1 + $0x8] sm:$0xff]
  %v34 = vld [vmem:[%s1 + $0x10] sm:$0xff]
  %v35 = vld [vmem:[%s0] sm:$0xff]
  %v36 = vld [vmem:[%s0 + $0x8] sm:$0xff]
  %v37 = vld [vmem:[%s0 + $0x10] sm:$0xff]
  %v38 = vld [vmem:[%s0 + $0x18] sm:$0xff]
  %v39 = vld [vmem:[%s0 + $0x20] sm:$0xff]
  %v40 = vld [vmem:[%s0 + $0x28] sm:$0xff]
  %v41 = vld [vmem:[%s0 + $0x30] sm:$0xff]
  %v42 = vld [vmem:[%s0 + $0x38] sm:$0xff]
  %v43 = vld [vmem:[%s0 + $0x40] sm:$0xff]
  %v44 = vld [vmem:[%s0 + $0x48] sm:$0xff]
  %v45 = vld [vmem:[%s0 + $0x50] sm:$0xff]
  %v46 = vld [vmem:[%s0 + $0x58] sm:$0xff]
  %v47 = vld [vmem:[%s0 + $0x60] sm:$0xff]
  %v48 = vld [vmem:[%s0 + $0x68] sm:$0xf]
  %vm49 = vcmask 883712
  %v51 = vsel %vm49, %v32, 0
  %v54 = vsel %vm49, %v33, 0
  %v57 = vsel %vm49, %v34, 0
  %vm59 = vcmask 1043456
  %v61 = vsel %vm59, %v48, 0
  %63 = vmatpush.msra.mxu0 0.0
  %64 = vmatpush.msra.mxu0 0.0
  %65 = vmatpush.msra.mxu0 %v61
  %66 = vmatpush.msra.mxu0 %v47
  %67 = vmatpush.msra.mxu0 %v46
  %68 = vmatpush.msra.mxu0 %v45
  %69 = vmatpush.msra.mxu0 %v44
  %70 = vmatpush.msra.mxu0 %v43
  %71 = vmatpush.msra.mxu0 %v42
  %72 = vmatpush.msra.mxu0 %v41
  %73 = vmatpush.msra.mxu0 %v40
  %74 = vmatpush.msra.mxu0 %v39
  %75 = vmatpush.msra.mxu0 %v38
  %76 = vmatpush.msra.mxu0 %v37
  %77 = vmatpush.msra.mxu0 %v36
  %78 = vmatpush.msra.mxu0 %v35
  %79 = vmatmul.f32.gmra.mxu0 %v51
  %v80 = vpop.f32.mrf.mxu0
  %v81 = vadd.f32 0.0, %v80
  %82 = vmatmul.f32.gmra.mxu0 %v54
  %v83 = vpop.f32.mrf.mxu0
  %v84 = vadd.f32 0.0, %v83
  %85 = vmatmul.f32.gmra.mxu0 %v57
  %v86 = vpop.f32.mrf.mxu0
  %v87 = vadd.f32 0.0, %v86
  %88 = vdwg.mxu0
  %v89 = vld [vmem:[%s3] sm:$0xff]
  %v90 = vld [vmem:[%s3 + $0x8] sm:$0xf]
  %v91 = vld [vmem:[%s2] sm:$0xff]
  %v92 = vld [vmem:[%s2 + $0x8] sm:$0xff]
  %v93 = vld [vmem:[%s2 + $0x10] sm:$0xff]
  %v94 = vmul.f32 %v81, %v91
  %v95 = vmul.f32 %v84, %v92
  %v96 = vmul.f32 %v87, %v93
  %vm97 = vcmask 195584
  %v99 = vsel %vm97, %v89, 0
  %v102 = vsel %vm97, %v90, 0
  %104 = vmatpush.msra.mxu0 0.0
  %105 = vmatpush.msra.mxu0 0.0
  %106 = vmatpush.msra.mxu0 0.0
  %107 = vmatpush.msra.mxu0 0.0
  %108 = vmatpush.msra.mxu0 0.0
  %109 = vmatpush.msra.mxu0 0.0
  %110 = vmatpush.msra.mxu0 0.0
  %111 = vmatpush.msra.mxu0 0.0
  %112 = vmatpush.msra.mxu0 0.0
  %113 = vmatpush.msra.mxu0 0.0
  %114 = vmatpush.msra.mxu0 0.0
  %115 = vmatpush.msra.mxu0 0.0
  %116 = vmatpush.msra.mxu0 0.0
  %117 = vmatpush.msra.mxu0 %v96
  %118 = vmatpush.msra.mxu0 %v95
  %119 = vmatpush.msra.mxu0 %v94
  %120 = vmatmul.f32.gmra.mxu0 %v99
  %v121 = vpop.f32.mrf.mxu0
  %v122 = vadd.f32 0.0, %v121
  %123 = vmatmul.f32.gmra.mxu0 %v102
  %v124 = vpop.f32.mrf.mxu0
  %v125 = vadd.f32 0.0, %v124
  %126 = vdwg.mxu0
  %v127 = vld [vmem:[%s6] sm:$0xff]
  %v128 = vld [vmem:[%s6 + $0x8] sm:$0xff]
  %v129 = vld [vmem:[%s6 + $0x10] sm:$0xff]
  %v130 = vld [vmem:[%s6 + $0x18] sm:$0xff]
  %v131 = vld [vmem:[%s6 + $0x20] sm:$0xff]
  %v132 = vld [vmem:[%s6 + $0x28] sm:$0xff]
  %v133 = vld [vmem:[%s6 + $0x30] sm:$0xff]
  %v134 = vld [vmem:[%s6 + $0x38] sm:$0xff]
  %vm135 = vcmask 523264
  %v137 = vsel %vm135, %v122, 0
  %v140 = vsel %vm135, %v125, 0
  %142 = vmatpush.msra.mxu0 0.0
  %143 = vmatpush.msra.mxu0 0.0
  %144 = vmatpush.msra.mxu0 0.0
  %145 = vmatpush.msra.mxu0 0.0
  %146 = vmatpush.msra.mxu0 0.0
  %147 = vmatpush.msra.mxu0 0.0
  %148 = vmatpush.msra.mxu0 0.0
  %149 = vmatpush.msra.mxu0 0.0
  %150 = vmatpush.msra.mxu0 %v134
  %151 = vmatpush.msra.mxu0 %v133
  %152 = vmatpush.msra.mxu0 %v132
  %153 = vmatpush.msra.mxu0 %v131
  %154 = vmatpush.msra.mxu0 %v130
  %155 = vmatpush.msra.mxu0 %v129
  %156 = vmatpush.msra.mxu0 %v128
  %157 = vmatpush.msra.mxu0 %v127
  %158 = vmatmul.f32.gmra.mxu0 %v137
  %v159 = vpop.f32.mrf.mxu0
  %v160 = vadd.f32 0.0, %v159
  %161 = vmatmul.f32.gmra.mxu0 %v140
  %v162 = vpop.f32.mrf.mxu0
  %v163 = vadd.f32 0.0, %v162
  %164 = vdwg.mxu0
  %v165 = vld [vmem:[%s4] sm:$0x7]
  %vm166 = vcmask 97280
  %v168 = vsel %vm166, %v165, 0
  %v171 = vsel %vm59, %v163, 0
  %173 = vmatpush.msra.mxu0 0.0
  %174 = vmatpush.msra.mxu0 0.0
  %175 = vmatpush.msra.mxu0 0.0
  %176 = vmatpush.msra.mxu0 0.0
  %177 = vmatpush.msra.mxu0 0.0
  %178 = vmatpush.msra.mxu0 0.0
  %179 = vmatpush.msra.mxu0 0.0
  %180 = vmatpush.msra.mxu0 0.0
  %181 = vmatpush.msra.mxu0 0.0
  %182 = vmatpush.msra.mxu0 0.0
  %183 = vmatpush.msra.mxu0 0.0
  %184 = vmatpush.msra.mxu0 0.0
  %185 = vmatpush.msra.mxu0 0.0
  %186 = vmatpush.msra.mxu0 0.0
  %187 = vmatpush.msra.mxu0 %v171
  %188 = vmatpush.msra.mxu0 %v160
  %189 = vmatmul.f32.gmra.mxu0 %v168
  %v190 = vpop.f32.mrf.mxu0
  %v191 = vadd.f32 0.0, %v190
  %192 = vdwg.mxu0
  %v193 = vmax.f32 %v191, 0.0
  %v194 = vld [vmem:[%s5] sm:$0xff]
  %v195 = vld [vmem:[%s5 + $0x8] sm:$0xf]
  %vm196 = vcmask 23552
  %v198 = vsel %vm196, %v194, 0
  %v201 = vsel %vm196, %v195, 0
  %vm203 = vcmask 1042432
  %v205 = vsel %vm203, %v193, 0
  %207 = vmatpush.msra.mxu0 0.0
  %208 = vmatpush.msra.mxu0 0.0
  %209 = vmatpush.msra.mxu0 0.0
  %210 = vmatpush.msra.mxu0 0.0
  %211 = vmatpush.msra.mxu0 0.0
  %212 = vmatpush.msra.mxu0 0.0
  %213 = vmatpush.msra.mxu0 0.0
  %214 = vmatpush.msra.mxu0 0.0
  %215 = vmatpush.msra.mxu0 0.0
  %216 = vmatpush.msra.mxu0 0.0
  %217 = vmatpush.msra.mxu0 0.0
  %218 = vmatpush.msra.mxu0 0.0
  %219 = vmatpush.msra.mxu0 0.0
  %220 = vmatpush.msra.mxu0 0.0
  %221 = vmatpush.msra.mxu0 0.0
  %222 = vmatpush.msra.mxu0 %v205
  %223 = vmatmul.f32.gmra.mxu0 %v198
  %v224 = vpop.f32.mrf.mxu0
  %v225 = vadd.f32 0.0, %v224
  %226 = vmatmul.f32.gmra.mxu0 %v201
  %v227 = vpop.f32.mrf.mxu0
  %v228 = vadd.f32 0.0, %v227
  %229 = vdwg.mxu0
  %v230 = vxor.u32 %v225, 2147483648
  %v231 = vxor.u32 %v228, 2147483648
  %v232 = vmul.f32 %v230, 1.442695
  %v233 = vpow.pop %v232
  %v234 = vmul.f32 %v231, 1.442695
  %v235 = vpow.pop %v234
  %v236 = vadd.f32 %v233, 1.0
  %v237 = vadd.f32 %v235, 1.0
  %v238 = vrcp.pop %v236
  %v239 = vmul.f32 %v236, %v238
  %v240 = vsub.f32 1.0, %v239
  %v241 = vmul.f32 %v238, %v240
  %v242 = vadd.f32 %v238, %v241
  %vm243 = vweird.f32 %v236
  %vm244 = vweird.f32 %v238
  %vm245 = vmor %vm243, %vm244
  %v246 = vsel %vm245, %v238, %v242
  %v247 = vand.u32 2147483647, %v236
  %vm248 = vcmp.eq.f32.partialorder %v247, 8.507059e+37
  %v249 = vand.u32 %v236, 2147483648
  %v250 = vor.u32 1.1754944e-38, %v249
  %v251 = vsel %vm248, %v250, %v246
  %v252 = vmul.f32 1.0, %v251
  %v253 = vrcp.pop %v237
  %v254 = vmul.f32 %v237, %v253
  %v255 = vsub.f32 1.0, %v254
  %v256 = vmul.f32 %v253, %v255
  %v257 = vadd.f32 %v253, %v256
  %vm258 = vweird.f32 %v237
  %vm259 = vweird.f32 %v253
  %vm260 = vmor %vm258, %vm259
  %v261 = vsel %vm260, %v253, %v257
  %v262 = vand.u32 2147483647, %v237
  %vm263 = vcmp.eq.f32.partialorder %v262, 8.507059e+37
  %v264 = vand.u32 %v237, 2147483648
  %v265 = vor.u32 1.1754944e-38, %v264
  %v266 = vsel %vm263, %v265, %v261
  %v267 = vmul.f32 1.0, %v266
  %v268 = vld [vmem:[%s7] sm:$0x3]
  %vm269 = vcmask 15360
  %v271 = vsel %vm269, %v252, 0
  %v274 = vsel %vm269, %v267, 0
  %vm276 = vcmask 1041408
  %v278 = vsel %vm276, %v268, 0
  %280 = vmatpush.msra.mxu0 0.0
  %281 = vmatpush.msra.mxu0 0.0
  %282 = vmatpush.msra.mxu0 0.0
  %283 = vmatpush.msra.mxu0 0.0
  %284 = vmatpush.msra.mxu0 0.0
  %285 = vmatpush.msra.mxu0 0.0
  %286 = vmatpush.msra.mxu0 0.0
  %287 = vmatpush.msra.mxu0 0.0
  %288 = vmatpush.msra.mxu0 0.0
  %289 = vmatpush.msra.mxu0 0.0
  %290 = vmatpush.msra.mxu0 0.0
  %291 = vmatpush.msra.mxu0 0.0
  %292 = vmatpush.msra.mxu0 0.0
  %293 = vmatpush.msra.mxu0 0.0
  %294 = vmatpush.msra.mxu0 0.0
  %295 = vmatpush.msra.mxu0 %v278
  %296 = vmatmul.f32.gmra.mxu0 %v271
  %v297 = vpop.f32.mrf.mxu0
  %v298 = vadd.f32 0.0, %v297
  %299 = vmatmul.f32.gmra.mxu0 %v274
  %v300 = vpop.f32.mrf.mxu0
  %v301 = vadd.f32 0.0, %v300
  %302 = vdwg.mxu0
  %v303 = vmul.f32 %v122, %v298
  %v304 = vmul.f32 %v125, %v301
  %v305 = vld [vmem:[%s8] sm:$0xff]
  %v306 = vld [vmem:[%s8 + $0x8] sm:$0xf]
  %v307 = vadd.f32 %v303, %v305
  %v308 = vadd.f32 %v304, %v306
  %309 = vst.msk [vmem:[%s9] sm:$0xff] %vm135, %v307
  %vm310 = vcmask 519168
  %311 = vst.msk [vmem:[%s9 + $0x8] sm:$0xf] %vm310, %v308
  // Predicated region
  $region38: #{forward.143} parent=0 // pred_check
    _
  $region39: #{forward.143} parent=0 // pred_check_branch
    %313 = sbr.rel (0) target = $region41
  $region40: #{forward.143} parent=0 // pred_region
    _
  $region41: #{forward.143} parent=0 // pred_fallthru
    _
  // Predicated region
  $region42: #{forward.143} parent=0 // pred_check
    _
  $region43: #{forward.143} parent=0 // pred_check_branch
    %315 = sbr.rel (0) target = $region45
  $region44: #{forward.143} parent=0 // pred_region
    _
  $region45: #{forward.143} parent=0 // pred_fallthru
    _

// kernel: forward.151
$region0: #{forward.151}
  #allocation0 [shape = 'u32[]', space=smem, size = 0x4, offset = 0x4, fixed_abs, tag = 'smem constant byte address 0x4 - core index']
  #allocation1 [shape = 'u32[72,128]{1,0:T(1,128)}', space=vmem, size = 0x9000, scoped, tag = 'internal scratch']
  %s0 = inlined_call_operand.vmem [shape: f32[12,256], index: 0, kind: input, shape index: {}]
  %s1 = inlined_call_operand.vmem [shape: f32[8,12], index: 1, kind: input, shape index: {}]
  %s2 = inlined_call_operand.vmem [shape: f32[8,256], index: 2, kind: input, shape index: {}]
  %s3 = inlined_call_operand.vmem [shape: f32[8,256], index: 3, kind: output, shape index: {}]
  %s4 = sld [smem:[#allocation0]]
  $region22: #{forward.151} parent=0
    _
  %s6 = ssub.s32 1, %s4
  %s7 = scalar_select 0, %s6, %s4
  // Predicated region
  $region2: #{forward.151} parent=0 // pred_check
    _
  $region3: #{forward.151} parent=0 // pred_check_branch
    %9 = sbr.rel (0) target = $region5
  $region4: #{forward.151} parent=0 // pred_region
    _
  $region5: #{forward.151} parent=0 // pred_fallthru
    _
  // Predicated region
  $region6: #{forward.151} parent=0 // pred_check
    _
  $region7: #{forward.151} parent=0 // pred_check_branch
    %11 = sbr.rel (0) target = $region9
  $region8: #{forward.151} parent=0 // pred_region
    _
  $region9: #{forward.151} parent=0 // pred_fallthru
    _
  // Predicated region
  $region10: #{forward.151} parent=0 // pred_check
    _
  $region11: #{forward.151} parent=0 // pred_check_branch
    %13 = sbr.rel (0) target = $region13
  $region12: #{forward.151} parent=0 // pred_region
    _
  $region13: #{forward.151} parent=0 // pred_fallthru
    _
  %v14 = vld [vmem:[%s1] sm:$0xff]
  %v15 = vld [vmem:[%s0] sm:$0xff]
  %v16 = vld [vmem:[%s0 + $0x8] sm:$0xff]
  %v17 = vld [vmem:[%s0 + $0x10] sm:$0xf]
  %v18 = vld [vmem:[%s0 + $0x18] sm:$0xf]
  %v19 = vld [vmem:[%s2] sm:$0xff]
  %v20 = vld [vmem:[%s2 + $0x8] sm:$0xff]
  %vm21 = vcmask 97280
  %v23 = vsel %vm21, %v14, 0
  %vm25 = vcmask 1043456
  %v27 = vsel %vm25, %v17, 0
  %v30 = vsel %vm25, %v18, 0
  %32 = vmatpush.msra.mxu0 0.0
  %33 = vmatpush.msra.mxu0 0.0
  %34 = vmatpush.msra.mxu0 0.0
  %35 = vmatpush.msra.mxu0 0.0
  %36 = vmatpush.msra.mxu0 0.0
  %37 = vmatpush.msra.mxu0 0.0
  %38 = vmatpush.msra.mxu0 0.0
  %39 = vmatpush.msra.mxu0 0.0
  %40 = vmatpush.msra.mxu0 0.0
  %41 = vmatpush.msra.mxu0 0.0
  %42 = vmatpush.msra.mxu0 0.0
  %43 = vmatpush.msra.mxu0 0.0
  %44 = vmatpush.msra.mxu0 0.0
  %45 = vmatpush.msra.mxu0 0.0
  %46 = vmatpush.msra.mxu0 %v27
  %47 = vmatpush.msra.mxu0 %v15
  %48 = vmatmul.f32.gmra.mxu0 %v23
  %v49 = vpop.f32.mrf.mxu0
  %v50 = vadd.f32 %v19, %v49
  %51 = vdwg.mxu0
  %52 = vmatpush.msra.mxu0 0.0
  %53 = vmatpush.msra.mxu0 0.0
  %54 = vmatpush.msra.mxu0 0.0
  %55 = vmatpush.msra.mxu0 0.0
  %56 = vmatpush.msra.mxu0 0.0
  %57 = vmatpush.msra.mxu0 0.0
  %58 = vmatpush.msra.mxu0 0.0
  %59 = vmatpush.msra.mxu0 0.0
  %60 = vmatpush.msra.mxu0 0.0
  %61 = vmatpush.msra.mxu0 0.0
  %62 = vmatpush.msra.mxu0 0.0
  %63 = vmatpush.msra.mxu0 0.0
  %64 = vmatpush.msra.mxu0 0.0
  %65 = vmatpush.msra.mxu0 0.0
  %66 = vmatpush.msra.mxu0 %v30
  %67 = vmatpush.msra.mxu0 %v16
  %68 = vmatmul.f32.gmra.mxu0 %v23
  %v69 = vpop.f32.mrf.mxu0
  %v70 = vadd.f32 %v20, %v69
  %71 = vdwg.mxu0
  %72 = vst [vmem:[%s3] sm:$0xff] %v50
  %73 = vst [vmem:[%s3 + $0x8] sm:$0xff] %v70
  // Predicated region
  $region14: #{forward.151} parent=0 // pred_check
    _
  $region15: #{forward.151} parent=0 // pred_check_branch
    %75 = sbr.rel (0) target = $region17
  $region16: #{forward.151} parent=0 // pred_region
    _
  $region17: #{forward.151} parent=0 // pred_fallthru
    _
  // Predicated region
  $region18: #{forward.151} parent=0 // pred_check
    _
  $region19: #{forward.151} parent=0 // pred_check_branch
    %77 = sbr.rel (0) target = $region21
  $region20: #{forward.151} parent=0 // pred_region
    _
  $region21: #{forward.151} parent=0 // pred_fallthru
    _

// kernel: forward.150
$region0: #{forward.150}
  #allocation0 [shape = 'u32[]', space=smem, size = 0x4, offset = 0x4, fixed_abs, tag = 'smem constant byte address 0x4 - core index']
  #allocation1 [shape = 'u32[72,128]{1,0:T(1,128)}', space=vmem, size = 0x9000, scoped, tag = 'internal scratch']
  %s0 = inlined_call_operand.vmem [shape: f32[72,256], index: 0, kind: input, shape index: {}]
  %s1 = inlined_call_operand.vmem [shape: f32[16,72], index: 1, kind: input, shape index: {}]
  %s2 = inlined_call_operand.vmem [shape: f32[16,256], index: 2, kind: input, shape index: {}]
  %s3 = inlined_call_operand.vmem [shape: f32[8,16], index: 3, kind: input, shape index: {}]
  %s4 = inlined_call_operand.vmem [shape: f32[2,8], index: 4, kind: input, shape index: {}]
  %s5 = inlined_call_operand.vmem [shape: f32[8,2], index: 5, kind: input, shape index: {}]
  %s6 = inlined_call_operand.vmem [shape: f32[256,2], index: 6, kind: input, shape index: {}]
  %s7 = inlined_call_operand.vmem [shape: f32[2,256], index: 7, kind: input, shape index: {}]
  %s8 = inlined_call_operand.vmem [shape: f32[8,256], index: 8, kind: input, shape index: {}]
  %s9 = inlined_call_operand.vmem [shape: f32[8,256], index: 9, kind: output, shape index: {}]
  %s10 = sld [smem:[#allocation0]]
  $region46: #{forward.150} parent=0
    _
  %s12 = ssub.s32 1, %s10
  %s13 = scalar_select 0, %s12, %s10
  // Predicated region
  $region2: #{forward.150} parent=0 // pred_check
    _
  $region3: #{forward.150} parent=0 // pred_check_branch
    %15 = sbr.rel (0) target = $region5
  $region4: #{forward.150} parent=0 // pred_region
    _
  $region5: #{forward.150} parent=0 // pred_fallthru
    _
  // Predicated region
  $region6: #{forward.150} parent=0 // pred_check
    _
  $region7: #{forward.150} parent=0 // pred_check_branch
    %17 = sbr.rel (0) target = $region9
  $region8: #{forward.150} parent=0 // pred_region
    _
  $region9: #{forward.150} parent=0 // pred_fallthru
    _
  // Predicated region
  $region10: #{forward.150} parent=0 // pred_check
    _
  $region11: #{forward.150} parent=0 // pred_check_branch
    %19 = sbr.rel (0) target = $region13
  $region12: #{forward.150} parent=0 // pred_region
    _
  $region13: #{forward.150} parent=0 // pred_fallthru
    _
  // Predicated region
  $region14: #{forward.150} parent=0 // pred_check
    _
  $region15: #{forward.150} parent=0 // pred_check_branch
    %21 = sbr.rel (0) target = $region17
  $region16: #{forward.150} parent=0 // pred_region
    _
  $region17: #{forward.150} parent=0 // pred_fallthru
    _
  // Predicated region
  $region18: #{forward.150} parent=0 // pred_check
    _
  $region19: #{forward.150} parent=0 // pred_check_branch
    %23 = sbr.rel (0) target = $region21
  $region20: #{forward.150} parent=0 // pred_region
    _
  $region21: #{forward.150} parent=0 // pred_fallthru
    _
  // Predicated region
  $region22: #{forward.150} parent=0 // pred_check
    _
  $region23: #{forward.150} parent=0 // pred_check_branch
    %25 = sbr.rel (0) target = $region25
  $region24: #{forward.150} parent=0 // pred_region
    _
  $region25: #{forward.150} parent=0 // pred_fallthru
    _
  // Predicated region
  $region26: #{forward.150} parent=0 // pred_check
    _
  $region27: #{forward.150} parent=0 // pred_check_branch
    %27 = sbr.rel (0) target = $region29
  $region28: #{forward.150} parent=0 // pred_region
    _
  $region29: #{forward.150} parent=0 // pred_fallthru
    _
  // Predicated region
  $region30: #{forward.150} parent=0 // pred_check
    _
  $region31: #{forward.150} parent=0 // pred_check_branch
    %29 = sbr.rel (0) target = $region33
  $region32: #{forward.150} parent=0 // pred_region
    _
  $region33: #{forward.150} parent=0 // pred_fallthru
    _
  // Predicated region
  $region34: #{forward.150} parent=0 // pred_check
    _
  $region35: #{forward.150} parent=0 // pred_check_branch
    %31 = sbr.rel (0) target = $region37
  $region36: #{forward.150} parent=0 // pred_region
    _
  $region37: #{forward.150} parent=0 // pred_fallthru
    _
  %v32 = vld [vmem:[%s1] sm:$0xff]
  %v33 = vld [vmem:[%s1 + $0x8] sm:$0xff]
  %v34 = vld [vmem:[%s0] sm:$0xff]
  %v35 = vld [vmem:[%s0 + $0x8] sm:$0xff]
  %v36 = vld [vmem:[%s0 + $0x10] sm:$0xff]
  %v37 = vld [vmem:[%s0 + $0x18] sm:$0xff]
  %v38 = vld [vmem:[%s0 + $0x20] sm:$0xff]
  %v39 = vld [vmem:[%s0 + $0x28] sm:$0xff]
  %v40 = vld [vmem:[%s0 + $0x30] sm:$0xff]
  %v41 = vld [vmem:[%s0 + $0x38] sm:$0xff]
  %v42 = vld [vmem:[%s0 + $0x40] sm:$0xff]
  %v43 = vld [vmem:[%s0 + $0x48] sm:$0xff]
  %v44 = vld [vmem:[%s0 + $0x50] sm:$0xff]
  %v45 = vld [vmem:[%s0 + $0x58] sm:$0xff]
  %v46 = vld [vmem:[%s0 + $0x60] sm:$0xff]
  %v47 = vld [vmem:[%s0 + $0x68] sm:$0xff]
  %v48 = vld [vmem:[%s0 + $0x70] sm:$0xff]
  %v49 = vld [vmem:[%s0 + $0x78] sm:$0xff]
  %v50 = vld [vmem:[%s0 + $0x80] sm:$0xff]
  %v51 = vld [vmem:[%s0 + $0x88] sm:$0xff]
  %vm52 = vcmask 588800
  %v54 = vsel %vm52, %v32, 0
  %v57 = vsel %vm52, %v33, 0
  %59 = vmatpush.msra.mxu0 0.0
  %60 = vmatpush.msra.mxu0 0.0
  %61 = vmatpush.msra.mxu0 0.0
  %62 = vmatpush.msra.mxu0 0.0
  %63 = vmatpush.msra.mxu0 0.0
  %64 = vmatpush.msra.mxu0 0.0
  %65 = vmatpush.msra.mxu0 0.0
  %66 = vmatpush.msra.mxu0 %v50
  %67 = vmatpush.msra.mxu0 %v48
  %68 = vmatpush.msra.mxu0 %v46
  %69 = vmatpush.msra.mxu0 %v44
  %70 = vmatpush.msra.mxu0 %v42
  %71 = vmatpush.msra.mxu0 %v40
  %72 = vmatpush.msra.mxu0 %v38
  %73 = vmatpush.msra.mxu0 %v36
  %74 = vmatpush.msra.mxu0 %v34
  %75 = vmatmul.f32.gmra.mxu0 %v54
  %v76 = vpop.f32.mrf.mxu0
  %v77 = vadd.f32 0.0, %v76
  %78 = vmatmul.f32.gmra.mxu0 %v57
  %v79 = vpop.f32.mrf.mxu0
  %v80 = vadd.f32 0.0, %v79
  %81 = vdwg.mxu0
  %82 = vmatpush.msra.mxu0 0.0
  %83 = vmatpush.msra.mxu0 0.0
  %84 = vmatpush.msra.mxu0 0.0
  %85 = vmatpush.msra.mxu0 0.0
  %86 = vmatpush.msra.mxu0 0.0
  %87 = vmatpush.msra.mxu0 0.0
  %88 = vmatpush.msra.mxu0 0.0
  %89 = vmatpush.msra.mxu0 %v51
  %90 = vmatpush.msra.mxu0 %v49
  %91 = vmatpush.msra.mxu0 %v47
  %92 = vmatpush.msra.mxu0 %v45
  %93 = vmatpush.msra.mxu0 %v43
  %94 = vmatpush.msra.mxu0 %v41
  %95 = vmatpush.msra.mxu0 %v39
  %96 = vmatpush.msra.mxu0 %v37
  %97 = vmatpush.msra.mxu0 %v35
  %98 = vmatmul.f32.gmra.mxu0 %v54
  %v99 = vpop.f32.mrf.mxu0
  %v100 = vadd.f32 0.0, %v99
  %101 = vmatmul.f32.gmra.mxu0 %v57
  %v102 = vpop.f32.mrf.mxu0
  %v103 = vadd.f32 0.0, %v102
  %104 = vdwg.mxu0
  %v105 = vld [vmem:[%s3] sm:$0xff]
  %v106 = vld [vmem:[%s2] sm:$0xff]
  %v107 = vld [vmem:[%s2 + $0x8] sm:$0xff]
  %v108 = vld [vmem:[%s2 + $0x10] sm:$0xff]
  %v109 = vld [vmem:[%s2 + $0x18] sm:$0xff]
  %v110 = vmul.f32 %v77, %v106
  %v111 = vmul.f32 %v100, %v107
  %v112 = vmul.f32 %v80, %v108
  %v113 = vmul.f32 %v103, %v109
  %vm114 = vcmask 130048
  %v116 = vsel %vm114, %v105, 0
  %118 = vmatpush.msra.mxu0 0.0
  %119 = vmatpush.msra.mxu0 0.0
  %120 = vmatpush.msra.mxu0 0.0
  %121 = vmatpush.msra.mxu0 0.0
  %122 = vmatpush.msra.mxu0 0.0
  %123 = vmatpush.msra.mxu0 0.0
  %124 = vmatpush.msra.mxu0 0.0
  %125 = vmatpush.msra.mxu0 0.0
  %126 = vmatpush.msra.mxu0 0.0
  %127 = vmatpush.msra.mxu0 0.0
  %128 = vmatpush.msra.mxu0 0.0
  %129 = vmatpush.msra.mxu0 0.0
  %130 = vmatpush.msra.mxu0 0.0
  %131 = vmatpush.msra.mxu0 0.0
  %132 = vmatpush.msra.mxu0 %v112
  %133 = vmatpush.msra.mxu0 %v110
  %134 = vmatmul.f32.gmra.mxu0 %v116
  %v135 = vpop.f32.mrf.mxu0
  %v136 = vadd.f32 0.0, %v135
  %137 = vdwg.mxu0
  %138 = vmatpush.msra.mxu0 0.0
  %139 = vmatpush.msra.mxu0 0.0
  %140 = vmatpush.msra.mxu0 0.0
  %141 = vmatpush.msra.mxu0 0.0
  %142 = vmatpush.msra.mxu0 0.0
  %143 = vmatpush.msra.mxu0 0.0
  %144 = vmatpush.msra.mxu0 0.0
  %145 = vmatpush.msra.mxu0 0.0
  %146 = vmatpush.msra.mxu0 0.0
  %147 = vmatpush.msra.mxu0 0.0
  %148 = vmatpush.msra.mxu0 0.0
  %149 = vmatpush.msra.mxu0 0.0
  %150 = vmatpush.msra.mxu0 0.0
  %151 = vmatpush.msra.mxu0 0.0
  %152 = vmatpush.msra.mxu0 %v113
  %153 = vmatpush.msra.mxu0 %v111
  %154 = vmatmul.f32.gmra.mxu0 %v116
  %v155 = vpop.f32.mrf.mxu0
  %v156 = vadd.f32 0.0, %v155
  %157 = vdwg.mxu0
  %v158 = vld [vmem:[%s6] sm:$0xff]
  %v159 = vld [vmem:[%s6 + $0x8] sm:$0xff]
  %v160 = vld [vmem:[%s6 + $0x10] sm:$0xff]
  %v161 = vld [vmem:[%s6 + $0x18] sm:$0xff]
  %v162 = vld [vmem:[%s6 + $0x20] sm:$0xff]
  %v163 = vld [vmem:[%s6 + $0x28] sm:$0xff]
  %v164 = vld [vmem:[%s6 + $0x30] sm:$0xff]
  %v165 = vld [vmem:[%s6 + $0x38] sm:$0xff]
  %v166 = vld [vmem:[%s6 + $0x40] sm:$0xff]
  %v167 = vld [vmem:[%s6 + $0x48] sm:$0xff]
  %v168 = vld [vmem:[%s6 + $0x50] sm:$0xff]
  %v169 = vld [vmem:[%s6 + $0x58] sm:$0xff]
  %v170 = vld [vmem:[%s6 + $0x60] sm:$0xff]
  %v171 = vld [vmem:[%s6 + $0x68] sm:$0xff]
  %v172 = vld [vmem:[%s6 + $0x70] sm:$0xff]
  %v173 = vld [vmem:[%s6 + $0x78] sm:$0xff]
  %v174 = vld [vmem:[%s6 + $0x80] sm:$0xff]
  %v175 = vld [vmem:[%s6 + $0x88] sm:$0xff]
  %v176 = vld [vmem:[%s6 + $0x90] sm:$0xff]
  %v177 = vld [vmem:[%s6 + $0x98] sm:$0xff]
  %v178 = vld [vmem:[%s6 + $0xa0] sm:$0xff]
  %v179 = vld [vmem:[%s6 + $0xa8] sm:$0xff]
  %v180 = vld [vmem:[%s6 + $0xb0] sm:$0xff]
  %v181 = vld [vmem:[%s6 + $0xb8] sm:$0xff]
  %v182 = vld [vmem:[%s6 + $0xc0] sm:$0xff]
  %v183 = vld [vmem:[%s6 + $0xc8] sm:$0xff]
  %v184 = vld [vmem:[%s6 + $0xd0] sm:$0xff]
  %v185 = vld [vmem:[%s6 + $0xd8] sm:$0xff]
  %v186 = vld [vmem:[%s6 + $0xe0] sm:$0xff]
  %v187 = vld [vmem:[%s6 + $0xe8] sm:$0xff]
  %v188 = vld [vmem:[%s6 + $0xf0] sm:$0xff]
  %v189 = vld [vmem:[%s6 + $0xf8] sm:$0xff]
  %190 = vmatpush.msra.mxu0 %v173
  %191 = vmatpush.msra.mxu0 %v172
  %192 = vmatpush.msra.mxu0 %v171
  %193 = vmatpush.msra.mxu0 %v170
  %194 = vmatpush.msra.mxu0 %v169
  %195 = vmatpush.msra.mxu0 %v168
  %196 = vmatpush.msra.mxu0 %v167
  %197 = vmatpush.msra.mxu0 %v166
  %198 = vmatpush.msra.mxu0 %v165
  %199 = vmatpush.msra.mxu0 %v164
  %200 = vmatpush.msra.mxu0 %v163
  %201 = vmatpush.msra.mxu0 %v162
  %202 = vmatpush.msra.mxu0 %v161
  %203 = vmatpush.msra.mxu0 %v160
  %204 = vmatpush.msra.mxu0 %v159
  %205 = vmatpush.msra.mxu0 %v158
  %206 = vmatmul.f32.gmra.mxu0 %v136
  %v207 = vpop.f32.mrf.mxu0
  %v208 = vadd.f32 0.0, %v207
  %209 = vdwg.mxu0
  %210 = vmatpush.msra.mxu0 %v189
  %211 = vmatpush.msra.mxu0 %v188
  %212 = vmatpush.msra.mxu0 %v187
  %213 = vmatpush.msra.mxu0 %v186
  %214 = vmatpush.msra.mxu0 %v185
  %215 = vmatpush.msra.mxu0 %v184
  %216 = vmatpush.msra.mxu0 %v183
  %217 = vmatpush.msra.mxu0 %v182
  %218 = vmatpush.msra.mxu0 %v181
  %219 = vmatpush.msra.mxu0 %v180
  %220 = vmatpush.msra.mxu0 %v179
  %221 = vmatpush.msra.mxu0 %v178
  %222 = vmatpush.msra.mxu0 %v177
  %223 = vmatpush.msra.mxu0 %v176
  %224 = vmatpush.msra.mxu0 %v175
  %225 = vmatpush.msra.mxu0 %v174
  %226 = vmatmul.f32.gmra.mxu0 %v156
  %v227 = vpop.f32.mrf.mxu0
  %v228 = vadd.f32 %v208, %v227
  %229 = vdwg.mxu0
  %v230 = vld [vmem:[%s4] sm:$0x3]
  %vm231 = vcmask 64512
  %v233 = vsel %vm231, %v230, 0
  %235 = vmatpush.msra.mxu0 0.0
  %236 = vmatpush.msra.mxu0 0.0
  %237 = vmatpush.msra.mxu0 0.0
  %238 = vmatpush.msra.mxu0 0.0
  %239 = vmatpush.msra.mxu0 0.0
  %240 = vmatpush.msra.mxu0 0.0
  %241 = vmatpush.msra.mxu0 0.0
  %242 = vmatpush.msra.mxu0 0.0
  %243 = vmatpush.msra.mxu0 0.0
  %244 = vmatpush.msra.mxu0 0.0
  %245 = vmatpush.msra.mxu0 0.0
  %246 = vmatpush.msra.mxu0 0.0
  %247 = vmatpush.msra.mxu0 0.0
  %248 = vmatpush.msra.mxu0 0.0
  %249 = vmatpush.msra.mxu0 0.0
  %250 = vmatpush.msra.mxu0 %v228
  %251 = vmatmul.f32.gmra.mxu0 %v233
  %v252 = vpop.f32.mrf.mxu0
  %v253 = vadd.f32 0.0, %v252
  %254 = vdwg.mxu0
  %v255 = vmax.f32 %v253, 0.0
  %v256 = vld [vmem:[%s5] sm:$0xff]
  %vm257 = vcmask 15360
  %v259 = vsel %vm257, %v256, 0
  %vm261 = vcmask 1041408
  %v263 = vsel %vm261, %v255, 0
  %265 = vmatpush.msra.mxu0 0.0
  %266 = vmatpush.msra.mxu0 0.0
  %267 = vmatpush.msra.mxu0 0.0
  %268 = vmatpush.msra.mxu0 0.0
  %269 = vmatpush.msra.mxu0 0.0
  %270 = vmatpush.msra.mxu0 0.0
  %271 = vmatpush.msra.mxu0 0.0
  %272 = vmatpush.msra.mxu0 0.0
  %273 = vmatpush.msra.mxu0 0.0
  %274 = vmatpush.msra.mxu0 0.0
  %275 = vmatpush.msra.mxu0 0.0
  %276 = vmatpush.msra.mxu0 0.0
  %277 = vmatpush.msra.mxu0 0.0
  %278 = vmatpush.msra.mxu0 0.0
  %279 = vmatpush.msra.mxu0 0.0
  %280 = vmatpush.msra.mxu0 %v263
  %281 = vmatmul.f32.gmra.mxu0 %v259
  %v282 = vpop.f32.mrf.mxu0
  %v283 = vadd.f32 0.0, %v282
  %284 = vdwg.mxu0
  %v285 = vxor.u32 %v283, 2147483648
  %v286 = vmul.f32 %v285, 1.442695
  %v287 = vpow.pop %v286
  %v288 = vadd.f32 %v287, 1.0
  %v289 = vrcp.pop %v288
  %v290 = vmul.f32 %v288, %v289
  %v291 = vsub.f32 1.0, %v290
  %v292 = vmul.f32 %v289, %v291
  %v293 = vadd.f32 %v289, %v292
  %vm294 = vweird.f32 %v288
  %vm295 = vweird.f32 %v289
  %vm296 = vmor %vm294, %vm295
  %v297 = vsel %vm296, %v289, %v293
  %v298 = vand.u32 2147483647, %v288
  %vm299 = vcmp.eq.f32.partialorder %v298, 8.507059e+37
  %v300 = vand.u32 %v288, 2147483648
  %v301 = vor.u32 1.1754944e-38, %v300
  %v302 = vsel %vm299, %v301, %v297
  %v303 = vmul.f32 1.0, %v302
  %v304 = vld [vmem:[%s7] sm:$0xf]
  %306 = vst [vmem:[#allocation1] ss:$4 sm:$0xff] %v304
  %v307 = vld.sshfl [vmem:[#allocation1] sm:$0xff pattern:$0x73625140]
  %v308 = vld.sshfl [vmem:[#allocation1 + $0x8] sm:$0xff pattern:$0x73625140]
  %v310 = vsel %vm257, %v303, 0
  %v312 = vsel %vm261, %v307, 0
  %v314 = vsel %vm261, %v308, 0
  %316 = vmatpush.msra.mxu0 0.0
  %317 = vmatpush.msra.mxu0 0.0
  %318 = vmatpush.msra.mxu0 0.0
  %319 = vmatpush.msra.mxu0 0.0
  %320 = vmatpush.msra.mxu0 0.0
  %321 = vmatpush.msra.mxu0 0.0
  %322 = vmatpush.msra.mxu0 0.0
  %323 = vmatpush.msra.mxu0 0.0
  %324 = vmatpush.msra.mxu0 0.0
  %325 = vmatpush.msra.mxu0 0.0
  %326 = vmatpush.msra.mxu0 0.0
  %327 = vmatpush.msra.mxu0 0.0
  %328 = vmatpush.msra.mxu0 0.0
  %329 = vmatpush.msra.mxu0 0.0
  %330 = vmatpush.msra.mxu0 0.0
  %331 = vmatpush.msra.mxu0 %v312
  %332 = vmatmul.f32.gmra.mxu0 %v310
  %v333 = vpop.f32.mrf.mxu0
  %v334 = vadd.f32 0.0, %v333
  %335 = vdwg.mxu0
  %336 = vmatpush.msra.mxu0 0.0
  %337 = vmatpush.msra.mxu0 0.0
  %338 = vmatpush.msra.mxu0 0.0
  %339 = vmatpush.msra.mxu0 0.0
  %340 = vmatpush.msra.mxu0 0.0
  %341 = vmatpush.msra.mxu0 0.0
  %342 = vmatpush.msra.mxu0 0.0
  %343 = vmatpush.msra.mxu0 0.0
  %344 = vmatpush.msra.mxu0 0.0
  %345 = vmatpush.msra.mxu0 0.0
  %346 = vmatpush.msra.mxu0 0.0
  %347 = vmatpush.msra.mxu0 0.0
  %348 = vmatpush.msra.mxu0 0.0
  %349 = vmatpush.msra.mxu0 0.0
  %350 = vmatpush.msra.mxu0 0.0
  %351 = vmatpush.msra.mxu0 %v314
  %352 = vmatmul.f32.gmra.mxu0 %v310
  %v353 = vpop.f32.mrf.mxu0
  %v354 = vadd.f32 0.0, %v353
  %355 = vdwg.mxu0
  %v356 = vmul.f32 %v136, %v334
  %v357 = vmul.f32 %v156, %v354
  %v358 = vld [vmem:[%s8] sm:$0xff]
  %v359 = vld [vmem:[%s8 + $0x8] sm:$0xff]
  %v360 = vadd.f32 %v356, %v358
  %v361 = vadd.f32 %v357, %v359
  %362 = vst [vmem:[%s9] sm:$0xff] %v360
  %363 = vst [vmem:[%s9 + $0x8] sm:$0xff] %v361
  // Predicated region
  $region38: #{forward.150} parent=0 // pred_check
    _
  $region39: #{forward.150} parent=0 // pred_check_branch
    %365 = sbr.rel (0) target = $region41
  $region40: #{forward.150} parent=0 // pred_region
    _
  $region41: #{forward.150} parent=0 // pred_fallthru
    _
  // Predicated region
  $region42: #{forward.150} parent=0 // pred_check
    _
  $region43: #{forward.150} parent=0 // pred_check_branch
    %367 = sbr.rel (0) target = $region45
  $region44: #{forward.150} parent=0 // pred_region
    _
  $region45: #{forward.150} parent=0 // pred_fallthru
    _

// kernel: forward.156
$region0: #{forward.156}
  #allocation0 [shape = 'u32[]', space=smem, size = 0x4, offset = 0x4, fixed_abs, tag = 'smem constant byte address 0x4 - core index']
  #allocation1 [shape = 'u32[72,128]{1,0:T(1,128)}', space=vmem, size = 0x9000, scoped, tag = 'internal scratch']
  %s0 = inlined_call_operand.vmem [shape: f32[8,256], index: 0, kind: input, shape index: {}]
  %s1 = inlined_call_operand.vmem [shape: f32[3,256], index: 1, kind: input, shape index: {}]
  %s2 = inlined_call_operand.vmem [shape: f32[8,8], index: 2, kind: input, shape index: {}]
  %s3 = inlined_call_operand.vmem [shape: f32[3,8], index: 3, kind: input, shape index: {}]
  %s4 = inlined_call_operand.vmem [shape: f32[8,3], index: 4, kind: input, shape index: {}]
  %s5 = inlined_call_operand.vmem [shape: f32[8,256], index: 5, kind: output, shape index: {0}]
  %s6 = inlined_call_operand.vmem [shape: f32[3,256], index: 6, kind: output, shape index: {1}]
  %7 = xla_tuple %s5, %s6
  %s8 = sld [smem:[#allocation0]]
  $region38: #{forward.156} parent=0
    _
  %s10 = ssub.s32 1, %s8
  %s11 = scalar_select 0, %s10, %s8
  // Predicated region
  $region2: #{forward.156} parent=0 // pred_check
    _
  $region3: #{forward.156} parent=0 // pred_check_branch
    %13 = sbr.rel (0) target = $region5
  $region4: #{forward.156} parent=0 // pred_region
    _
  $region5: #{forward.156} parent=0 // pred_fallthru
    _
  // Predicated region
  $region6: #{forward.156} parent=0 // pred_check
    _
  $region7: #{forward.156} parent=0 // pred_check_branch
    %15 = sbr.rel (0) target = $region9
  $region8: #{forward.156} parent=0 // pred_region
    _
  $region9: #{forward.156} parent=0 // pred_fallthru
    _
  // Predicated region
  $region10: #{forward.156} parent=0 // pred_check
    _
  $region11: #{forward.156} parent=0 // pred_check_branch
    %17 = sbr.rel (0) target = $region13
  $region12: #{forward.156} parent=0 // pred_region
    _
  $region13: #{forward.156} parent=0 // pred_fallthru
    _
  // Predicated region
  $region14: #{forward.156} parent=0 // pred_check
    _
  $region15: #{forward.156} parent=0 // pred_check_branch
    %19 = sbr.rel (0) target = $region17
  $region16: #{forward.156} parent=0 // pred_region
    _
  $region17: #{forward.156} parent=0 // pred_fallthru
    _
  // Predicated region
  $region18: #{forward.156} parent=0 // pred_check
    _
  $region19: #{forward.156} parent=0 // pred_check_branch
    %21 = sbr.rel (0) target = $region21
  $region20: #{forward.156} parent=0 // pred_region
    _
  $region21: #{forward.156} parent=0 // pred_fallthru
    _
  %v22 = vld [vmem:[%s0] sm:$0xff]
  %v23 = vld [vmem:[%s0 + $0x8] sm:$0xff]
  %v24 = vld [vmem:[%s2] sm:$0xff]
  %vm25 = vcmask 64512
  %v27 = vsel %vm25, %v24, 0
  %29 = vmatpush.msra.mxu0 0.0
  %30 = vmatpush.msra.mxu0 0.0
  %31 = vmatpush.msra.mxu0 0.0
  %32 = vmatpush.msra.mxu0 0.0
  %33 = vmatpush.msra.mxu0 0.0
  %34 = vmatpush.msra.mxu0 0.0
  %35 = vmatpush.msra.mxu0 0.0
  %36 = vmatpush.msra.mxu0 0.0
  %37 = vmatpush.msra.mxu0 0.0
  %38 = vmatpush.msra.mxu0 0.0
  %39 = vmatpush.msra.mxu0 0.0
  %40 = vmatpush.msra.mxu0 0.0
  %41 = vmatpush.msra.mxu0 0.0
  %42 = vmatpush.msra.mxu0 0.0
  %43 = vmatpush.msra.mxu0 0.0
  %44 = vmatpush.msra.mxu0 %v22
  %45 = vmatmul.f32.gmra.mxu0 %v27
  %v46 = vpop.f32.mrf.mxu0
  %v47 = vadd.f32 0.0, %v46
  %48 = vdwg.mxu0
  %49 = vmatpush.msra.mxu0 0.0
  %50 = vmatpush.msra.mxu0 0.0
  %51 = vmatpush.msra.mxu0 0.0
  %52 = vmatpush.msra.mxu0 0.0
  %53 = vmatpush.msra.mxu0 0.0
  %54 = vmatpush.msra.mxu0 0.0
  %55 = vmatpush.msra.mxu0 0.0
  %56 = vmatpush.msra.mxu0 0.0
  %57 = vmatpush.msra.mxu0 0.0
  %58 = vmatpush.msra.mxu0 0.0
  %59 = vmatpush.msra.mxu0 0.0
  %60 = vmatpush.msra.mxu0 0.0
  %61 = vmatpush.msra.mxu0 0.0
  %62 = vmatpush.msra.mxu0 0.0
  %63 = vmatpush.msra.mxu0 0.0
  %64 = vmatpush.msra.mxu0 %v23
  %65 = vmatmul.f32.gmra.mxu0 %v27
  %v66 = vpop.f32.mrf.mxu0
  %v67 = vadd.f32 0.0, %v66
  %68 = vdwg.mxu0
  %v69 = vld [vmem:[%s3] sm:$0x7]
  %v70 = vld [vmem:[%s1] sm:$0x77]
  %72 = vst [vmem:[#allocation1] ss:$2 sm:$0xff] %v70
  %v73 = vld.sshfl [vmem:[#allocation1] sm:$0xff pattern:$0x75316420]
  %v74 = vld.sshfl [vmem:[#allocation1 + $0x8] sm:$0xff pattern:$0x75316420]
  %v78 = vsel %vm25, %v69, 0
  %80 = vmatpush.msra.mxu0 0.0
  %81 = vmatpush.msra.mxu0 0.0
  %82 = vmatpush.msra.mxu0 0.0
  %83 = vmatpush.msra.mxu0 0.0
  %84 = vmatpush.msra.mxu0 0.0
  %85 = vmatpush.msra.mxu0 0.0
  %86 = vmatpush.msra.mxu0 0.0
  %87 = vmatpush.msra.mxu0 0.0
  %88 = vmatpush.msra.mxu0 0.0
  %89 = vmatpush.msra.mxu0 0.0
  %90 = vmatpush.msra.mxu0 0.0
  %91 = vmatpush.msra.mxu0 0.0
  %92 = vmatpush.msra.mxu0 0.0
  %93 = vmatpush.msra.mxu0 0.0
  %94 = vmatpush.msra.mxu0 0.0
  %95 = vmatpush.msra.mxu0 %v22
  %96 = vmatmul.f32.gmra.mxu0 %v78
  %v97 = vpop.f32.mrf.mxu0
  %v98 = vadd.f32 %v73, %v97
  %99 = vdwg.mxu0
  %100 = vmatpush.msra.mxu0 0.0
  %101 = vmatpush.msra.mxu0 0.0
  %102 = vmatpush.msra.mxu0 0.0
  %103 = vmatpush.msra.mxu0 0.0
  %104 = vmatpush.msra.mxu0 0.0
  %105 = vmatpush.msra.mxu0 0.0
  %106 = vmatpush.msra.mxu0 0.0
  %107 = vmatpush.msra.mxu0 0.0
  %108 = vmatpush.msra.mxu0 0.0
  %109 = vmatpush.msra.mxu0 0.0
  %110 = vmatpush.msra.mxu0 0.0
  %111 = vmatpush.msra.mxu0 0.0
  %112 = vmatpush.msra.mxu0 0.0
  %113 = vmatpush.msra.mxu0 0.0
  %114 = vmatpush.msra.mxu0 0.0
  %115 = vmatpush.msra.mxu0 %v23
  %116 = vmatmul.f32.gmra.mxu0 %v78
  %v117 = vpop.f32.mrf.mxu0
  %v118 = vadd.f32 %v74, %v117
  %119 = vdwg.mxu0
  %v120 = vld [vmem:[%s4] sm:$0xff]
  %vm121 = vcmask 23552
  %v123 = vsel %vm121, %v120, 0
  %vm125 = vcmask 1042432
  %v127 = vsel %vm125, %v98, 0
  %v130 = vsel %vm125, %v118, 0
  %132 = vmatpush.msra.mxu0 0.0
  %133 = vmatpush.msra.mxu0 0.0
  %134 = vmatpush.msra.mxu0 0.0
  %135 = vmatpush.msra.mxu0 0.0
  %136 = vmatpush.msra.mxu0 0.0
  %137 = vmatpush.msra.mxu0 0.0
  %138 = vmatpush.msra.mxu0 0.0
  %139 = vmatpush.msra.mxu0 0.0
  %140 = vmatpush.msra.mxu0 0.0
  %141 = vmatpush.msra.mxu0 0.0
  %142 = vmatpush.msra.mxu0 0.0
  %143 = vmatpush.msra.mxu0 0.0
  %144 = vmatpush.msra.mxu0 0.0
  %145 = vmatpush.msra.mxu0 0.0
  %146 = vmatpush.msra.mxu0 0.0
  %147 = vmatpush.msra.mxu0 %v127
  %148 = vmatmul.f32.gmra.mxu0 %v123
  %v149 = vpop.f32.mrf.mxu0
  %v150 = vadd.f32 0.0, %v149
  %151 = vdwg.mxu0
  %152 = vmatpush.msra.mxu0 0.0
  %153 = vmatpush.msra.mxu0 0.0
  %154 = vmatpush.msra.mxu0 0.0
  %155 = vmatpush.msra.mxu0 0.0
  %156 = vmatpush.msra.mxu0 0.0
  %157 = vmatpush.msra.mxu0 0.0
  %158 = vmatpush.msra.mxu0 0.0
  %159 = vmatpush.msra.mxu0 0.0
  %160 = vmatpush.msra.mxu0 0.0
  %161 = vmatpush.msra.mxu0 0.0
  %162 = vmatpush.msra.mxu0 0.0
  %163 = vmatpush.msra.mxu0 0.0
  %164 = vmatpush.msra.mxu0 0.0
  %165 = vmatpush.msra.mxu0 0.0
  %166 = vmatpush.msra.mxu0 0.0
  %167 = vmatpush.msra.mxu0 %v130
  %168 = vmatmul.f32.gmra.mxu0 %v123
  %v169 = vpop.f32.mrf.mxu0
  %v170 = vadd.f32 0.0, %v169
  %171 = vdwg.mxu0
  %v172 = vxor.u32 %v150, 2147483648
  %v173 = vxor.u32 %v170, 2147483648
  %v174 = vmul.f32 %v172, 1.442695
  %v175 = vpow.pop %v174
  %v176 = vmul.f32 %v173, 1.442695
  %v177 = vpow.pop %v176
  %v178 = vadd.f32 %v175, 1.0
  %v179 = vadd.f32 %v177, 1.0
  %v180 = vrcp.pop %v178
  %v181 = vmul.f32 %v178, %v180
  %v182 = vsub.f32 1.0, %v181
  %v183 = vmul.f32 %v180, %v182
  %v184 = vadd.f32 %v180, %v183
  %vm185 = vweird.f32 %v178
  %vm186 = vweird.f32 %v180
  %vm187 = vmor %vm185, %vm186
  %v188 = vsel %vm187, %v180, %v184
  %v189 = vand.u32 2147483647, %v178
  %vm190 = vcmp.eq.f32.partialorder %v189, 8.507059e+37
  %v191 = vand.u32 %v178, 2147483648
  %v192 = vor.u32 1.1754944e-38, %v191
  %v193 = vsel %vm190, %v192, %v188
  %v194 = vmul.f32 1.0, %v193
  %v195 = vrcp.pop %v179
  %v196 = vmul.f32 %v179, %v195
  %v197 = vsub.f32 1.0, %v196
  %v198 = vmul.f32 %v195, %v197
  %v199 = vadd.f32 %v195, %v198
  %vm200 = vweird.f32 %v179
  %vm201 = vweird.f32 %v195
  %vm202 = vmor %vm200, %vm201
  %v203 = vsel %vm202, %v195, %v199
  %v204 = vand.u32 2147483647, %v179
  %vm205 = vcmp.eq.f32.partialorder %v204, 8.507059e+37
  %v206 = vand.u32 %v179, 2147483648
  %v207 = vor.u32 1.1754944e-38, %v206
  %v208 = vsel %vm205, %v207, %v203
  %v209 = vmul.f32 1.0, %v208
  %v210 = vmul.f32 %v47, %v194
  %v211 = vmul.f32 %v67, %v209
  %v212 = vadd.f32 %v210, %v22
  %v213 = vadd.f32 %v211, %v23
  %214 = vst [vmem:[%s5] sm:$0xff] %v212
  %215 = vst [vmem:[%s5 + $0x8] sm:$0xff] %v213
  %v216 = vrot.slane %v118, 4
  %vm217 = vcmask 1043456
  %v218 = vsel %vm217, %v98, %v216
  %220 = vst [vmem:[%s6] sm:$0x77] %v218
  // Predicated region
  $region22: #{forward.156} parent=0 // pred_check
    _
  $region23: #{forward.156} parent=0 // pred_check_branch
    %222 = sbr.rel (0) target = $region25
  $region24: #{forward.156} parent=0 // pred_region
    _
  $region25: #{forward.156} parent=0 // pred_fallthru
    _
  // Predicated region
  $region26: #{forward.156} parent=0 // pred_check
    _
  $region27: #{forward.156} parent=0 // pred_check_branch
    %224 = sbr.rel (0) target = $region29
  $region28: #{forward.156} parent=0 // pred_region
    _
  $region29: #{forward.156} parent=0 // pred_fallthru
    _
  // Predicated region
  $region30: #{forward.156} parent=0 // pred_check
    _
  $region31: #{forward.156} parent=0 // pred_check_branch
    %226 = sbr.rel (0) target = $region33
  $region32: #{forward.156} parent=0 // pred_region
    _
  $region33: #{forward.156} parent=0 // pred_fallthru
    _
  // Predicated region
  $region34: #{forward.156} parent=0 // pred_check
    _
  $region35: #{forward.156} parent=0 // pred_check_branch
    %228 = sbr.rel (0) target = $region37
  $region36: #{forward.156} parent=0 // pred_region
    _
  $region37: #{forward.156} parent=0 // pred_fallthru
    _

// kernel: forward.169
$region0: #{forward.169}
  #allocation0 [shape = 'u32[]', space=smem, size = 0x4, offset = 0x4, fixed_abs, tag = 'smem constant byte address 0x4 - core index']
  #allocation1 [shape = 'u32[72,128]{1,0:T(1,128)}', space=vmem, size = 0x9000, scoped, tag = 'internal scratch']
  %s0 = inlined_call_operand.vmem [shape: f32[8,256], index: 0, kind: input, shape index: {}]
  %s1 = inlined_call_operand.vmem [shape: f32[8,256], index: 1, kind: input, shape index: {}]
  %s2 = inlined_call_operand.vmem [shape: f32[8,8], index: 2, kind: input, shape index: {}]
  %s3 = inlined_call_operand.vmem [shape: f32[8,256], index: 3, kind: input, shape index: {}]
  %s4 = inlined_call_operand.vmem [shape: f32[8,8], index: 4, kind: input, shape index: {}]
  %s5 = inlined_call_operand.vmem [shape: f32[8,256], index: 5, kind: output, shape index: {}]
  %s6 = sld [smem:[#allocation0]]
  $region30: #{forward.169} parent=0
    _
  %s8 = ssub.s32 1, %s6
  %s9 = scalar_select 0, %s8, %s6
  // Predicated region
  $region2: #{forward.169} parent=0 // pred_check
    _
  $region3: #{forward.169} parent=0 // pred_check_branch
    %11 = sbr.rel (0) target = $region5
  $region4: #{forward.169} parent=0 // pred_region
    _
  $region5: #{forward.169} parent=0 // pred_fallthru
    _
  // Predicated region
  $region6: #{forward.169} parent=0 // pred_check
    _
  $region7: #{forward.169} parent=0 // pred_check_branch
    %13 = sbr.rel (0) target = $region9
  $region8: #{forward.169} parent=0 // pred_region
    _
  $region9: #{forward.169} parent=0 // pred_fallthru
    _
  // Predicated region
  $region10: #{forward.169} parent=0 // pred_check
    _
  $region11: #{forward.169} parent=0 // pred_check_branch
    %15 = sbr.rel (0) target = $region13
  $region12: #{forward.169} parent=0 // pred_region
    _
  $region13: #{forward.169} parent=0 // pred_fallthru
    _
  // Predicated region
  $region14: #{forward.169} parent=0 // pred_check
    _
  $region15: #{forward.169} parent=0 // pred_check_branch
    %17 = sbr.rel (0) target = $region17
  $region16: #{forward.169} parent=0 // pred_region
    _
  $region17: #{forward.169} parent=0 // pred_fallthru
    _
  // Predicated region
  $region18: #{forward.169} parent=0 // pred_check
    _
  $region19: #{forward.169} parent=0 // pred_check_branch
    %19 = sbr.rel (0) target = $region21
  $region20: #{forward.169} parent=0 // pred_region
    _
  $region21: #{forward.169} parent=0 // pred_fallthru
    _
  %v20 = vld [vmem:[%s0] sm:$0xff]
  %v21 = vld [vmem:[%s0 + $0x8] sm:$0xff]
  %v22 = vld [vmem:[%s2] sm:$0xff]
  %v23 = vld [vmem:[%s1] sm:$0xff]
  %v24 = vld [vmem:[%s1 + $0x8] sm:$0xff]
  %vm25 = vcmask 64512
  %v27 = vsel %vm25, %v22, 0
  %29 = vmatpush.msra.mxu0 0.0
  %30 = vmatpush.msra.mxu0 0.0
  %31 = vmatpush.msra.mxu0 0.0
  %32 = vmatpush.msra.mxu0 0.0
  %33 = vmatpush.msra.mxu0 0.0
  %34 = vmatpush.msra.mxu0 0.0
  %35 = vmatpush.msra.mxu0 0.0
  %36 = vmatpush.msra.mxu0 0.0
  %37 = vmatpush.msra.mxu0 0.0
  %38 = vmatpush.msra.mxu0 0.0
  %39 = vmatpush.msra.mxu0 0.0
  %40 = vmatpush.msra.mxu0 0.0
  %41 = vmatpush.msra.mxu0 0.0
  %42 = vmatpush.msra.mxu0 0.0
  %43 = vmatpush.msra.mxu0 0.0
  %44 = vmatpush.msra.mxu0 %v23
  %45 = vmatmul.f32.gmra.mxu0 %v27
  %v46 = vpop.f32.mrf.mxu0
  %v47 = vadd.f32 0.0, %v46
  %48 = vdwg.mxu0
  %49 = vmatpush.msra.mxu0 0.0
  %50 = vmatpush.msra.mxu0 0.0
  %51 = vmatpush.msra.mxu0 0.0
  %52 = vmatpush.msra.mxu0 0.0
  %53 = vmatpush.msra.mxu0 0.0
  %54 = vmatpush.msra.mxu0 0.0
  %55 = vmatpush.msra.mxu0 0.0
  %56 = vmatpush.msra.mxu0 0.0
  %57 = vmatpush.msra.mxu0 0.0
  %58 = vmatpush.msra.mxu0 0.0
  %59 = vmatpush.msra.mxu0 0.0
  %60 = vmatpush.msra.mxu0 0.0
  %61 = vmatpush.msra.mxu0 0.0
  %62 = vmatpush.msra.mxu0 0.0
  %63 = vmatpush.msra.mxu0 0.0
  %64 = vmatpush.msra.mxu0 %v24
  %65 = vmatmul.f32.gmra.mxu0 %v27
  %v66 = vpop.f32.mrf.mxu0
  %v67 = vadd.f32 0.0, %v66
  %68 = vdwg.mxu0
  %v69 = vadd.f32 %v20, %v47
  %v70 = vadd.f32 %v21, %v67
  %v71 = vld [vmem:[%s4] sm:$0xff]
  %v72 = vld [vmem:[%s3] sm:$0xff]
  %v73 = vld [vmem:[%s3 + $0x8] sm:$0xff]
  %v75 = vsel %vm25, %v71, 0
  %77 = vmatpush.msra.mxu0 0.0
  %78 = vmatpush.msra.mxu0 0.0
  %79 = vmatpush.msra.mxu0 0.0
  %80 = vmatpush.msra.mxu0 0.0
  %81 = vmatpush.msra.mxu0 0.0
  %82 = vmatpush.msra.mxu0 0.0
  %83 = vmatpush.msra.mxu0 0.0
  %84 = vmatpush.msra.mxu0 0.0
  %85 = vmatpush.msra.mxu0 0.0
  %86 = vmatpush.msra.mxu0 0.0
  %87 = vmatpush.msra.mxu0 0.0
  %88 = vmatpush.msra.mxu0 0.0
  %89 = vmatpush.msra.mxu0 0.0
  %90 = vmatpush.msra.mxu0 0.0
  %91 = vmatpush.msra.mxu0 0.0
  %92 = vmatpush.msra.mxu0 %v72
  %93 = vmatmul.f32.gmra.mxu0 %v75
  %v94 = vpop.f32.mrf.mxu0
  %v95 = vadd.f32 0.0, %v94
  %96 = vdwg.mxu0
  %97 = vmatpush.msra.mxu0 0.0
  %98 = vmatpush.msra.mxu0 0.0
  %99 = vmatpush.msra.mxu0 0.0
  %100 = vmatpush.msra.mxu0 0.0
  %101 = vmatpush.msra.mxu0 0.0
  %102 = vmatpush.msra.mxu0 0.0
  %103 = vmatpush.msra.mxu0 0.0
  %104 = vmatpush.msra.mxu0 0.0
  %105 = vmatpush.msra.mxu0 0.0
  %106 = vmatpush.msra.mxu0 0.0
  %107 = vmatpush.msra.mxu0 0.0
  %108 = vmatpush.msra.mxu0 0.0
  %109 = vmatpush.msra.mxu0 0.0
  %110 = vmatpush.msra.mxu0 0.0
  %111 = vmatpush.msra.mxu0 0.0
  %112 = vmatpush.msra.mxu0 %v73
  %113 = vmatmul.f32.gmra.mxu0 %v75
  %v114 = vpop.f32.mrf.mxu0
  %v115 = vadd.f32 0.0, %v114
  %116 = vdwg.mxu0
  %v117 = vadd.f32 %v69, %v95
  %v118 = vadd.f32 %v70, %v115
  %119 = vst [vmem:[%s5] sm:$0xff] %v117
  %120 = vst [vmem:[%s5 + $0x8] sm:$0xff] %v118
  // Predicated region
  $region22: #{forward.169} parent=0 // pred_check
    _
  $region23: #{forward.169} parent=0 // pred_check_branch
    %122 = sbr.rel (0) target = $region25
  $region24: #{forward.169} parent=0 // pred_region
    _
  $region25: #{forward.169} parent=0 // pred_fallthru
    _
  // Predicated region
  $region26: #{forward.169} parent=0 // pred_check
    _
  $region27: #{forward.169} parent=0 // pred_check_branch
    %124 = sbr.rel (0) target = $region29
  $region28: #{forward.169} parent=0 // pred_region
    _
  $region29: #{forward.169} parent=0 // pred_fallthru
    _

// kernel: forward.164
$region0: #{forward.164}
  #allocation0 [shape = 'u32[]', space=smem, size = 0x4, offset = 0x4, fixed_abs, tag = 'smem constant byte address 0x4 - core index']
  #allocation1 [shape = 'u32[72,128]{1,0:T(1,128)}', space=vmem, size = 0x9000, scoped, tag = 'internal scratch']
  %s0 = inlined_call_operand.vmem [shape: f32[144,256], index: 0, kind: input, shape index: {}]
  %s1 = inlined_call_operand.vmem [shape: f32[8,144], index: 1, kind: input, shape index: {}]
  %s2 = inlined_call_operand.vmem [shape: f32[8,256], index: 2, kind: output, shape index: {}]
  %s3 = sld [smem:[#allocation0]]
  $region18: #{forward.164} parent=0
    _
  %s5 = ssub.s32 1, %s3
  %s6 = scalar_select 0, %s5, %s3
  // Predicated region
  $region2: #{forward.164} parent=0 // pred_check
    _
  $region3: #{forward.164} parent=0 // pred_check_branch
    %8 = sbr.rel (0) target = $region5
  $region4: #{forward.164} parent=0 // pred_region
    _
  $region5: #{forward.164} parent=0 // pred_fallthru
    _
  // Predicated region
  $region6: #{forward.164} parent=0 // pred_check
    _
  $region7: #{forward.164} parent=0 // pred_check_branch
    %10 = sbr.rel (0) target = $region9
  $region8: #{forward.164} parent=0 // pred_region
    _
  $region9: #{forward.164} parent=0 // pred_fallthru
    _
  %v11 = vld [vmem:[%s1] sm:$0xff]
  %v12 = vld [vmem:[%s1 + $0x8] sm:$0xff]
  %v13 = vld [vmem:[%s0] sm:$0xff]
  %v14 = vld [vmem:[%s0 + $0x8] sm:$0xff]
  %v15 = vld [vmem:[%s0 + $0x10] sm:$0xff]
  %v16 = vld [vmem:[%s0 + $0x18] sm:$0xff]
  %v17 = vld [vmem:[%s0 + $0x20] sm:$0xff]
  %v18 = vld [vmem:[%s0 + $0x28] sm:$0xff]
  %v19 = vld [vmem:[%s0 + $0x30] sm:$0xff]
  %v20 = vld [vmem:[%s0 + $0x38] sm:$0xff]
  %v21 = vld [vmem:[%s0 + $0x40] sm:$0xff]
  %v22 = vld [vmem:[%s0 + $0x48] sm:$0xff]
  %v23 = vld [vmem:[%s0 + $0x50] sm:$0xff]
  %v24 = vld [vmem:[%s0 + $0x58] sm:$0xff]
  %v25 = vld [vmem:[%s0 + $0x60] sm:$0xff]
  %v26 = vld [vmem:[%s0 + $0x68] sm:$0xff]
  %v27 = vld [vmem:[%s0 + $0x70] sm:$0xff]
  %v28 = vld [vmem:[%s0 + $0x78] sm:$0xff]
  %v29 = vld [vmem:[%s0 + $0x80] sm:$0xff]
  %v30 = vld [vmem:[%s0 + $0x88] sm:$0xff]
  %v31 = vld [vmem:[%s0 + $0x90] sm:$0xff]
  %v32 = vld [vmem:[%s0 + $0x98] sm:$0xff]
  %v33 = vld [vmem:[%s0 + $0xa0] sm:$0xff]
  %v34 = vld [vmem:[%s0 + $0xa8] sm:$0xff]
  %v35 = vld [vmem:[%s0 + $0xb0] sm:$0xff]
  %v36 = vld [vmem:[%s0 + $0xb8] sm:$0xff]
  %v37 = vld [vmem:[%s0 + $0xc0] sm:$0xff]
  %v38 = vld [vmem:[%s0 + $0xc8] sm:$0xff]
  %v39 = vld [vmem:[%s0 + $0xd0] sm:$0xff]
  %v40 = vld [vmem:[%s0 + $0xd8] sm:$0xff]
  %v41 = vld [vmem:[%s0 + $0xe0] sm:$0xff]
  %v42 = vld [vmem:[%s0 + $0xe8] sm:$0xff]
  %v43 = vld [vmem:[%s0 + $0xf0] sm:$0xff]
  %v44 = vld [vmem:[%s0 + $0xf8] sm:$0xff]
  %v45 = vld [vmem:[%s0 + $0x100] sm:$0xff]
  %v46 = vld [vmem:[%s0 + $0x108] sm:$0xff]
  %v47 = vld [vmem:[%s0 + $0x110] sm:$0xff]
  %v48 = vld [vmem:[%s0 + $0x118] sm:$0xff]
  %vm49 = vcmask 130048
  %v51 = vsel %vm49, %v12, 0
  %53 = vmatpush.msra.mxu0 %v43
  %54 = vmatpush.msra.mxu0 %v41
  %55 = vmatpush.msra.mxu0 %v39
  %56 = vmatpush.msra.mxu0 %v37
  %57 = vmatpush.msra.mxu0 %v35
  %58 = vmatpush.msra.mxu0 %v33
  %59 = vmatpush.msra.mxu0 %v31
  %60 = vmatpush.msra.mxu0 %v29
  %61 = vmatpush.msra.mxu0 %v27
  %62 = vmatpush.msra.mxu0 %v25
  %63 = vmatpush.msra.mxu0 %v23
  %64 = vmatpush.msra.mxu0 %v21
  %65 = vmatpush.msra.mxu0 %v19
  %66 = vmatpush.msra.mxu0 %v17
  %67 = vmatpush.msra.mxu0 %v15
  %68 = vmatpush.msra.mxu0 %v13
  %69 = vmatmul.f32.gmra.mxu0 %v11
  %v70 = vpop.f32.mrf.mxu0
  %v71 = vadd.f32 0.0, %v70
  %72 = vdwg.mxu0
  %73 = vmatpush.msra.mxu0 0.0
  %74 = vmatpush.msra.mxu0 0.0
  %75 = vmatpush.msra.mxu0 0.0
  %76 = vmatpush.msra.mxu0 0.0
  %77 = vmatpush.msra.mxu0 0.0
  %78 = vmatpush.msra.mxu0 0.0
  %79 = vmatpush.msra.mxu0 0.0
  %80 = vmatpush.msra.mxu0 0.0
  %81 = vmatpush.msra.mxu0 0.0
  %82 = vmatpush.msra.mxu0 0.0
  %83 = vmatpush.msra.mxu0 0.0
  %84 = vmatpush.msra.mxu0 0.0
  %85 = vmatpush.msra.mxu0 0.0
  %86 = vmatpush.msra.mxu0 0.0
  %87 = vmatpush.msra.mxu0 %v47
  %88 = vmatpush.msra.mxu0 %v45
  %89 = vmatmul.f32.gmra.mxu0 %v51
  %v90 = vpop.f32.mrf.mxu0
  %v91 = vadd.f32 %v71, %v90
  %92 = vdwg.mxu0
  %93 = vmatpush.msra.mxu0 %v44
  %94 = vmatpush.msra.mxu0 %v42
  %95 = vmatpush.msra.mxu0 %v40
  %96 = vmatpush.msra.mxu0 %v38
  %97 = vmatpush.msra.mxu0 %v36
  %98 = vmatpush.msra.mxu0 %v34
  %99 = vmatpush.msra.mxu0 %v32
  %100 = vmatpush.msra.mxu0 %v30
  %101 = vmatpush.msra.mxu0 %v28
  %102 = vmatpush.msra.mxu0 %v26
  %103 = vmatpush.msra.mxu0 %v24
  %104 = vmatpush.msra.mxu0 %v22
  %105 = vmatpush.msra.mxu0 %v20
  %106 = vmatpush.msra.mxu0 %v18
  %107 = vmatpush.msra.mxu0 %v16
  %108 = vmatpush.msra.mxu0 %v14
  %109 = vmatmul.f32.gmra.mxu0 %v11
  %v110 = vpop.f32.mrf.mxu0
  %v111 = vadd.f32 0.0, %v110
  %112 = vdwg.mxu0
  %113 = vmatpush.msra.mxu0 0.0
  %114 = vmatpush.msra.mxu0 0.0
  %115 = vmatpush.msra.mxu0 0.0
  %116 = vmatpush.msra.mxu0 0.0
  %117 = vmatpush.msra.mxu0 0.0
  %118 = vmatpush.msra.mxu0 0.0
  %119 = vmatpush.msra.mxu0 0.0
  %120 = vmatpush.msra.mxu0 0.0
  %121 = vmatpush.msra.mxu0 0.0
  %122 = vmatpush.msra.mxu0 0.0
  %123 = vmatpush.msra.mxu0 0.0
  %124 = vmatpush.msra.mxu0 0.0
  %125 = vmatpush.msra.mxu0 0.0
  %126 = vmatpush.msra.mxu0 0.0
  %127 = vmatpush.msra.mxu0 %v48
  %128 = vmatpush.msra.mxu0 %v46
  %129 = vmatmul.f32.gmra.mxu0 %v51
  %v130 = vpop.f32.mrf.mxu0
  %v131 = vadd.f32 %v111, %v130
  %132 = vdwg.mxu0
  %133 = vst [vmem:[%s2] sm:$0xff] %v91
  %134 = vst [vmem:[%s2 + $0x8] sm:$0xff] %v131
  // Predicated region
  $region10: #{forward.164} parent=0 // pred_check
    _
  $region11: #{forward.164} parent=0 // pred_check_branch
    %136 = sbr.rel (0) target = $region13
  $region12: #{forward.164} parent=0 // pred_region
    _
  $region13: #{forward.164} parent=0 // pred_fallthru
    _
  // Predicated region
  $region14: #{forward.164} parent=0 // pred_check
    _
  $region15: #{forward.164} parent=0 // pred_check_branch
    %138 = sbr.rel (0) target = $region17
  $region16: #{forward.164} parent=0 // pred_region
    _
  $region17: #{forward.164} parent=0 // pred_fallthru
    _

// kernel: forward.175
$region0: #{forward.175}
  #allocation0 [shape = 'u32[]', space=smem, size = 0x4, offset = 0x4, fixed_abs, tag = 'smem constant byte address 0x4 - core index']
  #allocation1 [shape = 'u32[72,128]{1,0:T(1,128)}', space=vmem, size = 0x9000, scoped, tag = 'internal scratch']
  %s0 = inlined_call_operand.vmem [shape: f32[12,64], index: 0, kind: input, shape index: {}]
  %s1 = inlined_call_operand.vmem [shape: f32[12,64], index: 1, kind: input, shape index: {}]
  %s2 = inlined_call_operand.vmem [shape: f32[12,12], index: 2, kind: input, shape index: {}]
  %s3 = inlined_call_operand.vmem [shape: f32[12,64], index: 3, kind: input, shape index: {}]
  %s4 = inlined_call_operand.vmem [shape: f32[12,12], index: 4, kind: input, shape index: {}]
  %s5 = inlined_call_operand.vmem [shape: f32[12,64], index: 5, kind: output, shape index: {}]
  %s6 = sld [smem:[#allocation0]]
  $region30: #{forward.175} parent=0
    _
  %s8 = ssub.s32 1, %s6
  %s9 = scalar_select 0, %s8, %s6
  // Predicated region
  $region2: #{forward.175} parent=0 // pred_check
    _
  $region3: #{forward.175} parent=0 // pred_check_branch
    %11 = sbr.rel (0) target = $region5
  $region4: #{forward.175} parent=0 // pred_region
    _
  $region5: #{forward.175} parent=0 // pred_fallthru
    _
  // Predicated region
  $region6: #{forward.175} parent=0 // pred_check
    _
  $region7: #{forward.175} parent=0 // pred_check_branch
    %13 = sbr.rel (0) target = $region9
  $region8: #{forward.175} parent=0 // pred_region
    _
  $region9: #{forward.175} parent=0 // pred_fallthru
    _
  // Predicated region
  $region10: #{forward.175} parent=0 // pred_check
    _
  $region11: #{forward.175} parent=0 // pred_check_branch
    %15 = sbr.rel (0) target = $region13
  $region12: #{forward.175} parent=0 // pred_region
    _
  $region13: #{forward.175} parent=0 // pred_fallthru
    _
  // Predicated region
  $region14: #{forward.175} parent=0 // pred_check
    _
  $region15: #{forward.175} parent=0 // pred_check_branch
    %17 = sbr.rel (0) target = $region17
  $region16: #{forward.175} parent=0 // pred_region
    _
  $region17: #{forward.175} parent=0 // pred_fallthru
    _
  // Predicated region
  $region18: #{forward.175} parent=0 // pred_check
    _
  $region19: #{forward.175} parent=0 // pred_check_branch
    %19 = sbr.rel (0) target = $region21
  $region20: #{forward.175} parent=0 // pred_region
    _
  $region21: #{forward.175} parent=0 // pred_fallthru
    _
  %v20 = vld [vmem:[%s0] sm:$0xff]
  %v21 = vld [vmem:[%s0 + $0x8] sm:$0xf]
  %v22 = vld [vmem:[%s2] sm:$0xff]
  %v23 = vld [vmem:[%s2 + $0x8] sm:$0xf]
  %v24 = vld [vmem:[%s1] sm:$0xff]
  %v25 = vld [vmem:[%s1 + $0x8] sm:$0xf]
  %vm26 = vcmask 97280
  %v28 = vsel %vm26, %v22, 0
  %v31 = vsel %vm26, %v23, 0
  %vm33 = vcmask 1043456
  %v35 = vsel %vm33, %v25, 0
  %37 = vmatpush.msra.mxu0 0.0
  %38 = vmatpush.msra.mxu0 0.0
  %39 = vmatpush.msra.mxu0 0.0
  %40 = vmatpush.msra.mxu0 0.0
  %41 = vmatpush.msra.mxu0 0.0
  %42 = vmatpush.msra.mxu0 0.0
  %43 = vmatpush.msra.mxu0 0.0
  %44 = vmatpush.msra.mxu0 0.0
  %45 = vmatpush.msra.mxu0 0.0
  %46 = vmatpush.msra.mxu0 0.0
  %47 = vmatpush.msra.mxu0 0.0
  %48 = vmatpush.msra.mxu0 0.0
  %49 = vmatpush.msra.mxu0 0.0
  %50 = vmatpush.msra.mxu0 0.0
  %51 = vmatpush.msra.mxu0 %v35
  %52 = vmatpush.msra.mxu0 %v24
  %53 = vmatmul.f32.gmra.mxu0 %v28
  %v54 = vpop.f32.mrf.mxu0
  %v55 = vadd.f32 0.0, %v54
  %56 = vmatmul.f32.gmra.mxu0 %v31
  %v57 = vpop.f32.mrf.mxu0
  %v58 = vadd.f32 0.0, %v57
  %59 = vdwg.mxu0
  %v60 = vadd.f32 %v20, %v55
  %v61 = vadd.f32 %v21, %v58
  %v62 = vld [vmem:[%s4] sm:$0xff]
  %v63 = vld [vmem:[%s4 + $0x8] sm:$0xf]
  %v64 = vld [vmem:[%s3] sm:$0xff]
  %v65 = vld [vmem:[%s3 + $0x8] sm:$0xf]
  %v67 = vsel %vm26, %v62, 0
  %v70 = vsel %vm26, %v63, 0
  %v73 = vsel %vm33, %v65, 0
  %75 = vmatpush.msra.mxu0 0.0
  %76 = vmatpush.msra.mxu0 0.0
  %77 = vmatpush.msra.mxu0 0.0
  %78 = vmatpush.msra.mxu0 0.0
  %79 = vmatpush.msra.mxu0 0.0
  %80 = vmatpush.msra.mxu0 0.0
  %81 = vmatpush.msra.mxu0 0.0
  %82 = vmatpush.msra.mxu0 0.0
  %83 = vmatpush.msra.mxu0 0.0
  %84 = vmatpush.msra.mxu0 0.0
  %85 = vmatpush.msra.mxu0 0.0
  %86 = vmatpush.msra.mxu0 0.0
  %87 = vmatpush.msra.mxu0 0.0
  %88 = vmatpush.msra.mxu0 0.0
  %89 = vmatpush.msra.mxu0 %v73
  %90 = vmatpush.msra.mxu0 %v64
  %91 = vmatmul.f32.gmra.mxu0 %v67
  %v92 = vpop.f32.mrf.mxu0
  %v93 = vadd.f32 0.0, %v92
  %94 = vmatmul.f32.gmra.mxu0 %v70
  %v95 = vpop.f32.mrf.mxu0
  %v96 = vadd.f32 0.0, %v95
  %97 = vdwg.mxu0
  %v98 = vadd.f32 %v60, %v93
  %v99 = vadd.f32 %v61, %v96
  %vm100 = vcmask 523264
  %101 = vst.msk [vmem:[%s5] sm:$0xff] %vm100, %v98
  %vm102 = vcmask 519168
  %103 = vst.msk [vmem:[%s5 + $0x8] sm:$0xf] %vm102, %v99
  // Predicated region
  $region22: #{forward.175} parent=0 // pred_check
    _
  $region23: #{forward.175} parent=0 // pred_check_branch
    %105 = sbr.rel (0) target = $region25
  $region24: #{forward.175} parent=0 // pred_region
    _
  $region25: #{forward.175} parent=0 // pred_fallthru
    _
  // Predicated region
  $region26: #{forward.175} parent=0 // pred_check
    _
  $region27: #{forward.175} parent=0 // pred_check_branch
    %107 = sbr.rel (0) target = $region29
  $region28: #{forward.175} parent=0 // pred_region
    _
  $region29: #{forward.175} parent=0 // pred_fallthru
    _

// kernel: forward.181
$region0: #{forward.181}
  #allocation0 [shape = 'u32[]', space=smem, size = 0x4, offset = 0x4, fixed_abs, tag = 'smem constant byte address 0x4 - core index']
  #allocation1 [shape = 'u32[72,128]{1,0:T(1,128)}', space=vmem, size = 0x9000, scoped, tag = 'internal scratch']
  %s0 = inlined_call_operand.vmem [shape: f32[16,16], index: 0, kind: input, shape index: {}]
  %s1 = inlined_call_operand.vmem [shape: f32[16,16], index: 1, kind: input, shape index: {}]
  %s2 = inlined_call_operand.vmem [shape: f32[16,16], index: 2, kind: input, shape index: {}]
  %s3 = inlined_call_operand.vmem [shape: f32[16,16], index: 3, kind: input, shape index: {}]
  %s4 = inlined_call_operand.vmem [shape: f32[16,16], index: 4, kind: input, shape index: {}]
  %s5 = inlined_call_operand.vmem [shape: f32[16,16], index: 5, kind: output, shape index: {}]
  %s6 = sld [smem:[#allocation0]]
  $region30: #{forward.181} parent=0
    _
  %s8 = ssub.s32 1, %s6
  %s9 = scalar_select 0, %s8, %s6
  // Predicated region
  $region2: #{forward.181} parent=0 // pred_check
    _
  $region3: #{forward.181} parent=0 // pred_check_branch
    %11 = sbr.rel (0) target = $region5
  $region4: #{forward.181} parent=0 // pred_region
    _
  $region5: #{forward.181} parent=0 // pred_fallthru
    _
  // Predicated region
  $region6: #{forward.181} parent=0 // pred_check
    _
  $region7: #{forward.181} parent=0 // pred_check_branch
    %13 = sbr.rel (0) target = $region9
  $region8: #{forward.181} parent=0 // pred_region
    _
  $region9: #{forward.181} parent=0 // pred_fallthru
    _
  // Predicated region
  $region10: #{forward.181} parent=0 // pred_check
    _
  $region11: #{forward.181} parent=0 // pred_check_branch
    %15 = sbr.rel (0) target = $region13
  $region12: #{forward.181} parent=0 // pred_region
    _
  $region13: #{forward.181} parent=0 // pred_fallthru
    _
  // Predicated region
  $region14: #{forward.181} parent=0 // pred_check
    _
  $region15: #{forward.181} parent=0 // pred_check_branch
    %17 = sbr.rel (0) target = $region17
  $region16: #{forward.181} parent=0 // pred_region
    _
  $region17: #{forward.181} parent=0 // pred_fallthru
    _
  // Predicated region
  $region18: #{forward.181} parent=0 // pred_check
    _
  $region19: #{forward.181} parent=0 // pred_check_branch
    %19 = sbr.rel (0) target = $region21
  $region20: #{forward.181} parent=0 // pred_region
    _
  $region21: #{forward.181} parent=0 // pred_fallthru
    _
  %v20 = vld [vmem:[%s0] sm:$0xff]
  %v21 = vld [vmem:[%s0 + $0x8] sm:$0xff]
  %v22 = vld [vmem:[%s2] sm:$0xff]
  %v23 = vld [vmem:[%s2 + $0x8] sm:$0xff]
  %v24 = vld [vmem:[%s1] sm:$0xff]
  %v25 = vld [vmem:[%s1 + $0x8] sm:$0xff]
  %vm26 = vcmask 130048
  %v28 = vsel %vm26, %v22, 0
  %v31 = vsel %vm26, %v23, 0
  %33 = vmatpush.msra.mxu0 0.0
  %34 = vmatpush.msra.mxu0 0.0
  %35 = vmatpush.msra.mxu0 0.0
  %36 = vmatpush.msra.mxu0 0.0
  %37 = vmatpush.msra.mxu0 0.0
  %38 = vmatpush.msra.mxu0 0.0
  %39 = vmatpush.msra.mxu0 0.0
  %40 = vmatpush.msra.mxu0 0.0
  %41 = vmatpush.msra.mxu0 0.0
  %42 = vmatpush.msra.mxu0 0.0
  %43 = vmatpush.msra.mxu0 0.0
  %44 = vmatpush.msra.mxu0 0.0
  %45 = vmatpush.msra.mxu0 0.0
  %46 = vmatpush.msra.mxu0 0.0
  %47 = vmatpush.msra.mxu0 %v25
  %48 = vmatpush.msra.mxu0 %v24
  %49 = vmatmul.f32.gmra.mxu0 %v28
  %v50 = vpop.f32.mrf.mxu0
  %v51 = vadd.f32 0.0, %v50
  %52 = vmatmul.f32.gmra.mxu0 %v31
  %v53 = vpop.f32.mrf.mxu0
  %v54 = vadd.f32 0.0, %v53
  %55 = vdwg.mxu0
  %v56 = vadd.f32 %v20, %v51
  %v57 = vadd.f32 %v21, %v54
  %v58 = vld [vmem:[%s4] sm:$0xff]
  %v59 = vld [vmem:[%s4 + $0x8] sm:$0xff]
  %v60 = vld [vmem:[%s3] sm:$0xff]
  %v61 = vld [vmem:[%s3 + $0x8] sm:$0xff]
  %v63 = vsel %vm26, %v58, 0
  %v66 = vsel %vm26, %v59, 0
  %68 = vmatpush.msra.mxu0 0.0
  %69 = vmatpush.msra.mxu0 0.0
  %70 = vmatpush.msra.mxu0 0.0
  %71 = vmatpush.msra.mxu0 0.0
  %72 = vmatpush.msra.mxu0 0.0
  %73 = vmatpush.msra.mxu0 0.0
  %74 = vmatpush.msra.mxu0 0.0
  %75 = vmatpush.msra.mxu0 0.0
  %76 = vmatpush.msra.mxu0 0.0
  %77 = vmatpush.msra.mxu0 0.0
  %78 = vmatpush.msra.mxu0 0.0
  %79 = vmatpush.msra.mxu0 0.0
  %80 = vmatpush.msra.mxu0 0.0
  %81 = vmatpush.msra.mxu0 0.0
  %82 = vmatpush.msra.mxu0 %v61
  %83 = vmatpush.msra.mxu0 %v60
  %84 = vmatmul.f32.gmra.mxu0 %v63
  %v85 = vpop.f32.mrf.mxu0
  %v86 = vadd.f32 0.0, %v85
  %87 = vmatmul.f32.gmra.mxu0 %v66
  %v88 = vpop.f32.mrf.mxu0
  %v89 = vadd.f32 0.0, %v88
  %90 = vdwg.mxu0
  %v91 = vadd.f32 %v56, %v86
  %v92 = vadd.f32 %v57, %v89
  %93 = vst.msk [vmem:[%s5] sm:$0xff] %vm26, %v91
  %94 = vst.msk [vmem:[%s5 + $0x8] sm:$0xff] %vm26, %v92
  // Predicated region
  $region22: #{forward.181} parent=0 // pred_check
    _
  $region23: #{forward.181} parent=0 // pred_check_branch
    %96 = sbr.rel (0) target = $region25
  $region24: #{forward.181} parent=0 // pred_region
    _
  $region25: #{forward.181} parent=0 // pred_fallthru
    _
  // Predicated region
  $region26: #{forward.181} parent=0 // pred_check
    _
  $region27: #{forward.181} parent=0 // pred_check_branch
    %98 = sbr.rel (0) target = $region29
  $region28: #{forward.181} parent=0 // pred_region
    _
  $region29: #{forward.181} parent=0 // pred_fallthru
    _

// kernel: forward.183
$region0: #{forward.183}
  #allocation0 [shape = 'u32[]', space=smem, size = 0x4, offset = 0x4, fixed_abs, tag = 'smem constant byte address 0x4 - core index']
  #allocation1 [shape = 'u32[72,128]{1,0:T(1,128)}', space=vmem, size = 0x9000, scoped, tag = 'internal scratch']
  %s0 = inlined_call_operand.vmem [shape: f32[144,16], index: 0, kind: input, shape index: {}]
  %s1 = inlined_call_operand.vmem [shape: f32[32,144], index: 1, kind: input, shape index: {}]
  %s2 = inlined_call_operand.vmem [shape: f32[32,16], index: 2, kind: input, shape index: {}]
  %s3 = inlined_call_operand.vmem [shape: f32[16,32], index: 3, kind: input, shape index: {}]
  %s4 = inlined_call_operand.vmem [shape: f32[4,16], index: 4, kind: input, shape index: {}]
  %s5 = inlined_call_operand.vmem [shape: f32[16,4], index: 5, kind: input, shape index: {}]
  %s6 = inlined_call_operand.vmem [shape: f32[16,1], index: 6, kind: input, shape index: {}]
  %s7 = inlined_call_operand.vmem [shape: f32[1,16], index: 7, kind: input, shape index: {}]
  %s8 = inlined_call_operand.vmem [shape: f32[16,16], index: 8, kind: input, shape index: {}]
  %s9 = inlined_call_operand.vmem [shape: f32[16,16], index: 9, kind: output, shape index: {}]
  %s10 = sld [smem:[#allocation0]]
  $region46: #{forward.183} parent=0
    _
  %s12 = ssub.s32 1, %s10
  %s13 = scalar_select 0, %s12, %s10
  // Predicated region
  $region2: #{forward.183} parent=0 // pred_check
    _
  $region3: #{forward.183} parent=0 // pred_check_branch
    %15 = sbr.rel (0) target = $region5
  $region4: #{forward.183} parent=0 // pred_region
    _
  $region5: #{forward.183} parent=0 // pred_fallthru
    _
  // Predicated region
  $region6: #{forward.183} parent=0 // pred_check
    _
  $region7: #{forward.183} parent=0 // pred_check_branch
    %17 = sbr.rel (0) target = $region9
  $region8: #{forward.183} parent=0 // pred_region
    _
  $region9: #{forward.183} parent=0 // pred_fallthru
    _
  // Predicated region
  $region10: #{forward.183} parent=0 // pred_check
    _
  $region11: #{forward.183} parent=0 // pred_check_branch
    %19 = sbr.rel (0) target = $region13
  $region12: #{forward.183} parent=0 // pred_region
    _
  $region13: #{forward.183} parent=0 // pred_fallthru
    _
  // Predicated region
  $region14: #{forward.183} parent=0 // pred_check
    _
  $region15: #{forward.183} parent=0 // pred_check_branch
    %21 = sbr.rel (0) target = $region17
  $region16: #{forward.183} parent=0 // pred_region
    _
  $region17: #{forward.183} parent=0 // pred_fallthru
    _
  // Predicated region
  $region18: #{forward.183} parent=0 // pred_check
    _
  $region19: #{forward.183} parent=0 // pred_check_branch
    %23 = sbr.rel (0) target = $region21
  $region20: #{forward.183} parent=0 // pred_region
    _
  $region21: #{forward.183} parent=0 // pred_fallthru
    _
  // Predicated region
  $region22: #{forward.183} parent=0 // pred_check
    _
  $region23: #{forward.183} parent=0 // pred_check_branch
    %25 = sbr.rel (0) target = $region25
  $region24: #{forward.183} parent=0 // pred_region
    _
  $region25: #{forward.183} parent=0 // pred_fallthru
    _
  // Predicated region
  $region26: #{forward.183} parent=0 // pred_check
    _
  $region27: #{forward.183} parent=0 // pred_check_branch
    %27 = sbr.rel (0) target = $region29
  $region28: #{forward.183} parent=0 // pred_region
    _
  $region29: #{forward.183} parent=0 // pred_fallthru
    _
  // Predicated region
  $region30: #{forward.183} parent=0 // pred_check
    _
  $region31: #{forward.183} parent=0 // pred_check_branch
    %29 = sbr.rel (0) target = $region33
  $region32: #{forward.183} parent=0 // pred_region
    _
  $region33: #{forward.183} parent=0 // pred_fallthru
    _
  // Predicated region
  $region34: #{forward.183} parent=0 // pred_check
    _
  $region35: #{forward.183} parent=0 // pred_check_branch
    %31 = sbr.rel (0) target = $region37
  $region36: #{forward.183} parent=0 // pred_region
    _
  $region37: #{forward.183} parent=0 // pred_fallthru
    _
  %v32 = vld [vmem:[%s1] sm:$0xff]
  %v33 = vld [vmem:[%s1 + $0x8] sm:$0xff]
  %v34 = vld [vmem:[%s1 + $0x10] sm:$0xff]
  %v35 = vld [vmem:[%s1 + $0x18] sm:$0xff]
  %v36 = vld [vmem:[%s1 + $0x20] sm:$0xff]
  %v37 = vld [vmem:[%s1 + $0x28] sm:$0xff]
  %v38 = vld [vmem:[%s1 + $0x30] sm:$0xff]
  %v39 = vld [vmem:[%s1 + $0x38] sm:$0xff]
  %v40 = vld [vmem:[%s0] sm:$0xff]
  %v41 = vld [vmem:[%s0 + $0x8] sm:$0xff]
  %v42 = vld [vmem:[%s0 + $0x10] sm:$0xff]
  %v43 = vld [vmem:[%s0 + $0x18] sm:$0xff]
  %v44 = vld [vmem:[%s0 + $0x20] sm:$0xff]
  %v45 = vld [vmem:[%s0 + $0x28] sm:$0xff]
  %v46 = vld [vmem:[%s0 + $0x30] sm:$0xff]
  %v47 = vld [vmem:[%s0 + $0x38] sm:$0xff]
  %v48 = vld [vmem:[%s0 + $0x40] sm:$0xff]
  %v49 = vld [vmem:[%s0 + $0x48] sm:$0xff]
  %v50 = vld [vmem:[%s0 + $0x50] sm:$0xff]
  %v51 = vld [vmem:[%s0 + $0x58] sm:$0xff]
  %v52 = vld [vmem:[%s0 + $0x60] sm:$0xff]
  %v53 = vld [vmem:[%s0 + $0x68] sm:$0xff]
  %v54 = vld [vmem:[%s0 + $0x70] sm:$0xff]
  %v55 = vld [vmem:[%s0 + $0x78] sm:$0xff]
  %v56 = vld [vmem:[%s0 + $0x80] sm:$0xff]
  %v57 = vld [vmem:[%s0 + $0x88] sm:$0xff]
  %vm58 = vcmask 130048
  %v60 = vsel %vm58, %v33, 0
  %v63 = vsel %vm58, %v35, 0
  %v66 = vsel %vm58, %v37, 0
  %v69 = vsel %vm58, %v39, 0
  %71 = vmatpush.msra.mxu0 %v55
  %72 = vmatpush.msra.mxu0 %v54
  %73 = vmatpush.msra.mxu0 %v53
  %74 = vmatpush.msra.mxu0 %v52
  %75 = vmatpush.msra.mxu0 %v51
  %76 = vmatpush.msra.mxu0 %v50
  %77 = vmatpush.msra.mxu0 %v49
  %78 = vmatpush.msra.mxu0 %v48
  %79 = vmatpush.msra.mxu0 %v47
  %80 = vmatpush.msra.mxu0 %v46
  %81 = vmatpush.msra.mxu0 %v45
  %82 = vmatpush.msra.mxu0 %v44
  %83 = vmatpush.msra.mxu0 %v43
  %84 = vmatpush.msra.mxu0 %v42
  %85 = vmatpush.msra.mxu0 %v41
  %86 = vmatpush.msra.mxu0 %v40
  %87 = vmatmul.f32.gmra.mxu0 %v32
  %v88 = vpop.f32.mrf.mxu0
  %v89 = vadd.f32 0.0, %v88
  %90 = vmatmul.f32.gmra.mxu0 %v34
  %v91 = vpop.f32.mrf.mxu0
  %v92 = vadd.f32 0.0, %v91
  %93 = vmatmul.f32.gmra.mxu0 %v36
  %v94 = vpop.f32.mrf.mxu0
  %v95 = vadd.f32 0.0, %v94
  %96 = vmatmul.f32.gmra.mxu0 %v38
  %v97 = vpop.f32.mrf.mxu0
  %v98 = vadd.f32 0.0, %v97
  %99 = vdwg.mxu0
  %100 = vmatpush.msra.mxu0 0.0
  %101 = vmatpush.msra.mxu0 0.0
  %102 = vmatpush.msra.mxu0 0.0
  %103 = vmatpush.msra.mxu0 0.0
  %104 = vmatpush.msra.mxu0 0.0
  %105 = vmatpush.msra.mxu0 0.0
  %106 = vmatpush.msra.mxu0 0.0
  %107 = vmatpush.msra.mxu0 0.0
  %108 = vmatpush.msra.mxu0 0.0
  %109 = vmatpush.msra.mxu0 0.0
  %110 = vmatpush.msra.mxu0 0.0
  %111 = vmatpush.msra.mxu0 0.0
  %112 = vmatpush.msra.mxu0 0.0
  %113 = vmatpush.msra.mxu0 0.0
  %114 = vmatpush.msra.mxu0 %v57
  %115 = vmatpush.msra.mxu0 %v56
  %116 = vmatmul.f32.gmra.mxu0 %v60
  %v117 = vpop.f32.mrf.mxu0
  %v118 = vadd.f32 %v89, %v117
  %119 = vmatmul.f32.gmra.mxu0 %v63
  %v120 = vpop.f32.mrf.mxu0
  %v121 = vadd.f32 %v92, %v120
  %122 = vmatmul.f32.gmra.mxu0 %v66
  %v123 = vpop.f32.mrf.mxu0
  %v124 = vadd.f32 %v95, %v123
  %125 = vmatmul.f32.gmra.mxu0 %v69
  %v126 = vpop.f32.mrf.mxu0
  %v127 = vadd.f32 %v98, %v126
  %128 = vdwg.mxu0
  %v129 = vld [vmem:[%s3] sm:$0xff]
  %v130 = vld [vmem:[%s3 + $0x8] sm:$0xff]
  %v131 = vld [vmem:[%s2] sm:$0xff]
  %v132 = vld [vmem:[%s2 + $0x8] sm:$0xff]
  %v133 = vld [vmem:[%s2 + $0x10] sm:$0xff]
  %v134 = vld [vmem:[%s2 + $0x18] sm:$0xff]
  %v135 = vmul.f32 %v118, %v131
  %v136 = vmul.f32 %v121, %v132
  %v137 = vmul.f32 %v124, %v133
  %v138 = vmul.f32 %v127, %v134
  %vm139 = vcmask 261120
  %v141 = vsel %vm139, %v129, 0
  %v144 = vsel %vm139, %v130, 0
  %146 = vmatpush.msra.mxu0 0.0
  %147 = vmatpush.msra.mxu0 0.0
  %148 = vmatpush.msra.mxu0 0.0
  %149 = vmatpush.msra.mxu0 0.0
  %150 = vmatpush.msra.mxu0 0.0
  %151 = vmatpush.msra.mxu0 0.0
  %152 = vmatpush.msra.mxu0 0.0
  %153 = vmatpush.msra.mxu0 0.0
  %154 = vmatpush.msra.mxu0 0.0
  %155 = vmatpush.msra.mxu0 0.0
  %156 = vmatpush.msra.mxu0 0.0
  %157 = vmatpush.msra.mxu0 0.0
  %158 = vmatpush.msra.mxu0 %v138
  %159 = vmatpush.msra.mxu0 %v137
  %160 = vmatpush.msra.mxu0 %v136
  %161 = vmatpush.msra.mxu0 %v135
  %162 = vmatmul.f32.gmra.mxu0 %v141
  %v163 = vpop.f32.mrf.mxu0
  %v164 = vadd.f32 0.0, %v163
  %165 = vmatmul.f32.gmra.mxu0 %v144
  %v166 = vpop.f32.mrf.mxu0
  %v167 = vadd.f32 0.0, %v166
  %168 = vdwg.mxu0
  %v169 = vld [vmem:[%s6] sm:$0xff]
  %v170 = vld [vmem:[%s6 + $0x8] sm:$0xff]
  %v172 = vsel %vm58, %v164, 0
  %v175 = vsel %vm58, %v167, 0
  %177 = vmatpush.msra.mxu0 0.0
  %178 = vmatpush.msra.mxu0 0.0
  %179 = vmatpush.msra.mxu0 0.0
  %180 = vmatpush.msra.mxu0 0.0
  %181 = vmatpush.msra.mxu0 0.0
  %182 = vmatpush.msra.mxu0 0.0
  %183 = vmatpush.msra.mxu0 0.0
  %184 = vmatpush.msra.mxu0 0.0
  %185 = vmatpush.msra.mxu0 0.0
  %186 = vmatpush.msra.mxu0 0.0
  %187 = vmatpush.msra.mxu0 0.0
  %188 = vmatpush.msra.mxu0 0.0
  %189 = vmatpush.msra.mxu0 0.0
  %190 = vmatpush.msra.mxu0 0.0
  %191 = vmatpush.msra.mxu0 %v170
  %192 = vmatpush.msra.mxu0 %v169
  %193 = vmatmul.f32.gmra.mxu0 %v172
  %v194 = vpop.f32.mrf.mxu0
  %v195 = vadd.f32 0.0, %v194
  %196 = vmatmul.f32.gmra.mxu0 %v175
  %v197 = vpop.f32.mrf.mxu0
  %v198 = vadd.f32 0.0, %v197
  %199 = vdwg.mxu0
  %v200 = vld [vmem:[%s4] sm:$0xf]
  %v202 = vsel %vm58, %v200, 0
  %204 = vmatpush.msra.mxu0 0.0
  %205 = vmatpush.msra.mxu0 0.0
  %206 = vmatpush.msra.mxu0 0.0
  %207 = vmatpush.msra.mxu0 0.0
  %208 = vmatpush.msra.mxu0 0.0
  %209 = vmatpush.msra.mxu0 0.0
  %210 = vmatpush.msra.mxu0 0.0
  %211 = vmatpush.msra.mxu0 0.0
  %212 = vmatpush.msra.mxu0 0.0
  %213 = vmatpush.msra.mxu0 0.0
  %214 = vmatpush.msra.mxu0 0.0
  %215 = vmatpush.msra.mxu0 0.0
  %216 = vmatpush.msra.mxu0 0.0
  %217 = vmatpush.msra.mxu0 0.0
  %218 = vmatpush.msra.mxu0 %v198
  %219 = vmatpush.msra.mxu0 %v195
  %220 = vmatmul.f32.gmra.mxu0 %v202
  %v221 = vpop.f32.mrf.mxu0
  %v222 = vadd.f32 0.0, %v221
  %223 = vdwg.mxu0
  %v224 = vmax.f32 %v222, 0.0
  %v225 = vld [vmem:[%s5] sm:$0xff]
  %v226 = vld [vmem:[%s5 + $0x8] sm:$0xff]
  %vm227 = vcmask 31744
  %v229 = vsel %vm227, %v225, 0
  %v232 = vsel %vm227, %v226, 0
  %vm234 = vcmask 1043456
  %v236 = vsel %vm234, %v224, 0
  %238 = vmatpush.msra.mxu0 0.0
  %239 = vmatpush.msra.mxu0 0.0
  %240 = vmatpush.msra.mxu0 0.0
  %241 = vmatpush.msra.mxu0 0.0
  %242 = vmatpush.msra.mxu0 0.0
  %243 = vmatpush.msra.mxu0 0.0
  %244 = vmatpush.msra.mxu0 0.0
  %245 = vmatpush.msra.mxu0 0.0
  %246 = vmatpush.msra.mxu0 0.0
  %247 = vmatpush.msra.mxu0 0.0
  %248 = vmatpush.msra.mxu0 0.0
  %249 = vmatpush.msra.mxu0 0.0
  %250 = vmatpush.msra.mxu0 0.0
  %251 = vmatpush.msra.mxu0 0.0
  %252 = vmatpush.msra.mxu0 0.0
  %253 = vmatpush.msra.mxu0 %v236
  %254 = vmatmul.f32.gmra.mxu0 %v229
  %v255 = vpop.f32.mrf.mxu0
  %v256 = vadd.f32 0.0, %v255
  %257 = vmatmul.f32.gmra.mxu0 %v232
  %v258 = vpop.f32.mrf.mxu0
  %v259 = vadd.f32 0.0, %v258
  %260 = vdwg.mxu0
  %v261 = vxor.u32 %v256, 2147483648
  %v262 = vxor.u32 %v259, 2147483648
  %v263 = vmul.f32 %v261, 1.442695
  %v264 = vpow.pop %v263
  %v265 = vmul.f32 %v262, 1.442695
  %v266 = vpow.pop %v265
  %v267 = vadd.f32 %v264, 1.0
  %v268 = vadd.f32 %v266, 1.0
  %v269 = vrcp.pop %v267
  %v270 = vmul.f32 %v267, %v269
  %v271 = vsub.f32 1.0, %v270
  %v272 = vmul.f32 %v269, %v271
  %v273 = vadd.f32 %v269, %v272
  %vm274 = vweird.f32 %v267
  %vm275 = vweird.f32 %v269
  %vm276 = vmor %vm274, %vm275
  %v277 = vsel %vm276, %v269, %v273
  %v278 = vand.u32 2147483647, %v267
  %vm279 = vcmp.eq.f32.partialorder %v278, 8.507059e+37
  %v280 = vand.u32 %v267, 2147483648
  %v281 = vor.u32 1.1754944e-38, %v280
  %v282 = vsel %vm279, %v281, %v277
  %v283 = vmul.f32 1.0, %v282
  %v284 = vrcp.pop %v268
  %v285 = vmul.f32 %v268, %v284
  %v286 = vsub.f32 1.0, %v285
  %v287 = vmul.f32 %v284, %v286
  %v288 = vadd.f32 %v284, %v287
  %vm289 = vweird.f32 %v268
  %vm290 = vweird.f32 %v284
  %vm291 = vmor %vm289, %vm290
  %v292 = vsel %vm291, %v284, %v288
  %v293 = vand.u32 2147483647, %v268
  %vm294 = vcmp.eq.f32.partialorder %v293, 8.507059e+37
  %v295 = vand.u32 %v268, 2147483648
  %v296 = vor.u32 1.1754944e-38, %v295
  %v297 = vsel %vm294, %v296, %v292
  %v298 = vmul.f32 1.0, %v297
  %v299 = vld [vmem:[%s7] sm:$0x1]
  %vm300 = vcmask 7168
  %v302 = vsel %vm300, %v283, 0
  %v305 = vsel %vm300, %v298, 0
  %vm307 = vcmask 1040384
  %v309 = vsel %vm307, %v299, 0
  %311 = vmatpush.msra.mxu0 0.0
  %312 = vmatpush.msra.mxu0 0.0
  %313 = vmatpush.msra.mxu0 0.0
  %314 = vmatpush.msra.mxu0 0.0
  %315 = vmatpush.msra.mxu0 0.0
  %316 = vmatpush.msra.mxu0 0.0
  %317 = vmatpush.msra.mxu0 0.0
  %318 = vmatpush.msra.mxu0 0.0
  %319 = vmatpush.msra.mxu0 0.0
  %320 = vmatpush.msra.mxu0 0.0
  %321 = vmatpush.msra.mxu0 0.0
  %322 = vmatpush.msra.mxu0 0.0
  %323 = vmatpush.msra.mxu0 0.0
  %324 = vmatpush.msra.mxu0 0.0
  %325 = vmatpush.msra.mxu0 0.0
  %326 = vmatpush.msra.mxu0 %v309
  %327 = vmatmul.f32.gmra.mxu0 %v302
  %v328 = vpop.f32.mrf.mxu0
  %v329 = vadd.f32 0.0, %v328
  %330 = vmatmul.f32.gmra.mxu0 %v305
  %v331 = vpop.f32.mrf.mxu0
  %v332 = vadd.f32 0.0, %v331
  %333 = vdwg.mxu0
  %v334 = vmul.f32 %v164, %v329
  %v335 = vmul.f32 %v167, %v332
  %v336 = vld [vmem:[%s8] sm:$0xff]
  %v337 = vld [vmem:[%s8 + $0x8] sm:$0xff]
  %v338 = vadd.f32 %v334, %v336
  %v339 = vadd.f32 %v335, %v337
  %340 = vst.msk [vmem:[%s9] sm:$0xff] %vm58, %v338
  %341 = vst.msk [vmem:[%s9 + $0x8] sm:$0xff] %vm58, %v339
  // Predicated region
  $region38: #{forward.183} parent=0 // pred_check
    _
  $region39: #{forward.183} parent=0 // pred_check_branch
    %343 = sbr.rel (0) target = $region41
  $region40: #{forward.183} parent=0 // pred_region
    _
  $region41: #{forward.183} parent=0 // pred_fallthru
    _
  // Predicated region
  $region42: #{forward.183} parent=0 // pred_check
    _
  $region43: #{forward.183} parent=0 // pred_check_branch
    %345 = sbr.rel (0) target = $region45
  $region44: #{forward.183} parent=0 // pred_region
    _
  $region45: #{forward.183} parent=0 // pred_fallthru
    _

// kernel: forward.230
$region0: #{forward.230}
  #allocation0 [shape = 'u32[]', space=smem, size = 0x4, offset = 0x4, fixed_abs, tag = 'smem constant byte address 0x4 - core index']
  #allocation1 [shape = 'u32[72,128]{1,0:T(1,128)}', space=vmem, size = 0x9000, scoped, tag = 'internal scratch']
  %s0 = inlined_call_operand.vmem [shape: f32[16,64], index: 0, kind: input, shape index: {}]
  %s1 = inlined_call_operand.vmem [shape: f32[12,16], index: 1, kind: input, shape index: {}]
  %s2 = inlined_call_operand.vmem [shape: f32[12,64], index: 2, kind: output, shape index: {}]
  %s3 = sld [smem:[#allocation0]]
  $region18: #{forward.230} parent=0
    _
  %s5 = ssub.s32 1, %s3
  %s6 = scalar_select 0, %s5, %s3
  // Predicated region
  $region2: #{forward.230} parent=0 // pred_check
    _
  $region3: #{forward.230} parent=0 // pred_check_branch
    %8 = sbr.rel (0) target = $region5
  $region4: #{forward.230} parent=0 // pred_region
    _
  $region5: #{forward.230} parent=0 // pred_fallthru
    _
  // Predicated region
  $region6: #{forward.230} parent=0 // pred_check
    _
  $region7: #{forward.230} parent=0 // pred_check_branch
    %10 = sbr.rel (0) target = $region9
  $region8: #{forward.230} parent=0 // pred_region
    _
  $region9: #{forward.230} parent=0 // pred_fallthru
    _
  %v11 = vld [vmem:[%s1] sm:$0xff]
  %v12 = vld [vmem:[%s1 + $0x8] sm:$0xf]
  %v13 = vld [vmem:[%s0] sm:$0xff]
  %v14 = vld [vmem:[%s0 + $0x8] sm:$0xff]
  %vm15 = vcmask 130048
  %v17 = vsel %vm15, %v11, 0
  %v20 = vsel %vm15, %v12, 0
  %22 = vmatpush.msra.mxu0 0.0
  %23 = vmatpush.msra.mxu0 0.0
  %24 = vmatpush.msra.mxu0 0.0
  %25 = vmatpush.msra.mxu0 0.0
  %26 = vmatpush.msra.mxu0 0.0
  %27 = vmatpush.msra.mxu0 0.0
  %28 = vmatpush.msra.mxu0 0.0
  %29 = vmatpush.msra.mxu0 0.0
  %30 = vmatpush.msra.mxu0 0.0
  %31 = vmatpush.msra.mxu0 0.0
  %32 = vmatpush.msra.mxu0 0.0
  %33 = vmatpush.msra.mxu0 0.0
  %34 = vmatpush.msra.mxu0 0.0
  %35 = vmatpush.msra.mxu0 0.0
  %36 = vmatpush.msra.mxu0 %v14
  %37 = vmatpush.msra.mxu0 %v13
  %38 = vmatmul.f32.gmra.mxu0 %v17
  %v39 = vpop.f32.mrf.mxu0
  %v40 = vadd.f32 0.0, %v39
  %41 = vmatmul.f32.gmra.mxu0 %v20
  %v42 = vpop.f32.mrf.mxu0
  %v43 = vadd.f32 0.0, %v42
  %44 = vdwg.mxu0
  %vm45 = vcmask 523264
  %46 = vst.msk [vmem:[%s2] sm:$0xff] %vm45, %v40
  %vm47 = vcmask 519168
  %48 = vst.msk [vmem:[%s2 + $0x8] sm:$0xf] %vm47, %v43
  // Predicated region
  $region10: #{forward.230} parent=0 // pred_check
    _
  $region11: #{forward.230} parent=0 // pred_check_branch
    %50 = sbr.rel (0) target = $region13
  $region12: #{forward.230} parent=0 // pred_region
    _
  $region13: #{forward.230} parent=0 // pred_fallthru
    _
  // Predicated region
  $region14: #{forward.230} parent=0 // pred_check
    _
  $region15: #{forward.230} parent=0 // pred_check_branch
    %52 = sbr.rel (0) target = $region17
  $region16: #{forward.230} parent=0 // pred_region
    _
  $region17: #{forward.230} parent=0 // pred_fallthru
    _

// kernel: forward.187
$region0: #{forward.187}
  #allocation0 [shape = 'u32[]', space=smem, size = 0x4, offset = 0x4, fixed_abs, tag = 'smem constant byte address 0x4 - core index']
  #allocation1 [shape = 'u32[72,128]{1,0:T(1,128)}', space=vmem, size = 0x9000, scoped, tag = 'internal scratch']
  %s0 = inlined_call_operand.vmem [shape: f32[108,64], index: 0, kind: input, shape index: {}]
  %s1 = inlined_call_operand.vmem [shape: f32[24,108], index: 1, kind: input, shape index: {}]
  %s2 = inlined_call_operand.vmem [shape: f32[24,64], index: 2, kind: input, shape index: {}]
  %s3 = inlined_call_operand.vmem [shape: f32[12,24], index: 3, kind: input, shape index: {}]
  %s4 = inlined_call_operand.vmem [shape: f32[3,12], index: 4, kind: input, shape index: {}]
  %s5 = inlined_call_operand.vmem [shape: f32[12,3], index: 5, kind: input, shape index: {}]
  %s6 = inlined_call_operand.vmem [shape: f32[64,1], index: 6, kind: input, shape index: {}]
  %s7 = inlined_call_operand.vmem [shape: f32[1,64], index: 7, kind: input, shape index: {}]
  %s8 = inlined_call_operand.vmem [shape: f32[12,64], index: 8, kind: input, shape index: {}]
  %s9 = inlined_call_operand.vmem [shape: f32[12,64], index: 9, kind: output, shape index: {}]
  %s10 = sld [smem:[#allocation0]]
  $region46: #{forward.187} parent=0
    _
  %s12 = ssub.s32 1, %s10
  %s13 = scalar_select 0, %s12, %s10
  // Predicated region
  $region2: #{forward.187} parent=0 // pred_check
    _
  $region3: #{forward.187} parent=0 // pred_check_branch
    %15 = sbr.rel (0) target = $region5
  $region4: #{forward.187} parent=0 // pred_region
    _
  $region5: #{forward.187} parent=0 // pred_fallthru
    _
  // Predicated region
  $region6: #{forward.187} parent=0 // pred_check
    _
  $region7: #{forward.187} parent=0 // pred_check_branch
    %17 = sbr.rel (0) target = $region9
  $region8: #{forward.187} parent=0 // pred_region
    _
  $region9: #{forward.187} parent=0 // pred_fallthru
    _
  // Predicated region
  $region10: #{forward.187} parent=0 // pred_check
    _
  $region11: #{forward.187} parent=0 // pred_check_branch
    %19 = sbr.rel (0) target = $region13
  $region12: #{forward.187} parent=0 // pred_region
    _
  $region13: #{forward.187} parent=0 // pred_fallthru
    _
  // Predicated region
  $region14: #{forward.187} parent=0 // pred_check
    _
  $region15: #{forward.187} parent=0 // pred_check_branch
    %21 = sbr.rel (0) target = $region17
  $region16: #{forward.187} parent=0 // pred_region
    _
  $region17: #{forward.187} parent=0 // pred_fallthru
    _
  // Predicated region
  $region18: #{forward.187} parent=0 // pred_check
    _
  $region19: #{forward.187} parent=0 // pred_check_branch
    %23 = sbr.rel (0) target = $region21
  $region20: #{forward.187} parent=0 // pred_region
    _
  $region21: #{forward.187} parent=0 // pred_fallthru
    _
  // Predicated region
  $region22: #{forward.187} parent=0 // pred_check
    _
  $region23: #{forward.187} parent=0 // pred_check_branch
    %25 = sbr.rel (0) target = $region25
  $region24: #{forward.187} parent=0 // pred_region
    _
  $region25: #{forward.187} parent=0 // pred_fallthru
    _
  // Predicated region
  $region26: #{forward.187} parent=0 // pred_check
    _
  $region27: #{forward.187} parent=0 // pred_check_branch
    %27 = sbr.rel (0) target = $region29
  $region28: #{forward.187} parent=0 // pred_region
    _
  $region29: #{forward.187} parent=0 // pred_fallthru
    _
  // Predicated region
  $region30: #{forward.187} parent=0 // pred_check
    _
  $region31: #{forward.187} parent=0 // pred_check_branch
    %29 = sbr.rel (0) target = $region33
  $region32: #{forward.187} parent=0 // pred_region
    _
  $region33: #{forward.187} parent=0 // pred_fallthru
    _
  // Predicated region
  $region34: #{forward.187} parent=0 // pred_check
    _
  $region35: #{forward.187} parent=0 // pred_check_branch
    %31 = sbr.rel (0) target = $region37
  $region36: #{forward.187} parent=0 // pred_region
    _
  $region37: #{forward.187} parent=0 // pred_fallthru
    _
  %v32 = vld [vmem:[%s1] sm:$0xff]
  %v33 = vld [vmem:[%s1 + $0x8] sm:$0xff]
  %v34 = vld [vmem:[%s1 + $0x10] sm:$0xff]
  %v35 = vld [vmem:[%s0] sm:$0xff]
  %v36 = vld [vmem:[%s0 + $0x8] sm:$0xff]
  %v37 = vld [vmem:[%s0 + $0x10] sm:$0xff]
  %v38 = vld [vmem:[%s0 + $0x18] sm:$0xff]
  %v39 = vld [vmem:[%s0 + $0x20] sm:$0xff]
  %v40 = vld [vmem:[%s0 + $0x28] sm:$0xff]
  %v41 = vld [vmem:[%s0 + $0x30] sm:$0xff]
  %v42 = vld [vmem:[%s0 + $0x38] sm:$0xff]
  %v43 = vld [vmem:[%s0 + $0x40] sm:$0xff]
  %v44 = vld [vmem:[%s0 + $0x48] sm:$0xff]
  %v45 = vld [vmem:[%s0 + $0x50] sm:$0xff]
  %v46 = vld [vmem:[%s0 + $0x58] sm:$0xff]
  %v47 = vld [vmem:[%s0 + $0x60] sm:$0xff]
  %v48 = vld [vmem:[%s0 + $0x68] sm:$0xf]
  %vm49 = vcmask 883712
  %v51 = vsel %vm49, %v32, 0
  %v54 = vsel %vm49, %v33, 0
  %v57 = vsel %vm49, %v34, 0
  %vm59 = vcmask 1043456
  %v61 = vsel %vm59, %v48, 0
  %63 = vmatpush.msra.mxu0 0.0
  %64 = vmatpush.msra.mxu0 0.0
  %65 = vmatpush.msra.mxu0 %v61
  %66 = vmatpush.msra.mxu0 %v47
  %67 = vmatpush.msra.mxu0 %v46
  %68 = vmatpush.msra.mxu0 %v45
  %69 = vmatpush.msra.mxu0 %v44
  %70 = vmatpush.msra.mxu0 %v43
  %71 = vmatpush.msra.mxu0 %v42
  %72 = vmatpush.msra.mxu0 %v41
  %73 = vmatpush.msra.mxu0 %v40
  %74 = vmatpush.msra.mxu0 %v39
  %75 = vmatpush.msra.mxu0 %v38
  %76 = vmatpush.msra.mxu0 %v37
  %77 = vmatpush.msra.mxu0 %v36
  %78 = vmatpush.msra.mxu0 %v35
  %79 = vmatmul.f32.gmra.mxu0 %v51
  %v80 = vpop.f32.mrf.mxu0
  %v81 = vadd.f32 0.0, %v80
  %82 = vmatmul.f32.gmra.mxu0 %v54
  %v83 = vpop.f32.mrf.mxu0
  %v84 = vadd.f32 0.0, %v83
  %85 = vmatmul.f32.gmra.mxu0 %v57
  %v86 = vpop.f32.mrf.mxu0
  %v87 = vadd.f32 0.0, %v86
  %88 = vdwg.mxu0
  %v89 = vld [vmem:[%s3] sm:$0xff]
  %v90 = vld [vmem:[%s3 + $0x8] sm:$0xf]
  %v91 = vld [vmem:[%s2] sm:$0xff]
  %v92 = vld [vmem:[%s2 + $0x8] sm:$0xff]
  %v93 = vld [vmem:[%s2 + $0x10] sm:$0xff]
  %v94 = vmul.f32 %v81, %v91
  %v95 = vmul.f32 %v84, %v92
  %v96 = vmul.f32 %v87, %v93
  %vm97 = vcmask 195584
  %v99 = vsel %vm97, %v89, 0
  %v102 = vsel %vm97, %v90, 0
  %104 = vmatpush.msra.mxu0 0.0
  %105 = vmatpush.msra.mxu0 0.0
  %106 = vmatpush.msra.mxu0 0.0
  %107 = vmatpush.msra.mxu0 0.0
  %108 = vmatpush.msra.mxu0 0.0
  %109 = vmatpush.msra.mxu0 0.0
  %110 = vmatpush.msra.mxu0 0.0
  %111 = vmatpush.msra.mxu0 0.0
  %112 = vmatpush.msra.mxu0 0.0
  %113 = vmatpush.msra.mxu0 0.0
  %114 = vmatpush.msra.mxu0 0.0
  %115 = vmatpush.msra.mxu0 0.0
  %116 = vmatpush.msra.mxu0 0.0
  %117 = vmatpush.msra.mxu0 %v96
  %118 = vmatpush.msra.mxu0 %v95
  %119 = vmatpush.msra.mxu0 %v94
  %120 = vmatmul.f32.gmra.mxu0 %v99
  %v121 = vpop.f32.mrf.mxu0
  %v122 = vadd.f32 0.0, %v121
  %123 = vmatmul.f32.gmra.mxu0 %v102
  %v124 = vpop.f32.mrf.mxu0
  %v125 = vadd.f32 0.0, %v124
  %126 = vdwg.mxu0
  %v127 = vld [vmem:[%s6] sm:$0xff]
  %v128 = vld [vmem:[%s6 + $0x8] sm:$0xff]
  %v129 = vld [vmem:[%s6 + $0x10] sm:$0xff]
  %v130 = vld [vmem:[%s6 + $0x18] sm:$0xff]
  %v131 = vld [vmem:[%s6 + $0x20] sm:$0xff]
  %v132 = vld [vmem:[%s6 + $0x28] sm:$0xff]
  %v133 = vld [vmem:[%s6 + $0x30] sm:$0xff]
  %v134 = vld [vmem:[%s6 + $0x38] sm:$0xff]
  %vm135 = vcmask 523264
  %v137 = vsel %vm135, %v122, 0
  %v140 = vsel %vm135, %v125, 0
  %142 = vmatpush.msra.mxu0 0.0
  %143 = vmatpush.msra.mxu0 0.0
  %144 = vmatpush.msra.mxu0 0.0
  %145 = vmatpush.msra.mxu0 0.0
  %146 = vmatpush.msra.mxu0 0.0
  %147 = vmatpush.msra.mxu0 0.0
  %148 = vmatpush.msra.mxu0 0.0
  %149 = vmatpush.msra.mxu0 0.0
  %150 = vmatpush.msra.mxu0 %v134
  %151 = vmatpush.msra.mxu0 %v133
  %152 = vmatpush.msra.mxu0 %v132
  %153 = vmatpush.msra.mxu0 %v131
  %154 = vmatpush.msra.mxu0 %v130
  %155 = vmatpush.msra.mxu0 %v129
  %156 = vmatpush.msra.mxu0 %v128
  %157 = vmatpush.msra.mxu0 %v127
  %158 = vmatmul.f32.gmra.mxu0 %v137
  %v159 = vpop.f32.mrf.mxu0
  %v160 = vadd.f32 0.0, %v159
  %161 = vmatmul.f32.gmra.mxu0 %v140
  %v162 = vpop.f32.mrf.mxu0
  %v163 = vadd.f32 0.0, %v162
  %164 = vdwg.mxu0
  %v165 = vld [vmem:[%s4] sm:$0x7]
  %vm166 = vcmask 97280
  %v168 = vsel %vm166, %v165, 0
  %v171 = vsel %vm59, %v163, 0
  %173 = vmatpush.msra.mxu0 0.0
  %174 = vmatpush.msra.mxu0 0.0
  %175 = vmatpush.msra.mxu0 0.0
  %176 = vmatpush.msra.mxu0 0.0
  %177 = vmatpush.msra.mxu0 0.0
  %178 = vmatpush.msra.mxu0 0.0
  %179 = vmatpush.msra.mxu0 0.0
  %180 = vmatpush.msra.mxu0 0.0
  %181 = vmatpush.msra.mxu0 0.0
  %182 = vmatpush.msra.mxu0 0.0
  %183 = vmatpush.msra.mxu0 0.0
  %184 = vmatpush.msra.mxu0 0.0
  %185 = vmatpush.msra.mxu0 0.0
  %186 = vmatpush.msra.mxu0 0.0
  %187 = vmatpush.msra.mxu0 %v171
  %188 = vmatpush.msra.mxu0 %v160
  %189 = vmatmul.f32.gmra.mxu0 %v168
  %v190 = vpop.f32.mrf.mxu0
  %v191 = vadd.f32 0.0, %v190
  %192 = vdwg.mxu0
  %v193 = vmax.f32 %v191, 0.0
  %v194 = vld [vmem:[%s5] sm:$0xff]
  %v195 = vld [vmem:[%s5 + $0x8] sm:$0xf]
  %vm196 = vcmask 23552
  %v198 = vsel %vm196, %v194, 0
  %v201 = vsel %vm196, %v195, 0
  %vm203 = vcmask 1042432
  %v205 = vsel %vm203, %v193, 0
  %207 = vmatpush.msra.mxu0 0.0
  %208 = vmatpush.msra.mxu0 0.0
  %209 = vmatpush.msra.mxu0 0.0
  %210 = vmatpush.msra.mxu0 0.0
  %211 = vmatpush.msra.mxu0 0.0
  %212 = vmatpush.msra.mxu0 0.0
  %213 = vmatpush.msra.mxu0 0.0
  %214 = vmatpush.msra.mxu0 0.0
  %215 = vmatpush.msra.mxu0 0.0
  %216 = vmatpush.msra.mxu0 0.0
  %217 = vmatpush.msra.mxu0 0.0
  %218 = vmatpush.msra.mxu0 0.0
  %219 = vmatpush.msra.mxu0 0.0
  %220 = vmatpush.msra.mxu0 0.0
  %221 = vmatpush.msra.mxu0 0.0
  %222 = vmatpush.msra.mxu0 %v205
  %223 = vmatmul.f32.gmra.mxu0 %v198
  %v224 = vpop.f32.mrf.mxu0
  %v225 = vadd.f32 0.0, %v224
  %226 = vmatmul.f32.gmra.mxu0 %v201
  %v227 = vpop.f32.mrf.mxu0
  %v228 = vadd.f32 0.0, %v227
  %229 = vdwg.mxu0
  %v230 = vxor.u32 %v225, 2147483648
  %v231 = vxor.u32 %v228, 2147483648
  %v232 = vmul.f32 %v230, 1.442695
  %v233 = vpow.pop %v232
  %v234 = vmul.f32 %v231, 1.442695
  %v235 = vpow.pop %v234
  %v236 = vadd.f32 %v233, 1.0
  %v237 = vadd.f32 %v235, 1.0
  %v238 = vrcp.pop %v236
  %v239 = vmul.f32 %v236, %v238
  %v240 = vsub.f32 1.0, %v239
  %v241 = vmul.f32 %v238, %v240
  %v242 = vadd.f32 %v238, %v241
  %vm243 = vweird.f32 %v236
  %vm244 = vweird.f32 %v238
  %vm245 = vmor %vm243, %vm244
  %v246 = vsel %vm245, %v238, %v242
  %v247 = vand.u32 2147483647, %v236
  %vm248 = vcmp.eq.f32.partialorder %v247, 8.507059e+37
  %v249 = vand.u32 %v236, 2147483648
  %v250 = vor.u32 1.1754944e-38, %v249
  %v251 = vsel %vm248, %v250, %v246
  %v252 = vmul.f32 1.0, %v251
  %v253 = vrcp.pop %v237
  %v254 = vmul.f32 %v237, %v253
  %v255 = vsub.f32 1.0, %v254
  %v256 = vmul.f32 %v253, %v255
  %v257 = vadd.f32 %v253, %v256
  %vm258 = vweird.f32 %v237
  %vm259 = vweird.f32 %v253
  %vm260 = vmor %vm258, %vm259
  %v261 = vsel %vm260, %v253, %v257
  %v262 = vand.u32 2147483647, %v237
  %vm263 = vcmp.eq.f32.partialorder %v262, 8.507059e+37
  %v264 = vand.u32 %v237, 2147483648
  %v265 = vor.u32 1.1754944e-38, %v264
  %v266 = vsel %vm263, %v265, %v261
  %v267 = vmul.f32 1.0, %v266
  %v268 = vld [vmem:[%s7] sm:$0x1]
  %vm269 = vcmask 7168
  %v271 = vsel %vm269, %v252, 0
  %v274 = vsel %vm269, %v267, 0
  %vm276 = vcmask 1040384
  %v278 = vsel %vm276, %v268, 0
  %280 = vmatpush.msra.mxu0 0.0
  %281 = vmatpush.msra.mxu0 0.0
  %282 = vmatpush.msra.mxu0 0.0
  %283 = vmatpush.msra.mxu0 0.0
  %284 = vmatpush.msra.mxu0 0.0
  %285 = vmatpush.msra.mxu0 0.0
  %286 = vmatpush.msra.mxu0 0.0
  %287 = vmatpush.msra.mxu0 0.0
  %288 = vmatpush.msra.mxu0 0.0
  %289 = vmatpush.msra.mxu0 0.0
  %290 = vmatpush.msra.mxu0 0.0
  %291 = vmatpush.msra.mxu0 0.0
  %292 = vmatpush.msra.mxu0 0.0
  %293 = vmatpush.msra.mxu0 0.0
  %294 = vmatpush.msra.mxu0 0.0
  %295 = vmatpush.msra.mxu0 %v278
  %296 = vmatmul.f32.gmra.mxu0 %v271
  %v297 = vpop.f32.mrf.mxu0
  %v298 = vadd.f32 0.0, %v297
  %299 = vmatmul.f32.gmra.mxu0 %v274
  %v300 = vpop.f32.mrf.mxu0
  %v301 = vadd.f32 0.0, %v300
  %302 = vdwg.mxu0
  %v303 = vmul.f32 %v122, %v298
  %v304 = vmul.f32 %v125, %v301
  %v305 = vld [vmem:[%s8] sm:$0xff]
  %v306 = vld [vmem:[%s8 + $0x8] sm:$0xf]
  %v307 = vadd.f32 %v303, %v305
  %v308 = vadd.f32 %v304, %v306
  %309 = vst.msk [vmem:[%s9] sm:$0xff] %vm135, %v307
  %vm310 = vcmask 519168
  %311 = vst.msk [vmem:[%s9 + $0x8] sm:$0xf] %vm310, %v308
  // Predicated region
  $region38: #{forward.187} parent=0 // pred_check
    _
  $region39: #{forward.187} parent=0 // pred_check_branch
    %313 = sbr.rel (0) target = $region41
  $region40: #{forward.187} parent=0 // pred_region
    _
  $region41: #{forward.187} parent=0 // pred_fallthru
    _
  // Predicated region
  $region42: #{forward.187} parent=0 // pred_check
    _
  $region43: #{forward.187} parent=0 // pred_check_branch
    %315 = sbr.rel (0) target = $region45
  $region44: #{forward.187} parent=0 // pred_region
    _
  $region45: #{forward.187} parent=0 // pred_fallthru
    _

// kernel: forward.194
$region0: #{forward.194}
  #allocation0 [shape = 'u32[]', space=smem, size = 0x4, offset = 0x4, fixed_abs, tag = 'smem constant byte address 0x4 - core index']
  #allocation1 [shape = 'u32[72,128]{1,0:T(1,128)}', space=vmem, size = 0x9000, scoped, tag = 'internal scratch']
  %s0 = inlined_call_operand.vmem [shape: f32[72,256], index: 0, kind: input, shape index: {}]
  %s1 = inlined_call_operand.vmem [shape: f32[16,72], index: 1, kind: input, shape index: {}]
  %s2 = inlined_call_operand.vmem [shape: f32[16,256], index: 2, kind: input, shape index: {}]
  %s3 = inlined_call_operand.vmem [shape: f32[8,16], index: 3, kind: input, shape index: {}]
  %s4 = inlined_call_operand.vmem [shape: f32[2,8], index: 4, kind: input, shape index: {}]
  %s5 = inlined_call_operand.vmem [shape: f32[8,2], index: 5, kind: input, shape index: {}]
  %s6 = inlined_call_operand.vmem [shape: f32[256,1], index: 6, kind: input, shape index: {}]
  %s7 = inlined_call_operand.vmem [shape: f32[1,256], index: 7, kind: input, shape index: {}]
  %s8 = inlined_call_operand.vmem [shape: f32[8,256], index: 8, kind: input, shape index: {}]
  %s9 = inlined_call_operand.vmem [shape: f32[8,256], index: 9, kind: output, shape index: {}]
  %s10 = sld [smem:[#allocation0]]
  $region46: #{forward.194} parent=0
    _
  %s12 = ssub.s32 1, %s10
  %s13 = scalar_select 0, %s12, %s10
  // Predicated region
  $region2: #{forward.194} parent=0 // pred_check
    _
  $region3: #{forward.194} parent=0 // pred_check_branch
    %15 = sbr.rel (0) target = $region5
  $region4: #{forward.194} parent=0 // pred_region
    _
  $region5: #{forward.194} parent=0 // pred_fallthru
    _
  // Predicated region
  $region6: #{forward.194} parent=0 // pred_check
    _
  $region7: #{forward.194} parent=0 // pred_check_branch
    %17 = sbr.rel (0) target = $region9
  $region8: #{forward.194} parent=0 // pred_region
    _
  $region9: #{forward.194} parent=0 // pred_fallthru
    _
  // Predicated region
  $region10: #{forward.194} parent=0 // pred_check
    _
  $region11: #{forward.194} parent=0 // pred_check_branch
    %19 = sbr.rel (0) target = $region13
  $region12: #{forward.194} parent=0 // pred_region
    _
  $region13: #{forward.194} parent=0 // pred_fallthru
    _
  // Predicated region
  $region14: #{forward.194} parent=0 // pred_check
    _
  $region15: #{forward.194} parent=0 // pred_check_branch
    %21 = sbr.rel (0) target = $region17
  $region16: #{forward.194} parent=0 // pred_region
    _
  $region17: #{forward.194} parent=0 // pred_fallthru
    _
  // Predicated region
  $region18: #{forward.194} parent=0 // pred_check
    _
  $region19: #{forward.194} parent=0 // pred_check_branch
    %23 = sbr.rel (0) target = $region21
  $region20: #{forward.194} parent=0 // pred_region
    _
  $region21: #{forward.194} parent=0 // pred_fallthru
    _
  // Predicated region
  $region22: #{forward.194} parent=0 // pred_check
    _
  $region23: #{forward.194} parent=0 // pred_check_branch
    %25 = sbr.rel (0) target = $region25
  $region24: #{forward.194} parent=0 // pred_region
    _
  $region25: #{forward.194} parent=0 // pred_fallthru
    _
  // Predicated region
  $region26: #{forward.194} parent=0 // pred_check
    _
  $region27: #{forward.194} parent=0 // pred_check_branch
    %27 = sbr.rel (0) target = $region29
  $region28: #{forward.194} parent=0 // pred_region
    _
  $region29: #{forward.194} parent=0 // pred_fallthru
    _
  // Predicated region
  $region30: #{forward.194} parent=0 // pred_check
    _
  $region31: #{forward.194} parent=0 // pred_check_branch
    %29 = sbr.rel (0) target = $region33
  $region32: #{forward.194} parent=0 // pred_region
    _
  $region33: #{forward.194} parent=0 // pred_fallthru
    _
  // Predicated region
  $region34: #{forward.194} parent=0 // pred_check
    _
  $region35: #{forward.194} parent=0 // pred_check_branch
    %31 = sbr.rel (0) target = $region37
  $region36: #{forward.194} parent=0 // pred_region
    _
  $region37: #{forward.194} parent=0 // pred_fallthru
    _
  %v32 = vld [vmem:[%s1] sm:$0xff]
  %v33 = vld [vmem:[%s1 + $0x8] sm:$0xff]
  %v34 = vld [vmem:[%s0] sm:$0xff]
  %v35 = vld [vmem:[%s0 + $0x8] sm:$0xff]
  %v36 = vld [vmem:[%s0 + $0x10] sm:$0xff]
  %v37 = vld [vmem:[%s0 + $0x18] sm:$0xff]
  %v38 = vld [vmem:[%s0 + $0x20] sm:$0xff]
  %v39 = vld [vmem:[%s0 + $0x28] sm:$0xff]
  %v40 = vld [vmem:[%s0 + $0x30] sm:$0xff]
  %v41 = vld [vmem:[%s0 + $0x38] sm:$0xff]
  %v42 = vld [vmem:[%s0 + $0x40] sm:$0xff]
  %v43 = vld [vmem:[%s0 + $0x48] sm:$0xff]
  %v44 = vld [vmem:[%s0 + $0x50] sm:$0xff]
  %v45 = vld [vmem:[%s0 + $0x58] sm:$0xff]
  %v46 = vld [vmem:[%s0 + $0x60] sm:$0xff]
  %v47 = vld [vmem:[%s0 + $0x68] sm:$0xff]
  %v48 = vld [vmem:[%s0 + $0x70] sm:$0xff]
  %v49 = vld [vmem:[%s0 + $0x78] sm:$0xff]
  %v50 = vld [vmem:[%s0 + $0x80] sm:$0xff]
  %v51 = vld [vmem:[%s0 + $0x88] sm:$0xff]
  %vm52 = vcmask 588800
  %v54 = vsel %vm52, %v32, 0
  %v57 = vsel %vm52, %v33, 0
  %59 = vmatpush.msra.mxu0 0.0
  %60 = vmatpush.msra.mxu0 0.0
  %61 = vmatpush.msra.mxu0 0.0
  %62 = vmatpush.msra.mxu0 0.0
  %63 = vmatpush.msra.mxu0 0.0
  %64 = vmatpush.msra.mxu0 0.0
  %65 = vmatpush.msra.mxu0 0.0
  %66 = vmatpush.msra.mxu0 %v50
  %67 = vmatpush.msra.mxu0 %v48
  %68 = vmatpush.msra.mxu0 %v46
  %69 = vmatpush.msra.mxu0 %v44
  %70 = vmatpush.msra.mxu0 %v42
  %71 = vmatpush.msra.mxu0 %v40
  %72 = vmatpush.msra.mxu0 %v38
  %73 = vmatpush.msra.mxu0 %v36
  %74 = vmatpush.msra.mxu0 %v34
  %75 = vmatmul.f32.gmra.mxu0 %v54
  %v76 = vpop.f32.mrf.mxu0
  %v77 = vadd.f32 0.0, %v76
  %78 = vmatmul.f32.gmra.mxu0 %v57
  %v79 = vpop.f32.mrf.mxu0
  %v80 = vadd.f32 0.0, %v79
  %81 = vdwg.mxu0
  %82 = vmatpush.msra.mxu0 0.0
  %83 = vmatpush.msra.mxu0 0.0
  %84 = vmatpush.msra.mxu0 0.0
  %85 = vmatpush.msra.mxu0 0.0
  %86 = vmatpush.msra.mxu0 0.0
  %87 = vmatpush.msra.mxu0 0.0
  %88 = vmatpush.msra.mxu0 0.0
  %89 = vmatpush.msra.mxu0 %v51
  %90 = vmatpush.msra.mxu0 %v49
  %91 = vmatpush.msra.mxu0 %v47
  %92 = vmatpush.msra.mxu0 %v45
  %93 = vmatpush.msra.mxu0 %v43
  %94 = vmatpush.msra.mxu0 %v41
  %95 = vmatpush.msra.mxu0 %v39
  %96 = vmatpush.msra.mxu0 %v37
  %97 = vmatpush.msra.mxu0 %v35
  %98 = vmatmul.f32.gmra.mxu0 %v54
  %v99 = vpop.f32.mrf.mxu0
  %v100 = vadd.f32 0.0, %v99
  %101 = vmatmul.f32.gmra.mxu0 %v57
  %v102 = vpop.f32.mrf.mxu0
  %v103 = vadd.f32 0.0, %v102
  %104 = vdwg.mxu0
  %v105 = vld [vmem:[%s3] sm:$0xff]
  %v106 = vld [vmem:[%s2] sm:$0xff]
  %v107 = vld [vmem:[%s2 + $0x8] sm:$0xff]
  %v108 = vld [vmem:[%s2 + $0x10] sm:$0xff]
  %v109 = vld [vmem:[%s2 + $0x18] sm:$0xff]
  %v110 = vmul.f32 %v77, %v106
  %v111 = vmul.f32 %v100, %v107
  %v112 = vmul.f32 %v80, %v108
  %v113 = vmul.f32 %v103, %v109
  %vm114 = vcmask 130048
  %v116 = vsel %vm114, %v105, 0
  %118 = vmatpush.msra.mxu0 0.0
  %119 = vmatpush.msra.mxu0 0.0
  %120 = vmatpush.msra.mxu0 0.0
  %121 = vmatpush.msra.mxu0 0.0
  %122 = vmatpush.msra.mxu0 0.0
  %123 = vmatpush.msra.mxu0 0.0
  %124 = vmatpush.msra.mxu0 0.0
  %125 = vmatpush.msra.mxu0 0.0
  %126 = vmatpush.msra.mxu0 0.0
  %127 = vmatpush.msra.mxu0 0.0
  %128 = vmatpush.msra.mxu0 0.0
  %129 = vmatpush.msra.mxu0 0.0
  %130 = vmatpush.msra.mxu0 0.0
  %131 = vmatpush.msra.mxu0 0.0
  %132 = vmatpush.msra.mxu0 %v112
  %133 = vmatpush.msra.mxu0 %v110
  %134 = vmatmul.f32.gmra.mxu0 %v116
  %v135 = vpop.f32.mrf.mxu0
  %v136 = vadd.f32 0.0, %v135
  %137 = vdwg.mxu0
  %138 = vmatpush.msra.mxu0 0.0
  %139 = vmatpush.msra.mxu0 0.0
  %140 = vmatpush.msra.mxu0 0.0
  %141 = vmatpush.msra.mxu0 0.0
  %142 = vmatpush.msra.mxu0 0.0
  %143 = vmatpush.msra.mxu0 0.0
  %144 = vmatpush.msra.mxu0 0.0
  %145 = vmatpush.msra.mxu0 0.0
  %146 = vmatpush.msra.mxu0 0.0
  %147 = vmatpush.msra.mxu0 0.0
  %148 = vmatpush.msra.mxu0 0.0
  %149 = vmatpush.msra.mxu0 0.0
  %150 = vmatpush.msra.mxu0 0.0
  %151 = vmatpush.msra.mxu0 0.0
  %152 = vmatpush.msra.mxu0 %v113
  %153 = vmatpush.msra.mxu0 %v111
  %154 = vmatmul.f32.gmra.mxu0 %v116
  %v155 = vpop.f32.mrf.mxu0
  %v156 = vadd.f32 0.0, %v155
  %157 = vdwg.mxu0
  %v158 = vld [vmem:[%s6] sm:$0xff]
  %v159 = vld [vmem:[%s6 + $0x8] sm:$0xff]
  %v160 = vld [vmem:[%s6 + $0x10] sm:$0xff]
  %v161 = vld [vmem:[%s6 + $0x18] sm:$0xff]
  %v162 = vld [vmem:[%s6 + $0x20] sm:$0xff]
  %v163 = vld [vmem:[%s6 + $0x28] sm:$0xff]
  %v164 = vld [vmem:[%s6 + $0x30] sm:$0xff]
  %v165 = vld [vmem:[%s6 + $0x38] sm:$0xff]
  %v166 = vld [vmem:[%s6 + $0x40] sm:$0xff]
  %v167 = vld [vmem:[%s6 + $0x48] sm:$0xff]
  %v168 = vld [vmem:[%s6 + $0x50] sm:$0xff]
  %v169 = vld [vmem:[%s6 + $0x58] sm:$0xff]
  %v170 = vld [vmem:[%s6 + $0x60] sm:$0xff]
  %v171 = vld [vmem:[%s6 + $0x68] sm:$0xff]
  %v172 = vld [vmem:[%s6 + $0x70] sm:$0xff]
  %v173 = vld [vmem:[%s6 + $0x78] sm:$0xff]
  %v174 = vld [vmem:[%s6 + $0x80] sm:$0xff]
  %v175 = vld [vmem:[%s6 + $0x88] sm:$0xff]
  %v176 = vld [vmem:[%s6 + $0x90] sm:$0xff]
  %v177 = vld [vmem:[%s6 + $0x98] sm:$0xff]
  %v178 = vld [vmem:[%s6 + $0xa0] sm:$0xff]
  %v179 = vld [vmem:[%s6 + $0xa8] sm:$0xff]
  %v180 = vld [vmem:[%s6 + $0xb0] sm:$0xff]
  %v181 = vld [vmem:[%s6 + $0xb8] sm:$0xff]
  %v182 = vld [vmem:[%s6 + $0xc0] sm:$0xff]
  %v183 = vld [vmem:[%s6 + $0xc8] sm:$0xff]
  %v184 = vld [vmem:[%s6 + $0xd0] sm:$0xff]
  %v185 = vld [vmem:[%s6 + $0xd8] sm:$0xff]
  %v186 = vld [vmem:[%s6 + $0xe0] sm:$0xff]
  %v187 = vld [vmem:[%s6 + $0xe8] sm:$0xff]
  %v188 = vld [vmem:[%s6 + $0xf0] sm:$0xff]
  %v189 = vld [vmem:[%s6 + $0xf8] sm:$0xff]
  %190 = vmatpush.msra.mxu0 %v173
  %191 = vmatpush.msra.mxu0 %v172
  %192 = vmatpush.msra.mxu0 %v171
  %193 = vmatpush.msra.mxu0 %v170
  %194 = vmatpush.msra.mxu0 %v169
  %195 = vmatpush.msra.mxu0 %v168
  %196 = vmatpush.msra.mxu0 %v167
  %197 = vmatpush.msra.mxu0 %v166
  %198 = vmatpush.msra.mxu0 %v165
  %199 = vmatpush.msra.mxu0 %v164
  %200 = vmatpush.msra.mxu0 %v163
  %201 = vmatpush.msra.mxu0 %v162
  %202 = vmatpush.msra.mxu0 %v161
  %203 = vmatpush.msra.mxu0 %v160
  %204 = vmatpush.msra.mxu0 %v159
  %205 = vmatpush.msra.mxu0 %v158
  %206 = vmatmul.f32.gmra.mxu0 %v136
  %v207 = vpop.f32.mrf.mxu0
  %v208 = vadd.f32 0.0, %v207
  %209 = vdwg.mxu0
  %210 = vmatpush.msra.mxu0 %v189
  %211 = vmatpush.msra.mxu0 %v188
  %212 = vmatpush.msra.mxu0 %v187
  %213 = vmatpush.msra.mxu0 %v186
  %214 = vmatpush.msra.mxu0 %v185
  %215 = vmatpush.msra.mxu0 %v184
  %216 = vmatpush.msra.mxu0 %v183
  %217 = vmatpush.msra.mxu0 %v182
  %218 = vmatpush.msra.mxu0 %v181
  %219 = vmatpush.msra.mxu0 %v180
  %220 = vmatpush.msra.mxu0 %v179
  %221 = vmatpush.msra.mxu0 %v178
  %222 = vmatpush.msra.mxu0 %v177
  %223 = vmatpush.msra.mxu0 %v176
  %224 = vmatpush.msra.mxu0 %v175
  %225 = vmatpush.msra.mxu0 %v174
  %226 = vmatmul.f32.gmra.mxu0 %v156
  %v227 = vpop.f32.mrf.mxu0
  %v228 = vadd.f32 %v208, %v227
  %229 = vdwg.mxu0
  %v230 = vld [vmem:[%s4] sm:$0x3]
  %vm231 = vcmask 64512
  %v233 = vsel %vm231, %v230, 0
  %235 = vmatpush.msra.mxu0 0.0
  %236 = vmatpush.msra.mxu0 0.0
  %237 = vmatpush.msra.mxu0 0.0
  %238 = vmatpush.msra.mxu0 0.0
  %239 = vmatpush.msra.mxu0 0.0
  %240 = vmatpush.msra.mxu0 0.0
  %241 = vmatpush.msra.mxu0 0.0
  %242 = vmatpush.msra.mxu0 0.0
  %243 = vmatpush.msra.mxu0 0.0
  %244 = vmatpush.msra.mxu0 0.0
  %245 = vmatpush.msra.mxu0 0.0
  %246 = vmatpush.msra.mxu0 0.0
  %247 = vmatpush.msra.mxu0 0.0
  %248 = vmatpush.msra.mxu0 0.0
  %249 = vmatpush.msra.mxu0 0.0
  %250 = vmatpush.msra.mxu0 %v228
  %251 = vmatmul.f32.gmra.mxu0 %v233
  %v252 = vpop.f32.mrf.mxu0
  %v253 = vadd.f32 0.0, %v252
  %254 = vdwg.mxu0
  %v255 = vmax.f32 %v253, 0.0
  %v256 = vld [vmem:[%s5] sm:$0xff]
  %vm257 = vcmask 15360
  %v259 = vsel %vm257, %v256, 0
  %vm261 = vcmask 1041408
  %v263 = vsel %vm261, %v255, 0
  %265 = vmatpush.msra.mxu0 0.0
  %266 = vmatpush.msra.mxu0 0.0
  %267 = vmatpush.msra.mxu0 0.0
  %268 = vmatpush.msra.mxu0 0.0
  %269 = vmatpush.msra.mxu0 0.0
  %270 = vmatpush.msra.mxu0 0.0
  %271 = vmatpush.msra.mxu0 0.0
  %272 = vmatpush.msra.mxu0 0.0
  %273 = vmatpush.msra.mxu0 0.0
  %274 = vmatpush.msra.mxu0 0.0
  %275 = vmatpush.msra.mxu0 0.0
  %276 = vmatpush.msra.mxu0 0.0
  %277 = vmatpush.msra.mxu0 0.0
  %278 = vmatpush.msra.mxu0 0.0
  %279 = vmatpush.msra.mxu0 0.0
  %280 = vmatpush.msra.mxu0 %v263
  %281 = vmatmul.f32.gmra.mxu0 %v259
  %v282 = vpop.f32.mrf.mxu0
  %v283 = vadd.f32 0.0, %v282
  %284 = vdwg.mxu0
  %v285 = vxor.u32 %v283, 2147483648
  %v286 = vmul.f32 %v285, 1.442695
  %v287 = vpow.pop %v286
  %v288 = vadd.f32 %v287, 1.0
  %v289 = vrcp.pop %v288
  %v290 = vmul.f32 %v288, %v289
  %v291 = vsub.f32 1.0, %v290
  %v292 = vmul.f32 %v289, %v291
  %v293 = vadd.f32 %v289, %v292
  %vm294 = vweird.f32 %v288
  %vm295 = vweird.f32 %v289
  %vm296 = vmor %vm294, %vm295
  %v297 = vsel %vm296, %v289, %v293
  %v298 = vand.u32 2147483647, %v288
  %vm299 = vcmp.eq.f32.partialorder %v298, 8.507059e+37
  %v300 = vand.u32 %v288, 2147483648
  %v301 = vor.u32 1.1754944e-38, %v300
  %v302 = vsel %vm299, %v301, %v297
  %v303 = vmul.f32 1.0, %v302
  %v304 = vld [vmem:[%s7] sm:$0x3]
  %v306 = vperm.slane %v304, 0
  %v307 = vperm.slane %v304, 1
  %vm308 = vcmask 7168
  %v310 = vsel %vm308, %v303, 0
  %vm312 = vcmask 1040384
  %v313 = vsel %vm312, %v306, 0
  %v315 = vsel %vm312, %v307, 0
  %317 = vmatpush.msra.mxu0 0.0
  %318 = vmatpush.msra.mxu0 0.0
  %319 = vmatpush.msra.mxu0 0.0
  %320 = vmatpush.msra.mxu0 0.0
  %321 = vmatpush.msra.mxu0 0.0
  %322 = vmatpush.msra.mxu0 0.0
  %323 = vmatpush.msra.mxu0 0.0
  %324 = vmatpush.msra.mxu0 0.0
  %325 = vmatpush.msra.mxu0 0.0
  %326 = vmatpush.msra.mxu0 0.0
  %327 = vmatpush.msra.mxu0 0.0
  %328 = vmatpush.msra.mxu0 0.0
  %329 = vmatpush.msra.mxu0 0.0
  %330 = vmatpush.msra.mxu0 0.0
  %331 = vmatpush.msra.mxu0 0.0
  %332 = vmatpush.msra.mxu0 %v313
  %333 = vmatmul.f32.gmra.mxu0 %v310
  %v334 = vpop.f32.mrf.mxu0
  %v335 = vadd.f32 0.0, %v334
  %336 = vdwg.mxu0
  %337 = vmatpush.msra.mxu0 0.0
  %338 = vmatpush.msra.mxu0 0.0
  %339 = vmatpush.msra.mxu0 0.0
  %340 = vmatpush.msra.mxu0 0.0
  %341 = vmatpush.msra.mxu0 0.0
  %342 = vmatpush.msra.mxu0 0.0
  %343 = vmatpush.msra.mxu0 0.0
  %344 = vmatpush.msra.mxu0 0.0
  %345 = vmatpush.msra.mxu0 0.0
  %346 = vmatpush.msra.mxu0 0.0
  %347 = vmatpush.msra.mxu0 0.0
  %348 = vmatpush.msra.mxu0 0.0
  %349 = vmatpush.msra.mxu0 0.0
  %350 = vmatpush.msra.mxu0 0.0
  %351 = vmatpush.msra.mxu0 0.0
  %352 = vmatpush.msra.mxu0 %v315
  %353 = vmatmul.f32.gmra.mxu0 %v310
  %v354 = vpop.f32.mrf.mxu0
  %v355 = vadd.f32 0.0, %v354
  %356 = vdwg.mxu0
  %v357 = vmul.f32 %v136, %v335
  %v358 = vmul.f32 %v156, %v355
  %v359 = vld [vmem:[%s8] sm:$0xff]
  %v360 = vld [vmem:[%s8 + $0x8] sm:$0xff]
  %v361 = vadd.f32 %v357, %v359
  %v362 = vadd.f32 %v358, %v360
  %363 = vst [vmem:[%s9] sm:$0xff] %v361
  %364 = vst [vmem:[%s9 + $0x8] sm:$0xff] %v362
  // Predicated region
  $region38: #{forward.194} parent=0 // pred_check
    _
  $region39: #{forward.194} parent=0 // pred_check_branch
    %366 = sbr.rel (0) target = $region41
  $region40: #{forward.194} parent=0 // pred_region
    _
  $region41: #{forward.194} parent=0 // pred_fallthru
    _
  // Predicated region
  $region42: #{forward.194} parent=0 // pred_check
    _
  $region43: #{forward.194} parent=0 // pred_check_branch
    %368 = sbr.rel (0) target = $region45
  $region44: #{forward.194} parent=0 // pred_region
    _
  $region45: #{forward.194} parent=0 // pred_fallthru
    _

// kernel: forward.208
$region0: #{forward.208}
  #allocation0 [shape = 'u32[]', space=smem, size = 0x4, offset = 0x4, fixed_abs, tag = 'smem constant byte address 0x4 - core index']
  #allocation1 [shape = 'u32[72,128]{1,0:T(1,128)}', space=vmem, size = 0x9000, scoped, tag = 'internal scratch']
  %s0 = inlined_call_operand.vmem [shape: f32[144,256], index: 0, kind: input, shape index: {}]
  %s1 = inlined_call_operand.vmem [shape: f32[12,144], index: 1, kind: input, shape index: {}]
  %s2 = inlined_call_operand.vmem [shape: f32[12,256], index: 2, kind: output, shape index: {}]
  %s3 = sld [smem:[#allocation0]]
  $region18: #{forward.208} parent=0
    _
  %s5 = ssub.s32 1, %s3
  %s6 = scalar_select 0, %s5, %s3
  // Predicated region
  $region2: #{forward.208} parent=0 // pred_check
    _
  $region3: #{forward.208} parent=0 // pred_check_branch
    %8 = sbr.rel (0) target = $region5
  $region4: #{forward.208} parent=0 // pred_region
    _
  $region5: #{forward.208} parent=0 // pred_fallthru
    _
  // Predicated region
  $region6: #{forward.208} parent=0 // pred_check
    _
  $region7: #{forward.208} parent=0 // pred_check_branch
    %10 = sbr.rel (0) target = $region9
  $region8: #{forward.208} parent=0 // pred_region
    _
  $region9: #{forward.208} parent=0 // pred_fallthru
    _
  %v11 = vld [vmem:[%s1] sm:$0xff]
  %v12 = vld [vmem:[%s1 + $0x8] sm:$0xff]
  %v13 = vld [vmem:[%s1 + $0x10] sm:$0xf]
  %v14 = vld [vmem:[%s1 + $0x18] sm:$0xf]
  %v15 = vld [vmem:[%s0] sm:$0xff]
  %v16 = vld [vmem:[%s0 + $0x8] sm:$0xff]
  %v17 = vld [vmem:[%s0 + $0x10] sm:$0xff]
  %v18 = vld [vmem:[%s0 + $0x18] sm:$0xff]
  %v19 = vld [vmem:[%s0 + $0x20] sm:$0xff]
  %v20 = vld [vmem:[%s0 + $0x28] sm:$0xff]
  %v21 = vld [vmem:[%s0 + $0x30] sm:$0xff]
  %v22 = vld [vmem:[%s0 + $0x38] sm:$0xff]
  %v23 = vld [vmem:[%s0 + $0x40] sm:$0xff]
  %v24 = vld [vmem:[%s0 + $0x48] sm:$0xff]
  %v25 = vld [vmem:[%s0 + $0x50] sm:$0xff]
  %v26 = vld [vmem:[%s0 + $0x58] sm:$0xff]
  %v27 = vld [vmem:[%s0 + $0x60] sm:$0xff]
  %v28 = vld [vmem:[%s0 + $0x68] sm:$0xff]
  %v29 = vld [vmem:[%s0 + $0x70] sm:$0xff]
  %v30 = vld [vmem:[%s0 + $0x78] sm:$0xff]
  %v31 = vld [vmem:[%s0 + $0x80] sm:$0xff]
  %v32 = vld [vmem:[%s0 + $0x88] sm:$0xff]
  %v33 = vld [vmem:[%s0 + $0x90] sm:$0xff]
  %v34 = vld [vmem:[%s0 + $0x98] sm:$0xff]
  %v35 = vld [vmem:[%s0 + $0xa0] sm:$0xff]
  %v36 = vld [vmem:[%s0 + $0xa8] sm:$0xff]
  %v37 = vld [vmem:[%s0 + $0xb0] sm:$0xff]
  %v38 = vld [vmem:[%s0 + $0xb8] sm:$0xff]
  %v39 = vld [vmem:[%s0 + $0xc0] sm:$0xff]
  %v40 = vld [vmem:[%s0 + $0xc8] sm:$0xff]
  %v41 = vld [vmem:[%s0 + $0xd0] sm:$0xff]
  %v42 = vld [vmem:[%s0 + $0xd8] sm:$0xff]
  %v43 = vld [vmem:[%s0 + $0xe0] sm:$0xff]
  %v44 = vld [vmem:[%s0 + $0xe8] sm:$0xff]
  %v45 = vld [vmem:[%s0 + $0xf0] sm:$0xff]
  %v46 = vld [vmem:[%s0 + $0xf8] sm:$0xff]
  %v47 = vld [vmem:[%s0 + $0x100] sm:$0xff]
  %v48 = vld [vmem:[%s0 + $0x108] sm:$0xff]
  %v49 = vld [vmem:[%s0 + $0x110] sm:$0xff]
  %v50 = vld [vmem:[%s0 + $0x118] sm:$0xff]
  %vm51 = vcmask 130048
  %v53 = vsel %vm51, %v12, 0
  %v56 = vsel %vm51, %v14, 0
  %58 = vmatpush.msra.mxu0 %v45
  %59 = vmatpush.msra.mxu0 %v43
  %60 = vmatpush.msra.mxu0 %v41
  %61 = vmatpush.msra.mxu0 %v39
  %62 = vmatpush.msra.mxu0 %v37
  %63 = vmatpush.msra.mxu0 %v35
  %64 = vmatpush.msra.mxu0 %v33
  %65 = vmatpush.msra.mxu0 %v31
  %66 = vmatpush.msra.mxu0 %v29
  %67 = vmatpush.msra.mxu0 %v27
  %68 = vmatpush.msra.mxu0 %v25
  %69 = vmatpush.msra.mxu0 %v23
  %70 = vmatpush.msra.mxu0 %v21
  %71 = vmatpush.msra.mxu0 %v19
  %72 = vmatpush.msra.mxu0 %v17
  %73 = vmatpush.msra.mxu0 %v15
  %74 = vmatmul.f32.gmra.mxu0 %v11
  %v75 = vpop.f32.mrf.mxu0
  %v76 = vadd.f32 0.0, %v75
  %77 = vmatmul.f32.gmra.mxu0 %v13
  %v78 = vpop.f32.mrf.mxu0
  %v79 = vadd.f32 0.0, %v78
  %80 = vdwg.mxu0
  %81 = vmatpush.msra.mxu0 0.0
  %82 = vmatpush.msra.mxu0 0.0
  %83 = vmatpush.msra.mxu0 0.0
  %84 = vmatpush.msra.mxu0 0.0
  %85 = vmatpush.msra.mxu0 0.0
  %86 = vmatpush.msra.mxu0 0.0
  %87 = vmatpush.msra.mxu0 0.0
  %88 = vmatpush.msra.mxu0 0.0
  %89 = vmatpush.msra.mxu0 0.0
  %90 = vmatpush.msra.mxu0 0.0
  %91 = vmatpush.msra.mxu0 0.0
  %92 = vmatpush.msra.mxu0 0.0
  %93 = vmatpush.msra.mxu0 0.0
  %94 = vmatpush.msra.mxu0 0.0
  %95 = vmatpush.msra.mxu0 %v49
  %96 = vmatpush.msra.mxu0 %v47
  %97 = vmatmul.f32.gmra.mxu0 %v53
  %v98 = vpop.f32.mrf.mxu0
  %v99 = vadd.f32 %v76, %v98
  %100 = vmatmul.f32.gmra.mxu0 %v56
  %v101 = vpop.f32.mrf.mxu0
  %v102 = vadd.f32 %v79, %v101
  %103 = vdwg.mxu0
  %104 = vmatpush.msra.mxu0 %v46
  %105 = vmatpush.msra.mxu0 %v44
  %106 = vmatpush.msra.mxu0 %v42
  %107 = vmatpush.msra.mxu0 %v40
  %108 = vmatpush.msra.mxu0 %v38
  %109 = vmatpush.msra.mxu0 %v36
  %110 = vmatpush.msra.mxu0 %v34
  %111 = vmatpush.msra.mxu0 %v32
  %112 = vmatpush.msra.mxu0 %v30
  %113 = vmatpush.msra.mxu0 %v28
  %114 = vmatpush.msra.mxu0 %v26
  %115 = vmatpush.msra.mxu0 %v24
  %116 = vmatpush.msra.mxu0 %v22
  %117 = vmatpush.msra.mxu0 %v20
  %118 = vmatpush.msra.mxu0 %v18
  %119 = vmatpush.msra.mxu0 %v16
  %120 = vmatmul.f32.gmra.mxu0 %v11
  %v121 = vpop.f32.mrf.mxu0
  %v122 = vadd.f32 0.0, %v121
  %123 = vmatmul.f32.gmra.mxu0 %v13
  %v124 = vpop.f32.mrf.mxu0
  %v125 = vadd.f32 0.0, %v124
  %126 = vdwg.mxu0
  %127 = vmatpush.msra.mxu0 0.0
  %128 = vmatpush.msra.mxu0 0.0
  %129 = vmatpush.msra.mxu0 0.0
  %130 = vmatpush.msra.mxu0 0.0
  %131 = vmatpush.msra.mxu0 0.0
  %132 = vmatpush.msra.mxu0 0.0
  %133 = vmatpush.msra.mxu0 0.0
  %134 = vmatpush.msra.mxu0 0.0
  %135 = vmatpush.msra.mxu0 0.0
  %136 = vmatpush.msra.mxu0 0.0
  %137 = vmatpush.msra.mxu0 0.0
  %138 = vmatpush.msra.mxu0 0.0
  %139 = vmatpush.msra.mxu0 0.0
  %140 = vmatpush.msra.mxu0 0.0
  %141 = vmatpush.msra.mxu0 %v50
  %142 = vmatpush.msra.mxu0 %v48
  %143 = vmatmul.f32.gmra.mxu0 %v53
  %v144 = vpop.f32.mrf.mxu0
  %v145 = vadd.f32 %v122, %v144
  %146 = vmatmul.f32.gmra.mxu0 %v56
  %v147 = vpop.f32.mrf.mxu0
  %v148 = vadd.f32 %v125, %v147
  %149 = vdwg.mxu0
  %150 = vst [vmem:[%s2] sm:$0xff] %v99
  %151 = vst [vmem:[%s2 + $0x8] sm:$0xff] %v145
  %152 = vst [vmem:[%s2 + $0x10] sm:$0xf] %v102
  %153 = vst [vmem:[%s2 + $0x18] sm:$0xf] %v148
  // Predicated region
  $region10: #{forward.208} parent=0 // pred_check
    _
  $region11: #{forward.208} parent=0 // pred_check_branch
    %155 = sbr.rel (0) target = $region13
  $region12: #{forward.208} parent=0 // pred_region
    _
  $region13: #{forward.208} parent=0 // pred_fallthru
    _
  // Predicated region
  $region14: #{forward.208} parent=0 // pred_check
    _
  $region15: #{forward.208} parent=0 // pred_check_branch
    %157 = sbr.rel (0) target = $region17
  $region16: #{forward.208} parent=0 // pred_region
    _
  $region17: #{forward.208} parent=0 // pred_fallthru
    _

// kernel: forward.209
$region0: #{forward.209}
  #allocation0 [shape = 'u32[]', space=smem, size = 0x4, offset = 0x4, fixed_abs, tag = 'smem constant byte address 0x4 - core index']
  #allocation1 [shape = 'u32[72,128]{1,0:T(1,128)}', space=vmem, size = 0x9000, scoped, tag = 'internal scratch']
  %s0 = inlined_call_operand.vmem [shape: f32[108,256], index: 0, kind: input, shape index: {}]
  %s1 = inlined_call_operand.vmem [shape: f32[12,108], index: 1, kind: input, shape index: {}]
  %s2 = inlined_call_operand.vmem [shape: f32[12,256], index: 2, kind: output, shape index: {}]
  %s3 = sld [smem:[#allocation0]]
  $region18: #{forward.209} parent=0
    _
  %s5 = ssub.s32 1, %s3
  %s6 = scalar_select 0, %s5, %s3
  // Predicated region
  $region2: #{forward.209} parent=0 // pred_check
    _
  $region3: #{forward.209} parent=0 // pred_check_branch
    %8 = sbr.rel (0) target = $region5
  $region4: #{forward.209} parent=0 // pred_region
    _
  $region5: #{forward.209} parent=0 // pred_fallthru
    _
  // Predicated region
  $region6: #{forward.209} parent=0 // pred_check
    _
  $region7: #{forward.209} parent=0 // pred_check_branch
    %10 = sbr.rel (0) target = $region9
  $region8: #{forward.209} parent=0 // pred_region
    _
  $region9: #{forward.209} parent=0 // pred_fallthru
    _
  %v11 = vld [vmem:[%s1] sm:$0xff]
  %v12 = vld [vmem:[%s1 + $0x8] sm:$0xf]
  %v13 = vld [vmem:[%s0] sm:$0xff]
  %v14 = vld [vmem:[%s0 + $0x8] sm:$0xff]
  %v15 = vld [vmem:[%s0 + $0x10] sm:$0xff]
  %v16 = vld [vmem:[%s0 + $0x18] sm:$0xff]
  %v17 = vld [vmem:[%s0 + $0x20] sm:$0xff]
  %v18 = vld [vmem:[%s0 + $0x28] sm:$0xff]
  %v19 = vld [vmem:[%s0 + $0x30] sm:$0xff]
  %v20 = vld [vmem:[%s0 + $0x38] sm:$0xff]
  %v21 = vld [vmem:[%s0 + $0x40] sm:$0xff]
  %v22 = vld [vmem:[%s0 + $0x48] sm:$0xff]
  %v23 = vld [vmem:[%s0 + $0x50] sm:$0xff]
  %v24 = vld [vmem:[%s0 + $0x58] sm:$0xff]
  %v25 = vld [vmem:[%s0 + $0x60] sm:$0xff]
  %v26 = vld [vmem:[%s0 + $0x68] sm:$0xff]
  %v27 = vld [vmem:[%s0 + $0x70] sm:$0xff]
  %v28 = vld [vmem:[%s0 + $0x78] sm:$0xff]
  %v29 = vld [vmem:[%s0 + $0x80] sm:$0xff]
  %v30 = vld [vmem:[%s0 + $0x88] sm:$0xff]
  %v31 = vld [vmem:[%s0 + $0x90] sm:$0xff]
  %v32 = vld [vmem:[%s0 + $0x98] sm:$0xff]
  %v33 = vld [vmem:[%s0 + $0xa0] sm:$0xff]
  %v34 = vld [vmem:[%s0 + $0xa8] sm:$0xff]
  %v35 = vld [vmem:[%s0 + $0xb0] sm:$0xff]
  %v36 = vld [vmem:[%s0 + $0xb8] sm:$0xff]
  %v37 = vld [vmem:[%s0 + $0xc0] sm:$0xff]
  %v38 = vld [vmem:[%s0 + $0xc8] sm:$0xff]
  %v39 = vld [vmem:[%s0 + $0xd0] sm:$0xf]
  %v40 = vld [vmem:[%s0 + $0xd8] sm:$0xf]
  %vm41 = vcmask 883712
  %v43 = vsel %vm41, %v11, 0
  %v46 = vsel %vm41, %v12, 0
  %vm48 = vcmask 1043456
  %v50 = vsel %vm48, %v39, 0
  %v53 = vsel %vm48, %v40, 0
  %55 = vmatpush.msra.mxu0 0.0
  %56 = vmatpush.msra.mxu0 0.0
  %57 = vmatpush.msra.mxu0 %v50
  %58 = vmatpush.msra.mxu0 %v37
  %59 = vmatpush.msra.mxu0 %v35
  %60 = vmatpush.msra.mxu0 %v33
  %61 = vmatpush.msra.mxu0 %v31
  %62 = vmatpush.msra.mxu0 %v29
  %63 = vmatpush.msra.mxu0 %v27
  %64 = vmatpush.msra.mxu0 %v25
  %65 = vmatpush.msra.mxu0 %v23
  %66 = vmatpush.msra.mxu0 %v21
  %67 = vmatpush.msra.mxu0 %v19
  %68 = vmatpush.msra.mxu0 %v17
  %69 = vmatpush.msra.mxu0 %v15
  %70 = vmatpush.msra.mxu0 %v13
  %71 = vmatmul.f32.gmra.mxu0 %v43
  %v72 = vpop.f32.mrf.mxu0
  %v73 = vadd.f32 0.0, %v72
  %74 = vmatmul.f32.gmra.mxu0 %v46
  %v75 = vpop.f32.mrf.mxu0
  %v76 = vadd.f32 0.0, %v75
  %77 = vdwg.mxu0
  %78 = vmatpush.msra.mxu0 0.0
  %79 = vmatpush.msra.mxu0 0.0
  %80 = vmatpush.msra.mxu0 %v53
  %81 = vmatpush.msra.mxu0 %v38
  %82 = vmatpush.msra.mxu0 %v36
  %83 = vmatpush.msra.mxu0 %v34
  %84 = vmatpush.msra.mxu0 %v32
  %85 = vmatpush.msra.mxu0 %v30
  %86 = vmatpush.msra.mxu0 %v28
  %87 = vmatpush.msra.mxu0 %v26
  %88 = vmatpush.msra.mxu0 %v24
  %89 = vmatpush.msra.mxu0 %v22
  %90 = vmatpush.msra.mxu0 %v20
  %91 = vmatpush.msra.mxu0 %v18
  %92 = vmatpush.msra.mxu0 %v16
  %93 = vmatpush.msra.mxu0 %v14
  %94 = vmatmul.f32.gmra.mxu0 %v43
  %v95 = vpop.f32.mrf.mxu0
  %v96 = vadd.f32 0.0, %v95
  %97 = vmatmul.f32.gmra.mxu0 %v46
  %v98 = vpop.f32.mrf.mxu0
  %v99 = vadd.f32 0.0, %v98
  %100 = vdwg.mxu0
  %vm101 = vcmp.ge.f32.partialorder %v73, 0.0
  %vm102 = vcmp.ge.f32.partialorder %v96, 0.0
  %vm103 = vcmp.ge.f32.partialorder %v76, 0.0
  %vm104 = vcmp.ge.f32.partialorder %v99, 0.0
  %v105 = vmul.f32 %v73, 0.25
  %v106 = vmul.f32 %v96, 0.25
  %v107 = vmul.f32 %v76, 0.25
  %v108 = vmul.f32 %v99, 0.25
  %v109 = vsel %vm101, %v73, %v105
  %v110 = vsel %vm102, %v96, %v106
  %v111 = vsel %vm103, %v76, %v107
  %v112 = vsel %vm104, %v99, %v108
  %113 = vst [vmem:[%s2] sm:$0xff] %v109
  %114 = vst [vmem:[%s2 + $0x8] sm:$0xff] %v110
  %115 = vst [vmem:[%s2 + $0x10] sm:$0xf] %v111
  %116 = vst [vmem:[%s2 + $0x18] sm:$0xf] %v112
  // Predicated region
  $region10: #{forward.209} parent=0 // pred_check
    _
  $region11: #{forward.209} parent=0 // pred_check_branch
    %118 = sbr.rel (0) target = $region13
  $region12: #{forward.209} parent=0 // pred_region
    _
  $region13: #{forward.209} parent=0 // pred_fallthru
    _
  // Predicated region
  $region14: #{forward.209} parent=0 // pred_check
    _
  $region15: #{forward.209} parent=0 // pred_check_branch
    %120 = sbr.rel (0) target = $region17
  $region16: #{forward.209} parent=0 // pred_region
    _
  $region17: #{forward.209} parent=0 // pred_fallthru
    _

// kernel: forward.214
$region0: #{forward.214}
  #allocation0 [shape = 'u32[]', space=smem, size = 0x4, offset = 0x4, fixed_abs, tag = 'smem constant byte address 0x4 - core index']
  #allocation1 [shape = 'u32[72,128]{1,0:T(1,128)}', space=vmem, size = 0x9000, scoped, tag = 'internal scratch']
  %s0 = inlined_call_operand.vmem [shape: f32[12,256], index: 0, kind: input, shape index: {}]
  %s1 = inlined_call_operand.vmem [shape: f32[8,256], index: 1, kind: input, shape index: {}]
  %s2 = inlined_call_operand.vmem [shape: f32[12,8], index: 2, kind: input, shape index: {}]
  %s3 = inlined_call_operand.vmem [shape: f32[8,256], index: 3, kind: input, shape index: {}]
  %s4 = inlined_call_operand.vmem [shape: f32[12,8], index: 4, kind: input, shape index: {}]
  %s5 = inlined_call_operand.vmem [shape: f32[12,256], index: 5, kind: output, shape index: {}]
  %s6 = sld [smem:[#allocation0]]
  $region30: #{forward.214} parent=0
    _
  %s8 = ssub.s32 1, %s6
  %s9 = scalar_select 0, %s8, %s6
  // Predicated region
  $region2: #{forward.214} parent=0 // pred_check
    _
  $region3: #{forward.214} parent=0 // pred_check_branch
    %11 = sbr.rel (0) target = $region5
  $region4: #{forward.214} parent=0 // pred_region
    _
  $region5: #{forward.214} parent=0 // pred_fallthru
    _
  // Predicated region
  $region6: #{forward.214} parent=0 // pred_check
    _
  $region7: #{forward.214} parent=0 // pred_check_branch
    %13 = sbr.rel (0) target = $region9
  $region8: #{forward.214} parent=0 // pred_region
    _
  $region9: #{forward.214} parent=0 // pred_fallthru
    _
  // Predicated region
  $region10: #{forward.214} parent=0 // pred_check
    _
  $region11: #{forward.214} parent=0 // pred_check_branch
    %15 = sbr.rel (0) target = $region13
  $region12: #{forward.214} parent=0 // pred_region
    _
  $region13: #{forward.214} parent=0 // pred_fallthru
    _
  // Predicated region
  $region14: #{forward.214} parent=0 // pred_check
    _
  $region15: #{forward.214} parent=0 // pred_check_branch
    %17 = sbr.rel (0) target = $region17
  $region16: #{forward.214} parent=0 // pred_region
    _
  $region17: #{forward.214} parent=0 // pred_fallthru
    _
  // Predicated region
  $region18: #{forward.214} parent=0 // pred_check
    _
  $region19: #{forward.214} parent=0 // pred_check_branch
    %19 = sbr.rel (0) target = $region21
  $region20: #{forward.214} parent=0 // pred_region
    _
  $region21: #{forward.214} parent=0 // pred_fallthru
    _
  %v20 = vld [vmem:[%s0] sm:$0xff]
  %v21 = vld [vmem:[%s0 + $0x8] sm:$0xff]
  %v22 = vld [vmem:[%s0 + $0x10] sm:$0xf]
  %v23 = vld [vmem:[%s0 + $0x18] sm:$0xf]
  %v24 = vld [vmem:[%s2] sm:$0xff]
  %v25 = vld [vmem:[%s2 + $0x8] sm:$0xf]
  %v26 = vld [vmem:[%s1] sm:$0xff]
  %v27 = vld [vmem:[%s1 + $0x8] sm:$0xff]
  %vm28 = vcmask 64512
  %v30 = vsel %vm28, %v24, 0
  %v33 = vsel %vm28, %v25, 0
  %35 = vmatpush.msra.mxu0 0.0
  %36 = vmatpush.msra.mxu0 0.0
  %37 = vmatpush.msra.mxu0 0.0
  %38 = vmatpush.msra.mxu0 0.0
  %39 = vmatpush.msra.mxu0 0.0
  %40 = vmatpush.msra.mxu0 0.0
  %41 = vmatpush.msra.mxu0 0.0
  %42 = vmatpush.msra.mxu0 0.0
  %43 = vmatpush.msra.mxu0 0.0
  %44 = vmatpush.msra.mxu0 0.0
  %45 = vmatpush.msra.mxu0 0.0
  %46 = vmatpush.msra.mxu0 0.0
  %47 = vmatpush.msra.mxu0 0.0
  %48 = vmatpush.msra.mxu0 0.0
  %49 = vmatpush.msra.mxu0 0.0
  %50 = vmatpush.msra.mxu0 %v26
  %51 = vmatmul.f32.gmra.mxu0 %v30
  %v52 = vpop.f32.mrf.mxu0
  %v53 = vadd.f32 0.0, %v52
  %54 = vmatmul.f32.gmra.mxu0 %v33
  %v55 = vpop.f32.mrf.mxu0
  %v56 = vadd.f32 0.0, %v55
  %57 = vdwg.mxu0
  %58 = vmatpush.msra.mxu0 0.0
  %59 = vmatpush.msra.mxu0 0.0
  %60 = vmatpush.msra.mxu0 0.0
  %61 = vmatpush.msra.mxu0 0.0
  %62 = vmatpush.msra.mxu0 0.0
  %63 = vmatpush.msra.mxu0 0.0
  %64 = vmatpush.msra.mxu0 0.0
  %65 = vmatpush.msra.mxu0 0.0
  %66 = vmatpush.msra.mxu0 0.0
  %67 = vmatpush.msra.mxu0 0.0
  %68 = vmatpush.msra.mxu0 0.0
  %69 = vmatpush.msra.mxu0 0.0
  %70 = vmatpush.msra.mxu0 0.0
  %71 = vmatpush.msra.mxu0 0.0
  %72 = vmatpush.msra.mxu0 0.0
  %73 = vmatpush.msra.mxu0 %v27
  %74 = vmatmul.f32.gmra.mxu0 %v30
  %v75 = vpop.f32.mrf.mxu0
  %v76 = vadd.f32 0.0, %v75
  %77 = vmatmul.f32.gmra.mxu0 %v33
  %v78 = vpop.f32.mrf.mxu0
  %v79 = vadd.f32 0.0, %v78
  %80 = vdwg.mxu0
  %v81 = vadd.f32 %v20, %v53
  %v82 = vadd.f32 %v21, %v76
  %v83 = vadd.f32 %v22, %v56
  %v84 = vadd.f32 %v23, %v79
  %v85 = vld [vmem:[%s4] sm:$0xff]
  %v86 = vld [vmem:[%s4 + $0x8] sm:$0xf]
  %v87 = vld [vmem:[%s3] sm:$0xff]
  %v88 = vld [vmem:[%s3 + $0x8] sm:$0xff]
  %v90 = vsel %vm28, %v85, 0
  %v93 = vsel %vm28, %v86, 0
  %95 = vmatpush.msra.mxu0 0.0
  %96 = vmatpush.msra.mxu0 0.0
  %97 = vmatpush.msra.mxu0 0.0
  %98 = vmatpush.msra.mxu0 0.0
  %99 = vmatpush.msra.mxu0 0.0
  %100 = vmatpush.msra.mxu0 0.0
  %101 = vmatpush.msra.mxu0 0.0
  %102 = vmatpush.msra.mxu0 0.0
  %103 = vmatpush.msra.mxu0 0.0
  %104 = vmatpush.msra.mxu0 0.0
  %105 = vmatpush.msra.mxu0 0.0
  %106 = vmatpush.msra.mxu0 0.0
  %107 = vmatpush.msra.mxu0 0.0
  %108 = vmatpush.msra.mxu0 0.0
  %109 = vmatpush.msra.mxu0 0.0
  %110 = vmatpush.msra.mxu0 %v87
  %111 = vmatmul.f32.gmra.mxu0 %v90
  %v112 = vpop.f32.mrf.mxu0
  %v113 = vadd.f32 0.0, %v112
  %114 = vmatmul.f32.gmra.mxu0 %v93
  %v115 = vpop.f32.mrf.mxu0
  %v116 = vadd.f32 0.0, %v115
  %117 = vdwg.mxu0
  %118 = vmatpush.msra.mxu0 0.0
  %119 = vmatpush.msra.mxu0 0.0
  %120 = vmatpush.msra.mxu0 0.0
  %121 = vmatpush.msra.mxu0 0.0
  %122 = vmatpush.msra.mxu0 0.0
  %123 = vmatpush.msra.mxu0 0.0
  %124 = vmatpush.msra.mxu0 0.0
  %125 = vmatpush.msra.mxu0 0.0
  %126 = vmatpush.msra.mxu0 0.0
  %127 = vmatpush.msra.mxu0 0.0
  %128 = vmatpush.msra.mxu0 0.0
  %129 = vmatpush.msra.mxu0 0.0
  %130 = vmatpush.msra.mxu0 0.0
  %131 = vmatpush.msra.mxu0 0.0
  %132 = vmatpush.msra.mxu0 0.0
  %133 = vmatpush.msra.mxu0 %v88
  %134 = vmatmul.f32.gmra.mxu0 %v90
  %v135 = vpop.f32.mrf.mxu0
  %v136 = vadd.f32 0.0, %v135
  %137 = vmatmul.f32.gmra.mxu0 %v93
  %v138 = vpop.f32.mrf.mxu0
  %v139 = vadd.f32 0.0, %v138
  %140 = vdwg.mxu0
  %v141 = vadd.f32 %v81, %v113
  %v142 = vadd.f32 %v82, %v136
  %v143 = vadd.f32 %v83, %v116
  %v144 = vadd.f32 %v84, %v139
  %145 = vst [vmem:[%s5] sm:$0xff] %v141
  %146 = vst [vmem:[%s5 + $0x8] sm:$0xff] %v142
  %147 = vst [vmem:[%s5 + $0x10] sm:$0xf] %v143
  %148 = vst [vmem:[%s5 + $0x18] sm:$0xf] %v144
  // Predicated region
  $region22: #{forward.214} parent=0 // pred_check
    _
  $region23: #{forward.214} parent=0 // pred_check_branch
    %150 = sbr.rel (0) target = $region25
  $region24: #{forward.214} parent=0 // pred_region
    _
  $region25: #{forward.214} parent=0 // pred_fallthru
    _
  // Predicated region
  $region26: #{forward.214} parent=0 // pred_check
    _
  $region27: #{forward.214} parent=0 // pred_check_branch
    %152 = sbr.rel (0) target = $region29
  $region28: #{forward.214} parent=0 // pred_region
    _
  $region29: #{forward.214} parent=0 // pred_fallthru
    _

// kernel: forward.213
$region0: #{forward.213}
  #allocation0 [shape = 'u32[]', space=smem, size = 0x4, offset = 0x4, fixed_abs, tag = 'smem constant byte address 0x4 - core index']
  #allocation1 [shape = 'u32[72,128]{1,0:T(1,128)}', space=vmem, size = 0x9000, scoped, tag = 'internal scratch']
  %s0 = inlined_call_operand.vmem [shape: f32[108,256], index: 0, kind: input, shape index: {}]
  %s1 = inlined_call_operand.vmem [shape: f32[12,108], index: 1, kind: input, shape index: {}]
  %s2 = inlined_call_operand.vmem [shape: f32[12,256], index: 2, kind: input, shape index: {}]
  %s3 = inlined_call_operand.vmem [shape: f32[12,256], index: 3, kind: output, shape index: {}]
  %s4 = sld [smem:[#allocation0]]
  $region22: #{forward.213} parent=0
    _
  %s6 = ssub.s32 1, %s4
  %s7 = scalar_select 0, %s6, %s4
  // Predicated region
  $region2: #{forward.213} parent=0 // pred_check
    _
  $region3: #{forward.213} parent=0 // pred_check_branch
    %9 = sbr.rel (0) target = $region5
  $region4: #{forward.213} parent=0 // pred_region
    _
  $region5: #{forward.213} parent=0 // pred_fallthru
    _
  // Predicated region
  $region6: #{forward.213} parent=0 // pred_check
    _
  $region7: #{forward.213} parent=0 // pred_check_branch
    %11 = sbr.rel (0) target = $region9
  $region8: #{forward.213} parent=0 // pred_region
    _
  $region9: #{forward.213} parent=0 // pred_fallthru
    _
  // Predicated region
  $region10: #{forward.213} parent=0 // pred_check
    _
  $region11: #{forward.213} parent=0 // pred_check_branch
    %13 = sbr.rel (0) target = $region13
  $region12: #{forward.213} parent=0 // pred_region
    _
  $region13: #{forward.213} parent=0 // pred_fallthru
    _
  %v14 = vld [vmem:[%s1] sm:$0xff]
  %v15 = vld [vmem:[%s1 + $0x8] sm:$0xf]
  %v16 = vld [vmem:[%s0] sm:$0xff]
  %v17 = vld [vmem:[%s0 + $0x8] sm:$0xff]
  %v18 = vld [vmem:[%s0 + $0x10] sm:$0xff]
  %v19 = vld [vmem:[%s0 + $0x18] sm:$0xff]
  %v20 = vld [vmem:[%s0 + $0x20] sm:$0xff]
  %v21 = vld [vmem:[%s0 + $0x28] sm:$0xff]
  %v22 = vld [vmem:[%s0 + $0x30] sm:$0xff]
  %v23 = vld [vmem:[%s0 + $0x38] sm:$0xff]
  %v24 = vld [vmem:[%s0 + $0x40] sm:$0xff]
  %v25 = vld [vmem:[%s0 + $0x48] sm:$0xff]
  %v26 = vld [vmem:[%s0 + $0x50] sm:$0xff]
  %v27 = vld [vmem:[%s0 + $0x58] sm:$0xff]
  %v28 = vld [vmem:[%s0 + $0x60] sm:$0xff]
  %v29 = vld [vmem:[%s0 + $0x68] sm:$0xff]
  %v30 = vld [vmem:[%s0 + $0x70] sm:$0xff]
  %v31 = vld [vmem:[%s0 + $0x78] sm:$0xff]
  %v32 = vld [vmem:[%s0 + $0x80] sm:$0xff]
  %v33 = vld [vmem:[%s0 + $0x88] sm:$0xff]
  %v34 = vld [vmem:[%s0 + $0x90] sm:$0xff]
  %v35 = vld [vmem:[%s0 + $0x98] sm:$0xff]
  %v36 = vld [vmem:[%s0 + $0xa0] sm:$0xff]
  %v37 = vld [vmem:[%s0 + $0xa8] sm:$0xff]
  %v38 = vld [vmem:[%s0 + $0xb0] sm:$0xff]
  %v39 = vld [vmem:[%s0 + $0xb8] sm:$0xff]
  %v40 = vld [vmem:[%s0 + $0xc0] sm:$0xff]
  %v41 = vld [vmem:[%s0 + $0xc8] sm:$0xff]
  %v42 = vld [vmem:[%s0 + $0xd0] sm:$0xf]
  %v43 = vld [vmem:[%s0 + $0xd8] sm:$0xf]
  %v44 = vld [vmem:[%s2] sm:$0xff]
  %v45 = vld [vmem:[%s2 + $0x8] sm:$0xff]
  %v46 = vld [vmem:[%s2 + $0x10] sm:$0xf]
  %v47 = vld [vmem:[%s2 + $0x18] sm:$0xf]
  %vm48 = vcmask 883712
  %v50 = vsel %vm48, %v14, 0
  %v53 = vsel %vm48, %v15, 0
  %vm55 = vcmask 1043456
  %v57 = vsel %vm55, %v42, 0
  %v60 = vsel %vm55, %v43, 0
  %62 = vmatpush.msra.mxu0 0.0
  %63 = vmatpush.msra.mxu0 0.0
  %64 = vmatpush.msra.mxu0 %v57
  %65 = vmatpush.msra.mxu0 %v40
  %66 = vmatpush.msra.mxu0 %v38
  %67 = vmatpush.msra.mxu0 %v36
  %68 = vmatpush.msra.mxu0 %v34
  %69 = vmatpush.msra.mxu0 %v32
  %70 = vmatpush.msra.mxu0 %v30
  %71 = vmatpush.msra.mxu0 %v28
  %72 = vmatpush.msra.mxu0 %v26
  %73 = vmatpush.msra.mxu0 %v24
  %74 = vmatpush.msra.mxu0 %v22
  %75 = vmatpush.msra.mxu0 %v20
  %76 = vmatpush.msra.mxu0 %v18
  %77 = vmatpush.msra.mxu0 %v16
  %78 = vmatmul.f32.gmra.mxu0 %v50
  %v79 = vpop.f32.mrf.mxu0
  %v80 = vadd.f32 %v44, %v79
  %81 = vmatmul.f32.gmra.mxu0 %v53
  %v82 = vpop.f32.mrf.mxu0
  %v83 = vadd.f32 %v46, %v82
  %84 = vdwg.mxu0
  %85 = vmatpush.msra.mxu0 0.0
  %86 = vmatpush.msra.mxu0 0.0
  %87 = vmatpush.msra.mxu0 %v60
  %88 = vmatpush.msra.mxu0 %v41
  %89 = vmatpush.msra.mxu0 %v39
  %90 = vmatpush.msra.mxu0 %v37
  %91 = vmatpush.msra.mxu0 %v35
  %92 = vmatpush.msra.mxu0 %v33
  %93 = vmatpush.msra.mxu0 %v31
  %94 = vmatpush.msra.mxu0 %v29
  %95 = vmatpush.msra.mxu0 %v27
  %96 = vmatpush.msra.mxu0 %v25
  %97 = vmatpush.msra.mxu0 %v23
  %98 = vmatpush.msra.mxu0 %v21
  %99 = vmatpush.msra.mxu0 %v19
  %100 = vmatpush.msra.mxu0 %v17
  %101 = vmatmul.f32.gmra.mxu0 %v50
  %v102 = vpop.f32.mrf.mxu0
  %v103 = vadd.f32 %v45, %v102
  %104 = vmatmul.f32.gmra.mxu0 %v53
  %v105 = vpop.f32.mrf.mxu0
  %v106 = vadd.f32 %v47, %v105
  %107 = vdwg.mxu0
  %108 = vst [vmem:[%s3] sm:$0xff] %v80
  %109 = vst [vmem:[%s3 + $0x8] sm:$0xff] %v103
  %110 = vst [vmem:[%s3 + $0x10] sm:$0xf] %v83
  %111 = vst [vmem:[%s3 + $0x18] sm:$0xf] %v106
  // Predicated region
  $region14: #{forward.213} parent=0 // pred_check
    _
  $region15: #{forward.213} parent=0 // pred_check_branch
    %113 = sbr.rel (0) target = $region17
  $region16: #{forward.213} parent=0 // pred_region
    _
  $region17: #{forward.213} parent=0 // pred_fallthru
    _
  // Predicated region
  $region18: #{forward.213} parent=0 // pred_check
    _
  $region19: #{forward.213} parent=0 // pred_check_branch
    %115 = sbr.rel (0) target = $region21
  $region20: #{forward.213} parent=0 // pred_region
    _
  $region21: #{forward.213} parent=0 // pred_fallthru
    _

// kernel: forward.220
$region0: #{forward.220}
  #allocation0 [shape = 'u32[]', space=smem, size = 0x4, offset = 0x4, fixed_abs, tag = 'smem constant byte address 0x4 - core index']
  #allocation1 [shape = 'u32[72,128]{1,0:T(1,128)}', space=vmem, size = 0x9000, scoped, tag = 'internal scratch']
  %s0 = inlined_call_operand.vmem [shape: f32[12,256], index: 0, kind: input, shape index: {}]
  %s1 = inlined_call_operand.vmem [shape: f32[8,12], index: 1, kind: input, shape index: {}]
  %s2 = inlined_call_operand.vmem [shape: f32[8,256], index: 2, kind: output, shape index: {}]
  %s3 = sld [smem:[#allocation0]]
  $region18: #{forward.220} parent=0
    _
  %s5 = ssub.s32 1, %s3
  %s6 = scalar_select 0, %s5, %s3
  // Predicated region
  $region2: #{forward.220} parent=0 // pred_check
    _
  $region3: #{forward.220} parent=0 // pred_check_branch
    %8 = sbr.rel (0) target = $region5
  $region4: #{forward.220} parent=0 // pred_region
    _
  $region5: #{forward.220} parent=0 // pred_fallthru
    _
  // Predicated region
  $region6: #{forward.220} parent=0 // pred_check
    _
  $region7: #{forward.220} parent=0 // pred_check_branch
    %10 = sbr.rel (0) target = $region9
  $region8: #{forward.220} parent=0 // pred_region
    _
  $region9: #{forward.220} parent=0 // pred_fallthru
    _
  %v11 = vld [vmem:[%s1] sm:$0xff]
  %v12 = vld [vmem:[%s0] sm:$0xff]
  %v13 = vld [vmem:[%s0 + $0x8] sm:$0xff]
  %v14 = vld [vmem:[%s0 + $0x10] sm:$0xf]
  %v15 = vld [vmem:[%s0 + $0x18] sm:$0xf]
  %vm16 = vcmask 97280
  %v18 = vsel %vm16, %v11, 0
  %vm20 = vcmask 1043456
  %v22 = vsel %vm20, %v14, 0
  %v25 = vsel %vm20, %v15, 0
  %27 = vmatpush.msra.mxu0 0.0
  %28 = vmatpush.msra.mxu0 0.0
  %29 = vmatpush.msra.mxu0 0.0
  %30 = vmatpush.msra.mxu0 0.0
  %31 = vmatpush.msra.mxu0 0.0
  %32 = vmatpush.msra.mxu0 0.0
  %33 = vmatpush.msra.mxu0 0.0
  %34 = vmatpush.msra.mxu0 0.0
  %35 = vmatpush.msra.mxu0 0.0
  %36 = vmatpush.msra.mxu0 0.0
  %37 = vmatpush.msra.mxu0 0.0
  %38 = vmatpush.msra.mxu0 0.0
  %39 = vmatpush.msra.mxu0 0.0
  %40 = vmatpush.msra.mxu0 0.0
  %41 = vmatpush.msra.mxu0 %v22
  %42 = vmatpush.msra.mxu0 %v12
  %43 = vmatmul.f32.gmra.mxu0 %v18
  %v44 = vpop.f32.mrf.mxu0
  %v45 = vadd.f32 0.0, %v44
  %46 = vdwg.mxu0
  %47 = vmatpush.msra.mxu0 0.0
  %48 = vmatpush.msra.mxu0 0.0
  %49 = vmatpush.msra.mxu0 0.0
  %50 = vmatpush.msra.mxu0 0.0
  %51 = vmatpush.msra.mxu0 0.0
  %52 = vmatpush.msra.mxu0 0.0
  %53 = vmatpush.msra.mxu0 0.0
  %54 = vmatpush.msra.mxu0 0.0
  %55 = vmatpush.msra.mxu0 0.0
  %56 = vmatpush.msra.mxu0 0.0
  %57 = vmatpush.msra.mxu0 0.0
  %58 = vmatpush.msra.mxu0 0.0
  %59 = vmatpush.msra.mxu0 0.0
  %60 = vmatpush.msra.mxu0 0.0
  %61 = vmatpush.msra.mxu0 %v25
  %62 = vmatpush.msra.mxu0 %v13
  %63 = vmatmul.f32.gmra.mxu0 %v18
  %v64 = vpop.f32.mrf.mxu0
  %v65 = vadd.f32 0.0, %v64
  %66 = vdwg.mxu0
  %67 = vst [vmem:[%s2] sm:$0xff] %v45
  %68 = vst [vmem:[%s2 + $0x8] sm:$0xff] %v65
  // Predicated region
  $region10: #{forward.220} parent=0 // pred_check
    _
  $region11: #{forward.220} parent=0 // pred_check_branch
    %70 = sbr.rel (0) target = $region13
  $region12: #{forward.220} parent=0 // pred_region
    _
  $region13: #{forward.220} parent=0 // pred_fallthru
    _
  // Predicated region
  $region14: #{forward.220} parent=0 // pred_check
    _
  $region15: #{forward.220} parent=0 // pred_check_branch
    %72 = sbr.rel (0) target = $region17
  $region16: #{forward.220} parent=0 // pred_region
    _
  $region17: #{forward.220} parent=0 // pred_fallthru
    _

// kernel: forward.210
$region0: #{forward.210}
  #allocation0 [shape = 'u32[]', space=smem, size = 0x4, offset = 0x4, fixed_abs, tag = 'smem constant byte address 0x4 - core index']
  #allocation1 [shape = 'u32[72,128]{1,0:T(1,128)}', space=vmem, size = 0x9000, scoped, tag = 'internal scratch']
  %s0 = inlined_call_operand.vmem [shape: f32[108,256], index: 0, kind: input, shape index: {}]
  %s1 = inlined_call_operand.vmem [shape: f32[24,108], index: 1, kind: input, shape index: {}]
  %s2 = inlined_call_operand.vmem [shape: f32[24,256], index: 2, kind: input, shape index: {}]
  %s3 = inlined_call_operand.vmem [shape: f32[12,24], index: 3, kind: input, shape index: {}]
  %s4 = inlined_call_operand.vmem [shape: f32[3,12], index: 4, kind: input, shape index: {}]
  %s5 = inlined_call_operand.vmem [shape: f32[12,3], index: 5, kind: input, shape index: {}]
  %s6 = inlined_call_operand.vmem [shape: f32[256,1], index: 6, kind: input, shape index: {}]
  %s7 = inlined_call_operand.vmem [shape: f32[1,256], index: 7, kind: input, shape index: {}]
  %s8 = inlined_call_operand.vmem [shape: f32[12,256], index: 8, kind: input, shape index: {}]
  %s9 = inlined_call_operand.vmem [shape: f32[12,256], index: 9, kind: output, shape index: {}]
  %s10 = sld [smem:[#allocation0]]
  $region46: #{forward.210} parent=0
    _
  %s12 = ssub.s32 1, %s10
  %s13 = scalar_select 0, %s12, %s10
  // Predicated region
  $region2: #{forward.210} parent=0 // pred_check
    _
  $region3: #{forward.210} parent=0 // pred_check_branch
    %15 = sbr.rel (0) target = $region5
  $region4: #{forward.210} parent=0 // pred_region
    _
  $region5: #{forward.210} parent=0 // pred_fallthru
    _
  // Predicated region
  $region6: #{forward.210} parent=0 // pred_check
    _
  $region7: #{forward.210} parent=0 // pred_check_branch
    %17 = sbr.rel (0) target = $region9
  $region8: #{forward.210} parent=0 // pred_region
    _
  $region9: #{forward.210} parent=0 // pred_fallthru
    _
  // Predicated region
  $region10: #{forward.210} parent=0 // pred_check
    _
  $region11: #{forward.210} parent=0 // pred_check_branch
    %19 = sbr.rel (0) target = $region13
  $region12: #{forward.210} parent=0 // pred_region
    _
  $region13: #{forward.210} parent=0 // pred_fallthru
    _
  // Predicated region
  $region14: #{forward.210} parent=0 // pred_check
    _
  $region15: #{forward.210} parent=0 // pred_check_branch
    %21 = sbr.rel (0) target = $region17
  $region16: #{forward.210} parent=0 // pred_region
    _
  $region17: #{forward.210} parent=0 // pred_fallthru
    _
  // Predicated region
  $region18: #{forward.210} parent=0 // pred_check
    _
  $region19: #{forward.210} parent=0 // pred_check_branch
    %23 = sbr.rel (0) target = $region21
  $region20: #{forward.210} parent=0 // pred_region
    _
  $region21: #{forward.210} parent=0 // pred_fallthru
    _
  // Predicated region
  $region22: #{forward.210} parent=0 // pred_check
    _
  $region23: #{forward.210} parent=0 // pred_check_branch
    %25 = sbr.rel (0) target = $region25
  $region24: #{forward.210} parent=0 // pred_region
    _
  $region25: #{forward.210} parent=0 // pred_fallthru
    _
  // Predicated region
  $region26: #{forward.210} parent=0 // pred_check
    _
  $region27: #{forward.210} parent=0 // pred_check_branch
    %27 = sbr.rel (0) target = $region29
  $region28: #{forward.210} parent=0 // pred_region
    _
  $region29: #{forward.210} parent=0 // pred_fallthru
    _
  // Predicated region
  $region30: #{forward.210} parent=0 // pred_check
    _
  $region31: #{forward.210} parent=0 // pred_check_branch
    %29 = sbr.rel (0) target = $region33
  $region32: #{forward.210} parent=0 // pred_region
    _
  $region33: #{forward.210} parent=0 // pred_fallthru
    _
  // Predicated region
  $region34: #{forward.210} parent=0 // pred_check
    _
  $region35: #{forward.210} parent=0 // pred_check_branch
    %31 = sbr.rel (0) target = $region37
  $region36: #{forward.210} parent=0 // pred_region
    _
  $region37: #{forward.210} parent=0 // pred_fallthru
    _
  %v32 = vld [vmem:[%s1] sm:$0xff]
  %v33 = vld [vmem:[%s1 + $0x8] sm:$0xff]
  %v34 = vld [vmem:[%s1 + $0x10] sm:$0xff]
  %v35 = vld [vmem:[%s0] sm:$0xff]
  %v36 = vld [vmem:[%s0 + $0x8] sm:$0xff]
  %v37 = vld [vmem:[%s0 + $0x10] sm:$0xff]
  %v38 = vld [vmem:[%s0 + $0x18] sm:$0xff]
  %v39 = vld [vmem:[%s0 + $0x20] sm:$0xff]
  %v40 = vld [vmem:[%s0 + $0x28] sm:$0xff]
  %v41 = vld [vmem:[%s0 + $0x30] sm:$0xff]
  %v42 = vld [vmem:[%s0 + $0x38] sm:$0xff]
  %v43 = vld [vmem:[%s0 + $0x40] sm:$0xff]
  %v44 = vld [vmem:[%s0 + $0x48] sm:$0xff]
  %v45 = vld [vmem:[%s0 + $0x50] sm:$0xff]
  %v46 = vld [vmem:[%s0 + $0x58] sm:$0xff]
  %v47 = vld [vmem:[%s0 + $0x60] sm:$0xff]
  %v48 = vld [vmem:[%s0 + $0x68] sm:$0xff]
  %v49 = vld [vmem:[%s0 + $0x70] sm:$0xff]
  %v50 = vld [vmem:[%s0 + $0x78] sm:$0xff]
  %v51 = vld [vmem:[%s0 + $0x80] sm:$0xff]
  %v52 = vld [vmem:[%s0 + $0x88] sm:$0xff]
  %v53 = vld [vmem:[%s0 + $0x90] sm:$0xff]
  %v54 = vld [vmem:[%s0 + $0x98] sm:$0xff]
  %v55 = vld [vmem:[%s0 + $0xa0] sm:$0xff]
  %v56 = vld [vmem:[%s0 + $0xa8] sm:$0xff]
  %v57 = vld [vmem:[%s0 + $0xb0] sm:$0xff]
  %v58 = vld [vmem:[%s0 + $0xb8] sm:$0xff]
  %v59 = vld [vmem:[%s0 + $0xc0] sm:$0xff]
  %v60 = vld [vmem:[%s0 + $0xc8] sm:$0xff]
  %v61 = vld [vmem:[%s0 + $0xd0] sm:$0xf]
  %v62 = vld [vmem:[%s0 + $0xd8] sm:$0xf]
  %vm63 = vcmask 883712
  %v65 = vsel %vm63, %v32, 0
  %v68 = vsel %vm63, %v33, 0
  %v71 = vsel %vm63, %v34, 0
  %vm73 = vcmask 1043456
  %v75 = vsel %vm73, %v61, 0
  %v78 = vsel %vm73, %v62, 0
  %80 = vmatpush.msra.mxu0 0.0
  %81 = vmatpush.msra.mxu0 0.0
  %82 = vmatpush.msra.mxu0 %v75
  %83 = vmatpush.msra.mxu0 %v59
  %84 = vmatpush.msra.mxu0 %v57
  %85 = vmatpush.msra.mxu0 %v55
  %86 = vmatpush.msra.mxu0 %v53
  %87 = vmatpush.msra.mxu0 %v51
  %88 = vmatpush.msra.mxu0 %v49
  %89 = vmatpush.msra.mxu0 %v47
  %90 = vmatpush.msra.mxu0 %v45
  %91 = vmatpush.msra.mxu0 %v43
  %92 = vmatpush.msra.mxu0 %v41
  %93 = vmatpush.msra.mxu0 %v39
  %94 = vmatpush.msra.mxu0 %v37
  %95 = vmatpush.msra.mxu0 %v35
  %96 = vmatmul.f32.gmra.mxu0 %v65
  %v97 = vpop.f32.mrf.mxu0
  %v98 = vadd.f32 0.0, %v97
  %99 = vmatmul.f32.gmra.mxu0 %v68
  %v100 = vpop.f32.mrf.mxu0
  %v101 = vadd.f32 0.0, %v100
  %102 = vmatmul.f32.gmra.mxu0 %v71
  %v103 = vpop.f32.mrf.mxu0
  %v104 = vadd.f32 0.0, %v103
  %105 = vdwg.mxu0
  %106 = vmatpush.msra.mxu0 0.0
  %107 = vmatpush.msra.mxu0 0.0
  %108 = vmatpush.msra.mxu0 %v78
  %109 = vmatpush.msra.mxu0 %v60
  %110 = vmatpush.msra.mxu0 %v58
  %111 = vmatpush.msra.mxu0 %v56
  %112 = vmatpush.msra.mxu0 %v54
  %113 = vmatpush.msra.mxu0 %v52
  %114 = vmatpush.msra.mxu0 %v50
  %115 = vmatpush.msra.mxu0 %v48
  %116 = vmatpush.msra.mxu0 %v46
  %117 = vmatpush.msra.mxu0 %v44
  %118 = vmatpush.msra.mxu0 %v42
  %119 = vmatpush.msra.mxu0 %v40
  %120 = vmatpush.msra.mxu0 %v38
  %121 = vmatpush.msra.mxu0 %v36
  %122 = vmatmul.f32.gmra.mxu0 %v65
  %v123 = vpop.f32.mrf.mxu0
  %v124 = vadd.f32 0.0, %v123
  %125 = vmatmul.f32.gmra.mxu0 %v68
  %v126 = vpop.f32.mrf.mxu0
  %v127 = vadd.f32 0.0, %v126
  %128 = vmatmul.f32.gmra.mxu0 %v71
  %v129 = vpop.f32.mrf.mxu0
  %v130 = vadd.f32 0.0, %v129
  %131 = vdwg.mxu0
  %v132 = vld [vmem:[%s3] sm:$0xff]
  %v133 = vld [vmem:[%s3 + $0x8] sm:$0xf]
  %v134 = vld [vmem:[%s2] sm:$0xff]
  %v135 = vld [vmem:[%s2 + $0x8] sm:$0xff]
  %v136 = vld [vmem:[%s2 + $0x10] sm:$0xff]
  %v137 = vld [vmem:[%s2 + $0x18] sm:$0xff]
  %v138 = vld [vmem:[%s2 + $0x20] sm:$0xff]
  %v139 = vld [vmem:[%s2 + $0x28] sm:$0xff]
  %v140 = vmul.f32 %v98, %v134
  %v141 = vmul.f32 %v124, %v135
  %v142 = vmul.f32 %v101, %v136
  %v143 = vmul.f32 %v127, %v137
  %v144 = vmul.f32 %v104, %v138
  %v145 = vmul.f32 %v130, %v139
  %vm146 = vcmask 195584
  %v148 = vsel %vm146, %v132, 0
  %v151 = vsel %vm146, %v133, 0
  %153 = vmatpush.msra.mxu0 0.0
  %154 = vmatpush.msra.mxu0 0.0
  %155 = vmatpush.msra.mxu0 0.0
  %156 = vmatpush.msra.mxu0 0.0
  %157 = vmatpush.msra.mxu0 0.0
  %158 = vmatpush.msra.mxu0 0.0
  %159 = vmatpush.msra.mxu0 0.0
  %160 = vmatpush.msra.mxu0 0.0
  %161 = vmatpush.msra.mxu0 0.0
  %162 = vmatpush.msra.mxu0 0.0
  %163 = vmatpush.msra.mxu0 0.0
  %164 = vmatpush.msra.mxu0 0.0
  %165 = vmatpush.msra.mxu0 0.0
  %166 = vmatpush.msra.mxu0 %v144
  %167 = vmatpush.msra.mxu0 %v142
  %168 = vmatpush.msra.mxu0 %v140
  %169 = vmatmul.f32.gmra.mxu0 %v148
  %v170 = vpop.f32.mrf.mxu0
  %v171 = vadd.f32 0.0, %v170
  %172 = vmatmul.f32.gmra.mxu0 %v151
  %v173 = vpop.f32.mrf.mxu0
  %v174 = vadd.f32 0.0, %v173
  %175 = vdwg.mxu0
  %176 = vmatpush.msra.mxu0 0.0
  %177 = vmatpush.msra.mxu0 0.0
  %178 = vmatpush.msra.mxu0 0.0
  %179 = vmatpush.msra.mxu0 0.0
  %180 = vmatpush.msra.mxu0 0.0
  %181 = vmatpush.msra.mxu0 0.0
  %182 = vmatpush.msra.mxu0 0.0
  %183 = vmatpush.msra.mxu0 0.0
  %184 = vmatpush.msra.mxu0 0.0
  %185 = vmatpush.msra.mxu0 0.0
  %186 = vmatpush.msra.mxu0 0.0
  %187 = vmatpush.msra.mxu0 0.0
  %188 = vmatpush.msra.mxu0 0.0
  %189 = vmatpush.msra.mxu0 %v145
  %190 = vmatpush.msra.mxu0 %v143
  %191 = vmatpush.msra.mxu0 %v141
  %192 = vmatmul.f32.gmra.mxu0 %v148
  %v193 = vpop.f32.mrf.mxu0
  %v194 = vadd.f32 0.0, %v193
  %195 = vmatmul.f32.gmra.mxu0 %v151
  %v196 = vpop.f32.mrf.mxu0
  %v197 = vadd.f32 0.0, %v196
  %198 = vdwg.mxu0
  %v199 = vld [vmem:[%s6] sm:$0xff]
  %v200 = vld [vmem:[%s6 + $0x8] sm:$0xff]
  %v201 = vld [vmem:[%s6 + $0x10] sm:$0xff]
  %v202 = vld [vmem:[%s6 + $0x18] sm:$0xff]
  %v203 = vld [vmem:[%s6 + $0x20] sm:$0xff]
  %v204 = vld [vmem:[%s6 + $0x28] sm:$0xff]
  %v205 = vld [vmem:[%s6 + $0x30] sm:$0xff]
  %v206 = vld [vmem:[%s6 + $0x38] sm:$0xff]
  %v207 = vld [vmem:[%s6 + $0x40] sm:$0xff]
  %v208 = vld [vmem:[%s6 + $0x48] sm:$0xff]
  %v209 = vld [vmem:[%s6 + $0x50] sm:$0xff]
  %v210 = vld [vmem:[%s6 + $0x58] sm:$0xff]
  %v211 = vld [vmem:[%s6 + $0x60] sm:$0xff]
  %v212 = vld [vmem:[%s6 + $0x68] sm:$0xff]
  %v213 = vld [vmem:[%s6 + $0x70] sm:$0xff]
  %v214 = vld [vmem:[%s6 + $0x78] sm:$0xff]
  %v215 = vld [vmem:[%s6 + $0x80] sm:$0xff]
  %v216 = vld [vmem:[%s6 + $0x88] sm:$0xff]
  %v217 = vld [vmem:[%s6 + $0x90] sm:$0xff]
  %v218 = vld [vmem:[%s6 + $0x98] sm:$0xff]
  %v219 = vld [vmem:[%s6 + $0xa0] sm:$0xff]
  %v220 = vld [vmem:[%s6 + $0xa8] sm:$0xff]
  %v221 = vld [vmem:[%s6 + $0xb0] sm:$0xff]
  %v222 = vld [vmem:[%s6 + $0xb8] sm:$0xff]
  %v223 = vld [vmem:[%s6 + $0xc0] sm:$0xff]
  %v224 = vld [vmem:[%s6 + $0xc8] sm:$0xff]
  %v225 = vld [vmem:[%s6 + $0xd0] sm:$0xff]
  %v226 = vld [vmem:[%s6 + $0xd8] sm:$0xff]
  %v227 = vld [vmem:[%s6 + $0xe0] sm:$0xff]
  %v228 = vld [vmem:[%s6 + $0xe8] sm:$0xff]
  %v229 = vld [vmem:[%s6 + $0xf0] sm:$0xff]
  %v230 = vld [vmem:[%s6 + $0xf8] sm:$0xff]
  %231 = vmatpush.msra.mxu0 %v214
  %232 = vmatpush.msra.mxu0 %v213
  %233 = vmatpush.msra.mxu0 %v212
  %234 = vmatpush.msra.mxu0 %v211
  %235 = vmatpush.msra.mxu0 %v210
  %236 = vmatpush.msra.mxu0 %v209
  %237 = vmatpush.msra.mxu0 %v208
  %238 = vmatpush.msra.mxu0 %v207
  %239 = vmatpush.msra.mxu0 %v206
  %240 = vmatpush.msra.mxu0 %v205
  %241 = vmatpush.msra.mxu0 %v204
  %242 = vmatpush.msra.mxu0 %v203
  %243 = vmatpush.msra.mxu0 %v202
  %244 = vmatpush.msra.mxu0 %v201
  %245 = vmatpush.msra.mxu0 %v200
  %246 = vmatpush.msra.mxu0 %v199
  %247 = vmatmul.f32.gmra.mxu0 %v171
  %v248 = vpop.f32.mrf.mxu0
  %v249 = vadd.f32 0.0, %v248
  %250 = vmatmul.f32.gmra.mxu0 %v174
  %v251 = vpop.f32.mrf.mxu0
  %v252 = vadd.f32 0.0, %v251
  %253 = vdwg.mxu0
  %254 = vmatpush.msra.mxu0 %v230
  %255 = vmatpush.msra.mxu0 %v229
  %256 = vmatpush.msra.mxu0 %v228
  %257 = vmatpush.msra.mxu0 %v227
  %258 = vmatpush.msra.mxu0 %v226
  %259 = vmatpush.msra.mxu0 %v225
  %260 = vmatpush.msra.mxu0 %v224
  %261 = vmatpush.msra.mxu0 %v223
  %262 = vmatpush.msra.mxu0 %v222
  %263 = vmatpush.msra.mxu0 %v221
  %264 = vmatpush.msra.mxu0 %v220
  %265 = vmatpush.msra.mxu0 %v219
  %266 = vmatpush.msra.mxu0 %v218
  %267 = vmatpush.msra.mxu0 %v217
  %268 = vmatpush.msra.mxu0 %v216
  %269 = vmatpush.msra.mxu0 %v215
  %270 = vmatmul.f32.gmra.mxu0 %v194
  %v271 = vpop.f32.mrf.mxu0
  %v272 = vadd.f32 %v249, %v271
  %273 = vmatmul.f32.gmra.mxu0 %v197
  %v274 = vpop.f32.mrf.mxu0
  %v275 = vadd.f32 %v252, %v274
  %276 = vdwg.mxu0
  %v277 = vld [vmem:[%s4] sm:$0x7]
  %vm278 = vcmask 97280
  %v280 = vsel %vm278, %v277, 0
  %v283 = vsel %vm73, %v275, 0
  %285 = vmatpush.msra.mxu0 0.0
  %286 = vmatpush.msra.mxu0 0.0
  %287 = vmatpush.msra.mxu0 0.0
  %288 = vmatpush.msra.mxu0 0.0
  %289 = vmatpush.msra.mxu0 0.0
  %290 = vmatpush.msra.mxu0 0.0
  %291 = vmatpush.msra.mxu0 0.0
  %292 = vmatpush.msra.mxu0 0.0
  %293 = vmatpush.msra.mxu0 0.0
  %294 = vmatpush.msra.mxu0 0.0
  %295 = vmatpush.msra.mxu0 0.0
  %296 = vmatpush.msra.mxu0 0.0
  %297 = vmatpush.msra.mxu0 0.0
  %298 = vmatpush.msra.mxu0 0.0
  %299 = vmatpush.msra.mxu0 %v283
  %300 = vmatpush.msra.mxu0 %v272
  %301 = vmatmul.f32.gmra.mxu0 %v280
  %v302 = vpop.f32.mrf.mxu0
  %v303 = vadd.f32 0.0, %v302
  %304 = vdwg.mxu0
  %v305 = vmax.f32 %v303, 0.0
  %v306 = vld [vmem:[%s5] sm:$0xff]
  %v307 = vld [vmem:[%s5 + $0x8] sm:$0xf]
  %vm308 = vcmask 23552
  %v310 = vsel %vm308, %v306, 0
  %v313 = vsel %vm308, %v307, 0
  %vm315 = vcmask 1042432
  %v317 = vsel %vm315, %v305, 0
  %319 = vmatpush.msra.mxu0 0.0
  %320 = vmatpush.msra.mxu0 0.0
  %321 = vmatpush.msra.mxu0 0.0
  %322 = vmatpush.msra.mxu0 0.0
  %323 = vmatpush.msra.mxu0 0.0
  %324 = vmatpush.msra.mxu0 0.0
  %325 = vmatpush.msra.mxu0 0.0
  %326 = vmatpush.msra.mxu0 0.0
  %327 = vmatpush.msra.mxu0 0.0
  %328 = vmatpush.msra.mxu0 0.0
  %329 = vmatpush.msra.mxu0 0.0
  %330 = vmatpush.msra.mxu0 0.0
  %331 = vmatpush.msra.mxu0 0.0
  %332 = vmatpush.msra.mxu0 0.0
  %333 = vmatpush.msra.mxu0 0.0
  %334 = vmatpush.msra.mxu0 %v317
  %335 = vmatmul.f32.gmra.mxu0 %v310
  %v336 = vpop.f32.mrf.mxu0
  %v337 = vadd.f32 0.0, %v336
  %338 = vmatmul.f32.gmra.mxu0 %v313
  %v339 = vpop.f32.mrf.mxu0
  %v340 = vadd.f32 0.0, %v339
  %341 = vdwg.mxu0
  %v342 = vxor.u32 %v337, 2147483648
  %v343 = vxor.u32 %v340, 2147483648
  %v344 = vmul.f32 %v342, 1.442695
  %v345 = vpow.pop %v344
  %v346 = vmul.f32 %v343, 1.442695
  %v347 = vpow.pop %v346
  %v348 = vadd.f32 %v345, 1.0
  %v349 = vadd.f32 %v347, 1.0
  %v350 = vrcp.pop %v348
  %v351 = vmul.f32 %v348, %v350
  %v352 = vsub.f32 1.0, %v351
  %v353 = vmul.f32 %v350, %v352
  %v354 = vadd.f32 %v350, %v353
  %vm355 = vweird.f32 %v348
  %vm356 = vweird.f32 %v350
  %vm357 = vmor %vm355, %vm356
  %v358 = vsel %vm357, %v350, %v354
  %v359 = vand.u32 2147483647, %v348
  %vm360 = vcmp.eq.f32.partialorder %v359, 8.507059e+37
  %v361 = vand.u32 %v348, 2147483648
  %v362 = vor.u32 1.1754944e-38, %v361
  %v363 = vsel %vm360, %v362, %v358
  %v364 = vmul.f32 1.0, %v363
  %v365 = vrcp.pop %v349
  %v366 = vmul.f32 %v349, %v365
  %v367 = vsub.f32 1.0, %v366
  %v368 = vmul.f32 %v365, %v367
  %v369 = vadd.f32 %v365, %v368
  %vm370 = vweird.f32 %v349
  %vm371 = vweird.f32 %v365
  %vm372 = vmor %vm370, %vm371
  %v373 = vsel %vm372, %v365, %v369
  %v374 = vand.u32 2147483647, %v349
  %vm375 = vcmp.eq.f32.partialorder %v374, 8.507059e+37
  %v376 = vand.u32 %v349, 2147483648
  %v377 = vor.u32 1.1754944e-38, %v376
  %v378 = vsel %vm375, %v377, %v373
  %v379 = vmul.f32 1.0, %v378
  %v380 = vld [vmem:[%s7] sm:$0x3]
  %v382 = vperm.slane %v380, 0
  %v383 = vperm.slane %v380, 1
  %vm384 = vcmask 7168
  %v386 = vsel %vm384, %v364, 0
  %v389 = vsel %vm384, %v379, 0
  %vm391 = vcmask 1040384
  %v392 = vsel %vm391, %v382, 0
  %v394 = vsel %vm391, %v383, 0
  %396 = vmatpush.msra.mxu0 0.0
  %397 = vmatpush.msra.mxu0 0.0
  %398 = vmatpush.msra.mxu0 0.0
  %399 = vmatpush.msra.mxu0 0.0
  %400 = vmatpush.msra.mxu0 0.0
  %401 = vmatpush.msra.mxu0 0.0
  %402 = vmatpush.msra.mxu0 0.0
  %403 = vmatpush.msra.mxu0 0.0
  %404 = vmatpush.msra.mxu0 0.0
  %405 = vmatpush.msra.mxu0 0.0
  %406 = vmatpush.msra.mxu0 0.0
  %407 = vmatpush.msra.mxu0 0.0
  %408 = vmatpush.msra.mxu0 0.0
  %409 = vmatpush.msra.mxu0 0.0
  %410 = vmatpush.msra.mxu0 0.0
  %411 = vmatpush.msra.mxu0 %v392
  %412 = vmatmul.f32.gmra.mxu0 %v386
  %v413 = vpop.f32.mrf.mxu0
  %v414 = vadd.f32 0.0, %v413
  %415 = vmatmul.f32.gmra.mxu0 %v389
  %v416 = vpop.f32.mrf.mxu0
  %v417 = vadd.f32 0.0, %v416
  %418 = vdwg.mxu0
  %419 = vmatpush.msra.mxu0 0.0
  %420 = vmatpush.msra.mxu0 0.0
  %421 = vmatpush.msra.mxu0 0.0
  %422 = vmatpush.msra.mxu0 0.0
  %423 = vmatpush.msra.mxu0 0.0
  %424 = vmatpush.msra.mxu0 0.0
  %425 = vmatpush.msra.mxu0 0.0
  %426 = vmatpush.msra.mxu0 0.0
  %427 = vmatpush.msra.mxu0 0.0
  %428 = vmatpush.msra.mxu0 0.0
  %429 = vmatpush.msra.mxu0 0.0
  %430 = vmatpush.msra.mxu0 0.0
  %431 = vmatpush.msra.mxu0 0.0
  %432 = vmatpush.msra.mxu0 0.0
  %433 = vmatpush.msra.mxu0 0.0
  %434 = vmatpush.msra.mxu0 %v394
  %435 = vmatmul.f32.gmra.mxu0 %v386
  %v436 = vpop.f32.mrf.mxu0
  %v437 = vadd.f32 0.0, %v436
  %438 = vmatmul.f32.gmra.mxu0 %v389
  %v439 = vpop.f32.mrf.mxu0
  %v440 = vadd.f32 0.0, %v439
  %441 = vdwg.mxu0
  %v442 = vmul.f32 %v171, %v414
  %v443 = vmul.f32 %v194, %v437
  %v444 = vmul.f32 %v174, %v417
  %v445 = vmul.f32 %v197, %v440
  %v446 = vld [vmem:[%s8] sm:$0xff]
  %v447 = vld [vmem:[%s8 + $0x8] sm:$0xff]
  %v448 = vld [vmem:[%s8 + $0x10] sm:$0xf]
  %v449 = vld [vmem:[%s8 + $0x18] sm:$0xf]
  %v450 = vadd.f32 %v442, %v446
  %v451 = vadd.f32 %v443, %v447
  %v452 = vadd.f32 %v444, %v448
  %v453 = vadd.f32 %v445, %v449
  %454 = vst [vmem:[%s9] sm:$0xff] %v450
  %455 = vst [vmem:[%s9 + $0x8] sm:$0xff] %v451
  %456 = vst [vmem:[%s9 + $0x10] sm:$0xf] %v452
  %457 = vst [vmem:[%s9 + $0x18] sm:$0xf] %v453
  // Predicated region
  $region38: #{forward.210} parent=0 // pred_check
    _
  $region39: #{forward.210} parent=0 // pred_check_branch
    %459 = sbr.rel (0) target = $region41
  $region40: #{forward.210} parent=0 // pred_region
    _
  $region41: #{forward.210} parent=0 // pred_fallthru
    _
  // Predicated region
  $region42: #{forward.210} parent=0 // pred_check
    _
  $region43: #{forward.210} parent=0 // pred_check_branch
    %461 = sbr.rel (0) target = $region45
  $region44: #{forward.210} parent=0 // pred_region
    _
  $region45: #{forward.210} parent=0 // pred_fallthru
    _

// kernel: forward.233
$region0: #{forward.233}
  #allocation0 [shape = 'u32[]', space=smem, size = 0x4, offset = 0x4, fixed_abs, tag = 'smem constant byte address 0x4 - core index']
  #allocation1 [shape = 'u32[72,128]{1,0:T(1,128)}', space=vmem, size = 0x9000, scoped, tag = 'internal scratch']
  %s0 = inlined_call_operand.vmem [shape: f32[108,256], index: 0, kind: input, shape index: {}]
  %s1 = inlined_call_operand.vmem [shape: f32[3,108], index: 1, kind: input, shape index: {}]
  %s2 = inlined_call_operand.vmem [shape: f32[3,256], index: 2, kind: input, shape index: {}]
  %s3 = inlined_call_operand.vmem [shape: f32[3,256], index: 3, kind: output, shape index: {}]
  %s4 = sld [smem:[#allocation0]]
  $region22: #{forward.233} parent=0
    _
  %s6 = ssub.s32 1, %s4
  %s7 = scalar_select 0, %s6, %s4
  // Predicated region
  $region2: #{forward.233} parent=0 // pred_check
    _
  $region3: #{forward.233} parent=0 // pred_check_branch
    %9 = sbr.rel (0) target = $region5
  $region4: #{forward.233} parent=0 // pred_region
    _
  $region5: #{forward.233} parent=0 // pred_fallthru
    _
  // Predicated region
  $region6: #{forward.233} parent=0 // pred_check
    _
  $region7: #{forward.233} parent=0 // pred_check_branch
    %11 = sbr.rel (0) target = $region9
  $region8: #{forward.233} parent=0 // pred_region
    _
  $region9: #{forward.233} parent=0 // pred_fallthru
    _
  // Predicated region
  $region10: #{forward.233} parent=0 // pred_check
    _
  $region11: #{forward.233} parent=0 // pred_check_branch
    %13 = sbr.rel (0) target = $region13
  $region12: #{forward.233} parent=0 // pred_region
    _
  $region13: #{forward.233} parent=0 // pred_fallthru
    _
  %v14 = vld [vmem:[%s1] sm:$0x7]
  %v15 = vld [vmem:[%s0] sm:$0xff]
  %v16 = vld [vmem:[%s0 + $0x8] sm:$0xff]
  %v17 = vld [vmem:[%s0 + $0x10] sm:$0xff]
  %v18 = vld [vmem:[%s0 + $0x18] sm:$0xff]
  %v19 = vld [vmem:[%s0 + $0x20] sm:$0xff]
  %v20 = vld [vmem:[%s0 + $0x28] sm:$0xff]
  %v21 = vld [vmem:[%s0 + $0x30] sm:$0xff]
  %v22 = vld [vmem:[%s0 + $0x38] sm:$0xff]
  %v23 = vld [vmem:[%s0 + $0x40] sm:$0xff]
  %v24 = vld [vmem:[%s0 + $0x48] sm:$0xff]
  %v25 = vld [vmem:[%s0 + $0x50] sm:$0xff]
  %v26 = vld [vmem:[%s0 + $0x58] sm:$0xff]
  %v27 = vld [vmem:[%s0 + $0x60] sm:$0xff]
  %v28 = vld [vmem:[%s0 + $0x68] sm:$0xff]
  %v29 = vld [vmem:[%s0 + $0x70] sm:$0xff]
  %v30 = vld [vmem:[%s0 + $0x78] sm:$0xff]
  %v31 = vld [vmem:[%s0 + $0x80] sm:$0xff]
  %v32 = vld [vmem:[%s0 + $0x88] sm:$0xff]
  %v33 = vld [vmem:[%s0 + $0x90] sm:$0xff]
  %v34 = vld [vmem:[%s0 + $0x98] sm:$0xff]
  %v35 = vld [vmem:[%s0 + $0xa0] sm:$0xff]
  %v36 = vld [vmem:[%s0 + $0xa8] sm:$0xff]
  %v37 = vld [vmem:[%s0 + $0xb0] sm:$0xff]
  %v38 = vld [vmem:[%s0 + $0xb8] sm:$0xff]
  %v39 = vld [vmem:[%s0 + $0xc0] sm:$0xff]
  %v40 = vld [vmem:[%s0 + $0xc8] sm:$0xff]
  %v41 = vld [vmem:[%s0 + $0xd0] sm:$0xf]
  %v42 = vld [vmem:[%s0 + $0xd8] sm:$0xf]
  %v43 = vld [vmem:[%s2] sm:$0x77]
  %45 = vst [vmem:[#allocation1] ss:$2 sm:$0xff] %v43
  %v46 = vld.sshfl [vmem:[#allocation1] sm:$0xff pattern:$0x75316420]
  %v47 = vld.sshfl [vmem:[#allocation1 + $0x8] sm:$0xff pattern:$0x75316420]
  %vm50 = vcmask 883712
  %v52 = vsel %vm50, %v14, 0
  %vm54 = vcmask 1043456
  %v56 = vsel %vm54, %v41, 0
  %v59 = vsel %vm54, %v42, 0
  %61 = vmatpush.msra.mxu0 0.0
  %62 = vmatpush.msra.mxu0 0.0
  %63 = vmatpush.msra.mxu0 %v56
  %64 = vmatpush.msra.mxu0 %v39
  %65 = vmatpush.msra.mxu0 %v37
  %66 = vmatpush.msra.mxu0 %v35
  %67 = vmatpush.msra.mxu0 %v33
  %68 = vmatpush.msra.mxu0 %v31
  %69 = vmatpush.msra.mxu0 %v29
  %70 = vmatpush.msra.mxu0 %v27
  %71 = vmatpush.msra.mxu0 %v25
  %72 = vmatpush.msra.mxu0 %v23
  %73 = vmatpush.msra.mxu0 %v21
  %74 = vmatpush.msra.mxu0 %v19
  %75 = vmatpush.msra.mxu0 %v17
  %76 = vmatpush.msra.mxu0 %v15
  %77 = vmatmul.f32.gmra.mxu0 %v52
  %v78 = vpop.f32.mrf.mxu0
  %v79 = vadd.f32 %v46, %v78
  %80 = vdwg.mxu0
  %81 = vmatpush.msra.mxu0 0.0
  %82 = vmatpush.msra.mxu0 0.0
  %83 = vmatpush.msra.mxu0 %v59
  %84 = vmatpush.msra.mxu0 %v40
  %85 = vmatpush.msra.mxu0 %v38
  %86 = vmatpush.msra.mxu0 %v36
  %87 = vmatpush.msra.mxu0 %v34
  %88 = vmatpush.msra.mxu0 %v32
  %89 = vmatpush.msra.mxu0 %v30
  %90 = vmatpush.msra.mxu0 %v28
  %91 = vmatpush.msra.mxu0 %v26
  %92 = vmatpush.msra.mxu0 %v24
  %93 = vmatpush.msra.mxu0 %v22
  %94 = vmatpush.msra.mxu0 %v20
  %95 = vmatpush.msra.mxu0 %v18
  %96 = vmatpush.msra.mxu0 %v16
  %97 = vmatmul.f32.gmra.mxu0 %v52
  %v98 = vpop.f32.mrf.mxu0
  %v99 = vadd.f32 %v47, %v98
  %100 = vdwg.mxu0
  %v103 = vrot.slane %v99, 4
  %v104 = vsel %vm54, %v79, %v103
  %106 = vst [vmem:[%s3] sm:$0x77] %v104
  // Predicated region
  $region14: #{forward.233} parent=0 // pred_check
    _
  $region15: #{forward.233} parent=0 // pred_check_branch
    %108 = sbr.rel (0) target = $region17
  $region16: #{forward.233} parent=0 // pred_region
    _
  $region17: #{forward.233} parent=0 // pred_fallthru
    _
  // Predicated region
  $region18: #{forward.233} parent=0 // pred_check
    _
  $region19: #{forward.233} parent=0 // pred_check_branch
    %110 = sbr.rel (0) target = $region21
  $region20: #{forward.233} parent=0 // pred_region
    _
  $region21: #{forward.233} parent=0 // pred_fallthru
    _

</llo_original>
